<compile_context>
chip_gen: v5e
topology: v5e:2x2
jax: 0.10.0
libtpu: 0.0.40
codegen_flags: <defaults>
</compile_context>

<pallas_src>
import jax
import jax.numpy as jnp
from jax.experimental import pallas as pl
from jax.experimental.pallas import tpu as pltpu


def _make_fused_kernel(ho1, wo1, ho2, wo2, ho3, wo3):
    """Kernel specialized (at trace time) to the spatial sizes of each layer."""

    def kernel(p1_ref, w1_ref, b1_ref, w2_ref, b2_ref, w3_ref, b3_ref,
               o_ref, act1_ref, act2_ref):
        # ---------- layer 1: relu(p1 @ w1 + b1) -> act1 (ho1*wo1, 128) ----------
        p1 = p1_ref[...].astype(jnp.bfloat16)                    # (m1, 128)
        a1 = jnp.dot(p1, w1_ref[...], preferred_element_type=jnp.float32)
        act1_ref[...] = jnp.maximum(a1 + b1_ref[...], 0.0)
        # Dropout(p=0.5): identity in eval mode.

        # ---------- layer 2: k=3, s=2  (ho1,wo1,128) -> (ho2,wo2,256) ----------
        # In-kernel im2col: for each output row block `oh`, gather the 3x3
        # receptive-field rows with strided sublane loads and concatenate them
        # along lanes (each piece is 128 lanes -> lane-tile aligned).
        for oh in range(ho2):
            pieces = []
            for i in range(3):
                for j in range(3):
                    start = (2 * oh + i) * wo1 + j
                    pieces.append(act1_ref[pl.ds(start, wo2, stride=2), :])
            row_patch = jnp.concatenate(pieces, axis=1).astype(jnp.bfloat16)
            a2 = jnp.dot(row_patch, w2_ref[...],
                         preferred_element_type=jnp.float32)
            act2_ref[pl.ds(wo2 * oh, wo2), :] = jnp.maximum(a2 + b2_ref[...], 0.0)

        # ---------- layer 3: k=2, s=1  (ho2,wo2,256) -> (ho3,wo3,512) ----------
        for oh in range(ho3):
            pieces = []
            for i in range(2):
                for j in range(2):
                    start = (oh + i) * wo2 + j
                    pieces.append(act2_ref[pl.ds(start, wo3), :])
            row_patch = jnp.concatenate(pieces, axis=1).astype(jnp.bfloat16)
            a3 = jnp.dot(row_patch, w3_ref[...],
                         preferred_element_type=jnp.float32)
            o_ref[pl.ds(wo3 * oh, wo3), :] = jnp.maximum(
                a3 + b3_ref[...], 0.0).astype(o_ref.dtype)

    return kernel


def pack_params(w1, b1, w2, b2, w3, b3):
    """PyTorch-layout conv params -> kernel-ready matrices (done once).

    weight (C_out, C_in, kh, kw) -> (kh, kw, C_in, C_out) -> (kh*kw*C_in, C_out)
    Weights are stored in bf16 (MXU operands, f32 accumulate); biases stay f32.
    Layer-1 K is zero-padded 75 -> 128 for lane alignment.
    """
    def to_mat(w):
        c_out, c_in, kh, kw = w.shape
        return w.transpose(2, 3, 1, 0).reshape(kh * kw * c_in, c_out)

    w1m = to_mat(w1)                                       # (75, 128)
    w1m = jnp.pad(w1m, ((0, 128 - w1m.shape[0]), (0, 0)))  # (128, 128)
    w2m = to_mat(w2)                                       # (1152, 256)
    w3m = to_mat(w3)                                       # (1024, 512)
    return (w1m.astype(jnp.bfloat16), b1.reshape(1, -1).astype(jnp.float32),
            w2m.astype(jnp.bfloat16), b2.reshape(1, -1).astype(jnp.float32),
            w3m.astype(jnp.bfloat16), b3.reshape(1, -1).astype(jnp.float32))


def init_params(key):
    """Deterministic init matching the module's shapes, then pre-packed."""
    ks = jax.random.split(key, 6)

    def conv_init(kw_, kb_, c_out, c_in, kh, kwid):
        fan_in = c_in * kh * kwid
        bound = 1.0 / jnp.sqrt(fan_in)
        w = jax.random.uniform(kw_, (c_out, c_in, kh, kwid),
                               minval=-bound, maxval=bound, dtype=jnp.float32)
        b = jax.random.uniform(kb_, (c_out,),
                               minval=-bound, maxval=bound, dtype=jnp.float32)
        return w, b

    w1, b1 = conv_init(ks[0], ks[1], 128, 3, 5, 5)
    w2, b2 = conv_init(ks[2], ks[3], 256, 128, 3, 3)
    w3, b3 = conv_init(ks[4], ks[5], 512, 256, 2, 2)
    return pack_params(w1, b1, w2, b2, w3, b3)


def three_layer_cnn_forward(x, params):
    """x: NCHW (N, 3, H, W) -> NCHW (N, 512, Ho3, Wo3)."""
    w1m, b1, w2m, b2, w3m, b3 = params
    n, c, h, w = x.shape
    assert c == 3, "ThreeLayerCNN expects 3 input channels"
    ho1, wo1 = (h - 5) // 2 + 1, (w - 5) // 2 + 1
    ho2, wo2 = (ho1 - 3) // 2 + 1, (wo1 - 3) // 2 + 1
    ho3, wo3 = ho2 - 1, wo2 - 1
    m1, m2, m3 = ho1 * wo1, ho2 * wo2, ho3 * wo3

    # Single NCHW -> NHWC conversion + layer-1 im2col (C_in=3 -> duplication is
    # tiny and the input must come from HBM anyway). Column order (kh, kw, C)
    # matches pack_params; K padded to 128.
    x_nhwc = jnp.transpose(x, (0, 2, 3, 1))
    cols = [x_nhwc[:, i:i + 2 * ho1:2, j:j + 2 * wo1:2, :]
            for i in range(5) for j in range(5)]
    p1 = jnp.stack(cols, axis=3).reshape(n, m1, 25 * c)          # (N, m1, 75)
    p1 = jnp.pad(p1, ((0, 0), (0, 0), (0, w1m.shape[0] - 25 * c)))  # -> 128

    kernel = _make_fused_kernel(ho1, wo1, ho2, wo2, ho3, wo3)

    flops = 2 * n * (m1 * 128 * 128 + m2 * 1152 * 256 + m3 * 1024 * 512)
    bytes_accessed = (p1.size * 4 + n * m3 * 512 * 4
                      + (w1m.size + w2m.size + w3m.size) * 2
                      + (b1.size + b2.size + b3.size) * 4)

    out = pl.pallas_call(
        kernel,
        out_shape=jax.ShapeDtypeStruct((n, m3, 512), jnp.float32),
        grid_spec=pltpu.PrefetchScalarGridSpec(
            num_scalar_prefetch=0,
            grid=(n,),
            in_specs=[
                pl.BlockSpec((None, m1, 128), lambda b: (b, 0, 0)),  # patches
                pl.BlockSpec((128, 128), lambda b: (0, 0)),          # w1
                pl.BlockSpec((1, 128), lambda b: (0, 0)),            # b1
                pl.BlockSpec((1152, 256), lambda b: (0, 0)),         # w2
                pl.BlockSpec((1, 256), lambda b: (0, 0)),            # b2
                pl.BlockSpec((1024, 512), lambda b: (0, 0)),         # w3
                pl.BlockSpec((1, 512), lambda b: (0, 0)),            # b3
            ],
            out_specs=pl.BlockSpec((None, m3, 512), lambda b: (b, 0, 0)),
            scratch_shapes=[
                pltpu.VMEM((m1, 128), jnp.float32),   # layer-1 activation
                pltpu.VMEM((m2, 256), jnp.float32),   # layer-2 activation
            ],
        ),
        compiler_params=pltpu.CompilerParams(
            dimension_semantics=("parallel",)),
        cost_estimate=pl.CostEstimate(flops=flops, transcendentals=0,
                                      bytes_accessed=bytes_accessed),
    )(p1, w1m, b1, w2m, b2, w3m, b3)

    # (N, ho3*wo3, 512) -> NCHW, the only output-side layout conversion.
    return out.reshape(n, ho3, wo3, 512).transpose(0, 3, 1, 2)


if __name__ == "__main__":
    key = jax.random.PRNGKey(0)
    k_x, k_p = jax.random.split(key)
    # N=2, C=3 (module requires 3 input channels), 17x17 spatial.
    # Spatial flow: 17 -> 7 (k5,s2) -> 3 (k3,s2) -> 2 (k2,s1).
    x = jax.random.normal(k_x, (2, 3, 17, 17), dtype=jnp.float32)
    params = init_params(k_p)

    out = jax.jit(three_layer_cnn_forward)(x, params)
    out = jax.block_until_ready(out)
    assert out.shape == (2, 512, 2, 2), out.shape
    assert out.dtype == jnp.float32
    print("KERNEL_OK")
</pallas_src>

<mosaic_0001>
module attributes {stable_mosaic.version = 11 : i64} {
  func.func @kernel(%arg0: i32, %arg1: memref<1x49x128xf32, #tpu.memory_space<vmem>>, %arg2: memref<128x128xbf16, #tpu.memory_space<vmem>>, %arg3: memref<1x128xf32, #tpu.memory_space<vmem>>, %arg4: memref<1152x256xbf16, #tpu.memory_space<vmem>>, %arg5: memref<1x256xf32, #tpu.memory_space<vmem>>, %arg6: memref<1024x512xbf16, #tpu.memory_space<vmem>>, %arg7: memref<1x512xf32, #tpu.memory_space<vmem>>, %arg8: memref<1x4x512xf32, #tpu.memory_space<vmem>>, %arg9: memref<49x128xf32, #tpu.memory_space<vmem>>, %arg10: memref<9x256xf32, #tpu.memory_space<vmem>>) attributes {dimension_semantics = [#tpu.dimension_semantics<parallel>], iteration_bounds = array<i64: 2>, scalar_prefetch = 0 : i64, scratch_operands = 2 : i64, tpu.core_type = #tpu.core_type<tc>, window_params = [{transform_indices = @transform_0, window_bounds = array<i64: 1, 49, 128>}, {pipeline_mode = #tpu.pipeline_mode<synchronous>, transform_indices = @transform_1, window_bounds = array<i64: 128, 128>}, {pipeline_mode = #tpu.pipeline_mode<synchronous>, transform_indices = @transform_2, window_bounds = array<i64: 1, 128>}, {pipeline_mode = #tpu.pipeline_mode<synchronous>, transform_indices = @transform_3, window_bounds = array<i64: 1152, 256>}, {pipeline_mode = #tpu.pipeline_mode<synchronous>, transform_indices = @transform_4, window_bounds = array<i64: 1, 256>}, {pipeline_mode = #tpu.pipeline_mode<synchronous>, transform_indices = @transform_5, window_bounds = array<i64: 1024, 512>}, {pipeline_mode = #tpu.pipeline_mode<synchronous>, transform_indices = @transform_6, window_bounds = array<i64: 1, 512>}, {transform_indices = @transform_7, window_bounds = array<i64: 1, 4, 512>}]} {
    %c0 = arith.constant 0 : index
    %c0_0 = arith.constant 0 : index
    %c0_1 = arith.constant 0 : index
    %0 = vector.load %arg1[%c0, %c0_0, %c0_1] : memref<1x49x128xf32, #tpu.memory_space<vmem>>, vector<1x49x128xf32>
    %1 = vector.shape_cast %0 : vector<1x49x128xf32> to vector<49x128xf32>
    %2 = arith.truncf %1 : vector<49x128xf32> to vector<49x128xbf16>
    %c0_2 = arith.constant 0 : index
    %c0_3 = arith.constant 0 : index
    %3 = vector.load %arg2[%c0_2, %c0_3] : memref<128x128xbf16, #tpu.memory_space<vmem>>, vector<128x128xbf16>
    %cst = arith.constant dense<0.000000e+00> : vector<49x128xf32>
    %4 = tpu.matmul %2, %3, %cst {dimension_numbers = #tpu.dot_dimension_numbers<[1], [0], [0], [1], [0, 0, 1, 1], [], []>} : vector<49x128xbf16>, vector<128x128xbf16>, vector<49x128xf32> -> vector<49x128xf32>
    %c0_4 = arith.constant 0 : index
    %c0_5 = arith.constant 0 : index
    %5 = vector.load %arg3[%c0_4, %c0_5] : memref<1x128xf32, #tpu.memory_space<vmem>>, vector<1x128xf32>
    %6 = vector.broadcast %5 : vector<1x128xf32> to vector<49x128xf32>
    %7 = arith.addf %4, %6 : vector<49x128xf32>
    %cst_6 = arith.constant 0.000000e+00 : f32
    %8 = vector.broadcast %cst_6 : f32 to vector<49x128xf32>
    %9 = arith.maximumf %7, %8 : vector<49x128xf32>
    %c0_7 = arith.constant 0 : index
    %c0_8 = arith.constant 0 : index
    %10 = vector.load %arg9[%c0_7, %c0_8] : memref<49x128xf32, #tpu.memory_space<vmem>>, vector<49x128xf32>
    tpu.vector_store %arg9[%c0_7, %c0_8], %9 {strides = array<i32>} : memref<49x128xf32, #tpu.memory_space<vmem>>, vector<49x128xf32>,
    %c0_9 = arith.constant 0 : index
    %c0_10 = arith.constant 0 : index
    %11 = tpu.strided_load %arg9[%c0_9, %c0_10] {strides = array<i32: 2, 1>} : memref<49x128xf32, #tpu.memory_space<vmem>>, vector<3x128xf32>
    %c1 = arith.constant 1 : index
    %c0_11 = arith.constant 0 : index
    %12 = tpu.strided_load %arg9[%c1, %c0_11] {strides = array<i32: 2, 1>} : memref<49x128xf32, #tpu.memory_space<vmem>>, vector<3x128xf32>
    %c2 = arith.constant 2 : index
    %c0_12 = arith.constant 0 : index
    %13 = tpu.strided_load %arg9[%c2, %c0_12] {strides = array<i32: 2, 1>} : memref<49x128xf32, #tpu.memory_space<vmem>>, vector<3x128xf32>
    %c7 = arith.constant 7 : index
    %c0_13 = arith.constant 0 : index
    %14 = tpu.strided_load %arg9[%c7, %c0_13] {strides = array<i32: 2, 1>} : memref<49x128xf32, #tpu.memory_space<vmem>>, vector<3x128xf32>
    %c8 = arith.constant 8 : index
    %c0_14 = arith.constant 0 : index
    %15 = tpu.strided_load %arg9[%c8, %c0_14] {strides = array<i32: 2, 1>} : memref<49x128xf32, #tpu.memory_space<vmem>>, vector<3x128xf32>
    %c9 = arith.constant 9 : index
    %c0_15 = arith.constant 0 : index
    %16 = tpu.strided_load %arg9[%c9, %c0_15] {strides = array<i32: 2, 1>} : memref<49x128xf32, #tpu.memory_space<vmem>>, vector<3x128xf32>
    %c14 = arith.constant 14 : index
    %c0_16 = arith.constant 0 : index
    %17 = tpu.strided_load %arg9[%c14, %c0_16] {strides = array<i32: 2, 1>} : memref<49x128xf32, #tpu.memory_space<vmem>>, vector<3x128xf32>
    %c15 = arith.constant 15 : index
    %c0_17 = arith.constant 0 : index
    %18 = tpu.strided_load %arg9[%c15, %c0_17] {strides = array<i32: 2, 1>} : memref<49x128xf32, #tpu.memory_space<vmem>>, vector<3x128xf32>
    %c16 = arith.constant 16 : index
    %c0_18 = arith.constant 0 : index
    %19 = tpu.strided_load %arg9[%c16, %c0_18] {strides = array<i32: 2, 1>} : memref<49x128xf32, #tpu.memory_space<vmem>>, vector<3x128xf32>
    %20 = tpu.concatenate %11, %12, %13, %14, %15, %16, %17, %18, %19 in 1 : vector<3x128xf32>, vector<3x128xf32>, vector<3x128xf32>, vector<3x128xf32>, vector<3x128xf32>, vector<3x128xf32>, vector<3x128xf32>, vector<3x128xf32>, vector<3x128xf32> -> vector<3x1152xf32>
    %21 = arith.truncf %20 : vector<3x1152xf32> to vector<3x1152xbf16>
    %c0_19 = arith.constant 0 : index
    %c0_20 = arith.constant 0 : index
    %22 = vector.load %arg4[%c0_19, %c0_20] : memref<1152x256xbf16, #tpu.memory_space<vmem>>, vector<1152x256xbf16>
    %cst_21 = arith.constant dense<0.000000e+00> : vector<3x256xf32>
    %23 = tpu.matmul %21, %22, %cst_21 {dimension_numbers = #tpu.dot_dimension_numbers<[1], [0], [0], [1], [0, 0, 1, 1], [], []>} : vector<3x1152xbf16>, vector<1152x256xbf16>, vector<3x256xf32> -> vector<3x256xf32>
    %c0_22 = arith.constant 0 : index
    %c0_23 = arith.constant 0 : index
    %24 = vector.load %arg5[%c0_22, %c0_23] : memref<1x256xf32, #tpu.memory_space<vmem>>, vector<1x256xf32>
    %25 = vector.broadcast %24 : vector<1x256xf32> to vector<3x256xf32>
    %26 = arith.addf %23, %25 : vector<3x256xf32>
    %cst_24 = arith.constant 0.000000e+00 : f32
    %27 = vector.broadcast %cst_24 : f32 to vector<3x256xf32>
    %28 = arith.maximumf %26, %27 : vector<3x256xf32>
    %c0_25 = arith.constant 0 : index
    %c0_26 = arith.constant 0 : index
    %29 = vector.load %arg10[%c0_25, %c0_26] : memref<9x256xf32, #tpu.memory_space<vmem>>, vector<3x256xf32>
    tpu.vector_store %arg10[%c0_25, %c0_26], %28 {strides = array<i32>} : memref<9x256xf32, #tpu.memory_space<vmem>>, vector<3x256xf32>,
    %c14_27 = arith.constant 14 : index
    %c0_28 = arith.constant 0 : index
    %30 = tpu.strided_load %arg9[%c14_27, %c0_28] {strides = array<i32: 2, 1>} : memref<49x128xf32, #tpu.memory_space<vmem>>, vector<3x128xf32>
    %c15_29 = arith.constant 15 : index
    %c0_30 = arith.constant 0 : index
    %31 = tpu.strided_load %arg9[%c15_29, %c0_30] {strides = array<i32: 2, 1>} : memref<49x128xf32, #tpu.memory_space<vmem>>, vector<3x128xf32>
    %c16_31 = arith.constant 16 : index
    %c0_32 = arith.constant 0 : index
    %32 = tpu.strided_load %arg9[%c16_31, %c0_32] {strides = array<i32: 2, 1>} : memref<49x128xf32, #tpu.memory_space<vmem>>, vector<3x128xf32>
    %c21 = arith.constant 21 : index
    %c0_33 = arith.constant 0 : index
    %33 = tpu.strided_load %arg9[%c21, %c0_33] {strides = array<i32: 2, 1>} : memref<49x128xf32, #tpu.memory_space<vmem>>, vector<3x128xf32>
    %c22 = arith.constant 22 : index
    %c0_34 = arith.constant 0 : index
    %34 = tpu.strided_load %arg9[%c22, %c0_34] {strides = array<i32: 2, 1>} : memref<49x128xf32, #tpu.memory_space<vmem>>, vector<3x128xf32>
    %c23 = arith.constant 23 : index
    %c0_35 = arith.constant 0 : index
    %35 = tpu.strided_load %arg9[%c23, %c0_35] {strides = array<i32: 2, 1>} : memref<49x128xf32, #tpu.memory_space<vmem>>, vector<3x128xf32>
    %c28 = arith.constant 28 : index
    %c0_36 = arith.constant 0 : index
    %36 = tpu.strided_load %arg9[%c28, %c0_36] {strides = array<i32: 2, 1>} : memref<49x128xf32, #tpu.memory_space<vmem>>, vector<3x128xf32>
    %c29 = arith.constant 29 : index
    %c0_37 = arith.constant 0 : index
    %37 = tpu.strided_load %arg9[%c29, %c0_37] {strides = array<i32: 2, 1>} : memref<49x128xf32, #tpu.memory_space<vmem>>, vector<3x128xf32>
    %c30 = arith.constant 30 : index
    %c0_38 = arith.constant 0 : index
    %38 = tpu.strided_load %arg9[%c30, %c0_38] {strides = array<i32: 2, 1>} : memref<49x128xf32, #tpu.memory_space<vmem>>, vector<3x128xf32>
    %39 = tpu.concatenate %30, %31, %32, %33, %34, %35, %36, %37, %38 in 1 : vector<3x128xf32>, vector<3x128xf32>, vector<3x128xf32>, vector<3x128xf32>, vector<3x128xf32>, vector<3x128xf32>, vector<3x128xf32>, vector<3x128xf32>, vector<3x128xf32> -> vector<3x1152xf32>
    %40 = arith.truncf %39 : vector<3x1152xf32> to vector<3x1152xbf16>
    %c0_39 = arith.constant 0 : index
    %c0_40 = arith.constant 0 : index
    %41 = vector.load %arg4[%c0_39, %c0_40] : memref<1152x256xbf16, #tpu.memory_space<vmem>>, vector<1152x256xbf16>
    %cst_41 = arith.constant dense<0.000000e+00> : vector<3x256xf32>
    %42 = tpu.matmul %40, %41, %cst_41 {dimension_numbers = #tpu.dot_dimension_numbers<[1], [0], [0], [1], [0, 0, 1, 1], [], []>} : vector<3x1152xbf16>, vector<1152x256xbf16>, vector<3x256xf32> -> vector<3x256xf32>
    %c0_42 = arith.constant 0 : index
    %c0_43 = arith.constant 0 : index
    %43 = vector.load %arg5[%c0_42, %c0_43] : memref<1x256xf32, #tpu.memory_space<vmem>>, vector<1x256xf32>
    %44 = vector.broadcast %43 : vector<1x256xf32> to vector<3x256xf32>
    %45 = arith.addf %42, %44 : vector<3x256xf32>
    %cst_44 = arith.constant 0.000000e+00 : f32
    %46 = vector.broadcast %cst_44 : f32 to vector<3x256xf32>
    %47 = arith.maximumf %45, %46 : vector<3x256xf32>
    %c3 = arith.constant 3 : index
    %c0_45 = arith.constant 0 : index
    %48 = vector.load %arg10[%c3, %c0_45] : memref<9x256xf32, #tpu.memory_space<vmem>>, vector<3x256xf32>
    tpu.vector_store %arg10[%c3, %c0_45], %47 {strides = array<i32>} : memref<9x256xf32, #tpu.memory_space<vmem>>, vector<3x256xf32>,
    %c28_46 = arith.constant 28 : index
    %c0_47 = arith.constant 0 : index
    %49 = tpu.strided_load %arg9[%c28_46, %c0_47] {strides = array<i32: 2, 1>} : memref<49x128xf32, #tpu.memory_space<vmem>>, vector<3x128xf32>
    %c29_48 = arith.constant 29 : index
    %c0_49 = arith.constant 0 : index
    %50 = tpu.strided_load %arg9[%c29_48, %c0_49] {strides = array<i32: 2, 1>} : memref<49x128xf32, #tpu.memory_space<vmem>>, vector<3x128xf32>
    %c30_50 = arith.constant 30 : index
    %c0_51 = arith.constant 0 : index
    %51 = tpu.strided_load %arg9[%c30_50, %c0_51] {strides = array<i32: 2, 1>} : memref<49x128xf32, #tpu.memory_space<vmem>>, vector<3x128xf32>
    %c35 = arith.constant 35 : index
    %c0_52 = arith.constant 0 : index
    %52 = tpu.strided_load %arg9[%c35, %c0_52] {strides = array<i32: 2, 1>} : memref<49x128xf32, #tpu.memory_space<vmem>>, vector<3x128xf32>
    %c36 = arith.constant 36 : index
    %c0_53 = arith.constant 0 : index
    %53 = tpu.strided_load %arg9[%c36, %c0_53] {strides = array<i32: 2, 1>} : memref<49x128xf32, #tpu.memory_space<vmem>>, vector<3x128xf32>
    %c37 = arith.constant 37 : index
    %c0_54 = arith.constant 0 : index
    %54 = tpu.strided_load %arg9[%c37, %c0_54] {strides = array<i32: 2, 1>} : memref<49x128xf32, #tpu.memory_space<vmem>>, vector<3x128xf32>
    %c42 = arith.constant 42 : index
    %c0_55 = arith.constant 0 : index
    %55 = tpu.strided_load %arg9[%c42, %c0_55] {strides = array<i32: 2, 1>} : memref<49x128xf32, #tpu.memory_space<vmem>>, vector<3x128xf32>
    %c43 = arith.constant 43 : index
    %c0_56 = arith.constant 0 : index
    %56 = tpu.strided_load %arg9[%c43, %c0_56] {strides = array<i32: 2, 1>} : memref<49x128xf32, #tpu.memory_space<vmem>>, vector<3x128xf32>
    %c44 = arith.constant 44 : index
    %c0_57 = arith.constant 0 : index
    %57 = tpu.strided_load %arg9[%c44, %c0_57] {strides = array<i32: 2, 1>} : memref<49x128xf32, #tpu.memory_space<vmem>>, vector<3x128xf32>
    %58 = tpu.concatenate %49, %50, %51, %52, %53, %54, %55, %56, %57 in 1 : vector<3x128xf32>, vector<3x128xf32>, vector<3x128xf32>, vector<3x128xf32>, vector<3x128xf32>, vector<3x128xf32>, vector<3x128xf32>, vector<3x128xf32>, vector<3x128xf32> -> vector<3x1152xf32>
    %59 = arith.truncf %58 : vector<3x1152xf32> to vector<3x1152xbf16>
    %c0_58 = arith.constant 0 : index
    %c0_59 = arith.constant 0 : index
    %60 = vector.load %arg4[%c0_58, %c0_59] : memref<1152x256xbf16, #tpu.memory_space<vmem>>, vector<1152x256xbf16>
    %cst_60 = arith.constant dense<0.000000e+00> : vector<3x256xf32>
    %61 = tpu.matmul %59, %60, %cst_60 {dimension_numbers = #tpu.dot_dimension_numbers<[1], [0], [0], [1], [0, 0, 1, 1], [], []>} : vector<3x1152xbf16>, vector<1152x256xbf16>, vector<3x256xf32> -> vector<3x256xf32>
    %c0_61 = arith.constant 0 : index
    %c0_62 = arith.constant 0 : index
    %62 = vector.load %arg5[%c0_61, %c0_62] : memref<1x256xf32, #tpu.memory_space<vmem>>, vector<1x256xf32>
    %63 = vector.broadcast %62 : vector<1x256xf32> to vector<3x256xf32>
    %64 = arith.addf %61, %63 : vector<3x256xf32>
    %cst_63 = arith.constant 0.000000e+00 : f32
    %65 = vector.broadcast %cst_63 : f32 to vector<3x256xf32>
    %66 = arith.maximumf %64, %65 : vector<3x256xf32>
    %c6 = arith.constant 6 : index
    %c0_64 = arith.constant 0 : index
    %67 = vector.load %arg10[%c6, %c0_64] : memref<9x256xf32, #tpu.memory_space<vmem>>, vector<3x256xf32>
    tpu.vector_store %arg10[%c6, %c0_64], %66 {strides = array<i32>} : memref<9x256xf32, #tpu.memory_space<vmem>>, vector<3x256xf32>,
    %c0_65 = arith.constant 0 : index
    %c0_66 = arith.constant 0 : index
    %68 = vector.load %arg10[%c0_65, %c0_66] : memref<9x256xf32, #tpu.memory_space<vmem>>, vector<2x256xf32>
    %c1_67 = arith.constant 1 : index
    %c0_68 = arith.constant 0 : index
    %69 = vector.load %arg10[%c1_67, %c0_68] : memref<9x256xf32, #tpu.memory_space<vmem>>, vector<2x256xf32>
    %c3_69 = arith.constant 3 : index
    %c0_70 = arith.constant 0 : index
    %70 = vector.load %arg10[%c3_69, %c0_70] : memref<9x256xf32, #tpu.memory_space<vmem>>, vector<2x256xf32>
    %c4 = arith.constant 4 : index
    %c0_71 = arith.constant 0 : index
    %71 = vector.load %arg10[%c4, %c0_71] : memref<9x256xf32, #tpu.memory_space<vmem>>, vector<2x256xf32>
    %72 = tpu.concatenate %68, %69, %70, %71 in 1 : vector<2x256xf32>, vector<2x256xf32>, vector<2x256xf32>, vector<2x256xf32> -> vector<2x1024xf32>
    %73 = arith.truncf %72 : vector<2x1024xf32> to vector<2x1024xbf16>
    %c0_72 = arith.constant 0 : index
    %c0_73 = arith.constant 0 : index
    %74 = vector.load %arg6[%c0_72, %c0_73] : memref<1024x512xbf16, #tpu.memory_space<vmem>>, vector<1024x512xbf16>
    %cst_74 = arith.constant dense<0.000000e+00> : vector<2x512xf32>
    %75 = tpu.matmul %73, %74, %cst_74 {dimension_numbers = #tpu.dot_dimension_numbers<[1], [0], [0], [1], [0, 0, 1, 1], [], []>} : vector<2x1024xbf16>, vector<1024x512xbf16>, vector<2x512xf32> -> vector<2x512xf32>
    %c0_75 = arith.constant 0 : index
    %c0_76 = arith.constant 0 : index
    %76 = vector.load %arg7[%c0_75, %c0_76] : memref<1x512xf32, #tpu.memory_space<vmem>>, vector<1x512xf32>
    %77 = vector.broadcast %76 : vector<1x512xf32> to vector<2x512xf32>
    %78 = arith.addf %75, %77 : vector<2x512xf32>
    %cst_77 = arith.constant 0.000000e+00 : f32
    %79 = vector.broadcast %cst_77 : f32 to vector<2x512xf32>
    %80 = arith.maximumf %78, %79 : vector<2x512xf32>
    %c0_78 = arith.constant 0 : index
    %c0_79 = arith.constant 0 : index
    %c0_80 = arith.constant 0 : index
    %81 = vector.load %arg8[%c0_78, %c0_79, %c0_80] : memref<1x4x512xf32, #tpu.memory_space<vmem>>, vector<1x2x512xf32>
    %82 = vector.shape_cast %81 : vector<1x2x512xf32> to vector<2x512xf32>
    %83 = vector.shape_cast %80 : vector<2x512xf32> to vector<1x2x512xf32>
    tpu.vector_store %arg8[%c0_78, %c0_79, %c0_80], %83 {strides = array<i32>} : memref<1x4x512xf32, #tpu.memory_space<vmem>>, vector<1x2x512xf32>,
    %c3_81 = arith.constant 3 : index
    %c0_82 = arith.constant 0 : index
    %84 = vector.load %arg10[%c3_81, %c0_82] : memref<9x256xf32, #tpu.memory_space<vmem>>, vector<2x256xf32>
    %c4_83 = arith.constant 4 : index
    %c0_84 = arith.constant 0 : index
    %85 = vector.load %arg10[%c4_83, %c0_84] : memref<9x256xf32, #tpu.memory_space<vmem>>, vector<2x256xf32>
    %c6_85 = arith.constant 6 : index
    %c0_86 = arith.constant 0 : index
    %86 = vector.load %arg10[%c6_85, %c0_86] : memref<9x256xf32, #tpu.memory_space<vmem>>, vector<2x256xf32>
    %c7_87 = arith.constant 7 : index
    %c0_88 = arith.constant 0 : index
    %87 = vector.load %arg10[%c7_87, %c0_88] : memref<9x256xf32, #tpu.memory_space<vmem>>, vector<2x256xf32>
    %88 = tpu.concatenate %84, %85, %86, %87 in 1 : vector<2x256xf32>, vector<2x256xf32>, vector<2x256xf32>, vector<2x256xf32> -> vector<2x1024xf32>
    %89 = arith.truncf %88 : vector<2x1024xf32> to vector<2x1024xbf16>
    %c0_89 = arith.constant 0 : index
    %c0_90 = arith.constant 0 : index
    %90 = vector.load %arg6[%c0_89, %c0_90] : memref<1024x512xbf16, #tpu.memory_space<vmem>>, vector<1024x512xbf16>
    %cst_91 = arith.constant dense<0.000000e+00> : vector<2x512xf32>
    %91 = tpu.matmul %89, %90, %cst_91 {dimension_numbers = #tpu.dot_dimension_numbers<[1], [0], [0], [1], [0, 0, 1, 1], [], []>} : vector<2x1024xbf16>, vector<1024x512xbf16>, vector<2x512xf32> -> vector<2x512xf32>
    %c0_92 = arith.constant 0 : index
    %c0_93 = arith.constant 0 : index
    %92 = vector.load %arg7[%c0_92, %c0_93] : memref<1x512xf32, #tpu.memory_space<vmem>>, vector<1x512xf32>
    %93 = vector.broadcast %92 : vector<1x512xf32> to vector<2x512xf32>
    %94 = arith.addf %91, %93 : vector<2x512xf32>
    %cst_94 = arith.constant 0.000000e+00 : f32
    %95 = vector.broadcast %cst_94 : f32 to vector<2x512xf32>
    %96 = arith.maximumf %94, %95 : vector<2x512xf32>
    %c0_95 = arith.constant 0 : index
    %c2_96 = arith.constant 2 : index
    %c0_97 = arith.constant 0 : index
    %97 = vector.load %arg8[%c0_95, %c2_96, %c0_97] : memref<1x4x512xf32, #tpu.memory_space<vmem>>, vector<1x2x512xf32>
    %98 = vector.shape_cast %97 : vector<1x2x512xf32> to vector<2x512xf32>
    %99 = vector.shape_cast %96 : vector<2x512xf32> to vector<1x2x512xf32>
    tpu.vector_store %arg8[%c0_95, %c2_96, %c0_97], %99 {strides = array<i32>} : memref<1x4x512xf32, #tpu.memory_space<vmem>>, vector<1x2x512xf32>,
    return
  }
  func.func @transform_0(%arg0: i32) -> (i32, i32, i32) {
    %c0_i32 = arith.constant 0 : i32
    %c0_i32_0 = arith.constant 0 : i32
    %c0_i32_1 = arith.constant 0 : i32
    return %arg0, %c0_i32, %c0_i32_0 : i32, i32, i32
  }
  func.func @transform_1(%arg0: i32) -> (i32, i32) {
    %c0_i32 = arith.constant 0 : i32
    %c0_i32_0 = arith.constant 0 : i32
    %c0_i32_1 = arith.constant 0 : i32
    return %c0_i32, %c0_i32_0 : i32, i32
  }
  func.func @transform_2(%arg0: i32) -> (i32, i32) {
    %c0_i32 = arith.constant 0 : i32
    %c0_i32_0 = arith.constant 0 : i32
    %c0_i32_1 = arith.constant 0 : i32
    return %c0_i32, %c0_i32_0 : i32, i32
  }
  func.func @transform_3(%arg0: i32) -> (i32, i32) {
    %c0_i32 = arith.constant 0 : i32
    %c0_i32_0 = arith.constant 0 : i32
    %c0_i32_1 = arith.constant 0 : i32
    return %c0_i32, %c0_i32_0 : i32, i32
  }
  func.func @transform_4(%arg0: i32) -> (i32, i32) {
    %c0_i32 = arith.constant 0 : i32
    %c0_i32_0 = arith.constant 0 : i32
    %c0_i32_1 = arith.constant 0 : i32
    return %c0_i32, %c0_i32_0 : i32, i32
  }
  func.func @transform_5(%arg0: i32) -> (i32, i32) {
    %c0_i32 = arith.constant 0 : i32
    %c0_i32_0 = arith.constant 0 : i32
    %c0_i32_1 = arith.constant 0 : i32
    return %c0_i32, %c0_i32_0 : i32, i32
  }
  func.func @transform_6(%arg0: i32) -> (i32, i32) {
    %c0_i32 = arith.constant 0 : i32
    %c0_i32_0 = arith.constant 0 : i32
    %c0_i32_1 = arith.constant 0 : i32
    return %c0_i32, %c0_i32_0 : i32, i32
  }
  func.func @transform_7(%arg0: i32) -> (i32, i32, i32) {
    %c0_i32 = arith.constant 0 : i32
    %c0_i32_0 = arith.constant 0 : i32
    %c0_i32_1 = arith.constant 0 : i32
    return %arg0, %c0_i32, %c0_i32_0 : i32, i32, i32
  }
}

</mosaic_0001>

<llo_original>
// kernel: three_layer_cnn_forward.1
$region0: #{three_layer_cnn_forward.1}
  #allocation0 [shape = 'u32[]', space=smem, size = 0x4, offset = 0x4, fixed_abs, tag = 'smem constant byte address 0x4 - core index']
  #allocation1 [shape = 'u32[72,128]{1,0:T(1,128)}', space=vmem, size = 0x9000, scoped, tag = 'internal scratch']
  #allocation2 [shape = 'f32[49,128]{1,0:T(8,128)}', space=vmem, size = 0x7000, scoped, tag = 'scratch operand']
  #allocation3 [shape = 'f32[9,256]{1,0:T(8,128)}', space=vmem, size = 0x4000, scoped, tag = 'scratch operand']
  %s0 = inlined_call_operand.vmem [shape: f32[2,49,128], index: 0, kind: input, shape index: {}]
  %s1 = inlined_call_operand.vmem [shape: bf16[128,128], index: 1, kind: input, shape index: {}]
  %s2 = inlined_call_operand.vmem [shape: f32[1,128], index: 2, kind: input, shape index: {}]
  %s3 = inlined_call_operand.vmem [shape: bf16[1152,256], index: 3, kind: input, shape index: {}]
  %s4 = inlined_call_operand.vmem [shape: f32[1,256], index: 4, kind: input, shape index: {}]
  %s5 = inlined_call_operand.vmem [shape: bf16[1024,512], index: 5, kind: input, shape index: {}]
  %s6 = inlined_call_operand.vmem [shape: f32[1,512], index: 6, kind: input, shape index: {}]
  %s7 = inlined_call_operand.vmem [shape: f32[2,4,512], index: 7, kind: output, shape index: {}]
  %s8 = sld [smem:[#allocation0]]
  $region61: #{three_layer_cnn_forward.1} parent=0
    _
  %s10 = ssub.s32 1, %s8
  %s11 = scalar_select 0, %s10, %s8
  loop: start=0, step=1, limit=4
  $region2: #{three_layer_cnn_forward.1} parent=0 // loop_pre_header
    _
  $region3: #{three_layer_cnn_forward.1} parent=0 // loop_header
    %s13 = sphi 0, %s17
    %p14 = scmp.ge.s32.totalorder %s13, 4
    %s23 = sphi 0, %s25
    %s26 = sphi 0, %s23
    %s27 = sphi 0, %s26
    %s43 = sphi 0, %s27
    %s47 = sphi 0, %s47
    %s49 = sphi 0, %s47
    %s50 = sphi 0, %s49
    %s64 = sphi 0, %s50
    %s68 = sphi 0, %s68
    %s70 = sphi 0, %s68
    %s71 = sphi 0, %s70
    %s85 = sphi 0, %s71
    %s89 = sphi 0, %s89
    %s91 = sphi 0, %s89
    %s92 = sphi 0, %s91
    %s106 = sphi 0, %s92
    %s110 = sphi 0, %s110
    %s112 = sphi 0, %s110
    %s113 = sphi 0, %s112
    %s127 = sphi 0, %s113
    %s131 = sphi 0, %s131
    %s133 = sphi 0, %s131
    %s134 = sphi 0, %s133
    %s148 = sphi 0, %s134
    %s152 = sphi 0, %s152
    %s154 = sphi 0, %s152
    %s155 = sphi 0, %s154
    %s169 = sphi 0, %s155
    %s175 = sphi 0, %s177
    %s178 = sphi 0, %s175
    %s179 = sphi 0, %s178
    %s195 = sphi 0, %s179
  $region4: #{three_layer_cnn_forward.1} parent=0 // loop_header_branch
    %16 = sbr.rel (%p14) target = $region8
  $region5: #{three_layer_cnn_forward.1} parent=0 // loop_body
    %s18 = ssub.s32 %s13, 1
    %s19 = ssub.s32 %s13, 2
    %s20 = sadd.s32 %s13, 1
    %s21 = ssub.s32 %s13, %s20
    %p22 = scmp.eq.s32.totalorder %s21, 0
    %s24 = sadd.s32 %s23, 1
    %s25 = scalar_select %p22, %s23, %s24
    %p28 = pneg %p22
    %p29 = scmp.eq.s32.totalorder %s13, 1
    %p30 = por %p28, %p29
    %p31 = scmp.ne.s32.totalorder %s23, %s26
    %p32 = scmp.eq.s32.totalorder %s13, 0
    %p33 = por %p31, %p32
    %p34 = scmp.ne.s32.totalorder %s23, %s26
    %p35 = scmp.eq.s32.totalorder %s18, 1
    %p36 = por %p34, %p35
    %p37 = scmp.ne.s32.totalorder %s26, %s27
    %p38 = scmp.eq.s32.totalorder %s18, 0
    %p39 = por %p37, %p38
    %p40 = scmp.ne.s32.totalorder %s26, %s27
    %p41 = scmp.eq.s32.totalorder %s19, 1
    %p42 = por %p40, %p41
    %p44 = scmp.ne.s32.totalorder %s27, %s43
    %p45 = scmp.eq.s32.totalorder %s19, 0
    %p46 = por %p44, %p45
    %s48 = sadd.s32 %s47, 1
    %p51 = scmp.eq.s32.totalorder %s13, 1
    %p52 = scmp.ne.s32.totalorder %s47, %s49
    %p53 = scmp.eq.s32.totalorder %s13, 0
    %p54 = por %p52, %p53
    %p55 = scmp.ne.s32.totalorder %s47, %s49
    %p56 = scmp.eq.s32.totalorder %s18, 1
    %p57 = por %p55, %p56
    %p58 = scmp.ne.s32.totalorder %s49, %s50
    %p59 = scmp.eq.s32.totalorder %s18, 0
    %p60 = por %p58, %p59
    %p61 = scmp.ne.s32.totalorder %s49, %s50
    %p62 = scmp.eq.s32.totalorder %s19, 1
    %p63 = por %p61, %p62
    %p65 = scmp.ne.s32.totalorder %s50, %s64
    %p66 = scmp.eq.s32.totalorder %s19, 0
    %p67 = por %p65, %p66
    %s69 = sadd.s32 %s68, 1
    %p72 = scmp.eq.s32.totalorder %s13, 1
    %p73 = scmp.ne.s32.totalorder %s68, %s70
    %p74 = scmp.eq.s32.totalorder %s13, 0
    %p75 = por %p73, %p74
    %p76 = scmp.ne.s32.totalorder %s68, %s70
    %p77 = scmp.eq.s32.totalorder %s18, 1
    %p78 = por %p76, %p77
    %p79 = scmp.ne.s32.totalorder %s70, %s71
    %p80 = scmp.eq.s32.totalorder %s18, 0
    %p81 = por %p79, %p80
    %p82 = scmp.ne.s32.totalorder %s70, %s71
    %p83 = scmp.eq.s32.totalorder %s19, 1
    %p84 = por %p82, %p83
    %p86 = scmp.ne.s32.totalorder %s71, %s85
    %p87 = scmp.eq.s32.totalorder %s19, 0
    %p88 = por %p86, %p87
    %s90 = sadd.s32 %s89, 1
    %p93 = scmp.eq.s32.totalorder %s13, 1
    %p94 = scmp.ne.s32.totalorder %s89, %s91
    %p95 = scmp.eq.s32.totalorder %s13, 0
    %p96 = por %p94, %p95
    %p97 = scmp.ne.s32.totalorder %s89, %s91
    %p98 = scmp.eq.s32.totalorder %s18, 1
    %p99 = por %p97, %p98
    %p100 = scmp.ne.s32.totalorder %s91, %s92
    %p101 = scmp.eq.s32.totalorder %s18, 0
    %p102 = por %p100, %p101
    %p103 = scmp.ne.s32.totalorder %s91, %s92
    %p104 = scmp.eq.s32.totalorder %s19, 1
    %p105 = por %p103, %p104
    %p107 = scmp.ne.s32.totalorder %s92, %s106
    %p108 = scmp.eq.s32.totalorder %s19, 0
    %p109 = por %p107, %p108
    %s111 = sadd.s32 %s110, 1
    %p114 = scmp.eq.s32.totalorder %s13, 1
    %p115 = scmp.ne.s32.totalorder %s110, %s112
    %p116 = scmp.eq.s32.totalorder %s13, 0
    %p117 = por %p115, %p116
    %p118 = scmp.ne.s32.totalorder %s110, %s112
    %p119 = scmp.eq.s32.totalorder %s18, 1
    %p120 = por %p118, %p119
    %p121 = scmp.ne.s32.totalorder %s112, %s113
    %p122 = scmp.eq.s32.totalorder %s18, 0
    %p123 = por %p121, %p122
    %p124 = scmp.ne.s32.totalorder %s112, %s113
    %p125 = scmp.eq.s32.totalorder %s19, 1
    %p126 = por %p124, %p125
    %p128 = scmp.ne.s32.totalorder %s113, %s127
    %p129 = scmp.eq.s32.totalorder %s19, 0
    %p130 = por %p128, %p129
    %s132 = sadd.s32 %s131, 1
    %p135 = scmp.eq.s32.totalorder %s13, 1
    %p136 = scmp.ne.s32.totalorder %s131, %s133
    %p137 = scmp.eq.s32.totalorder %s13, 0
    %p138 = por %p136, %p137
    %p139 = scmp.ne.s32.totalorder %s131, %s133
    %p140 = scmp.eq.s32.totalorder %s18, 1
    %p141 = por %p139, %p140
    %p142 = scmp.ne.s32.totalorder %s133, %s134
    %p143 = scmp.eq.s32.totalorder %s18, 0
    %p144 = por %p142, %p143
    %p145 = scmp.ne.s32.totalorder %s133, %s134
    %p146 = scmp.eq.s32.totalorder %s19, 1
    %p147 = por %p145, %p146
    %p149 = scmp.ne.s32.totalorder %s134, %s148
    %p150 = scmp.eq.s32.totalorder %s19, 0
    %p151 = por %p149, %p150
    %s153 = sadd.s32 %s152, 1
    %p156 = scmp.eq.s32.totalorder %s13, 1
    %p157 = scmp.ne.s32.totalorder %s152, %s154
    %p158 = scmp.eq.s32.totalorder %s13, 0
    %p159 = por %p157, %p158
    %p160 = scmp.ne.s32.totalorder %s152, %s154
    %p161 = scmp.eq.s32.totalorder %s18, 1
    %p162 = por %p160, %p161
    %p163 = scmp.ne.s32.totalorder %s154, %s155
    %p164 = scmp.eq.s32.totalorder %s18, 0
    %p165 = por %p163, %p164
    %p166 = scmp.ne.s32.totalorder %s154, %s155
    %p167 = scmp.eq.s32.totalorder %s19, 1
    %p168 = por %p166, %p167
    %p170 = scmp.ne.s32.totalorder %s155, %s169
    %p171 = scmp.eq.s32.totalorder %s19, 0
    %p172 = por %p170, %p171
    %s173 = ssub.s32 %s13, %s20
    %p174 = scmp.eq.s32.totalorder %s173, 0
    %s176 = sadd.s32 %s175, 1
    %s177 = scalar_select %p174, %s175, %s176
    %p180 = pneg %p174
    %p181 = scmp.eq.s32.totalorder %s13, 1
    %p182 = por %p180, %p181
    %p183 = scmp.ne.s32.totalorder %s175, %s178
    %p184 = scmp.eq.s32.totalorder %s13, 0
    %p185 = por %p183, %p184
    %p186 = scmp.ne.s32.totalorder %s175, %s178
    %p187 = scmp.eq.s32.totalorder %s18, 1
    %p188 = por %p186, %p187
    %p189 = scmp.ne.s32.totalorder %s178, %s179
    %p190 = scmp.eq.s32.totalorder %s18, 0
    %p191 = por %p189, %p190
    %p192 = scmp.ne.s32.totalorder %s178, %s179
    %p193 = scmp.eq.s32.totalorder %s19, 1
    %p194 = por %p192, %p193
    %p196 = scmp.ne.s32.totalorder %s179, %s195
    %p197 = scmp.eq.s32.totalorder %s19, 0
    %p198 = por %p196, %p197
    %p199 = scmp.le.s32.totalorder 1, %s13
    %p200 = scmp.lt.s32.totalorder %s13, 3
    %p201 = pnand %p199, %p200
    %p202 = pneg %p201
    // Predicated region
    $region9: #{three_layer_cnn_forward.1} parent=5 // pred_check
      _
    $region10: #{three_layer_cnn_forward.1} parent=5 // pred_check_branch
      %204 = sbr.rel (%p201) target = $region12
    $region11: #{three_layer_cnn_forward.1} parent=5 // pred_region
      %s205 = ssub.s32 %s13, 1
      // Predicated region
      $region13: #{three_layer_cnn_forward.1} parent=11 // pred_check
        %p206 = pneg %p60
      $region14: #{three_layer_cnn_forward.1} parent=11 // pred_check_branch
        %208 = sbr.rel (%p206) target = $region16
      $region15: #{three_layer_cnn_forward.1} parent=11 // pred_region
        _
      $region16: #{three_layer_cnn_forward.1} parent=11 // pred_fallthru
        _
      // Predicated region
      $region17: #{three_layer_cnn_forward.1} parent=11 // pred_check
        %p209 = pneg %p81
      $region18: #{three_layer_cnn_forward.1} parent=11 // pred_check_branch
        %211 = sbr.rel (%p209) target = $region20
      $region19: #{three_layer_cnn_forward.1} parent=11 // pred_region
        _
      $region20: #{three_layer_cnn_forward.1} parent=11 // pred_fallthru
        _
      // Predicated region
      $region21: #{three_layer_cnn_forward.1} parent=11 // pred_check
        %p212 = pneg %p102
      $region22: #{three_layer_cnn_forward.1} parent=11 // pred_check_branch
        %214 = sbr.rel (%p212) target = $region24
      $region23: #{three_layer_cnn_forward.1} parent=11 // pred_region
        _
      $region24: #{three_layer_cnn_forward.1} parent=11 // pred_fallthru
        _
      // Predicated region
      $region25: #{three_layer_cnn_forward.1} parent=11 // pred_check
        %p215 = pneg %p123
      $region26: #{three_layer_cnn_forward.1} parent=11 // pred_check_branch
        %217 = sbr.rel (%p215) target = $region28
      $region27: #{three_layer_cnn_forward.1} parent=11 // pred_region
        _
      $region28: #{three_layer_cnn_forward.1} parent=11 // pred_fallthru
        _
      // Predicated region
      $region29: #{three_layer_cnn_forward.1} parent=11 // pred_check
        %p218 = pneg %p144
      $region30: #{three_layer_cnn_forward.1} parent=11 // pred_check_branch
        %220 = sbr.rel (%p218) target = $region32
      $region31: #{three_layer_cnn_forward.1} parent=11 // pred_region
        _
      $region32: #{three_layer_cnn_forward.1} parent=11 // pred_fallthru
        _
      // Predicated region
      $region33: #{three_layer_cnn_forward.1} parent=11 // pred_check
        %p221 = pneg %p165
      $region34: #{three_layer_cnn_forward.1} parent=11 // pred_check_branch
        %223 = sbr.rel (%p221) target = $region36
      $region35: #{three_layer_cnn_forward.1} parent=11 // pred_region
        _
      $region36: #{three_layer_cnn_forward.1} parent=11 // pred_fallthru
        _
    $region12: #{three_layer_cnn_forward.1} parent=5 // pred_fallthru
      _
    %p224 = scmp.lt.s32.totalorder %s13, 2
    // Predicated region
    $region37: #{three_layer_cnn_forward.1} parent=5 // pred_check
      %p225 = pneg %p224
    $region38: #{three_layer_cnn_forward.1} parent=5 // pred_check_branch
      %227 = sbr.rel (%p225) target = $region40
    $region39: #{three_layer_cnn_forward.1} parent=5 // pred_region
      // Predicated region
      $region41: #{three_layer_cnn_forward.1} parent=39 // pred_check
        %p228 = pneg %p33
      $region42: #{three_layer_cnn_forward.1} parent=39 // pred_check_branch
        %230 = sbr.rel (%p228) target = $region44
      $region43: #{three_layer_cnn_forward.1} parent=39 // pred_region
        %p231 = scmp.lt.s32.totalorder %s13, 1
        %s232 = scalar_select %p231, %s13, 1
        %s233 = smul.addr %s232, 7
        %s234 = smul.addr %s233, 8
        %s235 = scalar_lea.vmem %s0, %s234
      $region44: #{three_layer_cnn_forward.1} parent=39 // pred_fallthru
        _
    $region40: #{three_layer_cnn_forward.1} parent=5 // pred_fallthru
      _
    %p236 = scmp.le.s32.totalorder 1, %s13
    %p237 = scmp.lt.s32.totalorder %s13, 3
    %p238 = pnand %p236, %p237
    %p239 = pneg %p238
    // Predicated region
    $region45: #{three_layer_cnn_forward.1} parent=5 // pred_check
      _
    $region46: #{three_layer_cnn_forward.1} parent=5 // pred_check_branch
      %241 = sbr.rel (%p238) target = $region48
    $region47: #{three_layer_cnn_forward.1} parent=5 // pred_region
      %s242 = ssub.s32 %s13, 1
      %p243 = scmp.lt.s32.totalorder %s18, 1
      %s244 = scalar_select %p243, %s18, 1
      %s245 = smul.addr %s244, 7
      %s246 = smul.addr %s245, 8
      %s247 = scalar_lea.vmem %s0, %s246
      %p248 = pneg %p39
      %p249 = pneg %p36
      %p250 = pneg %p60
      %p251 = pneg %p57
      %p252 = pneg %p81
      %p253 = pneg %p78
      %p254 = pneg %p102
      %p255 = pneg %p99
      %p256 = pneg %p123
      %p257 = pneg %p120
      %p258 = pneg %p144
      %p259 = pneg %p141
      %p260 = pneg %p165
      %p261 = pneg %p162
      %p262 = pneg %p191
      %p263 = pneg %p188
      %p264 = scmp.lt.s32.totalorder %s18, 1
      %s265 = scalar_select %p264, %s18, 1
      %s266 = smul.addr %s265, 4
      %s267 = smul.addr %s266, 4
      %s268 = scalar_lea.vmem %s7, %s267
      %p269 = scmp.lt.s32.totalorder %s18, 1
      %s270 = scalar_select %p269, %s18, 1
      %s271 = smul.addr %s270, 7
      %s272 = smul.addr %s271, 8
      %s273 = scalar_lea.vmem %s0, %s272
      %p274 = scmp.lt.s32.totalorder %s18, 1
      %s275 = scalar_select %p274, %s18, 1
      %s276 = smul.addr %s275, 4
      %s277 = smul.addr %s276, 4
      %s278 = scalar_lea.vmem %s7, %s277
      %v279 = vld [vmem:[%s273] sm:$0xff]
      %v280 = vld [vmem:[%s273 + $0x8] sm:$0xff]
      %v281 = vld [vmem:[%s273 + $0x10] sm:$0xff]
      %v282 = vld [vmem:[%s273 + $0x18] sm:$0xff]
      %v283 = vld [vmem:[%s273 + $0x20] sm:$0xff]
      %v284 = vld [vmem:[%s273 + $0x28] sm:$0xff]
      %v285 = vld [vmem:[%s273 + $0x30] sm:$0x1]
      %v286 = vpack.c.bf16 %v280, %v279
      %v287 = vpack.c.bf16 %v282, %v281
      %v288 = vpack.c.bf16 %v284, %v283
      %v289 = vpack.c.bf16 %v285, %v285
      %v290 = vld [vmem:[%s1] sm:$0xf]
      %v291 = vld [vmem:[%s1 + $0x4] sm:$0xf]
      %v292 = vld [vmem:[%s1 + $0x8] sm:$0xf]
      %v293 = vld [vmem:[%s1 + $0xc] sm:$0xf]
      %v294 = vld [vmem:[%s1 + $0x10] sm:$0xf]
      %v295 = vld [vmem:[%s1 + $0x14] sm:$0xf]
      %v296 = vld [vmem:[%s1 + $0x18] sm:$0xf]
      %v297 = vld [vmem:[%s1 + $0x1c] sm:$0xf]
      %v298 = vld [vmem:[%s1 + $0x20] sm:$0xf]
      %v299 = vld [vmem:[%s1 + $0x24] sm:$0xf]
      %v300 = vld [vmem:[%s1 + $0x28] sm:$0xf]
      %v301 = vld [vmem:[%s1 + $0x2c] sm:$0xf]
      %v302 = vld [vmem:[%s1 + $0x30] sm:$0xf]
      %v303 = vld [vmem:[%s1 + $0x34] sm:$0xf]
      %v304 = vld [vmem:[%s1 + $0x38] sm:$0xf]
      %v305 = vld [vmem:[%s1 + $0x3c] sm:$0xf]
      %v306 = vld [vmem:[%s2] sm:$0x1]
      %v308 = vperm.slane %v306, 0
      %v326 = vunpack.c.l.b16 %v290
      %v327 = vunpack.c.l.b16 %v291
      %v328 = vunpack.c.l.b16 %v292
      %v329 = vunpack.c.l.b16 %v293
      %v330 = vunpack.c.l.b16 %v294
      %v331 = vunpack.c.l.b16 %v295
      %v332 = vunpack.c.l.b16 %v296
      %v333 = vunpack.c.l.b16 %v297
      %v334 = vunpack.c.l.b16 %v298
      %v335 = vunpack.c.l.b16 %v299
      %v336 = vunpack.c.l.b16 %v300
      %v337 = vunpack.c.l.b16 %v301
      %v338 = vunpack.c.l.b16 %v302
      %v339 = vunpack.c.l.b16 %v303
      %v340 = vunpack.c.l.b16 %v304
      %v341 = vunpack.c.l.b16 %v305
      %v342 = vpack.c.b16 %v327, %v326
      %v343 = vpack.c.b16 %v329, %v328
      %v344 = vpack.c.b16 %v331, %v330
      %v345 = vpack.c.b16 %v333, %v332
      %v346 = vpack.c.b16 %v335, %v334
      %v347 = vpack.c.b16 %v337, %v336
      %v348 = vpack.c.b16 %v339, %v338
      %v349 = vpack.c.b16 %v341, %v340
      %358 = vmatpush.bf16.msra.mxu0 %v349
      %359 = vmatpush.bf16.msra.mxu0 %v348
      %360 = vmatpush.bf16.msra.mxu0 %v347
      %361 = vmatpush.bf16.msra.mxu0 %v346
      %362 = vmatpush.bf16.msra.mxu0 %v345
      %363 = vmatpush.bf16.msra.mxu0 %v344
      %364 = vmatpush.bf16.msra.mxu0 %v343
      %365 = vmatpush.bf16.msra.mxu0 %v342
      %366 = vmatmul.bf16.gmra.mxu0 %v286
      %v367 = vpop.f32.mrf.mxu0
      %v368 = vadd.f32 %v308, %v367
      %v369 = vpop.f32.mrf.mxu0
      %v370 = vadd.f32 %v308, %v369
      %371 = vmatmul.bf16.gmra.mxu0 %v287
      %v372 = vpop.f32.mrf.mxu0
      %v373 = vadd.f32 %v308, %v372
      %v374 = vpop.f32.mrf.mxu0
      %v375 = vadd.f32 %v308, %v374
      %376 = vmatmul.bf16.gmra.mxu0 %v288
      %v377 = vpop.f32.mrf.mxu0
      %v378 = vadd.f32 %v308, %v377
      %v379 = vpop.f32.mrf.mxu0
      %v380 = vadd.f32 %v308, %v379
      %381 = vmatmul.bf16.gmra.mxu0 %v289
      %v382 = vpop.f32.mrf.mxu0
      %v383 = vadd.f32 %v308, %v382
      %v384 = vpop.f32.mrf.mxu0
      %385 = vdwg.mxu0
      %v386 = vmax.f32 %v368, 0.0
      %v387 = vmax.f32 %v370, 0.0
      %v388 = vmax.f32 %v373, 0.0
      %v389 = vmax.f32 %v375, 0.0
      %v390 = vmax.f32 %v378, 0.0
      %v391 = vmax.f32 %v380, 0.0
      %v392 = vmax.f32 %v383, 0.0
      %393 = vst [vmem:[#allocation2] sm:$0xff] %v386
      %394 = vst [vmem:[#allocation2 + $0x8] sm:$0xff] %v387
      %395 = vst [vmem:[#allocation2 + $0x10] sm:$0xff] %v388
      %396 = vst [vmem:[#allocation2 + $0x18] sm:$0xff] %v389
      %397 = vst [vmem:[#allocation2 + $0x20] sm:$0xff] %v390
      %398 = vst [vmem:[#allocation2 + $0x28] sm:$0xff] %v391
      %399 = vst [vmem:[#allocation2 + $0x30] sm:$0x1] %v392
      %v400 = vld [vmem:[#allocation2] ss:$2 sm:$0x7]
      %s401 = scalar_lea.vmem [#allocation2], 1
      %v402 = vld [vmem:[%s401] ss:$2 sm:$0x7]
      %s403 = scalar_lea.vmem [#allocation2], 2
      %v404 = vld [vmem:[%s403] ss:$2 sm:$0x7]
      %s405 = scalar_lea.vmem [#allocation2], 7
      %v406 = vld [vmem:[%s405] ss:$2 sm:$0x7]
      %s407 = scalar_lea.vmem [#allocation2], 8
      %v408 = vld [vmem:[%s407] ss:$2 sm:$0x7]
      %s409 = scalar_lea.vmem [#allocation2], 9
      %v410 = vld [vmem:[%s409] ss:$2 sm:$0x7]
      %s411 = scalar_lea.vmem [#allocation2], 14
      %v412 = vld [vmem:[%s411] ss:$2 sm:$0x7]
      %s413 = scalar_lea.vmem [#allocation2], 15
      %v414 = vld [vmem:[%s413] ss:$2 sm:$0x7]
      %s415 = scalar_lea.vmem [#allocation2], 16
      %v416 = vld [vmem:[%s415] ss:$2 sm:$0x7]
      %v417 = vpack.c.bf16 %v400, %v400
      %v418 = vpack.c.bf16 %v402, %v402
      %v419 = vpack.c.bf16 %v404, %v404
      %v420 = vpack.c.bf16 %v406, %v406
      %v421 = vpack.c.bf16 %v408, %v408
      %v422 = vpack.c.bf16 %v410, %v410
      %v423 = vpack.c.bf16 %v412, %v412
      %v424 = vpack.c.bf16 %v414, %v414
      %v425 = vpack.c.bf16 %v416, %v416
      %v426 = vld [vmem:[%s3] sm:$0xff]
      %v427 = vld [vmem:[%s3 + $0x8] sm:$0xff]
      %v428 = vld [vmem:[%s3 + $0x10] sm:$0xff]
      %v429 = vld [vmem:[%s3 + $0x18] sm:$0xff]
      %v430 = vld [vmem:[%s3 + $0x20] sm:$0xff]
      %v431 = vld [vmem:[%s3 + $0x28] sm:$0xff]
      %v432 = vld [vmem:[%s3 + $0x30] sm:$0xff]
      %v433 = vld [vmem:[%s3 + $0x38] sm:$0xff]
      %v434 = vld [vmem:[%s3 + $0x40] sm:$0xff]
      %v435 = vld [vmem:[%s3 + $0x48] sm:$0xff]
      %v436 = vld [vmem:[%s3 + $0x50] sm:$0xff]
      %v437 = vld [vmem:[%s3 + $0x58] sm:$0xff]
      %v438 = vld [vmem:[%s3 + $0x60] sm:$0xff]
      %v439 = vld [vmem:[%s3 + $0x68] sm:$0xff]
      %v440 = vld [vmem:[%s3 + $0x70] sm:$0xff]
      %v441 = vld [vmem:[%s3 + $0x78] sm:$0xff]
      %v442 = vld [vmem:[%s3 + $0x80] sm:$0xff]
      %v443 = vld [vmem:[%s3 + $0x88] sm:$0xff]
      %v444 = vld [vmem:[%s3 + $0x90] sm:$0xff]
      %v445 = vld [vmem:[%s3 + $0x98] sm:$0xff]
      %v446 = vld [vmem:[%s3 + $0xa0] sm:$0xff]
      %v447 = vld [vmem:[%s3 + $0xa8] sm:$0xff]
      %v448 = vld [vmem:[%s3 + $0xb0] sm:$0xff]
      %v449 = vld [vmem:[%s3 + $0xb8] sm:$0xff]
      %v450 = vld [vmem:[%s3 + $0xc0] sm:$0xff]
      %v451 = vld [vmem:[%s3 + $0xc8] sm:$0xff]
      %v452 = vld [vmem:[%s3 + $0xd0] sm:$0xff]
      %v453 = vld [vmem:[%s3 + $0xd8] sm:$0xff]
      %v454 = vld [vmem:[%s3 + $0xe0] sm:$0xff]
      %v455 = vld [vmem:[%s3 + $0xe8] sm:$0xff]
      %v456 = vld [vmem:[%s3 + $0xf0] sm:$0xff]
      %v457 = vld [vmem:[%s3 + $0xf8] sm:$0xff]
      %v458 = vld [vmem:[%s3 + $0x100] sm:$0xff]
      %v459 = vld [vmem:[%s3 + $0x108] sm:$0xff]
      %v460 = vld [vmem:[%s3 + $0x110] sm:$0xff]
      %v461 = vld [vmem:[%s3 + $0x118] sm:$0xff]
      %v462 = vld [vmem:[%s3 + $0x120] sm:$0xff]
      %v463 = vld [vmem:[%s3 + $0x128] sm:$0xff]
      %v464 = vld [vmem:[%s3 + $0x130] sm:$0xff]
      %v465 = vld [vmem:[%s3 + $0x138] sm:$0xff]
      %v466 = vld [vmem:[%s3 + $0x140] sm:$0xff]
      %v467 = vld [vmem:[%s3 + $0x148] sm:$0xff]
      %v468 = vld [vmem:[%s3 + $0x150] sm:$0xff]
      %v469 = vld [vmem:[%s3 + $0x158] sm:$0xff]
      %v470 = vld [vmem:[%s3 + $0x160] sm:$0xff]
      %v471 = vld [vmem:[%s3 + $0x168] sm:$0xff]
      %v472 = vld [vmem:[%s3 + $0x170] sm:$0xff]
      %v473 = vld [vmem:[%s3 + $0x178] sm:$0xff]
      %v474 = vld [vmem:[%s3 + $0x180] sm:$0xff]
      %v475 = vld [vmem:[%s3 + $0x188] sm:$0xff]
      %v476 = vld [vmem:[%s3 + $0x190] sm:$0xff]
      %v477 = vld [vmem:[%s3 + $0x198] sm:$0xff]
      %v478 = vld [vmem:[%s3 + $0x1a0] sm:$0xff]
      %v479 = vld [vmem:[%s3 + $0x1a8] sm:$0xff]
      %v480 = vld [vmem:[%s3 + $0x1b0] sm:$0xff]
      %v481 = vld [vmem:[%s3 + $0x1b8] sm:$0xff]
      %v482 = vld [vmem:[%s3 + $0x1c0] sm:$0xff]
      %v483 = vld [vmem:[%s3 + $0x1c8] sm:$0xff]
      %v484 = vld [vmem:[%s3 + $0x1d0] sm:$0xff]
      %v485 = vld [vmem:[%s3 + $0x1d8] sm:$0xff]
      %v486 = vld [vmem:[%s3 + $0x1e0] sm:$0xff]
      %v487 = vld [vmem:[%s3 + $0x1e8] sm:$0xff]
      %v488 = vld [vmem:[%s3 + $0x1f0] sm:$0xff]
      %v489 = vld [vmem:[%s3 + $0x1f8] sm:$0xff]
      %v490 = vld [vmem:[%s3 + $0x200] sm:$0xff]
      %v491 = vld [vmem:[%s3 + $0x208] sm:$0xff]
      %v492 = vld [vmem:[%s3 + $0x210] sm:$0xff]
      %v493 = vld [vmem:[%s3 + $0x218] sm:$0xff]
      %v494 = vld [vmem:[%s3 + $0x220] sm:$0xff]
      %v495 = vld [vmem:[%s3 + $0x228] sm:$0xff]
      %v496 = vld [vmem:[%s3 + $0x230] sm:$0xff]
      %v497 = vld [vmem:[%s3 + $0x238] sm:$0xff]
      %v498 = vld [vmem:[%s3 + $0x240] sm:$0xff]
      %v499 = vld [vmem:[%s3 + $0x248] sm:$0xff]
      %v500 = vld [vmem:[%s3 + $0x250] sm:$0xff]
      %v501 = vld [vmem:[%s3 + $0x258] sm:$0xff]
      %v502 = vld [vmem:[%s3 + $0x260] sm:$0xff]
      %v503 = vld [vmem:[%s3 + $0x268] sm:$0xff]
      %v504 = vld [vmem:[%s3 + $0x270] sm:$0xff]
      %v505 = vld [vmem:[%s3 + $0x278] sm:$0xff]
      %v506 = vld [vmem:[%s3 + $0x280] sm:$0xff]
      %v507 = vld [vmem:[%s3 + $0x288] sm:$0xff]
      %v508 = vld [vmem:[%s3 + $0x290] sm:$0xff]
      %v509 = vld [vmem:[%s3 + $0x298] sm:$0xff]
      %v510 = vld [vmem:[%s3 + $0x2a0] sm:$0xff]
      %v511 = vld [vmem:[%s3 + $0x2a8] sm:$0xff]
      %v512 = vld [vmem:[%s3 + $0x2b0] sm:$0xff]
      %v513 = vld [vmem:[%s3 + $0x2b8] sm:$0xff]
      %v514 = vld [vmem:[%s3 + $0x2c0] sm:$0xff]
      %v515 = vld [vmem:[%s3 + $0x2c8] sm:$0xff]
      %v516 = vld [vmem:[%s3 + $0x2d0] sm:$0xff]
      %v517 = vld [vmem:[%s3 + $0x2d8] sm:$0xff]
      %v518 = vld [vmem:[%s3 + $0x2e0] sm:$0xff]
      %v519 = vld [vmem:[%s3 + $0x2e8] sm:$0xff]
      %v520 = vld [vmem:[%s3 + $0x2f0] sm:$0xff]
      %v521 = vld [vmem:[%s3 + $0x2f8] sm:$0xff]
      %v522 = vld [vmem:[%s3 + $0x300] sm:$0xff]
      %v523 = vld [vmem:[%s3 + $0x308] sm:$0xff]
      %v524 = vld [vmem:[%s3 + $0x310] sm:$0xff]
      %v525 = vld [vmem:[%s3 + $0x318] sm:$0xff]
      %v526 = vld [vmem:[%s3 + $0x320] sm:$0xff]
      %v527 = vld [vmem:[%s3 + $0x328] sm:$0xff]
      %v528 = vld [vmem:[%s3 + $0x330] sm:$0xff]
      %v529 = vld [vmem:[%s3 + $0x338] sm:$0xff]
      %v530 = vld [vmem:[%s3 + $0x340] sm:$0xff]
      %v531 = vld [vmem:[%s3 + $0x348] sm:$0xff]
      %v532 = vld [vmem:[%s3 + $0x350] sm:$0xff]
      %v533 = vld [vmem:[%s3 + $0x358] sm:$0xff]
      %v534 = vld [vmem:[%s3 + $0x360] sm:$0xff]
      %v535 = vld [vmem:[%s3 + $0x368] sm:$0xff]
      %v536 = vld [vmem:[%s3 + $0x370] sm:$0xff]
      %v537 = vld [vmem:[%s3 + $0x378] sm:$0xff]
      %v538 = vld [vmem:[%s3 + $0x380] sm:$0xff]
      %v539 = vld [vmem:[%s3 + $0x388] sm:$0xff]
      %v540 = vld [vmem:[%s3 + $0x390] sm:$0xff]
      %v541 = vld [vmem:[%s3 + $0x398] sm:$0xff]
      %v542 = vld [vmem:[%s3 + $0x3a0] sm:$0xff]
      %v543 = vld [vmem:[%s3 + $0x3a8] sm:$0xff]
      %v544 = vld [vmem:[%s3 + $0x3b0] sm:$0xff]
      %v545 = vld [vmem:[%s3 + $0x3b8] sm:$0xff]
      %v546 = vld [vmem:[%s3 + $0x3c0] sm:$0xff]
      %v547 = vld [vmem:[%s3 + $0x3c8] sm:$0xff]
      %v548 = vld [vmem:[%s3 + $0x3d0] sm:$0xff]
      %v549 = vld [vmem:[%s3 + $0x3d8] sm:$0xff]
      %v550 = vld [vmem:[%s3 + $0x3e0] sm:$0xff]
      %v551 = vld [vmem:[%s3 + $0x3e8] sm:$0xff]
      %v552 = vld [vmem:[%s3 + $0x3f0] sm:$0xff]
      %v553 = vld [vmem:[%s3 + $0x3f8] sm:$0xff]
      %v554 = vld [vmem:[%s3 + $0x400] sm:$0xff]
      %v555 = vld [vmem:[%s3 + $0x408] sm:$0xff]
      %v556 = vld [vmem:[%s3 + $0x410] sm:$0xff]
      %v557 = vld [vmem:[%s3 + $0x418] sm:$0xff]
      %v558 = vld [vmem:[%s3 + $0x420] sm:$0xff]
      %v559 = vld [vmem:[%s3 + $0x428] sm:$0xff]
      %v560 = vld [vmem:[%s3 + $0x430] sm:$0xff]
      %v561 = vld [vmem:[%s3 + $0x438] sm:$0xff]
      %v562 = vld [vmem:[%s3 + $0x440] sm:$0xff]
      %v563 = vld [vmem:[%s3 + $0x448] sm:$0xff]
      %v564 = vld [vmem:[%s3 + $0x450] sm:$0xff]
      %v565 = vld [vmem:[%s3 + $0x458] sm:$0xff]
      %v566 = vld [vmem:[%s3 + $0x460] sm:$0xff]
      %v567 = vld [vmem:[%s3 + $0x468] sm:$0xff]
      %v568 = vld [vmem:[%s3 + $0x470] sm:$0xff]
      %v569 = vld [vmem:[%s3 + $0x478] sm:$0xff]
      %v570 = vld [vmem:[%s4] sm:$0x3]
      %v572 = vperm.slane %v570, 0
      %v573 = vperm.slane %v570, 1
      %v720 = vunpack.c.l.b16 %v426
      %v721 = vunpack.c.h.b16 %v426
      %v722 = vunpack.c.l.b16 %v427
      %v723 = vunpack.c.h.b16 %v427
      %v724 = vunpack.c.l.b16 %v428
      %v725 = vunpack.c.h.b16 %v428
      %v726 = vunpack.c.l.b16 %v429
      %v727 = vunpack.c.h.b16 %v429
      %v728 = vunpack.c.l.b16 %v430
      %v729 = vunpack.c.h.b16 %v430
      %v730 = vunpack.c.l.b16 %v431
      %v731 = vunpack.c.h.b16 %v431
      %v732 = vunpack.c.l.b16 %v432
      %v733 = vunpack.c.h.b16 %v432
      %v734 = vunpack.c.l.b16 %v433
      %v735 = vunpack.c.h.b16 %v433
      %v736 = vunpack.c.l.b16 %v434
      %v737 = vunpack.c.h.b16 %v434
      %v738 = vunpack.c.l.b16 %v435
      %v739 = vunpack.c.h.b16 %v435
      %v740 = vunpack.c.l.b16 %v436
      %v741 = vunpack.c.h.b16 %v436
      %v742 = vunpack.c.l.b16 %v437
      %v743 = vunpack.c.h.b16 %v437
      %v744 = vunpack.c.l.b16 %v438
      %v745 = vunpack.c.h.b16 %v438
      %v746 = vunpack.c.l.b16 %v439
      %v747 = vunpack.c.h.b16 %v439
      %v748 = vunpack.c.l.b16 %v440
      %v749 = vunpack.c.h.b16 %v440
      %v750 = vunpack.c.l.b16 %v441
      %v751 = vunpack.c.h.b16 %v441
      %v752 = vunpack.c.l.b16 %v442
      %v753 = vunpack.c.h.b16 %v442
      %v754 = vunpack.c.l.b16 %v443
      %v755 = vunpack.c.h.b16 %v443
      %v756 = vunpack.c.l.b16 %v444
      %v757 = vunpack.c.h.b16 %v444
      %v758 = vunpack.c.l.b16 %v445
      %v759 = vunpack.c.h.b16 %v445
      %v760 = vunpack.c.l.b16 %v446
      %v761 = vunpack.c.h.b16 %v446
      %v762 = vunpack.c.l.b16 %v447
      %v763 = vunpack.c.h.b16 %v447
      %v764 = vunpack.c.l.b16 %v448
      %v765 = vunpack.c.h.b16 %v448
      %v766 = vunpack.c.l.b16 %v449
      %v767 = vunpack.c.h.b16 %v449
      %v768 = vunpack.c.l.b16 %v450
      %v769 = vunpack.c.h.b16 %v450
      %v770 = vunpack.c.l.b16 %v451
      %v771 = vunpack.c.h.b16 %v451
      %v772 = vunpack.c.l.b16 %v452
      %v773 = vunpack.c.h.b16 %v452
      %v774 = vunpack.c.l.b16 %v453
      %v775 = vunpack.c.h.b16 %v453
      %v776 = vunpack.c.l.b16 %v454
      %v777 = vunpack.c.h.b16 %v454
      %v778 = vunpack.c.l.b16 %v455
      %v779 = vunpack.c.h.b16 %v455
      %v780 = vunpack.c.l.b16 %v456
      %v781 = vunpack.c.h.b16 %v456
      %v782 = vunpack.c.l.b16 %v457
      %v783 = vunpack.c.h.b16 %v457
      %v784 = vunpack.c.l.b16 %v458
      %v785 = vunpack.c.h.b16 %v458
      %v786 = vunpack.c.l.b16 %v459
      %v787 = vunpack.c.h.b16 %v459
      %v788 = vunpack.c.l.b16 %v460
      %v789 = vunpack.c.h.b16 %v460
      %v790 = vunpack.c.l.b16 %v461
      %v791 = vunpack.c.h.b16 %v461
      %v792 = vunpack.c.l.b16 %v462
      %v793 = vunpack.c.h.b16 %v462
      %v794 = vunpack.c.l.b16 %v463
      %v795 = vunpack.c.h.b16 %v463
      %v796 = vunpack.c.l.b16 %v464
      %v797 = vunpack.c.h.b16 %v464
      %v798 = vunpack.c.l.b16 %v465
      %v799 = vunpack.c.h.b16 %v465
      %v800 = vunpack.c.l.b16 %v466
      %v801 = vunpack.c.h.b16 %v466
      %v802 = vunpack.c.l.b16 %v467
      %v803 = vunpack.c.h.b16 %v467
      %v804 = vunpack.c.l.b16 %v468
      %v805 = vunpack.c.h.b16 %v468
      %v806 = vunpack.c.l.b16 %v469
      %v807 = vunpack.c.h.b16 %v469
      %v808 = vunpack.c.l.b16 %v470
      %v809 = vunpack.c.h.b16 %v470
      %v810 = vunpack.c.l.b16 %v471
      %v811 = vunpack.c.h.b16 %v471
      %v812 = vunpack.c.l.b16 %v472
      %v813 = vunpack.c.h.b16 %v472
      %v814 = vunpack.c.l.b16 %v473
      %v815 = vunpack.c.h.b16 %v473
      %v816 = vunpack.c.l.b16 %v474
      %v817 = vunpack.c.h.b16 %v474
      %v818 = vunpack.c.l.b16 %v475
      %v819 = vunpack.c.h.b16 %v475
      %v820 = vunpack.c.l.b16 %v476
      %v821 = vunpack.c.h.b16 %v476
      %v822 = vunpack.c.l.b16 %v477
      %v823 = vunpack.c.h.b16 %v477
      %v824 = vunpack.c.l.b16 %v478
      %v825 = vunpack.c.h.b16 %v478
      %v826 = vunpack.c.l.b16 %v479
      %v827 = vunpack.c.h.b16 %v479
      %v828 = vunpack.c.l.b16 %v480
      %v829 = vunpack.c.h.b16 %v480
      %v830 = vunpack.c.l.b16 %v481
      %v831 = vunpack.c.h.b16 %v481
      %v832 = vunpack.c.l.b16 %v482
      %v833 = vunpack.c.h.b16 %v482
      %v834 = vunpack.c.l.b16 %v483
      %v835 = vunpack.c.h.b16 %v483
      %v836 = vunpack.c.l.b16 %v484
      %v837 = vunpack.c.h.b16 %v484
      %v838 = vunpack.c.l.b16 %v485
      %v839 = vunpack.c.h.b16 %v485
      %v840 = vunpack.c.l.b16 %v486
      %v841 = vunpack.c.h.b16 %v486
      %v842 = vunpack.c.l.b16 %v487
      %v843 = vunpack.c.h.b16 %v487
      %v844 = vunpack.c.l.b16 %v488
      %v845 = vunpack.c.h.b16 %v488
      %v846 = vunpack.c.l.b16 %v489
      %v847 = vunpack.c.h.b16 %v489
      %v848 = vunpack.c.l.b16 %v490
      %v849 = vunpack.c.h.b16 %v490
      %v850 = vunpack.c.l.b16 %v491
      %v851 = vunpack.c.h.b16 %v491
      %v852 = vunpack.c.l.b16 %v492
      %v853 = vunpack.c.h.b16 %v492
      %v854 = vunpack.c.l.b16 %v493
      %v855 = vunpack.c.h.b16 %v493
      %v856 = vunpack.c.l.b16 %v494
      %v857 = vunpack.c.h.b16 %v494
      %v858 = vunpack.c.l.b16 %v495
      %v859 = vunpack.c.h.b16 %v495
      %v860 = vunpack.c.l.b16 %v496
      %v861 = vunpack.c.h.b16 %v496
      %v862 = vunpack.c.l.b16 %v497
      %v863 = vunpack.c.h.b16 %v497
      %v864 = vunpack.c.l.b16 %v498
      %v865 = vunpack.c.h.b16 %v498
      %v866 = vunpack.c.l.b16 %v499
      %v867 = vunpack.c.h.b16 %v499
      %v868 = vunpack.c.l.b16 %v500
      %v869 = vunpack.c.h.b16 %v500
      %v870 = vunpack.c.l.b16 %v501
      %v871 = vunpack.c.h.b16 %v501
      %v872 = vunpack.c.l.b16 %v502
      %v873 = vunpack.c.h.b16 %v502
      %v874 = vunpack.c.l.b16 %v503
      %v875 = vunpack.c.h.b16 %v503
      %v876 = vunpack.c.l.b16 %v504
      %v877 = vunpack.c.h.b16 %v504
      %v878 = vunpack.c.l.b16 %v505
      %v879 = vunpack.c.h.b16 %v505
      %v880 = vunpack.c.l.b16 %v506
      %v881 = vunpack.c.h.b16 %v506
      %v882 = vunpack.c.l.b16 %v507
      %v883 = vunpack.c.h.b16 %v507
      %v884 = vunpack.c.l.b16 %v508
      %v885 = vunpack.c.h.b16 %v508
      %v886 = vunpack.c.l.b16 %v509
      %v887 = vunpack.c.h.b16 %v509
      %v888 = vunpack.c.l.b16 %v510
      %v889 = vunpack.c.h.b16 %v510
      %v890 = vunpack.c.l.b16 %v511
      %v891 = vunpack.c.h.b16 %v511
      %v892 = vunpack.c.l.b16 %v512
      %v893 = vunpack.c.h.b16 %v512
      %v894 = vunpack.c.l.b16 %v513
      %v895 = vunpack.c.h.b16 %v513
      %v896 = vunpack.c.l.b16 %v514
      %v897 = vunpack.c.h.b16 %v514
      %v898 = vunpack.c.l.b16 %v515
      %v899 = vunpack.c.h.b16 %v515
      %v900 = vunpack.c.l.b16 %v516
      %v901 = vunpack.c.h.b16 %v516
      %v902 = vunpack.c.l.b16 %v517
      %v903 = vunpack.c.h.b16 %v517
      %v904 = vunpack.c.l.b16 %v518
      %v905 = vunpack.c.h.b16 %v518
      %v906 = vunpack.c.l.b16 %v519
      %v907 = vunpack.c.h.b16 %v519
      %v908 = vunpack.c.l.b16 %v520
      %v909 = vunpack.c.h.b16 %v520
      %v910 = vunpack.c.l.b16 %v521
      %v911 = vunpack.c.h.b16 %v521
      %v912 = vunpack.c.l.b16 %v522
      %v913 = vunpack.c.h.b16 %v522
      %v914 = vunpack.c.l.b16 %v523
      %v915 = vunpack.c.h.b16 %v523
      %v916 = vunpack.c.l.b16 %v524
      %v917 = vunpack.c.h.b16 %v524
      %v918 = vunpack.c.l.b16 %v525
      %v919 = vunpack.c.h.b16 %v525
      %v920 = vunpack.c.l.b16 %v526
      %v921 = vunpack.c.h.b16 %v526
      %v922 = vunpack.c.l.b16 %v527
      %v923 = vunpack.c.h.b16 %v527
      %v924 = vunpack.c.l.b16 %v528
      %v925 = vunpack.c.h.b16 %v528
      %v926 = vunpack.c.l.b16 %v529
      %v927 = vunpack.c.h.b16 %v529
      %v928 = vunpack.c.l.b16 %v530
      %v929 = vunpack.c.h.b16 %v530
      %v930 = vunpack.c.l.b16 %v531
      %v931 = vunpack.c.h.b16 %v531
      %v932 = vunpack.c.l.b16 %v532
      %v933 = vunpack.c.h.b16 %v532
      %v934 = vunpack.c.l.b16 %v533
      %v935 = vunpack.c.h.b16 %v533
      %v936 = vunpack.c.l.b16 %v534
      %v937 = vunpack.c.h.b16 %v534
      %v938 = vunpack.c.l.b16 %v535
      %v939 = vunpack.c.h.b16 %v535
      %v940 = vunpack.c.l.b16 %v536
      %v941 = vunpack.c.h.b16 %v536
      %v942 = vunpack.c.l.b16 %v537
      %v943 = vunpack.c.h.b16 %v537
      %v944 = vunpack.c.l.b16 %v538
      %v945 = vunpack.c.h.b16 %v538
      %v946 = vunpack.c.l.b16 %v539
      %v947 = vunpack.c.h.b16 %v539
      %v948 = vunpack.c.l.b16 %v540
      %v949 = vunpack.c.h.b16 %v540
      %v950 = vunpack.c.l.b16 %v541
      %v951 = vunpack.c.h.b16 %v541
      %v952 = vunpack.c.l.b16 %v542
      %v953 = vunpack.c.h.b16 %v542
      %v954 = vunpack.c.l.b16 %v543
      %v955 = vunpack.c.h.b16 %v543
      %v956 = vunpack.c.l.b16 %v544
      %v957 = vunpack.c.h.b16 %v544
      %v958 = vunpack.c.l.b16 %v545
      %v959 = vunpack.c.h.b16 %v545
      %v960 = vunpack.c.l.b16 %v546
      %v961 = vunpack.c.h.b16 %v546
      %v962 = vunpack.c.l.b16 %v547
      %v963 = vunpack.c.h.b16 %v547
      %v964 = vunpack.c.l.b16 %v548
      %v965 = vunpack.c.h.b16 %v548
      %v966 = vunpack.c.l.b16 %v549
      %v967 = vunpack.c.h.b16 %v549
      %v968 = vunpack.c.l.b16 %v550
      %v969 = vunpack.c.h.b16 %v550
      %v970 = vunpack.c.l.b16 %v551
      %v971 = vunpack.c.h.b16 %v551
      %v972 = vunpack.c.l.b16 %v552
      %v973 = vunpack.c.h.b16 %v552
      %v974 = vunpack.c.l.b16 %v553
      %v975 = vunpack.c.h.b16 %v553
      %v976 = vunpack.c.l.b16 %v554
      %v977 = vunpack.c.h.b16 %v554
      %v978 = vunpack.c.l.b16 %v555
      %v979 = vunpack.c.h.b16 %v555
      %v980 = vunpack.c.l.b16 %v556
      %v981 = vunpack.c.h.b16 %v556
      %v982 = vunpack.c.l.b16 %v557
      %v983 = vunpack.c.h.b16 %v557
      %v984 = vunpack.c.l.b16 %v558
      %v985 = vunpack.c.h.b16 %v558
      %v986 = vunpack.c.l.b16 %v559
      %v987 = vunpack.c.h.b16 %v559
      %v988 = vunpack.c.l.b16 %v560
      %v989 = vunpack.c.h.b16 %v560
      %v990 = vunpack.c.l.b16 %v561
      %v991 = vunpack.c.h.b16 %v561
      %v992 = vunpack.c.l.b16 %v562
      %v993 = vunpack.c.h.b16 %v562
      %v994 = vunpack.c.l.b16 %v563
      %v995 = vunpack.c.h.b16 %v563
      %v996 = vunpack.c.l.b16 %v564
      %v997 = vunpack.c.h.b16 %v564
      %v998 = vunpack.c.l.b16 %v565
      %v999 = vunpack.c.h.b16 %v565
      %v1000 = vunpack.c.l.b16 %v566
      %v1001 = vunpack.c.h.b16 %v566
      %v1002 = vunpack.c.l.b16 %v567
      %v1003 = vunpack.c.h.b16 %v567
      %v1004 = vunpack.c.l.b16 %v568
      %v1005 = vunpack.c.h.b16 %v568
      %v1006 = vunpack.c.l.b16 %v569
      %v1007 = vunpack.c.h.b16 %v569
      %v1008 = vpack.c.b16 %v722, %v720
      %v1009 = vpack.c.b16 %v723, %v721
      %v1010 = vpack.c.b16 %v726, %v724
      %v1011 = vpack.c.b16 %v727, %v725
      %v1012 = vpack.c.b16 %v730, %v728
      %v1013 = vpack.c.b16 %v731, %v729
      %v1014 = vpack.c.b16 %v734, %v732
      %v1015 = vpack.c.b16 %v735, %v733
      %v1016 = vpack.c.b16 %v738, %v736
      %v1017 = vpack.c.b16 %v739, %v737
      %v1018 = vpack.c.b16 %v742, %v740
      %v1019 = vpack.c.b16 %v743, %v741
      %v1020 = vpack.c.b16 %v746, %v744
      %v1021 = vpack.c.b16 %v747, %v745
      %v1022 = vpack.c.b16 %v750, %v748
      %v1023 = vpack.c.b16 %v751, %v749
      %v1024 = vpack.c.b16 %v754, %v752
      %v1025 = vpack.c.b16 %v755, %v753
      %v1026 = vpack.c.b16 %v758, %v756
      %v1027 = vpack.c.b16 %v759, %v757
      %v1028 = vpack.c.b16 %v762, %v760
      %v1029 = vpack.c.b16 %v763, %v761
      %v1030 = vpack.c.b16 %v766, %v764
      %v1031 = vpack.c.b16 %v767, %v765
      %v1032 = vpack.c.b16 %v770, %v768
      %v1033 = vpack.c.b16 %v771, %v769
      %v1034 = vpack.c.b16 %v774, %v772
      %v1035 = vpack.c.b16 %v775, %v773
      %v1036 = vpack.c.b16 %v778, %v776
      %v1037 = vpack.c.b16 %v779, %v777
      %v1038 = vpack.c.b16 %v782, %v780
      %v1039 = vpack.c.b16 %v783, %v781
      %v1040 = vpack.c.b16 %v786, %v784
      %v1041 = vpack.c.b16 %v787, %v785
      %v1042 = vpack.c.b16 %v790, %v788
      %v1043 = vpack.c.b16 %v791, %v789
      %v1044 = vpack.c.b16 %v794, %v792
      %v1045 = vpack.c.b16 %v795, %v793
      %v1046 = vpack.c.b16 %v798, %v796
      %v1047 = vpack.c.b16 %v799, %v797
      %v1048 = vpack.c.b16 %v802, %v800
      %v1049 = vpack.c.b16 %v803, %v801
      %v1050 = vpack.c.b16 %v806, %v804
      %v1051 = vpack.c.b16 %v807, %v805
      %v1052 = vpack.c.b16 %v810, %v808
      %v1053 = vpack.c.b16 %v811, %v809
      %v1054 = vpack.c.b16 %v814, %v812
      %v1055 = vpack.c.b16 %v815, %v813
      %v1056 = vpack.c.b16 %v818, %v816
      %v1057 = vpack.c.b16 %v819, %v817
      %v1058 = vpack.c.b16 %v822, %v820
      %v1059 = vpack.c.b16 %v823, %v821
      %v1060 = vpack.c.b16 %v826, %v824
      %v1061 = vpack.c.b16 %v827, %v825
      %v1062 = vpack.c.b16 %v830, %v828
      %v1063 = vpack.c.b16 %v831, %v829
      %v1064 = vpack.c.b16 %v834, %v832
      %v1065 = vpack.c.b16 %v835, %v833
      %v1066 = vpack.c.b16 %v838, %v836
      %v1067 = vpack.c.b16 %v839, %v837
      %v1068 = vpack.c.b16 %v842, %v840
      %v1069 = vpack.c.b16 %v843, %v841
      %v1070 = vpack.c.b16 %v846, %v844
      %v1071 = vpack.c.b16 %v847, %v845
      %v1072 = vpack.c.b16 %v850, %v848
      %v1073 = vpack.c.b16 %v851, %v849
      %v1074 = vpack.c.b16 %v854, %v852
      %v1075 = vpack.c.b16 %v855, %v853
      %v1076 = vpack.c.b16 %v858, %v856
      %v1077 = vpack.c.b16 %v859, %v857
      %v1078 = vpack.c.b16 %v862, %v860
      %v1079 = vpack.c.b16 %v863, %v861
      %v1080 = vpack.c.b16 %v866, %v864
      %v1081 = vpack.c.b16 %v867, %v865
      %v1082 = vpack.c.b16 %v870, %v868
      %v1083 = vpack.c.b16 %v871, %v869
      %v1084 = vpack.c.b16 %v874, %v872
      %v1085 = vpack.c.b16 %v875, %v873
      %v1086 = vpack.c.b16 %v878, %v876
      %v1087 = vpack.c.b16 %v879, %v877
      %v1088 = vpack.c.b16 %v882, %v880
      %v1089 = vpack.c.b16 %v883, %v881
      %v1090 = vpack.c.b16 %v886, %v884
      %v1091 = vpack.c.b16 %v887, %v885
      %v1092 = vpack.c.b16 %v890, %v888
      %v1093 = vpack.c.b16 %v891, %v889
      %v1094 = vpack.c.b16 %v894, %v892
      %v1095 = vpack.c.b16 %v895, %v893
      %v1096 = vpack.c.b16 %v898, %v896
      %v1097 = vpack.c.b16 %v899, %v897
      %v1098 = vpack.c.b16 %v902, %v900
      %v1099 = vpack.c.b16 %v903, %v901
      %v1100 = vpack.c.b16 %v906, %v904
      %v1101 = vpack.c.b16 %v907, %v905
      %v1102 = vpack.c.b16 %v910, %v908
      %v1103 = vpack.c.b16 %v911, %v909
      %v1104 = vpack.c.b16 %v914, %v912
      %v1105 = vpack.c.b16 %v915, %v913
      %v1106 = vpack.c.b16 %v918, %v916
      %v1107 = vpack.c.b16 %v919, %v917
      %v1108 = vpack.c.b16 %v922, %v920
      %v1109 = vpack.c.b16 %v923, %v921
      %v1110 = vpack.c.b16 %v926, %v924
      %v1111 = vpack.c.b16 %v927, %v925
      %v1112 = vpack.c.b16 %v930, %v928
      %v1113 = vpack.c.b16 %v931, %v929
      %v1114 = vpack.c.b16 %v934, %v932
      %v1115 = vpack.c.b16 %v935, %v933
      %v1116 = vpack.c.b16 %v938, %v936
      %v1117 = vpack.c.b16 %v939, %v937
      %v1118 = vpack.c.b16 %v942, %v940
      %v1119 = vpack.c.b16 %v943, %v941
      %v1120 = vpack.c.b16 %v946, %v944
      %v1121 = vpack.c.b16 %v947, %v945
      %v1122 = vpack.c.b16 %v950, %v948
      %v1123 = vpack.c.b16 %v951, %v949
      %v1124 = vpack.c.b16 %v954, %v952
      %v1125 = vpack.c.b16 %v955, %v953
      %v1126 = vpack.c.b16 %v958, %v956
      %v1127 = vpack.c.b16 %v959, %v957
      %v1128 = vpack.c.b16 %v962, %v960
      %v1129 = vpack.c.b16 %v963, %v961
      %v1130 = vpack.c.b16 %v966, %v964
      %v1131 = vpack.c.b16 %v967, %v965
      %v1132 = vpack.c.b16 %v970, %v968
      %v1133 = vpack.c.b16 %v971, %v969
      %v1134 = vpack.c.b16 %v974, %v972
      %v1135 = vpack.c.b16 %v975, %v973
      %v1136 = vpack.c.b16 %v978, %v976
      %v1137 = vpack.c.b16 %v979, %v977
      %v1138 = vpack.c.b16 %v982, %v980
      %v1139 = vpack.c.b16 %v983, %v981
      %v1140 = vpack.c.b16 %v986, %v984
      %v1141 = vpack.c.b16 %v987, %v985
      %v1142 = vpack.c.b16 %v990, %v988
      %v1143 = vpack.c.b16 %v991, %v989
      %v1144 = vpack.c.b16 %v994, %v992
      %v1145 = vpack.c.b16 %v995, %v993
      %v1146 = vpack.c.b16 %v998, %v996
      %v1147 = vpack.c.b16 %v999, %v997
      %v1148 = vpack.c.b16 %v1002, %v1000
      %v1149 = vpack.c.b16 %v1003, %v1001
      %v1150 = vpack.c.b16 %v1006, %v1004
      %v1151 = vpack.c.b16 %v1007, %v1005
      %1296 = vmatpush.bf16.msra.mxu0 %v1022
      %1297 = vmatpush.bf16.msra.mxu0 %v1020
      %1298 = vmatpush.bf16.msra.mxu0 %v1018
      %1299 = vmatpush.bf16.msra.mxu0 %v1016
      %1300 = vmatpush.bf16.msra.mxu0 %v1014
      %1301 = vmatpush.bf16.msra.mxu0 %v1012
      %1302 = vmatpush.bf16.msra.mxu0 %v1010
      %1303 = vmatpush.bf16.msra.mxu0 %v1008
      %1304 = vmatmul.bf16.gmra.mxu0 %v417
      %v1305 = vpop.f32.mrf.mxu0
      %v1306 = vadd.f32 %v572, %v1305
      %v1307 = vpop.f32.mrf.mxu0
      %1308 = vdwg.mxu0
      %1309 = vmatpush.bf16.msra.mxu0 %v1038
      %1310 = vmatpush.bf16.msra.mxu0 %v1036
      %1311 = vmatpush.bf16.msra.mxu0 %v1034
      %1312 = vmatpush.bf16.msra.mxu0 %v1032
      %1313 = vmatpush.bf16.msra.mxu0 %v1030
      %1314 = vmatpush.bf16.msra.mxu0 %v1028
      %1315 = vmatpush.bf16.msra.mxu0 %v1026
      %1316 = vmatpush.bf16.msra.mxu0 %v1024
      %1317 = vmatmul.bf16.gmra.mxu0 %v418
      %v1318 = vpop.f32.mrf.mxu0
      %v1319 = vadd.f32 %v1306, %v1318
      %v1320 = vpop.f32.mrf.mxu0
      %1321 = vdwg.mxu0
      %1322 = vmatpush.bf16.msra.mxu0 %v1054
      %1323 = vmatpush.bf16.msra.mxu0 %v1052
      %1324 = vmatpush.bf16.msra.mxu0 %v1050
      %1325 = vmatpush.bf16.msra.mxu0 %v1048
      %1326 = vmatpush.bf16.msra.mxu0 %v1046
      %1327 = vmatpush.bf16.msra.mxu0 %v1044
      %1328 = vmatpush.bf16.msra.mxu0 %v1042
      %1329 = vmatpush.bf16.msra.mxu0 %v1040
      %1330 = vmatmul.bf16.gmra.mxu0 %v419
      %v1331 = vpop.f32.mrf.mxu0
      %v1332 = vadd.f32 %v1319, %v1331
      %v1333 = vpop.f32.mrf.mxu0
      %1334 = vdwg.mxu0
      %1335 = vmatpush.bf16.msra.mxu0 %v1070
      %1336 = vmatpush.bf16.msra.mxu0 %v1068
      %1337 = vmatpush.bf16.msra.mxu0 %v1066
      %1338 = vmatpush.bf16.msra.mxu0 %v1064
      %1339 = vmatpush.bf16.msra.mxu0 %v1062
      %1340 = vmatpush.bf16.msra.mxu0 %v1060
      %1341 = vmatpush.bf16.msra.mxu0 %v1058
      %1342 = vmatpush.bf16.msra.mxu0 %v1056
      %1343 = vmatmul.bf16.gmra.mxu0 %v420
      %v1344 = vpop.f32.mrf.mxu0
      %v1345 = vadd.f32 %v1332, %v1344
      %v1346 = vpop.f32.mrf.mxu0
      %1347 = vdwg.mxu0
      %1348 = vmatpush.bf16.msra.mxu0 %v1086
      %1349 = vmatpush.bf16.msra.mxu0 %v1084
      %1350 = vmatpush.bf16.msra.mxu0 %v1082
      %1351 = vmatpush.bf16.msra.mxu0 %v1080
      %1352 = vmatpush.bf16.msra.mxu0 %v1078
      %1353 = vmatpush.bf16.msra.mxu0 %v1076
      %1354 = vmatpush.bf16.msra.mxu0 %v1074
      %1355 = vmatpush.bf16.msra.mxu0 %v1072
      %1356 = vmatmul.bf16.gmra.mxu0 %v421
      %v1357 = vpop.f32.mrf.mxu0
      %v1358 = vadd.f32 %v1345, %v1357
      %v1359 = vpop.f32.mrf.mxu0
      %1360 = vdwg.mxu0
      %1361 = vmatpush.bf16.msra.mxu0 %v1102
      %1362 = vmatpush.bf16.msra.mxu0 %v1100
      %1363 = vmatpush.bf16.msra.mxu0 %v1098
      %1364 = vmatpush.bf16.msra.mxu0 %v1096
      %1365 = vmatpush.bf16.msra.mxu0 %v1094
      %1366 = vmatpush.bf16.msra.mxu0 %v1092
      %1367 = vmatpush.bf16.msra.mxu0 %v1090
      %1368 = vmatpush.bf16.msra.mxu0 %v1088
      %1369 = vmatmul.bf16.gmra.mxu0 %v422
      %v1370 = vpop.f32.mrf.mxu0
      %v1371 = vadd.f32 %v1358, %v1370
      %v1372 = vpop.f32.mrf.mxu0
      %1373 = vdwg.mxu0
      %1374 = vmatpush.bf16.msra.mxu0 %v1118
      %1375 = vmatpush.bf16.msra.mxu0 %v1116
      %1376 = vmatpush.bf16.msra.mxu0 %v1114
      %1377 = vmatpush.bf16.msra.mxu0 %v1112
      %1378 = vmatpush.bf16.msra.mxu0 %v1110
      %1379 = vmatpush.bf16.msra.mxu0 %v1108
      %1380 = vmatpush.bf16.msra.mxu0 %v1106
      %1381 = vmatpush.bf16.msra.mxu0 %v1104
      %1382 = vmatmul.bf16.gmra.mxu0 %v423
      %v1383 = vpop.f32.mrf.mxu0
      %v1384 = vadd.f32 %v1371, %v1383
      %v1385 = vpop.f32.mrf.mxu0
      %1386 = vdwg.mxu0
      %1387 = vmatpush.bf16.msra.mxu0 %v1134
      %1388 = vmatpush.bf16.msra.mxu0 %v1132
      %1389 = vmatpush.bf16.msra.mxu0 %v1130
      %1390 = vmatpush.bf16.msra.mxu0 %v1128
      %1391 = vmatpush.bf16.msra.mxu0 %v1126
      %1392 = vmatpush.bf16.msra.mxu0 %v1124
      %1393 = vmatpush.bf16.msra.mxu0 %v1122
      %1394 = vmatpush.bf16.msra.mxu0 %v1120
      %1395 = vmatmul.bf16.gmra.mxu0 %v424
      %v1396 = vpop.f32.mrf.mxu0
      %v1397 = vadd.f32 %v1384, %v1396
      %v1398 = vpop.f32.mrf.mxu0
      %1399 = vdwg.mxu0
      %1400 = vmatpush.bf16.msra.mxu0 %v1150
      %1401 = vmatpush.bf16.msra.mxu0 %v1148
      %1402 = vmatpush.bf16.msra.mxu0 %v1146
      %1403 = vmatpush.bf16.msra.mxu0 %v1144
      %1404 = vmatpush.bf16.msra.mxu0 %v1142
      %1405 = vmatpush.bf16.msra.mxu0 %v1140
      %1406 = vmatpush.bf16.msra.mxu0 %v1138
      %1407 = vmatpush.bf16.msra.mxu0 %v1136
      %1408 = vmatmul.bf16.gmra.mxu0 %v425
      %v1409 = vpop.f32.mrf.mxu0
      %v1410 = vadd.f32 %v1397, %v1409
      %v1411 = vpop.f32.mrf.mxu0
      %1412 = vdwg.mxu0
      %1413 = vmatpush.bf16.msra.mxu0 %v1023
      %1414 = vmatpush.bf16.msra.mxu0 %v1021
      %1415 = vmatpush.bf16.msra.mxu0 %v1019
      %1416 = vmatpush.bf16.msra.mxu0 %v1017
      %1417 = vmatpush.bf16.msra.mxu0 %v1015
      %1418 = vmatpush.bf16.msra.mxu0 %v1013
      %1419 = vmatpush.bf16.msra.mxu0 %v1011
      %1420 = vmatpush.bf16.msra.mxu0 %v1009
      %1421 = vmatmul.bf16.gmra.mxu0 %v417
      %v1422 = vpop.f32.mrf.mxu0
      %v1423 = vadd.f32 %v573, %v1422
      %v1424 = vpop.f32.mrf.mxu0
      %1425 = vdwg.mxu0
      %1426 = vmatpush.bf16.msra.mxu0 %v1039
      %1427 = vmatpush.bf16.msra.mxu0 %v1037
      %1428 = vmatpush.bf16.msra.mxu0 %v1035
      %1429 = vmatpush.bf16.msra.mxu0 %v1033
      %1430 = vmatpush.bf16.msra.mxu0 %v1031
      %1431 = vmatpush.bf16.msra.mxu0 %v1029
      %1432 = vmatpush.bf16.msra.mxu0 %v1027
      %1433 = vmatpush.bf16.msra.mxu0 %v1025
      %1434 = vmatmul.bf16.gmra.mxu0 %v418
      %v1435 = vpop.f32.mrf.mxu0
      %v1436 = vadd.f32 %v1423, %v1435
      %v1437 = vpop.f32.mrf.mxu0
      %1438 = vdwg.mxu0
      %1439 = vmatpush.bf16.msra.mxu0 %v1055
      %1440 = vmatpush.bf16.msra.mxu0 %v1053
      %1441 = vmatpush.bf16.msra.mxu0 %v1051
      %1442 = vmatpush.bf16.msra.mxu0 %v1049
      %1443 = vmatpush.bf16.msra.mxu0 %v1047
      %1444 = vmatpush.bf16.msra.mxu0 %v1045
      %1445 = vmatpush.bf16.msra.mxu0 %v1043
      %1446 = vmatpush.bf16.msra.mxu0 %v1041
      %1447 = vmatmul.bf16.gmra.mxu0 %v419
      %v1448 = vpop.f32.mrf.mxu0
      %v1449 = vadd.f32 %v1436, %v1448
      %v1450 = vpop.f32.mrf.mxu0
      %1451 = vdwg.mxu0
      %1452 = vmatpush.bf16.msra.mxu0 %v1071
      %1453 = vmatpush.bf16.msra.mxu0 %v1069
      %1454 = vmatpush.bf16.msra.mxu0 %v1067
      %1455 = vmatpush.bf16.msra.mxu0 %v1065
      %1456 = vmatpush.bf16.msra.mxu0 %v1063
      %1457 = vmatpush.bf16.msra.mxu0 %v1061
      %1458 = vmatpush.bf16.msra.mxu0 %v1059
      %1459 = vmatpush.bf16.msra.mxu0 %v1057
      %1460 = vmatmul.bf16.gmra.mxu0 %v420
      %v1461 = vpop.f32.mrf.mxu0
      %v1462 = vadd.f32 %v1449, %v1461
      %v1463 = vpop.f32.mrf.mxu0
      %1464 = vdwg.mxu0
      %1465 = vmatpush.bf16.msra.mxu0 %v1087
      %1466 = vmatpush.bf16.msra.mxu0 %v1085
      %1467 = vmatpush.bf16.msra.mxu0 %v1083
      %1468 = vmatpush.bf16.msra.mxu0 %v1081
      %1469 = vmatpush.bf16.msra.mxu0 %v1079
      %1470 = vmatpush.bf16.msra.mxu0 %v1077
      %1471 = vmatpush.bf16.msra.mxu0 %v1075
      %1472 = vmatpush.bf16.msra.mxu0 %v1073
      %1473 = vmatmul.bf16.gmra.mxu0 %v421
      %v1474 = vpop.f32.mrf.mxu0
      %v1475 = vadd.f32 %v1462, %v1474
      %v1476 = vpop.f32.mrf.mxu0
      %1477 = vdwg.mxu0
      %1478 = vmatpush.bf16.msra.mxu0 %v1103
      %1479 = vmatpush.bf16.msra.mxu0 %v1101
      %1480 = vmatpush.bf16.msra.mxu0 %v1099
      %1481 = vmatpush.bf16.msra.mxu0 %v1097
      %1482 = vmatpush.bf16.msra.mxu0 %v1095
      %1483 = vmatpush.bf16.msra.mxu0 %v1093
      %1484 = vmatpush.bf16.msra.mxu0 %v1091
      %1485 = vmatpush.bf16.msra.mxu0 %v1089
      %1486 = vmatmul.bf16.gmra.mxu0 %v422
      %v1487 = vpop.f32.mrf.mxu0
      %v1488 = vadd.f32 %v1475, %v1487
      %v1489 = vpop.f32.mrf.mxu0
      %1490 = vdwg.mxu0
      %1491 = vmatpush.bf16.msra.mxu0 %v1119
      %1492 = vmatpush.bf16.msra.mxu0 %v1117
      %1493 = vmatpush.bf16.msra.mxu0 %v1115
      %1494 = vmatpush.bf16.msra.mxu0 %v1113
      %1495 = vmatpush.bf16.msra.mxu0 %v1111
      %1496 = vmatpush.bf16.msra.mxu0 %v1109
      %1497 = vmatpush.bf16.msra.mxu0 %v1107
      %1498 = vmatpush.bf16.msra.mxu0 %v1105
      %1499 = vmatmul.bf16.gmra.mxu0 %v423
      %v1500 = vpop.f32.mrf.mxu0
      %v1501 = vadd.f32 %v1488, %v1500
      %v1502 = vpop.f32.mrf.mxu0
      %1503 = vdwg.mxu0
      %1504 = vmatpush.bf16.msra.mxu0 %v1135
      %1505 = vmatpush.bf16.msra.mxu0 %v1133
      %1506 = vmatpush.bf16.msra.mxu0 %v1131
      %1507 = vmatpush.bf16.msra.mxu0 %v1129
      %1508 = vmatpush.bf16.msra.mxu0 %v1127
      %1509 = vmatpush.bf16.msra.mxu0 %v1125
      %1510 = vmatpush.bf16.msra.mxu0 %v1123
      %1511 = vmatpush.bf16.msra.mxu0 %v1121
      %1512 = vmatmul.bf16.gmra.mxu0 %v424
      %v1513 = vpop.f32.mrf.mxu0
      %v1514 = vadd.f32 %v1501, %v1513
      %v1515 = vpop.f32.mrf.mxu0
      %1516 = vdwg.mxu0
      %1517 = vmatpush.bf16.msra.mxu0 %v1151
      %1518 = vmatpush.bf16.msra.mxu0 %v1149
      %1519 = vmatpush.bf16.msra.mxu0 %v1147
      %1520 = vmatpush.bf16.msra.mxu0 %v1145
      %1521 = vmatpush.bf16.msra.mxu0 %v1143
      %1522 = vmatpush.bf16.msra.mxu0 %v1141
      %1523 = vmatpush.bf16.msra.mxu0 %v1139
      %1524 = vmatpush.bf16.msra.mxu0 %v1137
      %1525 = vmatmul.bf16.gmra.mxu0 %v425
      %v1526 = vpop.f32.mrf.mxu0
      %v1527 = vadd.f32 %v1514, %v1526
      %v1528 = vpop.f32.mrf.mxu0
      %1529 = vdwg.mxu0
      %v1530 = vmax.f32 %v1410, 0.0
      %v1531 = vmax.f32 %v1527, 0.0
      %1532 = vst [vmem:[#allocation3] sm:$0x7] %v1530
      %1533 = vst [vmem:[#allocation3 + $0x8] sm:$0x7] %v1531
      %v1534 = vld [vmem:[%s411] ss:$2 sm:$0x7]
      %v1535 = vld [vmem:[%s413] ss:$2 sm:$0x7]
      %v1536 = vld [vmem:[%s415] ss:$2 sm:$0x7]
      %s1537 = scalar_lea.vmem [#allocation2], 21
      %v1538 = vld [vmem:[%s1537] ss:$2 sm:$0x7]
      %s1539 = scalar_lea.vmem [#allocation2], 22
      %v1540 = vld [vmem:[%s1539] ss:$2 sm:$0x7]
      %s1541 = scalar_lea.vmem [#allocation2], 23
      %v1542 = vld [vmem:[%s1541] ss:$2 sm:$0x7]
      %s1543 = scalar_lea.vmem [#allocation2], 28
      %v1544 = vld [vmem:[%s1543] ss:$2 sm:$0x7]
      %s1545 = scalar_lea.vmem [#allocation2], 29
      %v1546 = vld [vmem:[%s1545] ss:$2 sm:$0x7]
      %s1547 = scalar_lea.vmem [#allocation2], 30
      %v1548 = vld [vmem:[%s1547] ss:$2 sm:$0x7]
      %v1549 = vpack.c.bf16 %v1534, %v1534
      %v1550 = vpack.c.bf16 %v1535, %v1535
      %v1551 = vpack.c.bf16 %v1536, %v1536
      %v1552 = vpack.c.bf16 %v1538, %v1538
      %v1553 = vpack.c.bf16 %v1540, %v1540
      %v1554 = vpack.c.bf16 %v1542, %v1542
      %v1555 = vpack.c.bf16 %v1544, %v1544
      %v1556 = vpack.c.bf16 %v1546, %v1546
      %v1557 = vpack.c.bf16 %v1548, %v1548
      %v1558 = vld [vmem:[%s3] sm:$0xff]
      %v1559 = vld [vmem:[%s3 + $0x8] sm:$0xff]
      %v1560 = vld [vmem:[%s3 + $0x10] sm:$0xff]
      %v1561 = vld [vmem:[%s3 + $0x18] sm:$0xff]
      %v1562 = vld [vmem:[%s3 + $0x20] sm:$0xff]
      %v1563 = vld [vmem:[%s3 + $0x28] sm:$0xff]
      %v1564 = vld [vmem:[%s3 + $0x30] sm:$0xff]
      %v1565 = vld [vmem:[%s3 + $0x38] sm:$0xff]
      %v1566 = vld [vmem:[%s3 + $0x40] sm:$0xff]
      %v1567 = vld [vmem:[%s3 + $0x48] sm:$0xff]
      %v1568 = vld [vmem:[%s3 + $0x50] sm:$0xff]
      %v1569 = vld [vmem:[%s3 + $0x58] sm:$0xff]
      %v1570 = vld [vmem:[%s3 + $0x60] sm:$0xff]
      %v1571 = vld [vmem:[%s3 + $0x68] sm:$0xff]
      %v1572 = vld [vmem:[%s3 + $0x70] sm:$0xff]
      %v1573 = vld [vmem:[%s3 + $0x78] sm:$0xff]
      %v1574 = vld [vmem:[%s3 + $0x80] sm:$0xff]
      %v1575 = vld [vmem:[%s3 + $0x88] sm:$0xff]
      %v1576 = vld [vmem:[%s3 + $0x90] sm:$0xff]
      %v1577 = vld [vmem:[%s3 + $0x98] sm:$0xff]
      %v1578 = vld [vmem:[%s3 + $0xa0] sm:$0xff]
      %v1579 = vld [vmem:[%s3 + $0xa8] sm:$0xff]
      %v1580 = vld [vmem:[%s3 + $0xb0] sm:$0xff]
      %v1581 = vld [vmem:[%s3 + $0xb8] sm:$0xff]
      %v1582 = vld [vmem:[%s3 + $0xc0] sm:$0xff]
      %v1583 = vld [vmem:[%s3 + $0xc8] sm:$0xff]
      %v1584 = vld [vmem:[%s3 + $0xd0] sm:$0xff]
      %v1585 = vld [vmem:[%s3 + $0xd8] sm:$0xff]
      %v1586 = vld [vmem:[%s3 + $0xe0] sm:$0xff]
      %v1587 = vld [vmem:[%s3 + $0xe8] sm:$0xff]
      %v1588 = vld [vmem:[%s3 + $0xf0] sm:$0xff]
      %v1589 = vld [vmem:[%s3 + $0xf8] sm:$0xff]
      %v1590 = vld [vmem:[%s3 + $0x100] sm:$0xff]
      %v1591 = vld [vmem:[%s3 + $0x108] sm:$0xff]
      %v1592 = vld [vmem:[%s3 + $0x110] sm:$0xff]
      %v1593 = vld [vmem:[%s3 + $0x118] sm:$0xff]
      %v1594 = vld [vmem:[%s3 + $0x120] sm:$0xff]
      %v1595 = vld [vmem:[%s3 + $0x128] sm:$0xff]
      %v1596 = vld [vmem:[%s3 + $0x130] sm:$0xff]
      %v1597 = vld [vmem:[%s3 + $0x138] sm:$0xff]
      %v1598 = vld [vmem:[%s3 + $0x140] sm:$0xff]
      %v1599 = vld [vmem:[%s3 + $0x148] sm:$0xff]
      %v1600 = vld [vmem:[%s3 + $0x150] sm:$0xff]
      %v1601 = vld [vmem:[%s3 + $0x158] sm:$0xff]
      %v1602 = vld [vmem:[%s3 + $0x160] sm:$0xff]
      %v1603 = vld [vmem:[%s3 + $0x168] sm:$0xff]
      %v1604 = vld [vmem:[%s3 + $0x170] sm:$0xff]
      %v1605 = vld [vmem:[%s3 + $0x178] sm:$0xff]
      %v1606 = vld [vmem:[%s3 + $0x180] sm:$0xff]
      %v1607 = vld [vmem:[%s3 + $0x188] sm:$0xff]
      %v1608 = vld [vmem:[%s3 + $0x190] sm:$0xff]
      %v1609 = vld [vmem:[%s3 + $0x198] sm:$0xff]
      %v1610 = vld [vmem:[%s3 + $0x1a0] sm:$0xff]
      %v1611 = vld [vmem:[%s3 + $0x1a8] sm:$0xff]
      %v1612 = vld [vmem:[%s3 + $0x1b0] sm:$0xff]
      %v1613 = vld [vmem:[%s3 + $0x1b8] sm:$0xff]
      %v1614 = vld [vmem:[%s3 + $0x1c0] sm:$0xff]
      %v1615 = vld [vmem:[%s3 + $0x1c8] sm:$0xff]
      %v1616 = vld [vmem:[%s3 + $0x1d0] sm:$0xff]
      %v1617 = vld [vmem:[%s3 + $0x1d8] sm:$0xff]
      %v1618 = vld [vmem:[%s3 + $0x1e0] sm:$0xff]
      %v1619 = vld [vmem:[%s3 + $0x1e8] sm:$0xff]
      %v1620 = vld [vmem:[%s3 + $0x1f0] sm:$0xff]
      %v1621 = vld [vmem:[%s3 + $0x1f8] sm:$0xff]
      %v1622 = vld [vmem:[%s3 + $0x200] sm:$0xff]
      %v1623 = vld [vmem:[%s3 + $0x208] sm:$0xff]
      %v1624 = vld [vmem:[%s3 + $0x210] sm:$0xff]
      %v1625 = vld [vmem:[%s3 + $0x218] sm:$0xff]
      %v1626 = vld [vmem:[%s3 + $0x220] sm:$0xff]
      %v1627 = vld [vmem:[%s3 + $0x228] sm:$0xff]
      %v1628 = vld [vmem:[%s3 + $0x230] sm:$0xff]
      %v1629 = vld [vmem:[%s3 + $0x238] sm:$0xff]
      %v1630 = vld [vmem:[%s3 + $0x240] sm:$0xff]
      %v1631 = vld [vmem:[%s3 + $0x248] sm:$0xff]
      %v1632 = vld [vmem:[%s3 + $0x250] sm:$0xff]
      %v1633 = vld [vmem:[%s3 + $0x258] sm:$0xff]
      %v1634 = vld [vmem:[%s3 + $0x260] sm:$0xff]
      %v1635 = vld [vmem:[%s3 + $0x268] sm:$0xff]
      %v1636 = vld [vmem:[%s3 + $0x270] sm:$0xff]
      %v1637 = vld [vmem:[%s3 + $0x278] sm:$0xff]
      %v1638 = vld [vmem:[%s3 + $0x280] sm:$0xff]
      %v1639 = vld [vmem:[%s3 + $0x288] sm:$0xff]
      %v1640 = vld [vmem:[%s3 + $0x290] sm:$0xff]
      %v1641 = vld [vmem:[%s3 + $0x298] sm:$0xff]
      %v1642 = vld [vmem:[%s3 + $0x2a0] sm:$0xff]
      %v1643 = vld [vmem:[%s3 + $0x2a8] sm:$0xff]
      %v1644 = vld [vmem:[%s3 + $0x2b0] sm:$0xff]
      %v1645 = vld [vmem:[%s3 + $0x2b8] sm:$0xff]
      %v1646 = vld [vmem:[%s3 + $0x2c0] sm:$0xff]
      %v1647 = vld [vmem:[%s3 + $0x2c8] sm:$0xff]
      %v1648 = vld [vmem:[%s3 + $0x2d0] sm:$0xff]
      %v1649 = vld [vmem:[%s3 + $0x2d8] sm:$0xff]
      %v1650 = vld [vmem:[%s3 + $0x2e0] sm:$0xff]
      %v1651 = vld [vmem:[%s3 + $0x2e8] sm:$0xff]
      %v1652 = vld [vmem:[%s3 + $0x2f0] sm:$0xff]
      %v1653 = vld [vmem:[%s3 + $0x2f8] sm:$0xff]
      %v1654 = vld [vmem:[%s3 + $0x300] sm:$0xff]
      %v1655 = vld [vmem:[%s3 + $0x308] sm:$0xff]
      %v1656 = vld [vmem:[%s3 + $0x310] sm:$0xff]
      %v1657 = vld [vmem:[%s3 + $0x318] sm:$0xff]
      %v1658 = vld [vmem:[%s3 + $0x320] sm:$0xff]
      %v1659 = vld [vmem:[%s3 + $0x328] sm:$0xff]
      %v1660 = vld [vmem:[%s3 + $0x330] sm:$0xff]
      %v1661 = vld [vmem:[%s3 + $0x338] sm:$0xff]
      %v1662 = vld [vmem:[%s3 + $0x340] sm:$0xff]
      %v1663 = vld [vmem:[%s3 + $0x348] sm:$0xff]
      %v1664 = vld [vmem:[%s3 + $0x350] sm:$0xff]
      %v1665 = vld [vmem:[%s3 + $0x358] sm:$0xff]
      %v1666 = vld [vmem:[%s3 + $0x360] sm:$0xff]
      %v1667 = vld [vmem:[%s3 + $0x368] sm:$0xff]
      %v1668 = vld [vmem:[%s3 + $0x370] sm:$0xff]
      %v1669 = vld [vmem:[%s3 + $0x378] sm:$0xff]
      %v1670 = vld [vmem:[%s3 + $0x380] sm:$0xff]
      %v1671 = vld [vmem:[%s3 + $0x388] sm:$0xff]
      %v1672 = vld [vmem:[%s3 + $0x390] sm:$0xff]
      %v1673 = vld [vmem:[%s3 + $0x398] sm:$0xff]
      %v1674 = vld [vmem:[%s3 + $0x3a0] sm:$0xff]
      %v1675 = vld [vmem:[%s3 + $0x3a8] sm:$0xff]
      %v1676 = vld [vmem:[%s3 + $0x3b0] sm:$0xff]
      %v1677 = vld [vmem:[%s3 + $0x3b8] sm:$0xff]
      %v1678 = vld [vmem:[%s3 + $0x3c0] sm:$0xff]
      %v1679 = vld [vmem:[%s3 + $0x3c8] sm:$0xff]
      %v1680 = vld [vmem:[%s3 + $0x3d0] sm:$0xff]
      %v1681 = vld [vmem:[%s3 + $0x3d8] sm:$0xff]
      %v1682 = vld [vmem:[%s3 + $0x3e0] sm:$0xff]
      %v1683 = vld [vmem:[%s3 + $0x3e8] sm:$0xff]
      %v1684 = vld [vmem:[%s3 + $0x3f0] sm:$0xff]
      %v1685 = vld [vmem:[%s3 + $0x3f8] sm:$0xff]
      %v1686 = vld [vmem:[%s3 + $0x400] sm:$0xff]
      %v1687 = vld [vmem:[%s3 + $0x408] sm:$0xff]
      %v1688 = vld [vmem:[%s3 + $0x410] sm:$0xff]
      %v1689 = vld [vmem:[%s3 + $0x418] sm:$0xff]
      %v1690 = vld [vmem:[%s3 + $0x420] sm:$0xff]
      %v1691 = vld [vmem:[%s3 + $0x428] sm:$0xff]
      %v1692 = vld [vmem:[%s3 + $0x430] sm:$0xff]
      %v1693 = vld [vmem:[%s3 + $0x438] sm:$0xff]
      %v1694 = vld [vmem:[%s3 + $0x440] sm:$0xff]
      %v1695 = vld [vmem:[%s3 + $0x448] sm:$0xff]
      %v1696 = vld [vmem:[%s3 + $0x450] sm:$0xff]
      %v1697 = vld [vmem:[%s3 + $0x458] sm:$0xff]
      %v1698 = vld [vmem:[%s3 + $0x460] sm:$0xff]
      %v1699 = vld [vmem:[%s3 + $0x468] sm:$0xff]
      %v1700 = vld [vmem:[%s3 + $0x470] sm:$0xff]
      %v1701 = vld [vmem:[%s3 + $0x478] sm:$0xff]
      %v1702 = vld [vmem:[%s4] sm:$0x3]
      %v1704 = vperm.slane %v1702, 0
      %v1705 = vperm.slane %v1702, 1
      %v1852 = vunpack.c.l.b16 %v1558
      %v1853 = vunpack.c.h.b16 %v1558
      %v1854 = vunpack.c.l.b16 %v1559
      %v1855 = vunpack.c.h.b16 %v1559
      %v1856 = vunpack.c.l.b16 %v1560
      %v1857 = vunpack.c.h.b16 %v1560
      %v1858 = vunpack.c.l.b16 %v1561
      %v1859 = vunpack.c.h.b16 %v1561
      %v1860 = vunpack.c.l.b16 %v1562
      %v1861 = vunpack.c.h.b16 %v1562
      %v1862 = vunpack.c.l.b16 %v1563
      %v1863 = vunpack.c.h.b16 %v1563
      %v1864 = vunpack.c.l.b16 %v1564
      %v1865 = vunpack.c.h.b16 %v1564
      %v1866 = vunpack.c.l.b16 %v1565
      %v1867 = vunpack.c.h.b16 %v1565
      %v1868 = vunpack.c.l.b16 %v1566
      %v1869 = vunpack.c.h.b16 %v1566
      %v1870 = vunpack.c.l.b16 %v1567
      %v1871 = vunpack.c.h.b16 %v1567
      %v1872 = vunpack.c.l.b16 %v1568
      %v1873 = vunpack.c.h.b16 %v1568
      %v1874 = vunpack.c.l.b16 %v1569
      %v1875 = vunpack.c.h.b16 %v1569
      %v1876 = vunpack.c.l.b16 %v1570
      %v1877 = vunpack.c.h.b16 %v1570
      %v1878 = vunpack.c.l.b16 %v1571
      %v1879 = vunpack.c.h.b16 %v1571
      %v1880 = vunpack.c.l.b16 %v1572
      %v1881 = vunpack.c.h.b16 %v1572
      %v1882 = vunpack.c.l.b16 %v1573
      %v1883 = vunpack.c.h.b16 %v1573
      %v1884 = vunpack.c.l.b16 %v1574
      %v1885 = vunpack.c.h.b16 %v1574
      %v1886 = vunpack.c.l.b16 %v1575
      %v1887 = vunpack.c.h.b16 %v1575
      %v1888 = vunpack.c.l.b16 %v1576
      %v1889 = vunpack.c.h.b16 %v1576
      %v1890 = vunpack.c.l.b16 %v1577
      %v1891 = vunpack.c.h.b16 %v1577
      %v1892 = vunpack.c.l.b16 %v1578
      %v1893 = vunpack.c.h.b16 %v1578
      %v1894 = vunpack.c.l.b16 %v1579
      %v1895 = vunpack.c.h.b16 %v1579
      %v1896 = vunpack.c.l.b16 %v1580
      %v1897 = vunpack.c.h.b16 %v1580
      %v1898 = vunpack.c.l.b16 %v1581
      %v1899 = vunpack.c.h.b16 %v1581
      %v1900 = vunpack.c.l.b16 %v1582
      %v1901 = vunpack.c.h.b16 %v1582
      %v1902 = vunpack.c.l.b16 %v1583
      %v1903 = vunpack.c.h.b16 %v1583
      %v1904 = vunpack.c.l.b16 %v1584
      %v1905 = vunpack.c.h.b16 %v1584
      %v1906 = vunpack.c.l.b16 %v1585
      %v1907 = vunpack.c.h.b16 %v1585
      %v1908 = vunpack.c.l.b16 %v1586
      %v1909 = vunpack.c.h.b16 %v1586
      %v1910 = vunpack.c.l.b16 %v1587
      %v1911 = vunpack.c.h.b16 %v1587
      %v1912 = vunpack.c.l.b16 %v1588
      %v1913 = vunpack.c.h.b16 %v1588
      %v1914 = vunpack.c.l.b16 %v1589
      %v1915 = vunpack.c.h.b16 %v1589
      %v1916 = vunpack.c.l.b16 %v1590
      %v1917 = vunpack.c.h.b16 %v1590
      %v1918 = vunpack.c.l.b16 %v1591
      %v1919 = vunpack.c.h.b16 %v1591
      %v1920 = vunpack.c.l.b16 %v1592
      %v1921 = vunpack.c.h.b16 %v1592
      %v1922 = vunpack.c.l.b16 %v1593
      %v1923 = vunpack.c.h.b16 %v1593
      %v1924 = vunpack.c.l.b16 %v1594
      %v1925 = vunpack.c.h.b16 %v1594
      %v1926 = vunpack.c.l.b16 %v1595
      %v1927 = vunpack.c.h.b16 %v1595
      %v1928 = vunpack.c.l.b16 %v1596
      %v1929 = vunpack.c.h.b16 %v1596
      %v1930 = vunpack.c.l.b16 %v1597
      %v1931 = vunpack.c.h.b16 %v1597
      %v1932 = vunpack.c.l.b16 %v1598
      %v1933 = vunpack.c.h.b16 %v1598
      %v1934 = vunpack.c.l.b16 %v1599
      %v1935 = vunpack.c.h.b16 %v1599
      %v1936 = vunpack.c.l.b16 %v1600
      %v1937 = vunpack.c.h.b16 %v1600
      %v1938 = vunpack.c.l.b16 %v1601
      %v1939 = vunpack.c.h.b16 %v1601
      %v1940 = vunpack.c.l.b16 %v1602
      %v1941 = vunpack.c.h.b16 %v1602
      %v1942 = vunpack.c.l.b16 %v1603
      %v1943 = vunpack.c.h.b16 %v1603
      %v1944 = vunpack.c.l.b16 %v1604
      %v1945 = vunpack.c.h.b16 %v1604
      %v1946 = vunpack.c.l.b16 %v1605
      %v1947 = vunpack.c.h.b16 %v1605
      %v1948 = vunpack.c.l.b16 %v1606
      %v1949 = vunpack.c.h.b16 %v1606
      %v1950 = vunpack.c.l.b16 %v1607
      %v1951 = vunpack.c.h.b16 %v1607
      %v1952 = vunpack.c.l.b16 %v1608
      %v1953 = vunpack.c.h.b16 %v1608
      %v1954 = vunpack.c.l.b16 %v1609
      %v1955 = vunpack.c.h.b16 %v1609
      %v1956 = vunpack.c.l.b16 %v1610
      %v1957 = vunpack.c.h.b16 %v1610
      %v1958 = vunpack.c.l.b16 %v1611
      %v1959 = vunpack.c.h.b16 %v1611
      %v1960 = vunpack.c.l.b16 %v1612
      %v1961 = vunpack.c.h.b16 %v1612
      %v1962 = vunpack.c.l.b16 %v1613
      %v1963 = vunpack.c.h.b16 %v1613
      %v1964 = vunpack.c.l.b16 %v1614
      %v1965 = vunpack.c.h.b16 %v1614
      %v1966 = vunpack.c.l.b16 %v1615
      %v1967 = vunpack.c.h.b16 %v1615
      %v1968 = vunpack.c.l.b16 %v1616
      %v1969 = vunpack.c.h.b16 %v1616
      %v1970 = vunpack.c.l.b16 %v1617
      %v1971 = vunpack.c.h.b16 %v1617
      %v1972 = vunpack.c.l.b16 %v1618
      %v1973 = vunpack.c.h.b16 %v1618
      %v1974 = vunpack.c.l.b16 %v1619
      %v1975 = vunpack.c.h.b16 %v1619
      %v1976 = vunpack.c.l.b16 %v1620
      %v1977 = vunpack.c.h.b16 %v1620
      %v1978 = vunpack.c.l.b16 %v1621
      %v1979 = vunpack.c.h.b16 %v1621
      %v1980 = vunpack.c.l.b16 %v1622
      %v1981 = vunpack.c.h.b16 %v1622
      %v1982 = vunpack.c.l.b16 %v1623
      %v1983 = vunpack.c.h.b16 %v1623
      %v1984 = vunpack.c.l.b16 %v1624
      %v1985 = vunpack.c.h.b16 %v1624
      %v1986 = vunpack.c.l.b16 %v1625
      %v1987 = vunpack.c.h.b16 %v1625
      %v1988 = vunpack.c.l.b16 %v1626
      %v1989 = vunpack.c.h.b16 %v1626
      %v1990 = vunpack.c.l.b16 %v1627
      %v1991 = vunpack.c.h.b16 %v1627
      %v1992 = vunpack.c.l.b16 %v1628
      %v1993 = vunpack.c.h.b16 %v1628
      %v1994 = vunpack.c.l.b16 %v1629
      %v1995 = vunpack.c.h.b16 %v1629
      %v1996 = vunpack.c.l.b16 %v1630
      %v1997 = vunpack.c.h.b16 %v1630
      %v1998 = vunpack.c.l.b16 %v1631
      %v1999 = vunpack.c.h.b16 %v1631
      %v2000 = vunpack.c.l.b16 %v1632
      %v2001 = vunpack.c.h.b16 %v1632
      %v2002 = vunpack.c.l.b16 %v1633
      %v2003 = vunpack.c.h.b16 %v1633
      %v2004 = vunpack.c.l.b16 %v1634
      %v2005 = vunpack.c.h.b16 %v1634
      %v2006 = vunpack.c.l.b16 %v1635
      %v2007 = vunpack.c.h.b16 %v1635
      %v2008 = vunpack.c.l.b16 %v1636
      %v2009 = vunpack.c.h.b16 %v1636
      %v2010 = vunpack.c.l.b16 %v1637
      %v2011 = vunpack.c.h.b16 %v1637
      %v2012 = vunpack.c.l.b16 %v1638
      %v2013 = vunpack.c.h.b16 %v1638
      %v2014 = vunpack.c.l.b16 %v1639
      %v2015 = vunpack.c.h.b16 %v1639
      %v2016 = vunpack.c.l.b16 %v1640
      %v2017 = vunpack.c.h.b16 %v1640
      %v2018 = vunpack.c.l.b16 %v1641
      %v2019 = vunpack.c.h.b16 %v1641
      %v2020 = vunpack.c.l.b16 %v1642
      %v2021 = vunpack.c.h.b16 %v1642
      %v2022 = vunpack.c.l.b16 %v1643
      %v2023 = vunpack.c.h.b16 %v1643
      %v2024 = vunpack.c.l.b16 %v1644
      %v2025 = vunpack.c.h.b16 %v1644
      %v2026 = vunpack.c.l.b16 %v1645
      %v2027 = vunpack.c.h.b16 %v1645
      %v2028 = vunpack.c.l.b16 %v1646
      %v2029 = vunpack.c.h.b16 %v1646
      %v2030 = vunpack.c.l.b16 %v1647
      %v2031 = vunpack.c.h.b16 %v1647
      %v2032 = vunpack.c.l.b16 %v1648
      %v2033 = vunpack.c.h.b16 %v1648
      %v2034 = vunpack.c.l.b16 %v1649
      %v2035 = vunpack.c.h.b16 %v1649
      %v2036 = vunpack.c.l.b16 %v1650
      %v2037 = vunpack.c.h.b16 %v1650
      %v2038 = vunpack.c.l.b16 %v1651
      %v2039 = vunpack.c.h.b16 %v1651
      %v2040 = vunpack.c.l.b16 %v1652
      %v2041 = vunpack.c.h.b16 %v1652
      %v2042 = vunpack.c.l.b16 %v1653
      %v2043 = vunpack.c.h.b16 %v1653
      %v2044 = vunpack.c.l.b16 %v1654
      %v2045 = vunpack.c.h.b16 %v1654
      %v2046 = vunpack.c.l.b16 %v1655
      %v2047 = vunpack.c.h.b16 %v1655
      %v2048 = vunpack.c.l.b16 %v1656
      %v2049 = vunpack.c.h.b16 %v1656
      %v2050 = vunpack.c.l.b16 %v1657
      %v2051 = vunpack.c.h.b16 %v1657
      %v2052 = vunpack.c.l.b16 %v1658
      %v2053 = vunpack.c.h.b16 %v1658
      %v2054 = vunpack.c.l.b16 %v1659
      %v2055 = vunpack.c.h.b16 %v1659
      %v2056 = vunpack.c.l.b16 %v1660
      %v2057 = vunpack.c.h.b16 %v1660
      %v2058 = vunpack.c.l.b16 %v1661
      %v2059 = vunpack.c.h.b16 %v1661
      %v2060 = vunpack.c.l.b16 %v1662
      %v2061 = vunpack.c.h.b16 %v1662
      %v2062 = vunpack.c.l.b16 %v1663
      %v2063 = vunpack.c.h.b16 %v1663
      %v2064 = vunpack.c.l.b16 %v1664
      %v2065 = vunpack.c.h.b16 %v1664
      %v2066 = vunpack.c.l.b16 %v1665
      %v2067 = vunpack.c.h.b16 %v1665
      %v2068 = vunpack.c.l.b16 %v1666
      %v2069 = vunpack.c.h.b16 %v1666
      %v2070 = vunpack.c.l.b16 %v1667
      %v2071 = vunpack.c.h.b16 %v1667
      %v2072 = vunpack.c.l.b16 %v1668
      %v2073 = vunpack.c.h.b16 %v1668
      %v2074 = vunpack.c.l.b16 %v1669
      %v2075 = vunpack.c.h.b16 %v1669
      %v2076 = vunpack.c.l.b16 %v1670
      %v2077 = vunpack.c.h.b16 %v1670
      %v2078 = vunpack.c.l.b16 %v1671
      %v2079 = vunpack.c.h.b16 %v1671
      %v2080 = vunpack.c.l.b16 %v1672
      %v2081 = vunpack.c.h.b16 %v1672
      %v2082 = vunpack.c.l.b16 %v1673
      %v2083 = vunpack.c.h.b16 %v1673
      %v2084 = vunpack.c.l.b16 %v1674
      %v2085 = vunpack.c.h.b16 %v1674
      %v2086 = vunpack.c.l.b16 %v1675
      %v2087 = vunpack.c.h.b16 %v1675
      %v2088 = vunpack.c.l.b16 %v1676
      %v2089 = vunpack.c.h.b16 %v1676
      %v2090 = vunpack.c.l.b16 %v1677
      %v2091 = vunpack.c.h.b16 %v1677
      %v2092 = vunpack.c.l.b16 %v1678
      %v2093 = vunpack.c.h.b16 %v1678
      %v2094 = vunpack.c.l.b16 %v1679
      %v2095 = vunpack.c.h.b16 %v1679
      %v2096 = vunpack.c.l.b16 %v1680
      %v2097 = vunpack.c.h.b16 %v1680
      %v2098 = vunpack.c.l.b16 %v1681
      %v2099 = vunpack.c.h.b16 %v1681
      %v2100 = vunpack.c.l.b16 %v1682
      %v2101 = vunpack.c.h.b16 %v1682
      %v2102 = vunpack.c.l.b16 %v1683
      %v2103 = vunpack.c.h.b16 %v1683
      %v2104 = vunpack.c.l.b16 %v1684
      %v2105 = vunpack.c.h.b16 %v1684
      %v2106 = vunpack.c.l.b16 %v1685
      %v2107 = vunpack.c.h.b16 %v1685
      %v2108 = vunpack.c.l.b16 %v1686
      %v2109 = vunpack.c.h.b16 %v1686
      %v2110 = vunpack.c.l.b16 %v1687
      %v2111 = vunpack.c.h.b16 %v1687
      %v2112 = vunpack.c.l.b16 %v1688
      %v2113 = vunpack.c.h.b16 %v1688
      %v2114 = vunpack.c.l.b16 %v1689
      %v2115 = vunpack.c.h.b16 %v1689
      %v2116 = vunpack.c.l.b16 %v1690
      %v2117 = vunpack.c.h.b16 %v1690
      %v2118 = vunpack.c.l.b16 %v1691
      %v2119 = vunpack.c.h.b16 %v1691
      %v2120 = vunpack.c.l.b16 %v1692
      %v2121 = vunpack.c.h.b16 %v1692
      %v2122 = vunpack.c.l.b16 %v1693
      %v2123 = vunpack.c.h.b16 %v1693
      %v2124 = vunpack.c.l.b16 %v1694
      %v2125 = vunpack.c.h.b16 %v1694
      %v2126 = vunpack.c.l.b16 %v1695
      %v2127 = vunpack.c.h.b16 %v1695
      %v2128 = vunpack.c.l.b16 %v1696
      %v2129 = vunpack.c.h.b16 %v1696
      %v2130 = vunpack.c.l.b16 %v1697
      %v2131 = vunpack.c.h.b16 %v1697
      %v2132 = vunpack.c.l.b16 %v1698
      %v2133 = vunpack.c.h.b16 %v1698
      %v2134 = vunpack.c.l.b16 %v1699
      %v2135 = vunpack.c.h.b16 %v1699
      %v2136 = vunpack.c.l.b16 %v1700
      %v2137 = vunpack.c.h.b16 %v1700
      %v2138 = vunpack.c.l.b16 %v1701
      %v2139 = vunpack.c.h.b16 %v1701
      %v2140 = vpack.c.b16 %v1854, %v1852
      %v2141 = vpack.c.b16 %v1855, %v1853
      %v2142 = vpack.c.b16 %v1858, %v1856
      %v2143 = vpack.c.b16 %v1859, %v1857
      %v2144 = vpack.c.b16 %v1862, %v1860
      %v2145 = vpack.c.b16 %v1863, %v1861
      %v2146 = vpack.c.b16 %v1866, %v1864
      %v2147 = vpack.c.b16 %v1867, %v1865
      %v2148 = vpack.c.b16 %v1870, %v1868
      %v2149 = vpack.c.b16 %v1871, %v1869
      %v2150 = vpack.c.b16 %v1874, %v1872
      %v2151 = vpack.c.b16 %v1875, %v1873
      %v2152 = vpack.c.b16 %v1878, %v1876
      %v2153 = vpack.c.b16 %v1879, %v1877
      %v2154 = vpack.c.b16 %v1882, %v1880
      %v2155 = vpack.c.b16 %v1883, %v1881
      %v2156 = vpack.c.b16 %v1886, %v1884
      %v2157 = vpack.c.b16 %v1887, %v1885
      %v2158 = vpack.c.b16 %v1890, %v1888
      %v2159 = vpack.c.b16 %v1891, %v1889
      %v2160 = vpack.c.b16 %v1894, %v1892
      %v2161 = vpack.c.b16 %v1895, %v1893
      %v2162 = vpack.c.b16 %v1898, %v1896
      %v2163 = vpack.c.b16 %v1899, %v1897
      %v2164 = vpack.c.b16 %v1902, %v1900
      %v2165 = vpack.c.b16 %v1903, %v1901
      %v2166 = vpack.c.b16 %v1906, %v1904
      %v2167 = vpack.c.b16 %v1907, %v1905
      %v2168 = vpack.c.b16 %v1910, %v1908
      %v2169 = vpack.c.b16 %v1911, %v1909
      %v2170 = vpack.c.b16 %v1914, %v1912
      %v2171 = vpack.c.b16 %v1915, %v1913
      %v2172 = vpack.c.b16 %v1918, %v1916
      %v2173 = vpack.c.b16 %v1919, %v1917
      %v2174 = vpack.c.b16 %v1922, %v1920
      %v2175 = vpack.c.b16 %v1923, %v1921
      %v2176 = vpack.c.b16 %v1926, %v1924
      %v2177 = vpack.c.b16 %v1927, %v1925
      %v2178 = vpack.c.b16 %v1930, %v1928
      %v2179 = vpack.c.b16 %v1931, %v1929
      %v2180 = vpack.c.b16 %v1934, %v1932
      %v2181 = vpack.c.b16 %v1935, %v1933
      %v2182 = vpack.c.b16 %v1938, %v1936
      %v2183 = vpack.c.b16 %v1939, %v1937
      %v2184 = vpack.c.b16 %v1942, %v1940
      %v2185 = vpack.c.b16 %v1943, %v1941
      %v2186 = vpack.c.b16 %v1946, %v1944
      %v2187 = vpack.c.b16 %v1947, %v1945
      %v2188 = vpack.c.b16 %v1950, %v1948
      %v2189 = vpack.c.b16 %v1951, %v1949
      %v2190 = vpack.c.b16 %v1954, %v1952
      %v2191 = vpack.c.b16 %v1955, %v1953
      %v2192 = vpack.c.b16 %v1958, %v1956
      %v2193 = vpack.c.b16 %v1959, %v1957
      %v2194 = vpack.c.b16 %v1962, %v1960
      %v2195 = vpack.c.b16 %v1963, %v1961
      %v2196 = vpack.c.b16 %v1966, %v1964
      %v2197 = vpack.c.b16 %v1967, %v1965
      %v2198 = vpack.c.b16 %v1970, %v1968
      %v2199 = vpack.c.b16 %v1971, %v1969
      %v2200 = vpack.c.b16 %v1974, %v1972
      %v2201 = vpack.c.b16 %v1975, %v1973
      %v2202 = vpack.c.b16 %v1978, %v1976
      %v2203 = vpack.c.b16 %v1979, %v1977
      %v2204 = vpack.c.b16 %v1982, %v1980
      %v2205 = vpack.c.b16 %v1983, %v1981
      %v2206 = vpack.c.b16 %v1986, %v1984
      %v2207 = vpack.c.b16 %v1987, %v1985
      %v2208 = vpack.c.b16 %v1990, %v1988
      %v2209 = vpack.c.b16 %v1991, %v1989
      %v2210 = vpack.c.b16 %v1994, %v1992
      %v2211 = vpack.c.b16 %v1995, %v1993
      %v2212 = vpack.c.b16 %v1998, %v1996
      %v2213 = vpack.c.b16 %v1999, %v1997
      %v2214 = vpack.c.b16 %v2002, %v2000
      %v2215 = vpack.c.b16 %v2003, %v2001
      %v2216 = vpack.c.b16 %v2006, %v2004
      %v2217 = vpack.c.b16 %v2007, %v2005
      %v2218 = vpack.c.b16 %v2010, %v2008
      %v2219 = vpack.c.b16 %v2011, %v2009
      %v2220 = vpack.c.b16 %v2014, %v2012
      %v2221 = vpack.c.b16 %v2015, %v2013
      %v2222 = vpack.c.b16 %v2018, %v2016
      %v2223 = vpack.c.b16 %v2019, %v2017
      %v2224 = vpack.c.b16 %v2022, %v2020
      %v2225 = vpack.c.b16 %v2023, %v2021
      %v2226 = vpack.c.b16 %v2026, %v2024
      %v2227 = vpack.c.b16 %v2027, %v2025
      %v2228 = vpack.c.b16 %v2030, %v2028
      %v2229 = vpack.c.b16 %v2031, %v2029
      %v2230 = vpack.c.b16 %v2034, %v2032
      %v2231 = vpack.c.b16 %v2035, %v2033
      %v2232 = vpack.c.b16 %v2038, %v2036
      %v2233 = vpack.c.b16 %v2039, %v2037
      %v2234 = vpack.c.b16 %v2042, %v2040
      %v2235 = vpack.c.b16 %v2043, %v2041
      %v2236 = vpack.c.b16 %v2046, %v2044
      %v2237 = vpack.c.b16 %v2047, %v2045
      %v2238 = vpack.c.b16 %v2050, %v2048
      %v2239 = vpack.c.b16 %v2051, %v2049
      %v2240 = vpack.c.b16 %v2054, %v2052
      %v2241 = vpack.c.b16 %v2055, %v2053
      %v2242 = vpack.c.b16 %v2058, %v2056
      %v2243 = vpack.c.b16 %v2059, %v2057
      %v2244 = vpack.c.b16 %v2062, %v2060
      %v2245 = vpack.c.b16 %v2063, %v2061
      %v2246 = vpack.c.b16 %v2066, %v2064
      %v2247 = vpack.c.b16 %v2067, %v2065
      %v2248 = vpack.c.b16 %v2070, %v2068
      %v2249 = vpack.c.b16 %v2071, %v2069
      %v2250 = vpack.c.b16 %v2074, %v2072
      %v2251 = vpack.c.b16 %v2075, %v2073
      %v2252 = vpack.c.b16 %v2078, %v2076
      %v2253 = vpack.c.b16 %v2079, %v2077
      %v2254 = vpack.c.b16 %v2082, %v2080
      %v2255 = vpack.c.b16 %v2083, %v2081
      %v2256 = vpack.c.b16 %v2086, %v2084
      %v2257 = vpack.c.b16 %v2087, %v2085
      %v2258 = vpack.c.b16 %v2090, %v2088
      %v2259 = vpack.c.b16 %v2091, %v2089
      %v2260 = vpack.c.b16 %v2094, %v2092
      %v2261 = vpack.c.b16 %v2095, %v2093
      %v2262 = vpack.c.b16 %v2098, %v2096
      %v2263 = vpack.c.b16 %v2099, %v2097
      %v2264 = vpack.c.b16 %v2102, %v2100
      %v2265 = vpack.c.b16 %v2103, %v2101
      %v2266 = vpack.c.b16 %v2106, %v2104
      %v2267 = vpack.c.b16 %v2107, %v2105
      %v2268 = vpack.c.b16 %v2110, %v2108
      %v2269 = vpack.c.b16 %v2111, %v2109
      %v2270 = vpack.c.b16 %v2114, %v2112
      %v2271 = vpack.c.b16 %v2115, %v2113
      %v2272 = vpack.c.b16 %v2118, %v2116
      %v2273 = vpack.c.b16 %v2119, %v2117
      %v2274 = vpack.c.b16 %v2122, %v2120
      %v2275 = vpack.c.b16 %v2123, %v2121
      %v2276 = vpack.c.b16 %v2126, %v2124
      %v2277 = vpack.c.b16 %v2127, %v2125
      %v2278 = vpack.c.b16 %v2130, %v2128
      %v2279 = vpack.c.b16 %v2131, %v2129
      %v2280 = vpack.c.b16 %v2134, %v2132
      %v2281 = vpack.c.b16 %v2135, %v2133
      %v2282 = vpack.c.b16 %v2138, %v2136
      %v2283 = vpack.c.b16 %v2139, %v2137
      %2428 = vmatpush.bf16.msra.mxu0 %v2154
      %2429 = vmatpush.bf16.msra.mxu0 %v2152
      %2430 = vmatpush.bf16.msra.mxu0 %v2150
      %2431 = vmatpush.bf16.msra.mxu0 %v2148
      %2432 = vmatpush.bf16.msra.mxu0 %v2146
      %2433 = vmatpush.bf16.msra.mxu0 %v2144
      %2434 = vmatpush.bf16.msra.mxu0 %v2142
      %2435 = vmatpush.bf16.msra.mxu0 %v2140
      %2436 = vmatmul.bf16.gmra.mxu0 %v1549
      %v2437 = vpop.f32.mrf.mxu0
      %v2438 = vadd.f32 %v1704, %v2437
      %v2439 = vpop.f32.mrf.mxu0
      %2440 = vdwg.mxu0
      %2441 = vmatpush.bf16.msra.mxu0 %v2170
      %2442 = vmatpush.bf16.msra.mxu0 %v2168
      %2443 = vmatpush.bf16.msra.mxu0 %v2166
      %2444 = vmatpush.bf16.msra.mxu0 %v2164
      %2445 = vmatpush.bf16.msra.mxu0 %v2162
      %2446 = vmatpush.bf16.msra.mxu0 %v2160
      %2447 = vmatpush.bf16.msra.mxu0 %v2158
      %2448 = vmatpush.bf16.msra.mxu0 %v2156
      %2449 = vmatmul.bf16.gmra.mxu0 %v1550
      %v2450 = vpop.f32.mrf.mxu0
      %v2451 = vadd.f32 %v2438, %v2450
      %v2452 = vpop.f32.mrf.mxu0
      %2453 = vdwg.mxu0
      %2454 = vmatpush.bf16.msra.mxu0 %v2186
      %2455 = vmatpush.bf16.msra.mxu0 %v2184
      %2456 = vmatpush.bf16.msra.mxu0 %v2182
      %2457 = vmatpush.bf16.msra.mxu0 %v2180
      %2458 = vmatpush.bf16.msra.mxu0 %v2178
      %2459 = vmatpush.bf16.msra.mxu0 %v2176
      %2460 = vmatpush.bf16.msra.mxu0 %v2174
      %2461 = vmatpush.bf16.msra.mxu0 %v2172
      %2462 = vmatmul.bf16.gmra.mxu0 %v1551
      %v2463 = vpop.f32.mrf.mxu0
      %v2464 = vadd.f32 %v2451, %v2463
      %v2465 = vpop.f32.mrf.mxu0
      %2466 = vdwg.mxu0
      %2467 = vmatpush.bf16.msra.mxu0 %v2202
      %2468 = vmatpush.bf16.msra.mxu0 %v2200
      %2469 = vmatpush.bf16.msra.mxu0 %v2198
      %2470 = vmatpush.bf16.msra.mxu0 %v2196
      %2471 = vmatpush.bf16.msra.mxu0 %v2194
      %2472 = vmatpush.bf16.msra.mxu0 %v2192
      %2473 = vmatpush.bf16.msra.mxu0 %v2190
      %2474 = vmatpush.bf16.msra.mxu0 %v2188
      %2475 = vmatmul.bf16.gmra.mxu0 %v1552
      %v2476 = vpop.f32.mrf.mxu0
      %v2477 = vadd.f32 %v2464, %v2476
      %v2478 = vpop.f32.mrf.mxu0
      %2479 = vdwg.mxu0
      %2480 = vmatpush.bf16.msra.mxu0 %v2218
      %2481 = vmatpush.bf16.msra.mxu0 %v2216
      %2482 = vmatpush.bf16.msra.mxu0 %v2214
      %2483 = vmatpush.bf16.msra.mxu0 %v2212
      %2484 = vmatpush.bf16.msra.mxu0 %v2210
      %2485 = vmatpush.bf16.msra.mxu0 %v2208
      %2486 = vmatpush.bf16.msra.mxu0 %v2206
      %2487 = vmatpush.bf16.msra.mxu0 %v2204
      %2488 = vmatmul.bf16.gmra.mxu0 %v1553
      %v2489 = vpop.f32.mrf.mxu0
      %v2490 = vadd.f32 %v2477, %v2489
      %v2491 = vpop.f32.mrf.mxu0
      %2492 = vdwg.mxu0
      %2493 = vmatpush.bf16.msra.mxu0 %v2234
      %2494 = vmatpush.bf16.msra.mxu0 %v2232
      %2495 = vmatpush.bf16.msra.mxu0 %v2230
      %2496 = vmatpush.bf16.msra.mxu0 %v2228
      %2497 = vmatpush.bf16.msra.mxu0 %v2226
      %2498 = vmatpush.bf16.msra.mxu0 %v2224
      %2499 = vmatpush.bf16.msra.mxu0 %v2222
      %2500 = vmatpush.bf16.msra.mxu0 %v2220
      %2501 = vmatmul.bf16.gmra.mxu0 %v1554
      %v2502 = vpop.f32.mrf.mxu0
      %v2503 = vadd.f32 %v2490, %v2502
      %v2504 = vpop.f32.mrf.mxu0
      %2505 = vdwg.mxu0
      %2506 = vmatpush.bf16.msra.mxu0 %v2250
      %2507 = vmatpush.bf16.msra.mxu0 %v2248
      %2508 = vmatpush.bf16.msra.mxu0 %v2246
      %2509 = vmatpush.bf16.msra.mxu0 %v2244
      %2510 = vmatpush.bf16.msra.mxu0 %v2242
      %2511 = vmatpush.bf16.msra.mxu0 %v2240
      %2512 = vmatpush.bf16.msra.mxu0 %v2238
      %2513 = vmatpush.bf16.msra.mxu0 %v2236
      %2514 = vmatmul.bf16.gmra.mxu0 %v1555
      %v2515 = vpop.f32.mrf.mxu0
      %v2516 = vadd.f32 %v2503, %v2515
      %v2517 = vpop.f32.mrf.mxu0
      %2518 = vdwg.mxu0
      %2519 = vmatpush.bf16.msra.mxu0 %v2266
      %2520 = vmatpush.bf16.msra.mxu0 %v2264
      %2521 = vmatpush.bf16.msra.mxu0 %v2262
      %2522 = vmatpush.bf16.msra.mxu0 %v2260
      %2523 = vmatpush.bf16.msra.mxu0 %v2258
      %2524 = vmatpush.bf16.msra.mxu0 %v2256
      %2525 = vmatpush.bf16.msra.mxu0 %v2254
      %2526 = vmatpush.bf16.msra.mxu0 %v2252
      %2527 = vmatmul.bf16.gmra.mxu0 %v1556
      %v2528 = vpop.f32.mrf.mxu0
      %v2529 = vadd.f32 %v2516, %v2528
      %v2530 = vpop.f32.mrf.mxu0
      %2531 = vdwg.mxu0
      %2532 = vmatpush.bf16.msra.mxu0 %v2282
      %2533 = vmatpush.bf16.msra.mxu0 %v2280
      %2534 = vmatpush.bf16.msra.mxu0 %v2278
      %2535 = vmatpush.bf16.msra.mxu0 %v2276
      %2536 = vmatpush.bf16.msra.mxu0 %v2274
      %2537 = vmatpush.bf16.msra.mxu0 %v2272
      %2538 = vmatpush.bf16.msra.mxu0 %v2270
      %2539 = vmatpush.bf16.msra.mxu0 %v2268
      %2540 = vmatmul.bf16.gmra.mxu0 %v1557
      %v2541 = vpop.f32.mrf.mxu0
      %v2542 = vadd.f32 %v2529, %v2541
      %v2543 = vpop.f32.mrf.mxu0
      %2544 = vdwg.mxu0
      %2545 = vmatpush.bf16.msra.mxu0 %v2155
      %2546 = vmatpush.bf16.msra.mxu0 %v2153
      %2547 = vmatpush.bf16.msra.mxu0 %v2151
      %2548 = vmatpush.bf16.msra.mxu0 %v2149
      %2549 = vmatpush.bf16.msra.mxu0 %v2147
      %2550 = vmatpush.bf16.msra.mxu0 %v2145
      %2551 = vmatpush.bf16.msra.mxu0 %v2143
      %2552 = vmatpush.bf16.msra.mxu0 %v2141
      %2553 = vmatmul.bf16.gmra.mxu0 %v1549
      %v2554 = vpop.f32.mrf.mxu0
      %v2555 = vadd.f32 %v1705, %v2554
      %v2556 = vpop.f32.mrf.mxu0
      %2557 = vdwg.mxu0
      %2558 = vmatpush.bf16.msra.mxu0 %v2171
      %2559 = vmatpush.bf16.msra.mxu0 %v2169
      %2560 = vmatpush.bf16.msra.mxu0 %v2167
      %2561 = vmatpush.bf16.msra.mxu0 %v2165
      %2562 = vmatpush.bf16.msra.mxu0 %v2163
      %2563 = vmatpush.bf16.msra.mxu0 %v2161
      %2564 = vmatpush.bf16.msra.mxu0 %v2159
      %2565 = vmatpush.bf16.msra.mxu0 %v2157
      %2566 = vmatmul.bf16.gmra.mxu0 %v1550
      %v2567 = vpop.f32.mrf.mxu0
      %v2568 = vadd.f32 %v2555, %v2567
      %v2569 = vpop.f32.mrf.mxu0
      %2570 = vdwg.mxu0
      %2571 = vmatpush.bf16.msra.mxu0 %v2187
      %2572 = vmatpush.bf16.msra.mxu0 %v2185
      %2573 = vmatpush.bf16.msra.mxu0 %v2183
      %2574 = vmatpush.bf16.msra.mxu0 %v2181
      %2575 = vmatpush.bf16.msra.mxu0 %v2179
      %2576 = vmatpush.bf16.msra.mxu0 %v2177
      %2577 = vmatpush.bf16.msra.mxu0 %v2175
      %2578 = vmatpush.bf16.msra.mxu0 %v2173
      %2579 = vmatmul.bf16.gmra.mxu0 %v1551
      %v2580 = vpop.f32.mrf.mxu0
      %v2581 = vadd.f32 %v2568, %v2580
      %v2582 = vpop.f32.mrf.mxu0
      %2583 = vdwg.mxu0
      %2584 = vmatpush.bf16.msra.mxu0 %v2203
      %2585 = vmatpush.bf16.msra.mxu0 %v2201
      %2586 = vmatpush.bf16.msra.mxu0 %v2199
      %2587 = vmatpush.bf16.msra.mxu0 %v2197
      %2588 = vmatpush.bf16.msra.mxu0 %v2195
      %2589 = vmatpush.bf16.msra.mxu0 %v2193
      %2590 = vmatpush.bf16.msra.mxu0 %v2191
      %2591 = vmatpush.bf16.msra.mxu0 %v2189
      %2592 = vmatmul.bf16.gmra.mxu0 %v1552
      %v2593 = vpop.f32.mrf.mxu0
      %v2594 = vadd.f32 %v2581, %v2593
      %v2595 = vpop.f32.mrf.mxu0
      %2596 = vdwg.mxu0
      %2597 = vmatpush.bf16.msra.mxu0 %v2219
      %2598 = vmatpush.bf16.msra.mxu0 %v2217
      %2599 = vmatpush.bf16.msra.mxu0 %v2215
      %2600 = vmatpush.bf16.msra.mxu0 %v2213
      %2601 = vmatpush.bf16.msra.mxu0 %v2211
      %2602 = vmatpush.bf16.msra.mxu0 %v2209
      %2603 = vmatpush.bf16.msra.mxu0 %v2207
      %2604 = vmatpush.bf16.msra.mxu0 %v2205
      %2605 = vmatmul.bf16.gmra.mxu0 %v1553
      %v2606 = vpop.f32.mrf.mxu0
      %v2607 = vadd.f32 %v2594, %v2606
      %v2608 = vpop.f32.mrf.mxu0
      %2609 = vdwg.mxu0
      %2610 = vmatpush.bf16.msra.mxu0 %v2235
      %2611 = vmatpush.bf16.msra.mxu0 %v2233
      %2612 = vmatpush.bf16.msra.mxu0 %v2231
      %2613 = vmatpush.bf16.msra.mxu0 %v2229
      %2614 = vmatpush.bf16.msra.mxu0 %v2227
      %2615 = vmatpush.bf16.msra.mxu0 %v2225
      %2616 = vmatpush.bf16.msra.mxu0 %v2223
      %2617 = vmatpush.bf16.msra.mxu0 %v2221
      %2618 = vmatmul.bf16.gmra.mxu0 %v1554
      %v2619 = vpop.f32.mrf.mxu0
      %v2620 = vadd.f32 %v2607, %v2619
      %v2621 = vpop.f32.mrf.mxu0
      %2622 = vdwg.mxu0
      %2623 = vmatpush.bf16.msra.mxu0 %v2251
      %2624 = vmatpush.bf16.msra.mxu0 %v2249
      %2625 = vmatpush.bf16.msra.mxu0 %v2247
      %2626 = vmatpush.bf16.msra.mxu0 %v2245
      %2627 = vmatpush.bf16.msra.mxu0 %v2243
      %2628 = vmatpush.bf16.msra.mxu0 %v2241
      %2629 = vmatpush.bf16.msra.mxu0 %v2239
      %2630 = vmatpush.bf16.msra.mxu0 %v2237
      %2631 = vmatmul.bf16.gmra.mxu0 %v1555
      %v2632 = vpop.f32.mrf.mxu0
      %v2633 = vadd.f32 %v2620, %v2632
      %v2634 = vpop.f32.mrf.mxu0
      %2635 = vdwg.mxu0
      %2636 = vmatpush.bf16.msra.mxu0 %v2267
      %2637 = vmatpush.bf16.msra.mxu0 %v2265
      %2638 = vmatpush.bf16.msra.mxu0 %v2263
      %2639 = vmatpush.bf16.msra.mxu0 %v2261
      %2640 = vmatpush.bf16.msra.mxu0 %v2259
      %2641 = vmatpush.bf16.msra.mxu0 %v2257
      %2642 = vmatpush.bf16.msra.mxu0 %v2255
      %2643 = vmatpush.bf16.msra.mxu0 %v2253
      %2644 = vmatmul.bf16.gmra.mxu0 %v1556
      %v2645 = vpop.f32.mrf.mxu0
      %v2646 = vadd.f32 %v2633, %v2645
      %v2647 = vpop.f32.mrf.mxu0
      %2648 = vdwg.mxu0
      %2649 = vmatpush.bf16.msra.mxu0 %v2283
      %2650 = vmatpush.bf16.msra.mxu0 %v2281
      %2651 = vmatpush.bf16.msra.mxu0 %v2279
      %2652 = vmatpush.bf16.msra.mxu0 %v2277
      %2653 = vmatpush.bf16.msra.mxu0 %v2275
      %2654 = vmatpush.bf16.msra.mxu0 %v2273
      %2655 = vmatpush.bf16.msra.mxu0 %v2271
      %2656 = vmatpush.bf16.msra.mxu0 %v2269
      %2657 = vmatmul.bf16.gmra.mxu0 %v1557
      %v2658 = vpop.f32.mrf.mxu0
      %v2659 = vadd.f32 %v2646, %v2658
      %v2660 = vpop.f32.mrf.mxu0
      %2661 = vdwg.mxu0
      %v2662 = vmax.f32 %v2542, 0.0
      %v2663 = vmax.f32 %v2659, 0.0
      %v2666 = vrot.slane %v2662, 5
      %v2667 = vrot.slane %v2663, 5
      %2670 = vst [vmem:[#allocation3] sm:$0x38] %v2666
      %2671 = vst [vmem:[#allocation3 + $0x8] sm:$0x38] %v2667
      %v2672 = vld [vmem:[%s1543] ss:$2 sm:$0x7]
      %v2673 = vld [vmem:[%s1545] ss:$2 sm:$0x7]
      %v2674 = vld [vmem:[%s1547] ss:$2 sm:$0x7]
      %s2675 = scalar_lea.vmem [#allocation2], 35
      %v2676 = vld [vmem:[%s2675] ss:$2 sm:$0x7]
      %s2677 = scalar_lea.vmem [#allocation2], 36
      %v2678 = vld [vmem:[%s2677] ss:$2 sm:$0x7]
      %s2679 = scalar_lea.vmem [#allocation2], 37
      %v2680 = vld [vmem:[%s2679] ss:$2 sm:$0x7]
      %s2681 = scalar_lea.vmem [#allocation2], 42
      %v2682 = vld [vmem:[%s2681] ss:$2 sm:$0x7]
      %s2683 = scalar_lea.vmem [#allocation2], 43
      %v2684 = vld [vmem:[%s2683] ss:$2 sm:$0x7]
      %s2685 = scalar_lea.vmem [#allocation2], 44
      %v2686 = vld [vmem:[%s2685] ss:$2 sm:$0x7]
      %v2687 = vpack.c.bf16 %v2672, %v2672
      %v2688 = vpack.c.bf16 %v2673, %v2673
      %v2689 = vpack.c.bf16 %v2674, %v2674
      %v2690 = vpack.c.bf16 %v2676, %v2676
      %v2691 = vpack.c.bf16 %v2678, %v2678
      %v2692 = vpack.c.bf16 %v2680, %v2680
      %v2693 = vpack.c.bf16 %v2682, %v2682
      %v2694 = vpack.c.bf16 %v2684, %v2684
      %v2695 = vpack.c.bf16 %v2686, %v2686
      %v2696 = vld [vmem:[%s3] sm:$0xff]
      %v2697 = vld [vmem:[%s3 + $0x8] sm:$0xff]
      %v2698 = vld [vmem:[%s3 + $0x10] sm:$0xff]
      %v2699 = vld [vmem:[%s3 + $0x18] sm:$0xff]
      %v2700 = vld [vmem:[%s3 + $0x20] sm:$0xff]
      %v2701 = vld [vmem:[%s3 + $0x28] sm:$0xff]
      %v2702 = vld [vmem:[%s3 + $0x30] sm:$0xff]
      %v2703 = vld [vmem:[%s3 + $0x38] sm:$0xff]
      %v2704 = vld [vmem:[%s3 + $0x40] sm:$0xff]
      %v2705 = vld [vmem:[%s3 + $0x48] sm:$0xff]
      %v2706 = vld [vmem:[%s3 + $0x50] sm:$0xff]
      %v2707 = vld [vmem:[%s3 + $0x58] sm:$0xff]
      %v2708 = vld [vmem:[%s3 + $0x60] sm:$0xff]
      %v2709 = vld [vmem:[%s3 + $0x68] sm:$0xff]
      %v2710 = vld [vmem:[%s3 + $0x70] sm:$0xff]
      %v2711 = vld [vmem:[%s3 + $0x78] sm:$0xff]
      %v2712 = vld [vmem:[%s3 + $0x80] sm:$0xff]
      %v2713 = vld [vmem:[%s3 + $0x88] sm:$0xff]
      %v2714 = vld [vmem:[%s3 + $0x90] sm:$0xff]
      %v2715 = vld [vmem:[%s3 + $0x98] sm:$0xff]
      %v2716 = vld [vmem:[%s3 + $0xa0] sm:$0xff]
      %v2717 = vld [vmem:[%s3 + $0xa8] sm:$0xff]
      %v2718 = vld [vmem:[%s3 + $0xb0] sm:$0xff]
      %v2719 = vld [vmem:[%s3 + $0xb8] sm:$0xff]
      %v2720 = vld [vmem:[%s3 + $0xc0] sm:$0xff]
      %v2721 = vld [vmem:[%s3 + $0xc8] sm:$0xff]
      %v2722 = vld [vmem:[%s3 + $0xd0] sm:$0xff]
      %v2723 = vld [vmem:[%s3 + $0xd8] sm:$0xff]
      %v2724 = vld [vmem:[%s3 + $0xe0] sm:$0xff]
      %v2725 = vld [vmem:[%s3 + $0xe8] sm:$0xff]
      %v2726 = vld [vmem:[%s3 + $0xf0] sm:$0xff]
      %v2727 = vld [vmem:[%s3 + $0xf8] sm:$0xff]
      %v2728 = vld [vmem:[%s3 + $0x100] sm:$0xff]
      %v2729 = vld [vmem:[%s3 + $0x108] sm:$0xff]
      %v2730 = vld [vmem:[%s3 + $0x110] sm:$0xff]
      %v2731 = vld [vmem:[%s3 + $0x118] sm:$0xff]
      %v2732 = vld [vmem:[%s3 + $0x120] sm:$0xff]
      %v2733 = vld [vmem:[%s3 + $0x128] sm:$0xff]
      %v2734 = vld [vmem:[%s3 + $0x130] sm:$0xff]
      %v2735 = vld [vmem:[%s3 + $0x138] sm:$0xff]
      %v2736 = vld [vmem:[%s3 + $0x140] sm:$0xff]
      %v2737 = vld [vmem:[%s3 + $0x148] sm:$0xff]
      %v2738 = vld [vmem:[%s3 + $0x150] sm:$0xff]
      %v2739 = vld [vmem:[%s3 + $0x158] sm:$0xff]
      %v2740 = vld [vmem:[%s3 + $0x160] sm:$0xff]
      %v2741 = vld [vmem:[%s3 + $0x168] sm:$0xff]
      %v2742 = vld [vmem:[%s3 + $0x170] sm:$0xff]
      %v2743 = vld [vmem:[%s3 + $0x178] sm:$0xff]
      %v2744 = vld [vmem:[%s3 + $0x180] sm:$0xff]
      %v2745 = vld [vmem:[%s3 + $0x188] sm:$0xff]
      %v2746 = vld [vmem:[%s3 + $0x190] sm:$0xff]
      %v2747 = vld [vmem:[%s3 + $0x198] sm:$0xff]
      %v2748 = vld [vmem:[%s3 + $0x1a0] sm:$0xff]
      %v2749 = vld [vmem:[%s3 + $0x1a8] sm:$0xff]
      %v2750 = vld [vmem:[%s3 + $0x1b0] sm:$0xff]
      %v2751 = vld [vmem:[%s3 + $0x1b8] sm:$0xff]
      %v2752 = vld [vmem:[%s3 + $0x1c0] sm:$0xff]
      %v2753 = vld [vmem:[%s3 + $0x1c8] sm:$0xff]
      %v2754 = vld [vmem:[%s3 + $0x1d0] sm:$0xff]
      %v2755 = vld [vmem:[%s3 + $0x1d8] sm:$0xff]
      %v2756 = vld [vmem:[%s3 + $0x1e0] sm:$0xff]
      %v2757 = vld [vmem:[%s3 + $0x1e8] sm:$0xff]
      %v2758 = vld [vmem:[%s3 + $0x1f0] sm:$0xff]
      %v2759 = vld [vmem:[%s3 + $0x1f8] sm:$0xff]
      %v2760 = vld [vmem:[%s3 + $0x200] sm:$0xff]
      %v2761 = vld [vmem:[%s3 + $0x208] sm:$0xff]
      %v2762 = vld [vmem:[%s3 + $0x210] sm:$0xff]
      %v2763 = vld [vmem:[%s3 + $0x218] sm:$0xff]
      %v2764 = vld [vmem:[%s3 + $0x220] sm:$0xff]
      %v2765 = vld [vmem:[%s3 + $0x228] sm:$0xff]
      %v2766 = vld [vmem:[%s3 + $0x230] sm:$0xff]
      %v2767 = vld [vmem:[%s3 + $0x238] sm:$0xff]
      %v2768 = vld [vmem:[%s3 + $0x240] sm:$0xff]
      %v2769 = vld [vmem:[%s3 + $0x248] sm:$0xff]
      %v2770 = vld [vmem:[%s3 + $0x250] sm:$0xff]
      %v2771 = vld [vmem:[%s3 + $0x258] sm:$0xff]
      %v2772 = vld [vmem:[%s3 + $0x260] sm:$0xff]
      %v2773 = vld [vmem:[%s3 + $0x268] sm:$0xff]
      %v2774 = vld [vmem:[%s3 + $0x270] sm:$0xff]
      %v2775 = vld [vmem:[%s3 + $0x278] sm:$0xff]
      %v2776 = vld [vmem:[%s3 + $0x280] sm:$0xff]
      %v2777 = vld [vmem:[%s3 + $0x288] sm:$0xff]
      %v2778 = vld [vmem:[%s3 + $0x290] sm:$0xff]
      %v2779 = vld [vmem:[%s3 + $0x298] sm:$0xff]
      %v2780 = vld [vmem:[%s3 + $0x2a0] sm:$0xff]
      %v2781 = vld [vmem:[%s3 + $0x2a8] sm:$0xff]
      %v2782 = vld [vmem:[%s3 + $0x2b0] sm:$0xff]
      %v2783 = vld [vmem:[%s3 + $0x2b8] sm:$0xff]
      %v2784 = vld [vmem:[%s3 + $0x2c0] sm:$0xff]
      %v2785 = vld [vmem:[%s3 + $0x2c8] sm:$0xff]
      %v2786 = vld [vmem:[%s3 + $0x2d0] sm:$0xff]
      %v2787 = vld [vmem:[%s3 + $0x2d8] sm:$0xff]
      %v2788 = vld [vmem:[%s3 + $0x2e0] sm:$0xff]
      %v2789 = vld [vmem:[%s3 + $0x2e8] sm:$0xff]
      %v2790 = vld [vmem:[%s3 + $0x2f0] sm:$0xff]
      %v2791 = vld [vmem:[%s3 + $0x2f8] sm:$0xff]
      %v2792 = vld [vmem:[%s3 + $0x300] sm:$0xff]
      %v2793 = vld [vmem:[%s3 + $0x308] sm:$0xff]
      %v2794 = vld [vmem:[%s3 + $0x310] sm:$0xff]
      %v2795 = vld [vmem:[%s3 + $0x318] sm:$0xff]
      %v2796 = vld [vmem:[%s3 + $0x320] sm:$0xff]
      %v2797 = vld [vmem:[%s3 + $0x328] sm:$0xff]
      %v2798 = vld [vmem:[%s3 + $0x330] sm:$0xff]
      %v2799 = vld [vmem:[%s3 + $0x338] sm:$0xff]
      %v2800 = vld [vmem:[%s3 + $0x340] sm:$0xff]
      %v2801 = vld [vmem:[%s3 + $0x348] sm:$0xff]
      %v2802 = vld [vmem:[%s3 + $0x350] sm:$0xff]
      %v2803 = vld [vmem:[%s3 + $0x358] sm:$0xff]
      %v2804 = vld [vmem:[%s3 + $0x360] sm:$0xff]
      %v2805 = vld [vmem:[%s3 + $0x368] sm:$0xff]
      %v2806 = vld [vmem:[%s3 + $0x370] sm:$0xff]
      %v2807 = vld [vmem:[%s3 + $0x378] sm:$0xff]
      %v2808 = vld [vmem:[%s3 + $0x380] sm:$0xff]
      %v2809 = vld [vmem:[%s3 + $0x388] sm:$0xff]
      %v2810 = vld [vmem:[%s3 + $0x390] sm:$0xff]
      %v2811 = vld [vmem:[%s3 + $0x398] sm:$0xff]
      %v2812 = vld [vmem:[%s3 + $0x3a0] sm:$0xff]
      %v2813 = vld [vmem:[%s3 + $0x3a8] sm:$0xff]
      %v2814 = vld [vmem:[%s3 + $0x3b0] sm:$0xff]
      %v2815 = vld [vmem:[%s3 + $0x3b8] sm:$0xff]
      %v2816 = vld [vmem:[%s3 + $0x3c0] sm:$0xff]
      %v2817 = vld [vmem:[%s3 + $0x3c8] sm:$0xff]
      %v2818 = vld [vmem:[%s3 + $0x3d0] sm:$0xff]
      %v2819 = vld [vmem:[%s3 + $0x3d8] sm:$0xff]
      %v2820 = vld [vmem:[%s3 + $0x3e0] sm:$0xff]
      %v2821 = vld [vmem:[%s3 + $0x3e8] sm:$0xff]
      %v2822 = vld [vmem:[%s3 + $0x3f0] sm:$0xff]
      %v2823 = vld [vmem:[%s3 + $0x3f8] sm:$0xff]
      %v2824 = vld [vmem:[%s3 + $0x400] sm:$0xff]
      %v2825 = vld [vmem:[%s3 + $0x408] sm:$0xff]
      %v2826 = vld [vmem:[%s3 + $0x410] sm:$0xff]
      %v2827 = vld [vmem:[%s3 + $0x418] sm:$0xff]
      %v2828 = vld [vmem:[%s3 + $0x420] sm:$0xff]
      %v2829 = vld [vmem:[%s3 + $0x428] sm:$0xff]
      %v2830 = vld [vmem:[%s3 + $0x430] sm:$0xff]
      %v2831 = vld [vmem:[%s3 + $0x438] sm:$0xff]
      %v2832 = vld [vmem:[%s3 + $0x440] sm:$0xff]
      %v2833 = vld [vmem:[%s3 + $0x448] sm:$0xff]
      %v2834 = vld [vmem:[%s3 + $0x450] sm:$0xff]
      %v2835 = vld [vmem:[%s3 + $0x458] sm:$0xff]
      %v2836 = vld [vmem:[%s3 + $0x460] sm:$0xff]
      %v2837 = vld [vmem:[%s3 + $0x468] sm:$0xff]
      %v2838 = vld [vmem:[%s3 + $0x470] sm:$0xff]
      %v2839 = vld [vmem:[%s3 + $0x478] sm:$0xff]
      %v2840 = vld [vmem:[%s4] sm:$0x3]
      %v2842 = vperm.slane %v2840, 0
      %v2843 = vperm.slane %v2840, 1
      %v2990 = vunpack.c.l.b16 %v2696
      %v2991 = vunpack.c.h.b16 %v2696
      %v2992 = vunpack.c.l.b16 %v2697
      %v2993 = vunpack.c.h.b16 %v2697
      %v2994 = vunpack.c.l.b16 %v2698
      %v2995 = vunpack.c.h.b16 %v2698
      %v2996 = vunpack.c.l.b16 %v2699
      %v2997 = vunpack.c.h.b16 %v2699
      %v2998 = vunpack.c.l.b16 %v2700
      %v2999 = vunpack.c.h.b16 %v2700
      %v3000 = vunpack.c.l.b16 %v2701
      %v3001 = vunpack.c.h.b16 %v2701
      %v3002 = vunpack.c.l.b16 %v2702
      %v3003 = vunpack.c.h.b16 %v2702
      %v3004 = vunpack.c.l.b16 %v2703
      %v3005 = vunpack.c.h.b16 %v2703
      %v3006 = vunpack.c.l.b16 %v2704
      %v3007 = vunpack.c.h.b16 %v2704
      %v3008 = vunpack.c.l.b16 %v2705
      %v3009 = vunpack.c.h.b16 %v2705
      %v3010 = vunpack.c.l.b16 %v2706
      %v3011 = vunpack.c.h.b16 %v2706
      %v3012 = vunpack.c.l.b16 %v2707
      %v3013 = vunpack.c.h.b16 %v2707
      %v3014 = vunpack.c.l.b16 %v2708
      %v3015 = vunpack.c.h.b16 %v2708
      %v3016 = vunpack.c.l.b16 %v2709
      %v3017 = vunpack.c.h.b16 %v2709
      %v3018 = vunpack.c.l.b16 %v2710
      %v3019 = vunpack.c.h.b16 %v2710
      %v3020 = vunpack.c.l.b16 %v2711
      %v3021 = vunpack.c.h.b16 %v2711
      %v3022 = vunpack.c.l.b16 %v2712
      %v3023 = vunpack.c.h.b16 %v2712
      %v3024 = vunpack.c.l.b16 %v2713
      %v3025 = vunpack.c.h.b16 %v2713
      %v3026 = vunpack.c.l.b16 %v2714
      %v3027 = vunpack.c.h.b16 %v2714
      %v3028 = vunpack.c.l.b16 %v2715
      %v3029 = vunpack.c.h.b16 %v2715
      %v3030 = vunpack.c.l.b16 %v2716
      %v3031 = vunpack.c.h.b16 %v2716
      %v3032 = vunpack.c.l.b16 %v2717
      %v3033 = vunpack.c.h.b16 %v2717
      %v3034 = vunpack.c.l.b16 %v2718
      %v3035 = vunpack.c.h.b16 %v2718
      %v3036 = vunpack.c.l.b16 %v2719
      %v3037 = vunpack.c.h.b16 %v2719
      %v3038 = vunpack.c.l.b16 %v2720
      %v3039 = vunpack.c.h.b16 %v2720
      %v3040 = vunpack.c.l.b16 %v2721
      %v3041 = vunpack.c.h.b16 %v2721
      %v3042 = vunpack.c.l.b16 %v2722
      %v3043 = vunpack.c.h.b16 %v2722
      %v3044 = vunpack.c.l.b16 %v2723
      %v3045 = vunpack.c.h.b16 %v2723
      %v3046 = vunpack.c.l.b16 %v2724
      %v3047 = vunpack.c.h.b16 %v2724
      %v3048 = vunpack.c.l.b16 %v2725
      %v3049 = vunpack.c.h.b16 %v2725
      %v3050 = vunpack.c.l.b16 %v2726
      %v3051 = vunpack.c.h.b16 %v2726
      %v3052 = vunpack.c.l.b16 %v2727
      %v3053 = vunpack.c.h.b16 %v2727
      %v3054 = vunpack.c.l.b16 %v2728
      %v3055 = vunpack.c.h.b16 %v2728
      %v3056 = vunpack.c.l.b16 %v2729
      %v3057 = vunpack.c.h.b16 %v2729
      %v3058 = vunpack.c.l.b16 %v2730
      %v3059 = vunpack.c.h.b16 %v2730
      %v3060 = vunpack.c.l.b16 %v2731
      %v3061 = vunpack.c.h.b16 %v2731
      %v3062 = vunpack.c.l.b16 %v2732
      %v3063 = vunpack.c.h.b16 %v2732
      %v3064 = vunpack.c.l.b16 %v2733
      %v3065 = vunpack.c.h.b16 %v2733
      %v3066 = vunpack.c.l.b16 %v2734
      %v3067 = vunpack.c.h.b16 %v2734
      %v3068 = vunpack.c.l.b16 %v2735
      %v3069 = vunpack.c.h.b16 %v2735
      %v3070 = vunpack.c.l.b16 %v2736
      %v3071 = vunpack.c.h.b16 %v2736
      %v3072 = vunpack.c.l.b16 %v2737
      %v3073 = vunpack.c.h.b16 %v2737
      %v3074 = vunpack.c.l.b16 %v2738
      %v3075 = vunpack.c.h.b16 %v2738
      %v3076 = vunpack.c.l.b16 %v2739
      %v3077 = vunpack.c.h.b16 %v2739
      %v3078 = vunpack.c.l.b16 %v2740
      %v3079 = vunpack.c.h.b16 %v2740
      %v3080 = vunpack.c.l.b16 %v2741
      %v3081 = vunpack.c.h.b16 %v2741
      %v3082 = vunpack.c.l.b16 %v2742
      %v3083 = vunpack.c.h.b16 %v2742
      %v3084 = vunpack.c.l.b16 %v2743
      %v3085 = vunpack.c.h.b16 %v2743
      %v3086 = vunpack.c.l.b16 %v2744
      %v3087 = vunpack.c.h.b16 %v2744
      %v3088 = vunpack.c.l.b16 %v2745
      %v3089 = vunpack.c.h.b16 %v2745
      %v3090 = vunpack.c.l.b16 %v2746
      %v3091 = vunpack.c.h.b16 %v2746
      %v3092 = vunpack.c.l.b16 %v2747
      %v3093 = vunpack.c.h.b16 %v2747
      %v3094 = vunpack.c.l.b16 %v2748
      %v3095 = vunpack.c.h.b16 %v2748
      %v3096 = vunpack.c.l.b16 %v2749
      %v3097 = vunpack.c.h.b16 %v2749
      %v3098 = vunpack.c.l.b16 %v2750
      %v3099 = vunpack.c.h.b16 %v2750
      %v3100 = vunpack.c.l.b16 %v2751
      %v3101 = vunpack.c.h.b16 %v2751
      %v3102 = vunpack.c.l.b16 %v2752
      %v3103 = vunpack.c.h.b16 %v2752
      %v3104 = vunpack.c.l.b16 %v2753
      %v3105 = vunpack.c.h.b16 %v2753
      %v3106 = vunpack.c.l.b16 %v2754
      %v3107 = vunpack.c.h.b16 %v2754
      %v3108 = vunpack.c.l.b16 %v2755
      %v3109 = vunpack.c.h.b16 %v2755
      %v3110 = vunpack.c.l.b16 %v2756
      %v3111 = vunpack.c.h.b16 %v2756
      %v3112 = vunpack.c.l.b16 %v2757
      %v3113 = vunpack.c.h.b16 %v2757
      %v3114 = vunpack.c.l.b16 %v2758
      %v3115 = vunpack.c.h.b16 %v2758
      %v3116 = vunpack.c.l.b16 %v2759
      %v3117 = vunpack.c.h.b16 %v2759
      %v3118 = vunpack.c.l.b16 %v2760
      %v3119 = vunpack.c.h.b16 %v2760
      %v3120 = vunpack.c.l.b16 %v2761
      %v3121 = vunpack.c.h.b16 %v2761
      %v3122 = vunpack.c.l.b16 %v2762
      %v3123 = vunpack.c.h.b16 %v2762
      %v3124 = vunpack.c.l.b16 %v2763
      %v3125 = vunpack.c.h.b16 %v2763
      %v3126 = vunpack.c.l.b16 %v2764
      %v3127 = vunpack.c.h.b16 %v2764
      %v3128 = vunpack.c.l.b16 %v2765
      %v3129 = vunpack.c.h.b16 %v2765
      %v3130 = vunpack.c.l.b16 %v2766
      %v3131 = vunpack.c.h.b16 %v2766
      %v3132 = vunpack.c.l.b16 %v2767
      %v3133 = vunpack.c.h.b16 %v2767
      %v3134 = vunpack.c.l.b16 %v2768
      %v3135 = vunpack.c.h.b16 %v2768
      %v3136 = vunpack.c.l.b16 %v2769
      %v3137 = vunpack.c.h.b16 %v2769
      %v3138 = vunpack.c.l.b16 %v2770
      %v3139 = vunpack.c.h.b16 %v2770
      %v3140 = vunpack.c.l.b16 %v2771
      %v3141 = vunpack.c.h.b16 %v2771
      %v3142 = vunpack.c.l.b16 %v2772
      %v3143 = vunpack.c.h.b16 %v2772
      %v3144 = vunpack.c.l.b16 %v2773
      %v3145 = vunpack.c.h.b16 %v2773
      %v3146 = vunpack.c.l.b16 %v2774
      %v3147 = vunpack.c.h.b16 %v2774
      %v3148 = vunpack.c.l.b16 %v2775
      %v3149 = vunpack.c.h.b16 %v2775
      %v3150 = vunpack.c.l.b16 %v2776
      %v3151 = vunpack.c.h.b16 %v2776
      %v3152 = vunpack.c.l.b16 %v2777
      %v3153 = vunpack.c.h.b16 %v2777
      %v3154 = vunpack.c.l.b16 %v2778
      %v3155 = vunpack.c.h.b16 %v2778
      %v3156 = vunpack.c.l.b16 %v2779
      %v3157 = vunpack.c.h.b16 %v2779
      %v3158 = vunpack.c.l.b16 %v2780
      %v3159 = vunpack.c.h.b16 %v2780
      %v3160 = vunpack.c.l.b16 %v2781
      %v3161 = vunpack.c.h.b16 %v2781
      %v3162 = vunpack.c.l.b16 %v2782
      %v3163 = vunpack.c.h.b16 %v2782
      %v3164 = vunpack.c.l.b16 %v2783
      %v3165 = vunpack.c.h.b16 %v2783
      %v3166 = vunpack.c.l.b16 %v2784
      %v3167 = vunpack.c.h.b16 %v2784
      %v3168 = vunpack.c.l.b16 %v2785
      %v3169 = vunpack.c.h.b16 %v2785
      %v3170 = vunpack.c.l.b16 %v2786
      %v3171 = vunpack.c.h.b16 %v2786
      %v3172 = vunpack.c.l.b16 %v2787
      %v3173 = vunpack.c.h.b16 %v2787
      %v3174 = vunpack.c.l.b16 %v2788
      %v3175 = vunpack.c.h.b16 %v2788
      %v3176 = vunpack.c.l.b16 %v2789
      %v3177 = vunpack.c.h.b16 %v2789
      %v3178 = vunpack.c.l.b16 %v2790
      %v3179 = vunpack.c.h.b16 %v2790
      %v3180 = vunpack.c.l.b16 %v2791
      %v3181 = vunpack.c.h.b16 %v2791
      %v3182 = vunpack.c.l.b16 %v2792
      %v3183 = vunpack.c.h.b16 %v2792
      %v3184 = vunpack.c.l.b16 %v2793
      %v3185 = vunpack.c.h.b16 %v2793
      %v3186 = vunpack.c.l.b16 %v2794
      %v3187 = vunpack.c.h.b16 %v2794
      %v3188 = vunpack.c.l.b16 %v2795
      %v3189 = vunpack.c.h.b16 %v2795
      %v3190 = vunpack.c.l.b16 %v2796
      %v3191 = vunpack.c.h.b16 %v2796
      %v3192 = vunpack.c.l.b16 %v2797
      %v3193 = vunpack.c.h.b16 %v2797
      %v3194 = vunpack.c.l.b16 %v2798
      %v3195 = vunpack.c.h.b16 %v2798
      %v3196 = vunpack.c.l.b16 %v2799
      %v3197 = vunpack.c.h.b16 %v2799
      %v3198 = vunpack.c.l.b16 %v2800
      %v3199 = vunpack.c.h.b16 %v2800
      %v3200 = vunpack.c.l.b16 %v2801
      %v3201 = vunpack.c.h.b16 %v2801
      %v3202 = vunpack.c.l.b16 %v2802
      %v3203 = vunpack.c.h.b16 %v2802
      %v3204 = vunpack.c.l.b16 %v2803
      %v3205 = vunpack.c.h.b16 %v2803
      %v3206 = vunpack.c.l.b16 %v2804
      %v3207 = vunpack.c.h.b16 %v2804
      %v3208 = vunpack.c.l.b16 %v2805
      %v3209 = vunpack.c.h.b16 %v2805
      %v3210 = vunpack.c.l.b16 %v2806
      %v3211 = vunpack.c.h.b16 %v2806
      %v3212 = vunpack.c.l.b16 %v2807
      %v3213 = vunpack.c.h.b16 %v2807
      %v3214 = vunpack.c.l.b16 %v2808
      %v3215 = vunpack.c.h.b16 %v2808
      %v3216 = vunpack.c.l.b16 %v2809
      %v3217 = vunpack.c.h.b16 %v2809
      %v3218 = vunpack.c.l.b16 %v2810
      %v3219 = vunpack.c.h.b16 %v2810
      %v3220 = vunpack.c.l.b16 %v2811
      %v3221 = vunpack.c.h.b16 %v2811
      %v3222 = vunpack.c.l.b16 %v2812
      %v3223 = vunpack.c.h.b16 %v2812
      %v3224 = vunpack.c.l.b16 %v2813
      %v3225 = vunpack.c.h.b16 %v2813
      %v3226 = vunpack.c.l.b16 %v2814
      %v3227 = vunpack.c.h.b16 %v2814
      %v3228 = vunpack.c.l.b16 %v2815
      %v3229 = vunpack.c.h.b16 %v2815
      %v3230 = vunpack.c.l.b16 %v2816
      %v3231 = vunpack.c.h.b16 %v2816
      %v3232 = vunpack.c.l.b16 %v2817
      %v3233 = vunpack.c.h.b16 %v2817
      %v3234 = vunpack.c.l.b16 %v2818
      %v3235 = vunpack.c.h.b16 %v2818
      %v3236 = vunpack.c.l.b16 %v2819
      %v3237 = vunpack.c.h.b16 %v2819
      %v3238 = vunpack.c.l.b16 %v2820
      %v3239 = vunpack.c.h.b16 %v2820
      %v3240 = vunpack.c.l.b16 %v2821
      %v3241 = vunpack.c.h.b16 %v2821
      %v3242 = vunpack.c.l.b16 %v2822
      %v3243 = vunpack.c.h.b16 %v2822
      %v3244 = vunpack.c.l.b16 %v2823
      %v3245 = vunpack.c.h.b16 %v2823
      %v3246 = vunpack.c.l.b16 %v2824
      %v3247 = vunpack.c.h.b16 %v2824
      %v3248 = vunpack.c.l.b16 %v2825
      %v3249 = vunpack.c.h.b16 %v2825
      %v3250 = vunpack.c.l.b16 %v2826
      %v3251 = vunpack.c.h.b16 %v2826
      %v3252 = vunpack.c.l.b16 %v2827
      %v3253 = vunpack.c.h.b16 %v2827
      %v3254 = vunpack.c.l.b16 %v2828
      %v3255 = vunpack.c.h.b16 %v2828
      %v3256 = vunpack.c.l.b16 %v2829
      %v3257 = vunpack.c.h.b16 %v2829
      %v3258 = vunpack.c.l.b16 %v2830
      %v3259 = vunpack.c.h.b16 %v2830
      %v3260 = vunpack.c.l.b16 %v2831
      %v3261 = vunpack.c.h.b16 %v2831
      %v3262 = vunpack.c.l.b16 %v2832
      %v3263 = vunpack.c.h.b16 %v2832
      %v3264 = vunpack.c.l.b16 %v2833
      %v3265 = vunpack.c.h.b16 %v2833
      %v3266 = vunpack.c.l.b16 %v2834
      %v3267 = vunpack.c.h.b16 %v2834
      %v3268 = vunpack.c.l.b16 %v2835
      %v3269 = vunpack.c.h.b16 %v2835
      %v3270 = vunpack.c.l.b16 %v2836
      %v3271 = vunpack.c.h.b16 %v2836
      %v3272 = vunpack.c.l.b16 %v2837
      %v3273 = vunpack.c.h.b16 %v2837
      %v3274 = vunpack.c.l.b16 %v2838
      %v3275 = vunpack.c.h.b16 %v2838
      %v3276 = vunpack.c.l.b16 %v2839
      %v3277 = vunpack.c.h.b16 %v2839
      %v3278 = vpack.c.b16 %v2992, %v2990
      %v3279 = vpack.c.b16 %v2993, %v2991
      %v3280 = vpack.c.b16 %v2996, %v2994
      %v3281 = vpack.c.b16 %v2997, %v2995
      %v3282 = vpack.c.b16 %v3000, %v2998
      %v3283 = vpack.c.b16 %v3001, %v2999
      %v3284 = vpack.c.b16 %v3004, %v3002
      %v3285 = vpack.c.b16 %v3005, %v3003
      %v3286 = vpack.c.b16 %v3008, %v3006
      %v3287 = vpack.c.b16 %v3009, %v3007
      %v3288 = vpack.c.b16 %v3012, %v3010
      %v3289 = vpack.c.b16 %v3013, %v3011
      %v3290 = vpack.c.b16 %v3016, %v3014
      %v3291 = vpack.c.b16 %v3017, %v3015
      %v3292 = vpack.c.b16 %v3020, %v3018
      %v3293 = vpack.c.b16 %v3021, %v3019
      %v3294 = vpack.c.b16 %v3024, %v3022
      %v3295 = vpack.c.b16 %v3025, %v3023
      %v3296 = vpack.c.b16 %v3028, %v3026
      %v3297 = vpack.c.b16 %v3029, %v3027
      %v3298 = vpack.c.b16 %v3032, %v3030
      %v3299 = vpack.c.b16 %v3033, %v3031
      %v3300 = vpack.c.b16 %v3036, %v3034
      %v3301 = vpack.c.b16 %v3037, %v3035
      %v3302 = vpack.c.b16 %v3040, %v3038
      %v3303 = vpack.c.b16 %v3041, %v3039
      %v3304 = vpack.c.b16 %v3044, %v3042
      %v3305 = vpack.c.b16 %v3045, %v3043
      %v3306 = vpack.c.b16 %v3048, %v3046
      %v3307 = vpack.c.b16 %v3049, %v3047
      %v3308 = vpack.c.b16 %v3052, %v3050
      %v3309 = vpack.c.b16 %v3053, %v3051
      %v3310 = vpack.c.b16 %v3056, %v3054
      %v3311 = vpack.c.b16 %v3057, %v3055
      %v3312 = vpack.c.b16 %v3060, %v3058
      %v3313 = vpack.c.b16 %v3061, %v3059
      %v3314 = vpack.c.b16 %v3064, %v3062
      %v3315 = vpack.c.b16 %v3065, %v3063
      %v3316 = vpack.c.b16 %v3068, %v3066
      %v3317 = vpack.c.b16 %v3069, %v3067
      %v3318 = vpack.c.b16 %v3072, %v3070
      %v3319 = vpack.c.b16 %v3073, %v3071
      %v3320 = vpack.c.b16 %v3076, %v3074
      %v3321 = vpack.c.b16 %v3077, %v3075
      %v3322 = vpack.c.b16 %v3080, %v3078
      %v3323 = vpack.c.b16 %v3081, %v3079
      %v3324 = vpack.c.b16 %v3084, %v3082
      %v3325 = vpack.c.b16 %v3085, %v3083
      %v3326 = vpack.c.b16 %v3088, %v3086
      %v3327 = vpack.c.b16 %v3089, %v3087
      %v3328 = vpack.c.b16 %v3092, %v3090
      %v3329 = vpack.c.b16 %v3093, %v3091
      %v3330 = vpack.c.b16 %v3096, %v3094
      %v3331 = vpack.c.b16 %v3097, %v3095
      %v3332 = vpack.c.b16 %v3100, %v3098
      %v3333 = vpack.c.b16 %v3101, %v3099
      %v3334 = vpack.c.b16 %v3104, %v3102
      %v3335 = vpack.c.b16 %v3105, %v3103
      %v3336 = vpack.c.b16 %v3108, %v3106
      %v3337 = vpack.c.b16 %v3109, %v3107
      %v3338 = vpack.c.b16 %v3112, %v3110
      %v3339 = vpack.c.b16 %v3113, %v3111
      %v3340 = vpack.c.b16 %v3116, %v3114
      %v3341 = vpack.c.b16 %v3117, %v3115
      %v3342 = vpack.c.b16 %v3120, %v3118
      %v3343 = vpack.c.b16 %v3121, %v3119
      %v3344 = vpack.c.b16 %v3124, %v3122
      %v3345 = vpack.c.b16 %v3125, %v3123
      %v3346 = vpack.c.b16 %v3128, %v3126
      %v3347 = vpack.c.b16 %v3129, %v3127
      %v3348 = vpack.c.b16 %v3132, %v3130
      %v3349 = vpack.c.b16 %v3133, %v3131
      %v3350 = vpack.c.b16 %v3136, %v3134
      %v3351 = vpack.c.b16 %v3137, %v3135
      %v3352 = vpack.c.b16 %v3140, %v3138
      %v3353 = vpack.c.b16 %v3141, %v3139
      %v3354 = vpack.c.b16 %v3144, %v3142
      %v3355 = vpack.c.b16 %v3145, %v3143
      %v3356 = vpack.c.b16 %v3148, %v3146
      %v3357 = vpack.c.b16 %v3149, %v3147
      %v3358 = vpack.c.b16 %v3152, %v3150
      %v3359 = vpack.c.b16 %v3153, %v3151
      %v3360 = vpack.c.b16 %v3156, %v3154
      %v3361 = vpack.c.b16 %v3157, %v3155
      %v3362 = vpack.c.b16 %v3160, %v3158
      %v3363 = vpack.c.b16 %v3161, %v3159
      %v3364 = vpack.c.b16 %v3164, %v3162
      %v3365 = vpack.c.b16 %v3165, %v3163
      %v3366 = vpack.c.b16 %v3168, %v3166
      %v3367 = vpack.c.b16 %v3169, %v3167
      %v3368 = vpack.c.b16 %v3172, %v3170
      %v3369 = vpack.c.b16 %v3173, %v3171
      %v3370 = vpack.c.b16 %v3176, %v3174
      %v3371 = vpack.c.b16 %v3177, %v3175
      %v3372 = vpack.c.b16 %v3180, %v3178
      %v3373 = vpack.c.b16 %v3181, %v3179
      %v3374 = vpack.c.b16 %v3184, %v3182
      %v3375 = vpack.c.b16 %v3185, %v3183
      %v3376 = vpack.c.b16 %v3188, %v3186
      %v3377 = vpack.c.b16 %v3189, %v3187
      %v3378 = vpack.c.b16 %v3192, %v3190
      %v3379 = vpack.c.b16 %v3193, %v3191
      %v3380 = vpack.c.b16 %v3196, %v3194
      %v3381 = vpack.c.b16 %v3197, %v3195
      %v3382 = vpack.c.b16 %v3200, %v3198
      %v3383 = vpack.c.b16 %v3201, %v3199
      %v3384 = vpack.c.b16 %v3204, %v3202
      %v3385 = vpack.c.b16 %v3205, %v3203
      %v3386 = vpack.c.b16 %v3208, %v3206
      %v3387 = vpack.c.b16 %v3209, %v3207
      %v3388 = vpack.c.b16 %v3212, %v3210
      %v3389 = vpack.c.b16 %v3213, %v3211
      %v3390 = vpack.c.b16 %v3216, %v3214
      %v3391 = vpack.c.b16 %v3217, %v3215
      %v3392 = vpack.c.b16 %v3220, %v3218
      %v3393 = vpack.c.b16 %v3221, %v3219
      %v3394 = vpack.c.b16 %v3224, %v3222
      %v3395 = vpack.c.b16 %v3225, %v3223
      %v3396 = vpack.c.b16 %v3228, %v3226
      %v3397 = vpack.c.b16 %v3229, %v3227
      %v3398 = vpack.c.b16 %v3232, %v3230
      %v3399 = vpack.c.b16 %v3233, %v3231
      %v3400 = vpack.c.b16 %v3236, %v3234
      %v3401 = vpack.c.b16 %v3237, %v3235
      %v3402 = vpack.c.b16 %v3240, %v3238
      %v3403 = vpack.c.b16 %v3241, %v3239
      %v3404 = vpack.c.b16 %v3244, %v3242
      %v3405 = vpack.c.b16 %v3245, %v3243
      %v3406 = vpack.c.b16 %v3248, %v3246
      %v3407 = vpack.c.b16 %v3249, %v3247
      %v3408 = vpack.c.b16 %v3252, %v3250
      %v3409 = vpack.c.b16 %v3253, %v3251
      %v3410 = vpack.c.b16 %v3256, %v3254
      %v3411 = vpack.c.b16 %v3257, %v3255
      %v3412 = vpack.c.b16 %v3260, %v3258
      %v3413 = vpack.c.b16 %v3261, %v3259
      %v3414 = vpack.c.b16 %v3264, %v3262
      %v3415 = vpack.c.b16 %v3265, %v3263
      %v3416 = vpack.c.b16 %v3268, %v3266
      %v3417 = vpack.c.b16 %v3269, %v3267
      %v3418 = vpack.c.b16 %v3272, %v3270
      %v3419 = vpack.c.b16 %v3273, %v3271
      %v3420 = vpack.c.b16 %v3276, %v3274
      %v3421 = vpack.c.b16 %v3277, %v3275
      %3566 = vmatpush.bf16.msra.mxu0 %v3292
      %3567 = vmatpush.bf16.msra.mxu0 %v3290
      %3568 = vmatpush.bf16.msra.mxu0 %v3288
      %3569 = vmatpush.bf16.msra.mxu0 %v3286
      %3570 = vmatpush.bf16.msra.mxu0 %v3284
      %3571 = vmatpush.bf16.msra.mxu0 %v3282
      %3572 = vmatpush.bf16.msra.mxu0 %v3280
      %3573 = vmatpush.bf16.msra.mxu0 %v3278
      %3574 = vmatmul.bf16.gmra.mxu0 %v2687
      %v3575 = vpop.f32.mrf.mxu0
      %v3576 = vadd.f32 %v2842, %v3575
      %v3577 = vpop.f32.mrf.mxu0
      %3578 = vdwg.mxu0
      %3579 = vmatpush.bf16.msra.mxu0 %v3308
      %3580 = vmatpush.bf16.msra.mxu0 %v3306
      %3581 = vmatpush.bf16.msra.mxu0 %v3304
      %3582 = vmatpush.bf16.msra.mxu0 %v3302
      %3583 = vmatpush.bf16.msra.mxu0 %v3300
      %3584 = vmatpush.bf16.msra.mxu0 %v3298
      %3585 = vmatpush.bf16.msra.mxu0 %v3296
      %3586 = vmatpush.bf16.msra.mxu0 %v3294
      %3587 = vmatmul.bf16.gmra.mxu0 %v2688
      %v3588 = vpop.f32.mrf.mxu0
      %v3589 = vadd.f32 %v3576, %v3588
      %v3590 = vpop.f32.mrf.mxu0
      %3591 = vdwg.mxu0
      %3592 = vmatpush.bf16.msra.mxu0 %v3324
      %3593 = vmatpush.bf16.msra.mxu0 %v3322
      %3594 = vmatpush.bf16.msra.mxu0 %v3320
      %3595 = vmatpush.bf16.msra.mxu0 %v3318
      %3596 = vmatpush.bf16.msra.mxu0 %v3316
      %3597 = vmatpush.bf16.msra.mxu0 %v3314
      %3598 = vmatpush.bf16.msra.mxu0 %v3312
      %3599 = vmatpush.bf16.msra.mxu0 %v3310
      %3600 = vmatmul.bf16.gmra.mxu0 %v2689
      %v3601 = vpop.f32.mrf.mxu0
      %v3602 = vadd.f32 %v3589, %v3601
      %v3603 = vpop.f32.mrf.mxu0
      %3604 = vdwg.mxu0
      %3605 = vmatpush.bf16.msra.mxu0 %v3340
      %3606 = vmatpush.bf16.msra.mxu0 %v3338
      %3607 = vmatpush.bf16.msra.mxu0 %v3336
      %3608 = vmatpush.bf16.msra.mxu0 %v3334
      %3609 = vmatpush.bf16.msra.mxu0 %v3332
      %3610 = vmatpush.bf16.msra.mxu0 %v3330
      %3611 = vmatpush.bf16.msra.mxu0 %v3328
      %3612 = vmatpush.bf16.msra.mxu0 %v3326
      %3613 = vmatmul.bf16.gmra.mxu0 %v2690
      %v3614 = vpop.f32.mrf.mxu0
      %v3615 = vadd.f32 %v3602, %v3614
      %v3616 = vpop.f32.mrf.mxu0
      %3617 = vdwg.mxu0
      %3618 = vmatpush.bf16.msra.mxu0 %v3356
      %3619 = vmatpush.bf16.msra.mxu0 %v3354
      %3620 = vmatpush.bf16.msra.mxu0 %v3352
      %3621 = vmatpush.bf16.msra.mxu0 %v3350
      %3622 = vmatpush.bf16.msra.mxu0 %v3348
      %3623 = vmatpush.bf16.msra.mxu0 %v3346
      %3624 = vmatpush.bf16.msra.mxu0 %v3344
      %3625 = vmatpush.bf16.msra.mxu0 %v3342
      %3626 = vmatmul.bf16.gmra.mxu0 %v2691
      %v3627 = vpop.f32.mrf.mxu0
      %v3628 = vadd.f32 %v3615, %v3627
      %v3629 = vpop.f32.mrf.mxu0
      %3630 = vdwg.mxu0
      %3631 = vmatpush.bf16.msra.mxu0 %v3372
      %3632 = vmatpush.bf16.msra.mxu0 %v3370
      %3633 = vmatpush.bf16.msra.mxu0 %v3368
      %3634 = vmatpush.bf16.msra.mxu0 %v3366
      %3635 = vmatpush.bf16.msra.mxu0 %v3364
      %3636 = vmatpush.bf16.msra.mxu0 %v3362
      %3637 = vmatpush.bf16.msra.mxu0 %v3360
      %3638 = vmatpush.bf16.msra.mxu0 %v3358
      %3639 = vmatmul.bf16.gmra.mxu0 %v2692
      %v3640 = vpop.f32.mrf.mxu0
      %v3641 = vadd.f32 %v3628, %v3640
      %v3642 = vpop.f32.mrf.mxu0
      %3643 = vdwg.mxu0
      %3644 = vmatpush.bf16.msra.mxu0 %v3388
      %3645 = vmatpush.bf16.msra.mxu0 %v3386
      %3646 = vmatpush.bf16.msra.mxu0 %v3384
      %3647 = vmatpush.bf16.msra.mxu0 %v3382
      %3648 = vmatpush.bf16.msra.mxu0 %v3380
      %3649 = vmatpush.bf16.msra.mxu0 %v3378
      %3650 = vmatpush.bf16.msra.mxu0 %v3376
      %3651 = vmatpush.bf16.msra.mxu0 %v3374
      %3652 = vmatmul.bf16.gmra.mxu0 %v2693
      %v3653 = vpop.f32.mrf.mxu0
      %v3654 = vadd.f32 %v3641, %v3653
      %v3655 = vpop.f32.mrf.mxu0
      %3656 = vdwg.mxu0
      %3657 = vmatpush.bf16.msra.mxu0 %v3404
      %3658 = vmatpush.bf16.msra.mxu0 %v3402
      %3659 = vmatpush.bf16.msra.mxu0 %v3400
      %3660 = vmatpush.bf16.msra.mxu0 %v3398
      %3661 = vmatpush.bf16.msra.mxu0 %v3396
      %3662 = vmatpush.bf16.msra.mxu0 %v3394
      %3663 = vmatpush.bf16.msra.mxu0 %v3392
      %3664 = vmatpush.bf16.msra.mxu0 %v3390
      %3665 = vmatmul.bf16.gmra.mxu0 %v2694
      %v3666 = vpop.f32.mrf.mxu0
      %v3667 = vadd.f32 %v3654, %v3666
      %v3668 = vpop.f32.mrf.mxu0
      %3669 = vdwg.mxu0
      %3670 = vmatpush.bf16.msra.mxu0 %v3420
      %3671 = vmatpush.bf16.msra.mxu0 %v3418
      %3672 = vmatpush.bf16.msra.mxu0 %v3416
      %3673 = vmatpush.bf16.msra.mxu0 %v3414
      %3674 = vmatpush.bf16.msra.mxu0 %v3412
      %3675 = vmatpush.bf16.msra.mxu0 %v3410
      %3676 = vmatpush.bf16.msra.mxu0 %v3408
      %3677 = vmatpush.bf16.msra.mxu0 %v3406
      %3678 = vmatmul.bf16.gmra.mxu0 %v2695
      %v3679 = vpop.f32.mrf.mxu0
      %v3680 = vadd.f32 %v3667, %v3679
      %v3681 = vpop.f32.mrf.mxu0
      %3682 = vdwg.mxu0
      %3683 = vmatpush.bf16.msra.mxu0 %v3293
      %3684 = vmatpush.bf16.msra.mxu0 %v3291
      %3685 = vmatpush.bf16.msra.mxu0 %v3289
      %3686 = vmatpush.bf16.msra.mxu0 %v3287
      %3687 = vmatpush.bf16.msra.mxu0 %v3285
      %3688 = vmatpush.bf16.msra.mxu0 %v3283
      %3689 = vmatpush.bf16.msra.mxu0 %v3281
      %3690 = vmatpush.bf16.msra.mxu0 %v3279
      %3691 = vmatmul.bf16.gmra.mxu0 %v2687
      %v3692 = vpop.f32.mrf.mxu0
      %v3693 = vadd.f32 %v2843, %v3692
      %v3694 = vpop.f32.mrf.mxu0
      %3695 = vdwg.mxu0
      %3696 = vmatpush.bf16.msra.mxu0 %v3309
      %3697 = vmatpush.bf16.msra.mxu0 %v3307
      %3698 = vmatpush.bf16.msra.mxu0 %v3305
      %3699 = vmatpush.bf16.msra.mxu0 %v3303
      %3700 = vmatpush.bf16.msra.mxu0 %v3301
      %3701 = vmatpush.bf16.msra.mxu0 %v3299
      %3702 = vmatpush.bf16.msra.mxu0 %v3297
      %3703 = vmatpush.bf16.msra.mxu0 %v3295
      %3704 = vmatmul.bf16.gmra.mxu0 %v2688
      %v3705 = vpop.f32.mrf.mxu0
      %v3706 = vadd.f32 %v3693, %v3705
      %v3707 = vpop.f32.mrf.mxu0
      %3708 = vdwg.mxu0
      %3709 = vmatpush.bf16.msra.mxu0 %v3325
      %3710 = vmatpush.bf16.msra.mxu0 %v3323
      %3711 = vmatpush.bf16.msra.mxu0 %v3321
      %3712 = vmatpush.bf16.msra.mxu0 %v3319
      %3713 = vmatpush.bf16.msra.mxu0 %v3317
      %3714 = vmatpush.bf16.msra.mxu0 %v3315
      %3715 = vmatpush.bf16.msra.mxu0 %v3313
      %3716 = vmatpush.bf16.msra.mxu0 %v3311
      %3717 = vmatmul.bf16.gmra.mxu0 %v2689
      %v3718 = vpop.f32.mrf.mxu0
      %v3719 = vadd.f32 %v3706, %v3718
      %v3720 = vpop.f32.mrf.mxu0
      %3721 = vdwg.mxu0
      %3722 = vmatpush.bf16.msra.mxu0 %v3341
      %3723 = vmatpush.bf16.msra.mxu0 %v3339
      %3724 = vmatpush.bf16.msra.mxu0 %v3337
      %3725 = vmatpush.bf16.msra.mxu0 %v3335
      %3726 = vmatpush.bf16.msra.mxu0 %v3333
      %3727 = vmatpush.bf16.msra.mxu0 %v3331
      %3728 = vmatpush.bf16.msra.mxu0 %v3329
      %3729 = vmatpush.bf16.msra.mxu0 %v3327
      %3730 = vmatmul.bf16.gmra.mxu0 %v2690
      %v3731 = vpop.f32.mrf.mxu0
      %v3732 = vadd.f32 %v3719, %v3731
      %v3733 = vpop.f32.mrf.mxu0
      %3734 = vdwg.mxu0
      %3735 = vmatpush.bf16.msra.mxu0 %v3357
      %3736 = vmatpush.bf16.msra.mxu0 %v3355
      %3737 = vmatpush.bf16.msra.mxu0 %v3353
      %3738 = vmatpush.bf16.msra.mxu0 %v3351
      %3739 = vmatpush.bf16.msra.mxu0 %v3349
      %3740 = vmatpush.bf16.msra.mxu0 %v3347
      %3741 = vmatpush.bf16.msra.mxu0 %v3345
      %3742 = vmatpush.bf16.msra.mxu0 %v3343
      %3743 = vmatmul.bf16.gmra.mxu0 %v2691
      %v3744 = vpop.f32.mrf.mxu0
      %v3745 = vadd.f32 %v3732, %v3744
      %v3746 = vpop.f32.mrf.mxu0
      %3747 = vdwg.mxu0
      %3748 = vmatpush.bf16.msra.mxu0 %v3373
      %3749 = vmatpush.bf16.msra.mxu0 %v3371
      %3750 = vmatpush.bf16.msra.mxu0 %v3369
      %3751 = vmatpush.bf16.msra.mxu0 %v3367
      %3752 = vmatpush.bf16.msra.mxu0 %v3365
      %3753 = vmatpush.bf16.msra.mxu0 %v3363
      %3754 = vmatpush.bf16.msra.mxu0 %v3361
      %3755 = vmatpush.bf16.msra.mxu0 %v3359
      %3756 = vmatmul.bf16.gmra.mxu0 %v2692
      %v3757 = vpop.f32.mrf.mxu0
      %v3758 = vadd.f32 %v3745, %v3757
      %v3759 = vpop.f32.mrf.mxu0
      %3760 = vdwg.mxu0
      %3761 = vmatpush.bf16.msra.mxu0 %v3389
      %3762 = vmatpush.bf16.msra.mxu0 %v3387
      %3763 = vmatpush.bf16.msra.mxu0 %v3385
      %3764 = vmatpush.bf16.msra.mxu0 %v3383
      %3765 = vmatpush.bf16.msra.mxu0 %v3381
      %3766 = vmatpush.bf16.msra.mxu0 %v3379
      %3767 = vmatpush.bf16.msra.mxu0 %v3377
      %3768 = vmatpush.bf16.msra.mxu0 %v3375
      %3769 = vmatmul.bf16.gmra.mxu0 %v2693
      %v3770 = vpop.f32.mrf.mxu0
      %v3771 = vadd.f32 %v3758, %v3770
      %v3772 = vpop.f32.mrf.mxu0
      %3773 = vdwg.mxu0
      %3774 = vmatpush.bf16.msra.mxu0 %v3405
      %3775 = vmatpush.bf16.msra.mxu0 %v3403
      %3776 = vmatpush.bf16.msra.mxu0 %v3401
      %3777 = vmatpush.bf16.msra.mxu0 %v3399
      %3778 = vmatpush.bf16.msra.mxu0 %v3397
      %3779 = vmatpush.bf16.msra.mxu0 %v3395
      %3780 = vmatpush.bf16.msra.mxu0 %v3393
      %3781 = vmatpush.bf16.msra.mxu0 %v3391
      %3782 = vmatmul.bf16.gmra.mxu0 %v2694
      %v3783 = vpop.f32.mrf.mxu0
      %v3784 = vadd.f32 %v3771, %v3783
      %v3785 = vpop.f32.mrf.mxu0
      %3786 = vdwg.mxu0
      %3787 = vmatpush.bf16.msra.mxu0 %v3421
      %3788 = vmatpush.bf16.msra.mxu0 %v3419
      %3789 = vmatpush.bf16.msra.mxu0 %v3417
      %3790 = vmatpush.bf16.msra.mxu0 %v3415
      %3791 = vmatpush.bf16.msra.mxu0 %v3413
      %3792 = vmatpush.bf16.msra.mxu0 %v3411
      %3793 = vmatpush.bf16.msra.mxu0 %v3409
      %3794 = vmatpush.bf16.msra.mxu0 %v3407
      %3795 = vmatmul.bf16.gmra.mxu0 %v2695
      %v3796 = vpop.f32.mrf.mxu0
      %v3797 = vadd.f32 %v3784, %v3796
      %v3798 = vpop.f32.mrf.mxu0
      %3799 = vdwg.mxu0
      %v3800 = vmax.f32 %v3680, 0.0
      %v3801 = vmax.f32 %v3797, 0.0
      %v3804 = vrot.slane %v3800, 2
      %v3805 = vrot.slane %v3801, 2
      %3808 = vst [vmem:[#allocation3] sm:$0xc0] %v3804
      %3809 = vst [vmem:[#allocation3 + $0x8] sm:$0xc0] %v3805
      %3810 = vst [vmem:[#allocation3 + $0x10] sm:$0x1] %v3804
      %3811 = vst [vmem:[#allocation3 + $0x18] sm:$0x1] %v3805
      %v3812 = vld [vmem:[#allocation3] sm:$0x3]
      %v3813 = vld [vmem:[#allocation3 + $0x8] sm:$0x3]
      %v3814 = vld [vmem:[#allocation3] sm:$0x6]
      %v3815 = vld [vmem:[#allocation3 + $0x8] sm:$0x6]
      %v3816 = vld [vmem:[#allocation3] sm:$0x18]
      %v3817 = vld [vmem:[#allocation3 + $0x8] sm:$0x18]
      %v3818 = vld [vmem:[#allocation3] sm:$0x30]
      %v3819 = vld [vmem:[#allocation3 + $0x8] sm:$0x30]
      %v3822 = vrot.slane %v3814, 1
      %v3823 = vrot.slane %v3815, 1
      %v3828 = vrot.slane %v3816, 3
      %v3829 = vrot.slane %v3817, 3
      %v3834 = vrot.slane %v3818, 4
      %v3835 = vrot.slane %v3819, 4
      %v3838 = vpack.c.bf16 %v3812, %v3812
      %v3839 = vpack.c.bf16 %v3813, %v3813
      %v3840 = vpack.c.bf16 %v3822, %v3822
      %v3841 = vpack.c.bf16 %v3823, %v3823
      %v3842 = vpack.c.bf16 %v3828, %v3828
      %v3843 = vpack.c.bf16 %v3829, %v3829
      %v3844 = vpack.c.bf16 %v3834, %v3834
      %v3845 = vpack.c.bf16 %v3835, %v3835
      %v3846 = vld [vmem:[%s5] sm:$0xff]
      %v3847 = vld [vmem:[%s5 + $0x8] sm:$0xff]
      %v3848 = vld [vmem:[%s5 + $0x10] sm:$0xff]
      %v3849 = vld [vmem:[%s5 + $0x18] sm:$0xff]
      %v3850 = vld [vmem:[%s5 + $0x20] sm:$0xff]
      %v3851 = vld [vmem:[%s5 + $0x28] sm:$0xff]
      %v3852 = vld [vmem:[%s5 + $0x30] sm:$0xff]
      %v3853 = vld [vmem:[%s5 + $0x38] sm:$0xff]
      %v3854 = vld [vmem:[%s5 + $0x40] sm:$0xff]
      %v3855 = vld [vmem:[%s5 + $0x48] sm:$0xff]
      %v3856 = vld [vmem:[%s5 + $0x50] sm:$0xff]
      %v3857 = vld [vmem:[%s5 + $0x58] sm:$0xff]
      %v3858 = vld [vmem:[%s5 + $0x60] sm:$0xff]
      %v3859 = vld [vmem:[%s5 + $0x68] sm:$0xff]
      %v3860 = vld [vmem:[%s5 + $0x70] sm:$0xff]
      %v3861 = vld [vmem:[%s5 + $0x78] sm:$0xff]
      %v3862 = vld [vmem:[%s5 + $0x80] sm:$0xff]
      %v3863 = vld [vmem:[%s5 + $0x88] sm:$0xff]
      %v3864 = vld [vmem:[%s5 + $0x90] sm:$0xff]
      %v3865 = vld [vmem:[%s5 + $0x98] sm:$0xff]
      %v3866 = vld [vmem:[%s5 + $0xa0] sm:$0xff]
      %v3867 = vld [vmem:[%s5 + $0xa8] sm:$0xff]
      %v3868 = vld [vmem:[%s5 + $0xb0] sm:$0xff]
      %v3869 = vld [vmem:[%s5 + $0xb8] sm:$0xff]
      %v3870 = vld [vmem:[%s5 + $0xc0] sm:$0xff]
      %v3871 = vld [vmem:[%s5 + $0xc8] sm:$0xff]
      %v3872 = vld [vmem:[%s5 + $0xd0] sm:$0xff]
      %v3873 = vld [vmem:[%s5 + $0xd8] sm:$0xff]
      %v3874 = vld [vmem:[%s5 + $0xe0] sm:$0xff]
      %v3875 = vld [vmem:[%s5 + $0xe8] sm:$0xff]
      %v3876 = vld [vmem:[%s5 + $0xf0] sm:$0xff]
      %v3877 = vld [vmem:[%s5 + $0xf8] sm:$0xff]
      %v3878 = vld [vmem:[%s5 + $0x100] sm:$0xff]
      %v3879 = vld [vmem:[%s5 + $0x108] sm:$0xff]
      %v3880 = vld [vmem:[%s5 + $0x110] sm:$0xff]
      %v3881 = vld [vmem:[%s5 + $0x118] sm:$0xff]
      %v3882 = vld [vmem:[%s5 + $0x120] sm:$0xff]
      %v3883 = vld [vmem:[%s5 + $0x128] sm:$0xff]
      %v3884 = vld [vmem:[%s5 + $0x130] sm:$0xff]
      %v3885 = vld [vmem:[%s5 + $0x138] sm:$0xff]
      %v3886 = vld [vmem:[%s5 + $0x140] sm:$0xff]
      %v3887 = vld [vmem:[%s5 + $0x148] sm:$0xff]
      %v3888 = vld [vmem:[%s5 + $0x150] sm:$0xff]
      %v3889 = vld [vmem:[%s5 + $0x158] sm:$0xff]
      %v3890 = vld [vmem:[%s5 + $0x160] sm:$0xff]
      %v3891 = vld [vmem:[%s5 + $0x168] sm:$0xff]
      %v3892 = vld [vmem:[%s5 + $0x170] sm:$0xff]
      %v3893 = vld [vmem:[%s5 + $0x178] sm:$0xff]
      %v3894 = vld [vmem:[%s5 + $0x180] sm:$0xff]
      %v3895 = vld [vmem:[%s5 + $0x188] sm:$0xff]
      %v3896 = vld [vmem:[%s5 + $0x190] sm:$0xff]
      %v3897 = vld [vmem:[%s5 + $0x198] sm:$0xff]
      %v3898 = vld [vmem:[%s5 + $0x1a0] sm:$0xff]
      %v3899 = vld [vmem:[%s5 + $0x1a8] sm:$0xff]
      %v3900 = vld [vmem:[%s5 + $0x1b0] sm:$0xff]
      %v3901 = vld [vmem:[%s5 + $0x1b8] sm:$0xff]
      %v3902 = vld [vmem:[%s5 + $0x1c0] sm:$0xff]
      %v3903 = vld [vmem:[%s5 + $0x1c8] sm:$0xff]
      %v3904 = vld [vmem:[%s5 + $0x1d0] sm:$0xff]
      %v3905 = vld [vmem:[%s5 + $0x1d8] sm:$0xff]
      %v3906 = vld [vmem:[%s5 + $0x1e0] sm:$0xff]
      %v3907 = vld [vmem:[%s5 + $0x1e8] sm:$0xff]
      %v3908 = vld [vmem:[%s5 + $0x1f0] sm:$0xff]
      %v3909 = vld [vmem:[%s5 + $0x1f8] sm:$0xff]
      %v3910 = vld [vmem:[%s5 + $0x200] sm:$0xff]
      %v3911 = vld [vmem:[%s5 + $0x208] sm:$0xff]
      %v3912 = vld [vmem:[%s5 + $0x210] sm:$0xff]
      %v3913 = vld [vmem:[%s5 + $0x218] sm:$0xff]
      %v3914 = vld [vmem:[%s5 + $0x220] sm:$0xff]
      %v3915 = vld [vmem:[%s5 + $0x228] sm:$0xff]
      %v3916 = vld [vmem:[%s5 + $0x230] sm:$0xff]
      %v3917 = vld [vmem:[%s5 + $0x238] sm:$0xff]
      %v3918 = vld [vmem:[%s5 + $0x240] sm:$0xff]
      %v3919 = vld [vmem:[%s5 + $0x248] sm:$0xff]
      %v3920 = vld [vmem:[%s5 + $0x250] sm:$0xff]
      %v3921 = vld [vmem:[%s5 + $0x258] sm:$0xff]
      %v3922 = vld [vmem:[%s5 + $0x260] sm:$0xff]
      %v3923 = vld [vmem:[%s5 + $0x268] sm:$0xff]
      %v3924 = vld [vmem:[%s5 + $0x270] sm:$0xff]
      %v3925 = vld [vmem:[%s5 + $0x278] sm:$0xff]
      %v3926 = vld [vmem:[%s5 + $0x280] sm:$0xff]
      %v3927 = vld [vmem:[%s5 + $0x288] sm:$0xff]
      %v3928 = vld [vmem:[%s5 + $0x290] sm:$0xff]
      %v3929 = vld [vmem:[%s5 + $0x298] sm:$0xff]
      %v3930 = vld [vmem:[%s5 + $0x2a0] sm:$0xff]
      %v3931 = vld [vmem:[%s5 + $0x2a8] sm:$0xff]
      %v3932 = vld [vmem:[%s5 + $0x2b0] sm:$0xff]
      %v3933 = vld [vmem:[%s5 + $0x2b8] sm:$0xff]
      %v3934 = vld [vmem:[%s5 + $0x2c0] sm:$0xff]
      %v3935 = vld [vmem:[%s5 + $0x2c8] sm:$0xff]
      %v3936 = vld [vmem:[%s5 + $0x2d0] sm:$0xff]
      %v3937 = vld [vmem:[%s5 + $0x2d8] sm:$0xff]
      %v3938 = vld [vmem:[%s5 + $0x2e0] sm:$0xff]
      %v3939 = vld [vmem:[%s5 + $0x2e8] sm:$0xff]
      %v3940 = vld [vmem:[%s5 + $0x2f0] sm:$0xff]
      %v3941 = vld [vmem:[%s5 + $0x2f8] sm:$0xff]
      %v3942 = vld [vmem:[%s5 + $0x300] sm:$0xff]
      %v3943 = vld [vmem:[%s5 + $0x308] sm:$0xff]
      %v3944 = vld [vmem:[%s5 + $0x310] sm:$0xff]
      %v3945 = vld [vmem:[%s5 + $0x318] sm:$0xff]
      %v3946 = vld [vmem:[%s5 + $0x320] sm:$0xff]
      %v3947 = vld [vmem:[%s5 + $0x328] sm:$0xff]
      %v3948 = vld [vmem:[%s5 + $0x330] sm:$0xff]
      %v3949 = vld [vmem:[%s5 + $0x338] sm:$0xff]
      %v3950 = vld [vmem:[%s5 + $0x340] sm:$0xff]
      %v3951 = vld [vmem:[%s5 + $0x348] sm:$0xff]
      %v3952 = vld [vmem:[%s5 + $0x350] sm:$0xff]
      %v3953 = vld [vmem:[%s5 + $0x358] sm:$0xff]
      %v3954 = vld [vmem:[%s5 + $0x360] sm:$0xff]
      %v3955 = vld [vmem:[%s5 + $0x368] sm:$0xff]
      %v3956 = vld [vmem:[%s5 + $0x370] sm:$0xff]
      %v3957 = vld [vmem:[%s5 + $0x378] sm:$0xff]
      %v3958 = vld [vmem:[%s5 + $0x380] sm:$0xff]
      %v3959 = vld [vmem:[%s5 + $0x388] sm:$0xff]
      %v3960 = vld [vmem:[%s5 + $0x390] sm:$0xff]
      %v3961 = vld [vmem:[%s5 + $0x398] sm:$0xff]
      %v3962 = vld [vmem:[%s5 + $0x3a0] sm:$0xff]
      %v3963 = vld [vmem:[%s5 + $0x3a8] sm:$0xff]
      %v3964 = vld [vmem:[%s5 + $0x3b0] sm:$0xff]
      %v3965 = vld [vmem:[%s5 + $0x3b8] sm:$0xff]
      %v3966 = vld [vmem:[%s5 + $0x3c0] sm:$0xff]
      %v3967 = vld [vmem:[%s5 + $0x3c8] sm:$0xff]
      %v3968 = vld [vmem:[%s5 + $0x3d0] sm:$0xff]
      %v3969 = vld [vmem:[%s5 + $0x3d8] sm:$0xff]
      %v3970 = vld [vmem:[%s5 + $0x3e0] sm:$0xff]
      %v3971 = vld [vmem:[%s5 + $0x3e8] sm:$0xff]
      %v3972 = vld [vmem:[%s5 + $0x3f0] sm:$0xff]
      %v3973 = vld [vmem:[%s5 + $0x3f8] sm:$0xff]
      %v3974 = vld [vmem:[%s5 + $0x400] sm:$0xff]
      %v3975 = vld [vmem:[%s5 + $0x408] sm:$0xff]
      %v3976 = vld [vmem:[%s5 + $0x410] sm:$0xff]
      %v3977 = vld [vmem:[%s5 + $0x418] sm:$0xff]
      %v3978 = vld [vmem:[%s5 + $0x420] sm:$0xff]
      %v3979 = vld [vmem:[%s5 + $0x428] sm:$0xff]
      %v3980 = vld [vmem:[%s5 + $0x430] sm:$0xff]
      %v3981 = vld [vmem:[%s5 + $0x438] sm:$0xff]
      %v3982 = vld [vmem:[%s5 + $0x440] sm:$0xff]
      %v3983 = vld [vmem:[%s5 + $0x448] sm:$0xff]
      %v3984 = vld [vmem:[%s5 + $0x450] sm:$0xff]
      %v3985 = vld [vmem:[%s5 + $0x458] sm:$0xff]
      %v3986 = vld [vmem:[%s5 + $0x460] sm:$0xff]
      %v3987 = vld [vmem:[%s5 + $0x468] sm:$0xff]
      %v3988 = vld [vmem:[%s5 + $0x470] sm:$0xff]
      %v3989 = vld [vmem:[%s5 + $0x478] sm:$0xff]
      %v3990 = vld [vmem:[%s5 + $0x480] sm:$0xff]
      %v3991 = vld [vmem:[%s5 + $0x488] sm:$0xff]
      %v3992 = vld [vmem:[%s5 + $0x490] sm:$0xff]
      %v3993 = vld [vmem:[%s5 + $0x498] sm:$0xff]
      %v3994 = vld [vmem:[%s5 + $0x4a0] sm:$0xff]
      %v3995 = vld [vmem:[%s5 + $0x4a8] sm:$0xff]
      %v3996 = vld [vmem:[%s5 + $0x4b0] sm:$0xff]
      %v3997 = vld [vmem:[%s5 + $0x4b8] sm:$0xff]
      %v3998 = vld [vmem:[%s5 + $0x4c0] sm:$0xff]
      %v3999 = vld [vmem:[%s5 + $0x4c8] sm:$0xff]
      %v4000 = vld [vmem:[%s5 + $0x4d0] sm:$0xff]
      %v4001 = vld [vmem:[%s5 + $0x4d8] sm:$0xff]
      %v4002 = vld [vmem:[%s5 + $0x4e0] sm:$0xff]
      %v4003 = vld [vmem:[%s5 + $0x4e8] sm:$0xff]
      %v4004 = vld [vmem:[%s5 + $0x4f0] sm:$0xff]
      %v4005 = vld [vmem:[%s5 + $0x4f8] sm:$0xff]
      %v4006 = vld [vmem:[%s5 + $0x500] sm:$0xff]
      %v4007 = vld [vmem:[%s5 + $0x508] sm:$0xff]
      %v4008 = vld [vmem:[%s5 + $0x510] sm:$0xff]
      %v4009 = vld [vmem:[%s5 + $0x518] sm:$0xff]
      %v4010 = vld [vmem:[%s5 + $0x520] sm:$0xff]
      %v4011 = vld [vmem:[%s5 + $0x528] sm:$0xff]
      %v4012 = vld [vmem:[%s5 + $0x530] sm:$0xff]
      %v4013 = vld [vmem:[%s5 + $0x538] sm:$0xff]
      %v4014 = vld [vmem:[%s5 + $0x540] sm:$0xff]
      %v4015 = vld [vmem:[%s5 + $0x548] sm:$0xff]
      %v4016 = vld [vmem:[%s5 + $0x550] sm:$0xff]
      %v4017 = vld [vmem:[%s5 + $0x558] sm:$0xff]
      %v4018 = vld [vmem:[%s5 + $0x560] sm:$0xff]
      %v4019 = vld [vmem:[%s5 + $0x568] sm:$0xff]
      %v4020 = vld [vmem:[%s5 + $0x570] sm:$0xff]
      %v4021 = vld [vmem:[%s5 + $0x578] sm:$0xff]
      %v4022 = vld [vmem:[%s5 + $0x580] sm:$0xff]
      %v4023 = vld [vmem:[%s5 + $0x588] sm:$0xff]
      %v4024 = vld [vmem:[%s5 + $0x590] sm:$0xff]
      %v4025 = vld [vmem:[%s5 + $0x598] sm:$0xff]
      %v4026 = vld [vmem:[%s5 + $0x5a0] sm:$0xff]
      %v4027 = vld [vmem:[%s5 + $0x5a8] sm:$0xff]
      %v4028 = vld [vmem:[%s5 + $0x5b0] sm:$0xff]
      %v4029 = vld [vmem:[%s5 + $0x5b8] sm:$0xff]
      %v4030 = vld [vmem:[%s5 + $0x5c0] sm:$0xff]
      %v4031 = vld [vmem:[%s5 + $0x5c8] sm:$0xff]
      %v4032 = vld [vmem:[%s5 + $0x5d0] sm:$0xff]
      %v4033 = vld [vmem:[%s5 + $0x5d8] sm:$0xff]
      %v4034 = vld [vmem:[%s5 + $0x5e0] sm:$0xff]
      %v4035 = vld [vmem:[%s5 + $0x5e8] sm:$0xff]
      %v4036 = vld [vmem:[%s5 + $0x5f0] sm:$0xff]
      %v4037 = vld [vmem:[%s5 + $0x5f8] sm:$0xff]
      %v4038 = vld [vmem:[%s5 + $0x600] sm:$0xff]
      %v4039 = vld [vmem:[%s5 + $0x608] sm:$0xff]
      %v4040 = vld [vmem:[%s5 + $0x610] sm:$0xff]
      %v4041 = vld [vmem:[%s5 + $0x618] sm:$0xff]
      %v4042 = vld [vmem:[%s5 + $0x620] sm:$0xff]
      %v4043 = vld [vmem:[%s5 + $0x628] sm:$0xff]
      %v4044 = vld [vmem:[%s5 + $0x630] sm:$0xff]
      %v4045 = vld [vmem:[%s5 + $0x638] sm:$0xff]
      %v4046 = vld [vmem:[%s5 + $0x640] sm:$0xff]
      %v4047 = vld [vmem:[%s5 + $0x648] sm:$0xff]
      %v4048 = vld [vmem:[%s5 + $0x650] sm:$0xff]
      %v4049 = vld [vmem:[%s5 + $0x658] sm:$0xff]
      %v4050 = vld [vmem:[%s5 + $0x660] sm:$0xff]
      %v4051 = vld [vmem:[%s5 + $0x668] sm:$0xff]
      %v4052 = vld [vmem:[%s5 + $0x670] sm:$0xff]
      %v4053 = vld [vmem:[%s5 + $0x678] sm:$0xff]
      %v4054 = vld [vmem:[%s5 + $0x680] sm:$0xff]
      %v4055 = vld [vmem:[%s5 + $0x688] sm:$0xff]
      %v4056 = vld [vmem:[%s5 + $0x690] sm:$0xff]
      %v4057 = vld [vmem:[%s5 + $0x698] sm:$0xff]
      %v4058 = vld [vmem:[%s5 + $0x6a0] sm:$0xff]
      %v4059 = vld [vmem:[%s5 + $0x6a8] sm:$0xff]
      %v4060 = vld [vmem:[%s5 + $0x6b0] sm:$0xff]
      %v4061 = vld [vmem:[%s5 + $0x6b8] sm:$0xff]
      %v4062 = vld [vmem:[%s5 + $0x6c0] sm:$0xff]
      %v4063 = vld [vmem:[%s5 + $0x6c8] sm:$0xff]
      %v4064 = vld [vmem:[%s5 + $0x6d0] sm:$0xff]
      %v4065 = vld [vmem:[%s5 + $0x6d8] sm:$0xff]
      %v4066 = vld [vmem:[%s5 + $0x6e0] sm:$0xff]
      %v4067 = vld [vmem:[%s5 + $0x6e8] sm:$0xff]
      %v4068 = vld [vmem:[%s5 + $0x6f0] sm:$0xff]
      %v4069 = vld [vmem:[%s5 + $0x6f8] sm:$0xff]
      %v4070 = vld [vmem:[%s5 + $0x700] sm:$0xff]
      %v4071 = vld [vmem:[%s5 + $0x708] sm:$0xff]
      %v4072 = vld [vmem:[%s5 + $0x710] sm:$0xff]
      %v4073 = vld [vmem:[%s5 + $0x718] sm:$0xff]
      %v4074 = vld [vmem:[%s5 + $0x720] sm:$0xff]
      %v4075 = vld [vmem:[%s5 + $0x728] sm:$0xff]
      %v4076 = vld [vmem:[%s5 + $0x730] sm:$0xff]
      %v4077 = vld [vmem:[%s5 + $0x738] sm:$0xff]
      %v4078 = vld [vmem:[%s5 + $0x740] sm:$0xff]
      %v4079 = vld [vmem:[%s5 + $0x748] sm:$0xff]
      %v4080 = vld [vmem:[%s5 + $0x750] sm:$0xff]
      %v4081 = vld [vmem:[%s5 + $0x758] sm:$0xff]
      %v4082 = vld [vmem:[%s5 + $0x760] sm:$0xff]
      %v4083 = vld [vmem:[%s5 + $0x768] sm:$0xff]
      %v4084 = vld [vmem:[%s5 + $0x770] sm:$0xff]
      %v4085 = vld [vmem:[%s5 + $0x778] sm:$0xff]
      %v4086 = vld [vmem:[%s5 + $0x780] sm:$0xff]
      %v4087 = vld [vmem:[%s5 + $0x788] sm:$0xff]
      %v4088 = vld [vmem:[%s5 + $0x790] sm:$0xff]
      %v4089 = vld [vmem:[%s5 + $0x798] sm:$0xff]
      %v4090 = vld [vmem:[%s5 + $0x7a0] sm:$0xff]
      %v4091 = vld [vmem:[%s5 + $0x7a8] sm:$0xff]
      %v4092 = vld [vmem:[%s5 + $0x7b0] sm:$0xff]
      %v4093 = vld [vmem:[%s5 + $0x7b8] sm:$0xff]
      %v4094 = vld [vmem:[%s5 + $0x7c0] sm:$0xff]
      %v4095 = vld [vmem:[%s5 + $0x7c8] sm:$0xff]
      %v4096 = vld [vmem:[%s5 + $0x7d0] sm:$0xff]
      %v4097 = vld [vmem:[%s5 + $0x7d8] sm:$0xff]
      %v4098 = vld [vmem:[%s5 + $0x7e0] sm:$0xff]
      %v4099 = vld [vmem:[%s5 + $0x7e8] sm:$0xff]
      %v4100 = vld [vmem:[%s5 + $0x7f0] sm:$0xff]
      %v4101 = vld [vmem:[%s5 + $0x7f8] sm:$0xff]
      %v4102 = vld [vmem:[%s6] sm:$0xf]
      %v4104 = vperm.slane %v4102, 0
      %v4105 = vperm.slane %v4102, 1
      %v4106 = vperm.slane %v4102, 2
      %v4107 = vperm.slane %v4102, 3
      %v4368 = vunpack.c.l.b16 %v3846
      %v4369 = vunpack.c.h.b16 %v3846
      %v4370 = vunpack.c.l.b16 %v3847
      %v4371 = vunpack.c.h.b16 %v3847
      %v4372 = vunpack.c.l.b16 %v3848
      %v4373 = vunpack.c.h.b16 %v3848
      %v4374 = vunpack.c.l.b16 %v3849
      %v4375 = vunpack.c.h.b16 %v3849
      %v4376 = vunpack.c.l.b16 %v3850
      %v4377 = vunpack.c.h.b16 %v3850
      %v4378 = vunpack.c.l.b16 %v3851
      %v4379 = vunpack.c.h.b16 %v3851
      %v4380 = vunpack.c.l.b16 %v3852
      %v4381 = vunpack.c.h.b16 %v3852
      %v4382 = vunpack.c.l.b16 %v3853
      %v4383 = vunpack.c.h.b16 %v3853
      %v4384 = vunpack.c.l.b16 %v3854
      %v4385 = vunpack.c.h.b16 %v3854
      %v4386 = vunpack.c.l.b16 %v3855
      %v4387 = vunpack.c.h.b16 %v3855
      %v4388 = vunpack.c.l.b16 %v3856
      %v4389 = vunpack.c.h.b16 %v3856
      %v4390 = vunpack.c.l.b16 %v3857
      %v4391 = vunpack.c.h.b16 %v3857
      %v4392 = vunpack.c.l.b16 %v3858
      %v4393 = vunpack.c.h.b16 %v3858
      %v4394 = vunpack.c.l.b16 %v3859
      %v4395 = vunpack.c.h.b16 %v3859
      %v4396 = vunpack.c.l.b16 %v3860
      %v4397 = vunpack.c.h.b16 %v3860
      %v4398 = vunpack.c.l.b16 %v3861
      %v4399 = vunpack.c.h.b16 %v3861
      %v4400 = vunpack.c.l.b16 %v3862
      %v4401 = vunpack.c.h.b16 %v3862
      %v4402 = vunpack.c.l.b16 %v3863
      %v4403 = vunpack.c.h.b16 %v3863
      %v4404 = vunpack.c.l.b16 %v3864
      %v4405 = vunpack.c.h.b16 %v3864
      %v4406 = vunpack.c.l.b16 %v3865
      %v4407 = vunpack.c.h.b16 %v3865
      %v4408 = vunpack.c.l.b16 %v3866
      %v4409 = vunpack.c.h.b16 %v3866
      %v4410 = vunpack.c.l.b16 %v3867
      %v4411 = vunpack.c.h.b16 %v3867
      %v4412 = vunpack.c.l.b16 %v3868
      %v4413 = vunpack.c.h.b16 %v3868
      %v4414 = vunpack.c.l.b16 %v3869
      %v4415 = vunpack.c.h.b16 %v3869
      %v4416 = vunpack.c.l.b16 %v3870
      %v4417 = vunpack.c.h.b16 %v3870
      %v4418 = vunpack.c.l.b16 %v3871
      %v4419 = vunpack.c.h.b16 %v3871
      %v4420 = vunpack.c.l.b16 %v3872
      %v4421 = vunpack.c.h.b16 %v3872
      %v4422 = vunpack.c.l.b16 %v3873
      %v4423 = vunpack.c.h.b16 %v3873
      %v4424 = vunpack.c.l.b16 %v3874
      %v4425 = vunpack.c.h.b16 %v3874
      %v4426 = vunpack.c.l.b16 %v3875
      %v4427 = vunpack.c.h.b16 %v3875
      %v4428 = vunpack.c.l.b16 %v3876
      %v4429 = vunpack.c.h.b16 %v3876
      %v4430 = vunpack.c.l.b16 %v3877
      %v4431 = vunpack.c.h.b16 %v3877
      %v4432 = vunpack.c.l.b16 %v3878
      %v4433 = vunpack.c.h.b16 %v3878
      %v4434 = vunpack.c.l.b16 %v3879
      %v4435 = vunpack.c.h.b16 %v3879
      %v4436 = vunpack.c.l.b16 %v3880
      %v4437 = vunpack.c.h.b16 %v3880
      %v4438 = vunpack.c.l.b16 %v3881
      %v4439 = vunpack.c.h.b16 %v3881
      %v4440 = vunpack.c.l.b16 %v3882
      %v4441 = vunpack.c.h.b16 %v3882
      %v4442 = vunpack.c.l.b16 %v3883
      %v4443 = vunpack.c.h.b16 %v3883
      %v4444 = vunpack.c.l.b16 %v3884
      %v4445 = vunpack.c.h.b16 %v3884
      %v4446 = vunpack.c.l.b16 %v3885
      %v4447 = vunpack.c.h.b16 %v3885
      %v4448 = vunpack.c.l.b16 %v3886
      %v4449 = vunpack.c.h.b16 %v3886
      %v4450 = vunpack.c.l.b16 %v3887
      %v4451 = vunpack.c.h.b16 %v3887
      %v4452 = vunpack.c.l.b16 %v3888
      %v4453 = vunpack.c.h.b16 %v3888
      %v4454 = vunpack.c.l.b16 %v3889
      %v4455 = vunpack.c.h.b16 %v3889
      %v4456 = vunpack.c.l.b16 %v3890
      %v4457 = vunpack.c.h.b16 %v3890
      %v4458 = vunpack.c.l.b16 %v3891
      %v4459 = vunpack.c.h.b16 %v3891
      %v4460 = vunpack.c.l.b16 %v3892
      %v4461 = vunpack.c.h.b16 %v3892
      %v4462 = vunpack.c.l.b16 %v3893
      %v4463 = vunpack.c.h.b16 %v3893
      %v4464 = vunpack.c.l.b16 %v3894
      %v4465 = vunpack.c.h.b16 %v3894
      %v4466 = vunpack.c.l.b16 %v3895
      %v4467 = vunpack.c.h.b16 %v3895
      %v4468 = vunpack.c.l.b16 %v3896
      %v4469 = vunpack.c.h.b16 %v3896
      %v4470 = vunpack.c.l.b16 %v3897
      %v4471 = vunpack.c.h.b16 %v3897
      %v4472 = vunpack.c.l.b16 %v3898
      %v4473 = vunpack.c.h.b16 %v3898
      %v4474 = vunpack.c.l.b16 %v3899
      %v4475 = vunpack.c.h.b16 %v3899
      %v4476 = vunpack.c.l.b16 %v3900
      %v4477 = vunpack.c.h.b16 %v3900
      %v4478 = vunpack.c.l.b16 %v3901
      %v4479 = vunpack.c.h.b16 %v3901
      %v4480 = vunpack.c.l.b16 %v3902
      %v4481 = vunpack.c.h.b16 %v3902
      %v4482 = vunpack.c.l.b16 %v3903
      %v4483 = vunpack.c.h.b16 %v3903
      %v4484 = vunpack.c.l.b16 %v3904
      %v4485 = vunpack.c.h.b16 %v3904
      %v4486 = vunpack.c.l.b16 %v3905
      %v4487 = vunpack.c.h.b16 %v3905
      %v4488 = vunpack.c.l.b16 %v3906
      %v4489 = vunpack.c.h.b16 %v3906
      %v4490 = vunpack.c.l.b16 %v3907
      %v4491 = vunpack.c.h.b16 %v3907
      %v4492 = vunpack.c.l.b16 %v3908
      %v4493 = vunpack.c.h.b16 %v3908
      %v4494 = vunpack.c.l.b16 %v3909
      %v4495 = vunpack.c.h.b16 %v3909
      %v4496 = vunpack.c.l.b16 %v3910
      %v4497 = vunpack.c.h.b16 %v3910
      %v4498 = vunpack.c.l.b16 %v3911
      %v4499 = vunpack.c.h.b16 %v3911
      %v4500 = vunpack.c.l.b16 %v3912
      %v4501 = vunpack.c.h.b16 %v3912
      %v4502 = vunpack.c.l.b16 %v3913
      %v4503 = vunpack.c.h.b16 %v3913
      %v4504 = vunpack.c.l.b16 %v3914
      %v4505 = vunpack.c.h.b16 %v3914
      %v4506 = vunpack.c.l.b16 %v3915
      %v4507 = vunpack.c.h.b16 %v3915
      %v4508 = vunpack.c.l.b16 %v3916
      %v4509 = vunpack.c.h.b16 %v3916
      %v4510 = vunpack.c.l.b16 %v3917
      %v4511 = vunpack.c.h.b16 %v3917
      %v4512 = vunpack.c.l.b16 %v3918
      %v4513 = vunpack.c.h.b16 %v3918
      %v4514 = vunpack.c.l.b16 %v3919
      %v4515 = vunpack.c.h.b16 %v3919
      %v4516 = vunpack.c.l.b16 %v3920
      %v4517 = vunpack.c.h.b16 %v3920
      %v4518 = vunpack.c.l.b16 %v3921
      %v4519 = vunpack.c.h.b16 %v3921
      %v4520 = vunpack.c.l.b16 %v3922
      %v4521 = vunpack.c.h.b16 %v3922
      %v4522 = vunpack.c.l.b16 %v3923
      %v4523 = vunpack.c.h.b16 %v3923
      %v4524 = vunpack.c.l.b16 %v3924
      %v4525 = vunpack.c.h.b16 %v3924
      %v4526 = vunpack.c.l.b16 %v3925
      %v4527 = vunpack.c.h.b16 %v3925
      %v4528 = vunpack.c.l.b16 %v3926
      %v4529 = vunpack.c.h.b16 %v3926
      %v4530 = vunpack.c.l.b16 %v3927
      %v4531 = vunpack.c.h.b16 %v3927
      %v4532 = vunpack.c.l.b16 %v3928
      %v4533 = vunpack.c.h.b16 %v3928
      %v4534 = vunpack.c.l.b16 %v3929
      %v4535 = vunpack.c.h.b16 %v3929
      %v4536 = vunpack.c.l.b16 %v3930
      %v4537 = vunpack.c.h.b16 %v3930
      %v4538 = vunpack.c.l.b16 %v3931
      %v4539 = vunpack.c.h.b16 %v3931
      %v4540 = vunpack.c.l.b16 %v3932
      %v4541 = vunpack.c.h.b16 %v3932
      %v4542 = vunpack.c.l.b16 %v3933
      %v4543 = vunpack.c.h.b16 %v3933
      %v4544 = vunpack.c.l.b16 %v3934
      %v4545 = vunpack.c.h.b16 %v3934
      %v4546 = vunpack.c.l.b16 %v3935
      %v4547 = vunpack.c.h.b16 %v3935
      %v4548 = vunpack.c.l.b16 %v3936
      %v4549 = vunpack.c.h.b16 %v3936
      %v4550 = vunpack.c.l.b16 %v3937
      %v4551 = vunpack.c.h.b16 %v3937
      %v4552 = vunpack.c.l.b16 %v3938
      %v4553 = vunpack.c.h.b16 %v3938
      %v4554 = vunpack.c.l.b16 %v3939
      %v4555 = vunpack.c.h.b16 %v3939
      %v4556 = vunpack.c.l.b16 %v3940
      %v4557 = vunpack.c.h.b16 %v3940
      %v4558 = vunpack.c.l.b16 %v3941
      %v4559 = vunpack.c.h.b16 %v3941
      %v4560 = vunpack.c.l.b16 %v3942
      %v4561 = vunpack.c.h.b16 %v3942
      %v4562 = vunpack.c.l.b16 %v3943
      %v4563 = vunpack.c.h.b16 %v3943
      %v4564 = vunpack.c.l.b16 %v3944
      %v4565 = vunpack.c.h.b16 %v3944
      %v4566 = vunpack.c.l.b16 %v3945
      %v4567 = vunpack.c.h.b16 %v3945
      %v4568 = vunpack.c.l.b16 %v3946
      %v4569 = vunpack.c.h.b16 %v3946
      %v4570 = vunpack.c.l.b16 %v3947
      %v4571 = vunpack.c.h.b16 %v3947
      %v4572 = vunpack.c.l.b16 %v3948
      %v4573 = vunpack.c.h.b16 %v3948
      %v4574 = vunpack.c.l.b16 %v3949
      %v4575 = vunpack.c.h.b16 %v3949
      %v4576 = vunpack.c.l.b16 %v3950
      %v4577 = vunpack.c.h.b16 %v3950
      %v4578 = vunpack.c.l.b16 %v3951
      %v4579 = vunpack.c.h.b16 %v3951
      %v4580 = vunpack.c.l.b16 %v3952
      %v4581 = vunpack.c.h.b16 %v3952
      %v4582 = vunpack.c.l.b16 %v3953
      %v4583 = vunpack.c.h.b16 %v3953
      %v4584 = vunpack.c.l.b16 %v3954
      %v4585 = vunpack.c.h.b16 %v3954
      %v4586 = vunpack.c.l.b16 %v3955
      %v4587 = vunpack.c.h.b16 %v3955
      %v4588 = vunpack.c.l.b16 %v3956
      %v4589 = vunpack.c.h.b16 %v3956
      %v4590 = vunpack.c.l.b16 %v3957
      %v4591 = vunpack.c.h.b16 %v3957
      %v4592 = vunpack.c.l.b16 %v3958
      %v4593 = vunpack.c.h.b16 %v3958
      %v4594 = vunpack.c.l.b16 %v3959
      %v4595 = vunpack.c.h.b16 %v3959
      %v4596 = vunpack.c.l.b16 %v3960
      %v4597 = vunpack.c.h.b16 %v3960
      %v4598 = vunpack.c.l.b16 %v3961
      %v4599 = vunpack.c.h.b16 %v3961
      %v4600 = vunpack.c.l.b16 %v3962
      %v4601 = vunpack.c.h.b16 %v3962
      %v4602 = vunpack.c.l.b16 %v3963
      %v4603 = vunpack.c.h.b16 %v3963
      %v4604 = vunpack.c.l.b16 %v3964
      %v4605 = vunpack.c.h.b16 %v3964
      %v4606 = vunpack.c.l.b16 %v3965
      %v4607 = vunpack.c.h.b16 %v3965
      %v4608 = vunpack.c.l.b16 %v3966
      %v4609 = vunpack.c.h.b16 %v3966
      %v4610 = vunpack.c.l.b16 %v3967
      %v4611 = vunpack.c.h.b16 %v3967
      %v4612 = vunpack.c.l.b16 %v3968
      %v4613 = vunpack.c.h.b16 %v3968
      %v4614 = vunpack.c.l.b16 %v3969
      %v4615 = vunpack.c.h.b16 %v3969
      %v4616 = vunpack.c.l.b16 %v3970
      %v4617 = vunpack.c.h.b16 %v3970
      %v4618 = vunpack.c.l.b16 %v3971
      %v4619 = vunpack.c.h.b16 %v3971
      %v4620 = vunpack.c.l.b16 %v3972
      %v4621 = vunpack.c.h.b16 %v3972
      %v4622 = vunpack.c.l.b16 %v3973
      %v4623 = vunpack.c.h.b16 %v3973
      %v4624 = vunpack.c.l.b16 %v3974
      %v4625 = vunpack.c.h.b16 %v3974
      %v4626 = vunpack.c.l.b16 %v3975
      %v4627 = vunpack.c.h.b16 %v3975
      %v4628 = vunpack.c.l.b16 %v3976
      %v4629 = vunpack.c.h.b16 %v3976
      %v4630 = vunpack.c.l.b16 %v3977
      %v4631 = vunpack.c.h.b16 %v3977
      %v4632 = vunpack.c.l.b16 %v3978
      %v4633 = vunpack.c.h.b16 %v3978
      %v4634 = vunpack.c.l.b16 %v3979
      %v4635 = vunpack.c.h.b16 %v3979
      %v4636 = vunpack.c.l.b16 %v3980
      %v4637 = vunpack.c.h.b16 %v3980
      %v4638 = vunpack.c.l.b16 %v3981
      %v4639 = vunpack.c.h.b16 %v3981
      %v4640 = vunpack.c.l.b16 %v3982
      %v4641 = vunpack.c.h.b16 %v3982
      %v4642 = vunpack.c.l.b16 %v3983
      %v4643 = vunpack.c.h.b16 %v3983
      %v4644 = vunpack.c.l.b16 %v3984
      %v4645 = vunpack.c.h.b16 %v3984
      %v4646 = vunpack.c.l.b16 %v3985
      %v4647 = vunpack.c.h.b16 %v3985
      %v4648 = vunpack.c.l.b16 %v3986
      %v4649 = vunpack.c.h.b16 %v3986
      %v4650 = vunpack.c.l.b16 %v3987
      %v4651 = vunpack.c.h.b16 %v3987
      %v4652 = vunpack.c.l.b16 %v3988
      %v4653 = vunpack.c.h.b16 %v3988
      %v4654 = vunpack.c.l.b16 %v3989
      %v4655 = vunpack.c.h.b16 %v3989
      %v4656 = vunpack.c.l.b16 %v3990
      %v4657 = vunpack.c.h.b16 %v3990
      %v4658 = vunpack.c.l.b16 %v3991
      %v4659 = vunpack.c.h.b16 %v3991
      %v4660 = vunpack.c.l.b16 %v3992
      %v4661 = vunpack.c.h.b16 %v3992
      %v4662 = vunpack.c.l.b16 %v3993
      %v4663 = vunpack.c.h.b16 %v3993
      %v4664 = vunpack.c.l.b16 %v3994
      %v4665 = vunpack.c.h.b16 %v3994
      %v4666 = vunpack.c.l.b16 %v3995
      %v4667 = vunpack.c.h.b16 %v3995
      %v4668 = vunpack.c.l.b16 %v3996
      %v4669 = vunpack.c.h.b16 %v3996
      %v4670 = vunpack.c.l.b16 %v3997
      %v4671 = vunpack.c.h.b16 %v3997
      %v4672 = vunpack.c.l.b16 %v3998
      %v4673 = vunpack.c.h.b16 %v3998
      %v4674 = vunpack.c.l.b16 %v3999
      %v4675 = vunpack.c.h.b16 %v3999
      %v4676 = vunpack.c.l.b16 %v4000
      %v4677 = vunpack.c.h.b16 %v4000
      %v4678 = vunpack.c.l.b16 %v4001
      %v4679 = vunpack.c.h.b16 %v4001
      %v4680 = vunpack.c.l.b16 %v4002
      %v4681 = vunpack.c.h.b16 %v4002
      %v4682 = vunpack.c.l.b16 %v4003
      %v4683 = vunpack.c.h.b16 %v4003
      %v4684 = vunpack.c.l.b16 %v4004
      %v4685 = vunpack.c.h.b16 %v4004
      %v4686 = vunpack.c.l.b16 %v4005
      %v4687 = vunpack.c.h.b16 %v4005
      %v4688 = vunpack.c.l.b16 %v4006
      %v4689 = vunpack.c.h.b16 %v4006
      %v4690 = vunpack.c.l.b16 %v4007
      %v4691 = vunpack.c.h.b16 %v4007
      %v4692 = vunpack.c.l.b16 %v4008
      %v4693 = vunpack.c.h.b16 %v4008
      %v4694 = vunpack.c.l.b16 %v4009
      %v4695 = vunpack.c.h.b16 %v4009
      %v4696 = vunpack.c.l.b16 %v4010
      %v4697 = vunpack.c.h.b16 %v4010
      %v4698 = vunpack.c.l.b16 %v4011
      %v4699 = vunpack.c.h.b16 %v4011
      %v4700 = vunpack.c.l.b16 %v4012
      %v4701 = vunpack.c.h.b16 %v4012
      %v4702 = vunpack.c.l.b16 %v4013
      %v4703 = vunpack.c.h.b16 %v4013
      %v4704 = vunpack.c.l.b16 %v4014
      %v4705 = vunpack.c.h.b16 %v4014
      %v4706 = vunpack.c.l.b16 %v4015
      %v4707 = vunpack.c.h.b16 %v4015
      %v4708 = vunpack.c.l.b16 %v4016
      %v4709 = vunpack.c.h.b16 %v4016
      %v4710 = vunpack.c.l.b16 %v4017
      %v4711 = vunpack.c.h.b16 %v4017
      %v4712 = vunpack.c.l.b16 %v4018
      %v4713 = vunpack.c.h.b16 %v4018
      %v4714 = vunpack.c.l.b16 %v4019
      %v4715 = vunpack.c.h.b16 %v4019
      %v4716 = vunpack.c.l.b16 %v4020
      %v4717 = vunpack.c.h.b16 %v4020
      %v4718 = vunpack.c.l.b16 %v4021
      %v4719 = vunpack.c.h.b16 %v4021
      %v4720 = vunpack.c.l.b16 %v4022
      %v4721 = vunpack.c.h.b16 %v4022
      %v4722 = vunpack.c.l.b16 %v4023
      %v4723 = vunpack.c.h.b16 %v4023
      %v4724 = vunpack.c.l.b16 %v4024
      %v4725 = vunpack.c.h.b16 %v4024
      %v4726 = vunpack.c.l.b16 %v4025
      %v4727 = vunpack.c.h.b16 %v4025
      %v4728 = vunpack.c.l.b16 %v4026
      %v4729 = vunpack.c.h.b16 %v4026
      %v4730 = vunpack.c.l.b16 %v4027
      %v4731 = vunpack.c.h.b16 %v4027
      %v4732 = vunpack.c.l.b16 %v4028
      %v4733 = vunpack.c.h.b16 %v4028
      %v4734 = vunpack.c.l.b16 %v4029
      %v4735 = vunpack.c.h.b16 %v4029
      %v4736 = vunpack.c.l.b16 %v4030
      %v4737 = vunpack.c.h.b16 %v4030
      %v4738 = vunpack.c.l.b16 %v4031
      %v4739 = vunpack.c.h.b16 %v4031
      %v4740 = vunpack.c.l.b16 %v4032
      %v4741 = vunpack.c.h.b16 %v4032
      %v4742 = vunpack.c.l.b16 %v4033
      %v4743 = vunpack.c.h.b16 %v4033
      %v4744 = vunpack.c.l.b16 %v4034
      %v4745 = vunpack.c.h.b16 %v4034
      %v4746 = vunpack.c.l.b16 %v4035
      %v4747 = vunpack.c.h.b16 %v4035
      %v4748 = vunpack.c.l.b16 %v4036
      %v4749 = vunpack.c.h.b16 %v4036
      %v4750 = vunpack.c.l.b16 %v4037
      %v4751 = vunpack.c.h.b16 %v4037
      %v4752 = vunpack.c.l.b16 %v4038
      %v4753 = vunpack.c.h.b16 %v4038
      %v4754 = vunpack.c.l.b16 %v4039
      %v4755 = vunpack.c.h.b16 %v4039
      %v4756 = vunpack.c.l.b16 %v4040
      %v4757 = vunpack.c.h.b16 %v4040
      %v4758 = vunpack.c.l.b16 %v4041
      %v4759 = vunpack.c.h.b16 %v4041
      %v4760 = vunpack.c.l.b16 %v4042
      %v4761 = vunpack.c.h.b16 %v4042
      %v4762 = vunpack.c.l.b16 %v4043
      %v4763 = vunpack.c.h.b16 %v4043
      %v4764 = vunpack.c.l.b16 %v4044
      %v4765 = vunpack.c.h.b16 %v4044
      %v4766 = vunpack.c.l.b16 %v4045
      %v4767 = vunpack.c.h.b16 %v4045
      %v4768 = vunpack.c.l.b16 %v4046
      %v4769 = vunpack.c.h.b16 %v4046
      %v4770 = vunpack.c.l.b16 %v4047
      %v4771 = vunpack.c.h.b16 %v4047
      %v4772 = vunpack.c.l.b16 %v4048
      %v4773 = vunpack.c.h.b16 %v4048
      %v4774 = vunpack.c.l.b16 %v4049
      %v4775 = vunpack.c.h.b16 %v4049
      %v4776 = vunpack.c.l.b16 %v4050
      %v4777 = vunpack.c.h.b16 %v4050
      %v4778 = vunpack.c.l.b16 %v4051
      %v4779 = vunpack.c.h.b16 %v4051
      %v4780 = vunpack.c.l.b16 %v4052
      %v4781 = vunpack.c.h.b16 %v4052
      %v4782 = vunpack.c.l.b16 %v4053
      %v4783 = vunpack.c.h.b16 %v4053
      %v4784 = vunpack.c.l.b16 %v4054
      %v4785 = vunpack.c.h.b16 %v4054
      %v4786 = vunpack.c.l.b16 %v4055
      %v4787 = vunpack.c.h.b16 %v4055
      %v4788 = vunpack.c.l.b16 %v4056
      %v4789 = vunpack.c.h.b16 %v4056
      %v4790 = vunpack.c.l.b16 %v4057
      %v4791 = vunpack.c.h.b16 %v4057
      %v4792 = vunpack.c.l.b16 %v4058
      %v4793 = vunpack.c.h.b16 %v4058
      %v4794 = vunpack.c.l.b16 %v4059
      %v4795 = vunpack.c.h.b16 %v4059
      %v4796 = vunpack.c.l.b16 %v4060
      %v4797 = vunpack.c.h.b16 %v4060
      %v4798 = vunpack.c.l.b16 %v4061
      %v4799 = vunpack.c.h.b16 %v4061
      %v4800 = vunpack.c.l.b16 %v4062
      %v4801 = vunpack.c.h.b16 %v4062
      %v4802 = vunpack.c.l.b16 %v4063
      %v4803 = vunpack.c.h.b16 %v4063
      %v4804 = vunpack.c.l.b16 %v4064
      %v4805 = vunpack.c.h.b16 %v4064
      %v4806 = vunpack.c.l.b16 %v4065
      %v4807 = vunpack.c.h.b16 %v4065
      %v4808 = vunpack.c.l.b16 %v4066
      %v4809 = vunpack.c.h.b16 %v4066
      %v4810 = vunpack.c.l.b16 %v4067
      %v4811 = vunpack.c.h.b16 %v4067
      %v4812 = vunpack.c.l.b16 %v4068
      %v4813 = vunpack.c.h.b16 %v4068
      %v4814 = vunpack.c.l.b16 %v4069
      %v4815 = vunpack.c.h.b16 %v4069
      %v4816 = vunpack.c.l.b16 %v4070
      %v4817 = vunpack.c.h.b16 %v4070
      %v4818 = vunpack.c.l.b16 %v4071
      %v4819 = vunpack.c.h.b16 %v4071
      %v4820 = vunpack.c.l.b16 %v4072
      %v4821 = vunpack.c.h.b16 %v4072
      %v4822 = vunpack.c.l.b16 %v4073
      %v4823 = vunpack.c.h.b16 %v4073
      %v4824 = vunpack.c.l.b16 %v4074
      %v4825 = vunpack.c.h.b16 %v4074
      %v4826 = vunpack.c.l.b16 %v4075
      %v4827 = vunpack.c.h.b16 %v4075
      %v4828 = vunpack.c.l.b16 %v4076
      %v4829 = vunpack.c.h.b16 %v4076
      %v4830 = vunpack.c.l.b16 %v4077
      %v4831 = vunpack.c.h.b16 %v4077
      %v4832 = vunpack.c.l.b16 %v4078
      %v4833 = vunpack.c.h.b16 %v4078
      %v4834 = vunpack.c.l.b16 %v4079
      %v4835 = vunpack.c.h.b16 %v4079
      %v4836 = vunpack.c.l.b16 %v4080
      %v4837 = vunpack.c.h.b16 %v4080
      %v4838 = vunpack.c.l.b16 %v4081
      %v4839 = vunpack.c.h.b16 %v4081
      %v4840 = vunpack.c.l.b16 %v4082
      %v4841 = vunpack.c.h.b16 %v4082
      %v4842 = vunpack.c.l.b16 %v4083
      %v4843 = vunpack.c.h.b16 %v4083
      %v4844 = vunpack.c.l.b16 %v4084
      %v4845 = vunpack.c.h.b16 %v4084
      %v4846 = vunpack.c.l.b16 %v4085
      %v4847 = vunpack.c.h.b16 %v4085
      %v4848 = vunpack.c.l.b16 %v4086
      %v4849 = vunpack.c.h.b16 %v4086
      %v4850 = vunpack.c.l.b16 %v4087
      %v4851 = vunpack.c.h.b16 %v4087
      %v4852 = vunpack.c.l.b16 %v4088
      %v4853 = vunpack.c.h.b16 %v4088
      %v4854 = vunpack.c.l.b16 %v4089
      %v4855 = vunpack.c.h.b16 %v4089
      %v4856 = vunpack.c.l.b16 %v4090
      %v4857 = vunpack.c.h.b16 %v4090
      %v4858 = vunpack.c.l.b16 %v4091
      %v4859 = vunpack.c.h.b16 %v4091
      %v4860 = vunpack.c.l.b16 %v4092
      %v4861 = vunpack.c.h.b16 %v4092
      %v4862 = vunpack.c.l.b16 %v4093
      %v4863 = vunpack.c.h.b16 %v4093
      %v4864 = vunpack.c.l.b16 %v4094
      %v4865 = vunpack.c.h.b16 %v4094
      %v4866 = vunpack.c.l.b16 %v4095
      %v4867 = vunpack.c.h.b16 %v4095
      %v4868 = vunpack.c.l.b16 %v4096
      %v4869 = vunpack.c.h.b16 %v4096
      %v4870 = vunpack.c.l.b16 %v4097
      %v4871 = vunpack.c.h.b16 %v4097
      %v4872 = vunpack.c.l.b16 %v4098
      %v4873 = vunpack.c.h.b16 %v4098
      %v4874 = vunpack.c.l.b16 %v4099
      %v4875 = vunpack.c.h.b16 %v4099
      %v4876 = vunpack.c.l.b16 %v4100
      %v4877 = vunpack.c.h.b16 %v4100
      %v4878 = vunpack.c.l.b16 %v4101
      %v4879 = vunpack.c.h.b16 %v4101
      %v4880 = vpack.c.b16 %v4372, %v4368
      %v4881 = vpack.c.b16 %v4373, %v4369
      %v4882 = vpack.c.b16 %v4374, %v4370
      %v4883 = vpack.c.b16 %v4375, %v4371
      %v4884 = vpack.c.b16 %v4380, %v4376
      %v4885 = vpack.c.b16 %v4381, %v4377
      %v4886 = vpack.c.b16 %v4382, %v4378
      %v4887 = vpack.c.b16 %v4383, %v4379
      %v4888 = vpack.c.b16 %v4388, %v4384
      %v4889 = vpack.c.b16 %v4389, %v4385
      %v4890 = vpack.c.b16 %v4390, %v4386
      %v4891 = vpack.c.b16 %v4391, %v4387
      %v4892 = vpack.c.b16 %v4396, %v4392
      %v4893 = vpack.c.b16 %v4397, %v4393
      %v4894 = vpack.c.b16 %v4398, %v4394
      %v4895 = vpack.c.b16 %v4399, %v4395
      %v4896 = vpack.c.b16 %v4404, %v4400
      %v4897 = vpack.c.b16 %v4405, %v4401
      %v4898 = vpack.c.b16 %v4406, %v4402
      %v4899 = vpack.c.b16 %v4407, %v4403
      %v4900 = vpack.c.b16 %v4412, %v4408
      %v4901 = vpack.c.b16 %v4413, %v4409
      %v4902 = vpack.c.b16 %v4414, %v4410
      %v4903 = vpack.c.b16 %v4415, %v4411
      %v4904 = vpack.c.b16 %v4420, %v4416
      %v4905 = vpack.c.b16 %v4421, %v4417
      %v4906 = vpack.c.b16 %v4422, %v4418
      %v4907 = vpack.c.b16 %v4423, %v4419
      %v4908 = vpack.c.b16 %v4428, %v4424
      %v4909 = vpack.c.b16 %v4429, %v4425
      %v4910 = vpack.c.b16 %v4430, %v4426
      %v4911 = vpack.c.b16 %v4431, %v4427
      %v4912 = vpack.c.b16 %v4436, %v4432
      %v4913 = vpack.c.b16 %v4437, %v4433
      %v4914 = vpack.c.b16 %v4438, %v4434
      %v4915 = vpack.c.b16 %v4439, %v4435
      %v4916 = vpack.c.b16 %v4444, %v4440
      %v4917 = vpack.c.b16 %v4445, %v4441
      %v4918 = vpack.c.b16 %v4446, %v4442
      %v4919 = vpack.c.b16 %v4447, %v4443
      %v4920 = vpack.c.b16 %v4452, %v4448
      %v4921 = vpack.c.b16 %v4453, %v4449
      %v4922 = vpack.c.b16 %v4454, %v4450
      %v4923 = vpack.c.b16 %v4455, %v4451
      %v4924 = vpack.c.b16 %v4460, %v4456
      %v4925 = vpack.c.b16 %v4461, %v4457
      %v4926 = vpack.c.b16 %v4462, %v4458
      %v4927 = vpack.c.b16 %v4463, %v4459
      %v4928 = vpack.c.b16 %v4468, %v4464
      %v4929 = vpack.c.b16 %v4469, %v4465
      %v4930 = vpack.c.b16 %v4470, %v4466
      %v4931 = vpack.c.b16 %v4471, %v4467
      %v4932 = vpack.c.b16 %v4476, %v4472
      %v4933 = vpack.c.b16 %v4477, %v4473
      %v4934 = vpack.c.b16 %v4478, %v4474
      %v4935 = vpack.c.b16 %v4479, %v4475
      %v4936 = vpack.c.b16 %v4484, %v4480
      %v4937 = vpack.c.b16 %v4485, %v4481
      %v4938 = vpack.c.b16 %v4486, %v4482
      %v4939 = vpack.c.b16 %v4487, %v4483
      %v4940 = vpack.c.b16 %v4492, %v4488
      %v4941 = vpack.c.b16 %v4493, %v4489
      %v4942 = vpack.c.b16 %v4494, %v4490
      %v4943 = vpack.c.b16 %v4495, %v4491
      %v4944 = vpack.c.b16 %v4500, %v4496
      %v4945 = vpack.c.b16 %v4501, %v4497
      %v4946 = vpack.c.b16 %v4502, %v4498
      %v4947 = vpack.c.b16 %v4503, %v4499
      %v4948 = vpack.c.b16 %v4508, %v4504
      %v4949 = vpack.c.b16 %v4509, %v4505
      %v4950 = vpack.c.b16 %v4510, %v4506
      %v4951 = vpack.c.b16 %v4511, %v4507
      %v4952 = vpack.c.b16 %v4516, %v4512
      %v4953 = vpack.c.b16 %v4517, %v4513
      %v4954 = vpack.c.b16 %v4518, %v4514
      %v4955 = vpack.c.b16 %v4519, %v4515
      %v4956 = vpack.c.b16 %v4524, %v4520
      %v4957 = vpack.c.b16 %v4525, %v4521
      %v4958 = vpack.c.b16 %v4526, %v4522
      %v4959 = vpack.c.b16 %v4527, %v4523
      %v4960 = vpack.c.b16 %v4532, %v4528
      %v4961 = vpack.c.b16 %v4533, %v4529
      %v4962 = vpack.c.b16 %v4534, %v4530
      %v4963 = vpack.c.b16 %v4535, %v4531
      %v4964 = vpack.c.b16 %v4540, %v4536
      %v4965 = vpack.c.b16 %v4541, %v4537
      %v4966 = vpack.c.b16 %v4542, %v4538
      %v4967 = vpack.c.b16 %v4543, %v4539
      %v4968 = vpack.c.b16 %v4548, %v4544
      %v4969 = vpack.c.b16 %v4549, %v4545
      %v4970 = vpack.c.b16 %v4550, %v4546
      %v4971 = vpack.c.b16 %v4551, %v4547
      %v4972 = vpack.c.b16 %v4556, %v4552
      %v4973 = vpack.c.b16 %v4557, %v4553
      %v4974 = vpack.c.b16 %v4558, %v4554
      %v4975 = vpack.c.b16 %v4559, %v4555
      %v4976 = vpack.c.b16 %v4564, %v4560
      %v4977 = vpack.c.b16 %v4565, %v4561
      %v4978 = vpack.c.b16 %v4566, %v4562
      %v4979 = vpack.c.b16 %v4567, %v4563
      %v4980 = vpack.c.b16 %v4572, %v4568
      %v4981 = vpack.c.b16 %v4573, %v4569
      %v4982 = vpack.c.b16 %v4574, %v4570
      %v4983 = vpack.c.b16 %v4575, %v4571
      %v4984 = vpack.c.b16 %v4580, %v4576
      %v4985 = vpack.c.b16 %v4581, %v4577
      %v4986 = vpack.c.b16 %v4582, %v4578
      %v4987 = vpack.c.b16 %v4583, %v4579
      %v4988 = vpack.c.b16 %v4588, %v4584
      %v4989 = vpack.c.b16 %v4589, %v4585
      %v4990 = vpack.c.b16 %v4590, %v4586
      %v4991 = vpack.c.b16 %v4591, %v4587
      %v4992 = vpack.c.b16 %v4596, %v4592
      %v4993 = vpack.c.b16 %v4597, %v4593
      %v4994 = vpack.c.b16 %v4598, %v4594
      %v4995 = vpack.c.b16 %v4599, %v4595
      %v4996 = vpack.c.b16 %v4604, %v4600
      %v4997 = vpack.c.b16 %v4605, %v4601
      %v4998 = vpack.c.b16 %v4606, %v4602
      %v4999 = vpack.c.b16 %v4607, %v4603
      %v5000 = vpack.c.b16 %v4612, %v4608
      %v5001 = vpack.c.b16 %v4613, %v4609
      %v5002 = vpack.c.b16 %v4614, %v4610
      %v5003 = vpack.c.b16 %v4615, %v4611
      %v5004 = vpack.c.b16 %v4620, %v4616
      %v5005 = vpack.c.b16 %v4621, %v4617
      %v5006 = vpack.c.b16 %v4622, %v4618
      %v5007 = vpack.c.b16 %v4623, %v4619
      %v5008 = vpack.c.b16 %v4628, %v4624
      %v5009 = vpack.c.b16 %v4629, %v4625
      %v5010 = vpack.c.b16 %v4630, %v4626
      %v5011 = vpack.c.b16 %v4631, %v4627
      %v5012 = vpack.c.b16 %v4636, %v4632
      %v5013 = vpack.c.b16 %v4637, %v4633
      %v5014 = vpack.c.b16 %v4638, %v4634
      %v5015 = vpack.c.b16 %v4639, %v4635
      %v5016 = vpack.c.b16 %v4644, %v4640
      %v5017 = vpack.c.b16 %v4645, %v4641
      %v5018 = vpack.c.b16 %v4646, %v4642
      %v5019 = vpack.c.b16 %v4647, %v4643
      %v5020 = vpack.c.b16 %v4652, %v4648
      %v5021 = vpack.c.b16 %v4653, %v4649
      %v5022 = vpack.c.b16 %v4654, %v4650
      %v5023 = vpack.c.b16 %v4655, %v4651
      %v5024 = vpack.c.b16 %v4660, %v4656
      %v5025 = vpack.c.b16 %v4661, %v4657
      %v5026 = vpack.c.b16 %v4662, %v4658
      %v5027 = vpack.c.b16 %v4663, %v4659
      %v5028 = vpack.c.b16 %v4668, %v4664
      %v5029 = vpack.c.b16 %v4669, %v4665
      %v5030 = vpack.c.b16 %v4670, %v4666
      %v5031 = vpack.c.b16 %v4671, %v4667
      %v5032 = vpack.c.b16 %v4676, %v4672
      %v5033 = vpack.c.b16 %v4677, %v4673
      %v5034 = vpack.c.b16 %v4678, %v4674
      %v5035 = vpack.c.b16 %v4679, %v4675
      %v5036 = vpack.c.b16 %v4684, %v4680
      %v5037 = vpack.c.b16 %v4685, %v4681
      %v5038 = vpack.c.b16 %v4686, %v4682
      %v5039 = vpack.c.b16 %v4687, %v4683
      %v5040 = vpack.c.b16 %v4692, %v4688
      %v5041 = vpack.c.b16 %v4693, %v4689
      %v5042 = vpack.c.b16 %v4694, %v4690
      %v5043 = vpack.c.b16 %v4695, %v4691
      %v5044 = vpack.c.b16 %v4700, %v4696
      %v5045 = vpack.c.b16 %v4701, %v4697
      %v5046 = vpack.c.b16 %v4702, %v4698
      %v5047 = vpack.c.b16 %v4703, %v4699
      %v5048 = vpack.c.b16 %v4708, %v4704
      %v5049 = vpack.c.b16 %v4709, %v4705
      %v5050 = vpack.c.b16 %v4710, %v4706
      %v5051 = vpack.c.b16 %v4711, %v4707
      %v5052 = vpack.c.b16 %v4716, %v4712
      %v5053 = vpack.c.b16 %v4717, %v4713
      %v5054 = vpack.c.b16 %v4718, %v4714
      %v5055 = vpack.c.b16 %v4719, %v4715
      %v5056 = vpack.c.b16 %v4724, %v4720
      %v5057 = vpack.c.b16 %v4725, %v4721
      %v5058 = vpack.c.b16 %v4726, %v4722
      %v5059 = vpack.c.b16 %v4727, %v4723
      %v5060 = vpack.c.b16 %v4732, %v4728
      %v5061 = vpack.c.b16 %v4733, %v4729
      %v5062 = vpack.c.b16 %v4734, %v4730
      %v5063 = vpack.c.b16 %v4735, %v4731
      %v5064 = vpack.c.b16 %v4740, %v4736
      %v5065 = vpack.c.b16 %v4741, %v4737
      %v5066 = vpack.c.b16 %v4742, %v4738
      %v5067 = vpack.c.b16 %v4743, %v4739
      %v5068 = vpack.c.b16 %v4748, %v4744
      %v5069 = vpack.c.b16 %v4749, %v4745
      %v5070 = vpack.c.b16 %v4750, %v4746
      %v5071 = vpack.c.b16 %v4751, %v4747
      %v5072 = vpack.c.b16 %v4756, %v4752
      %v5073 = vpack.c.b16 %v4757, %v4753
      %v5074 = vpack.c.b16 %v4758, %v4754
      %v5075 = vpack.c.b16 %v4759, %v4755
      %v5076 = vpack.c.b16 %v4764, %v4760
      %v5077 = vpack.c.b16 %v4765, %v4761
      %v5078 = vpack.c.b16 %v4766, %v4762
      %v5079 = vpack.c.b16 %v4767, %v4763
      %v5080 = vpack.c.b16 %v4772, %v4768
      %v5081 = vpack.c.b16 %v4773, %v4769
      %v5082 = vpack.c.b16 %v4774, %v4770
      %v5083 = vpack.c.b16 %v4775, %v4771
      %v5084 = vpack.c.b16 %v4780, %v4776
      %v5085 = vpack.c.b16 %v4781, %v4777
      %v5086 = vpack.c.b16 %v4782, %v4778
      %v5087 = vpack.c.b16 %v4783, %v4779
      %v5088 = vpack.c.b16 %v4788, %v4784
      %v5089 = vpack.c.b16 %v4789, %v4785
      %v5090 = vpack.c.b16 %v4790, %v4786
      %v5091 = vpack.c.b16 %v4791, %v4787
      %v5092 = vpack.c.b16 %v4796, %v4792
      %v5093 = vpack.c.b16 %v4797, %v4793
      %v5094 = vpack.c.b16 %v4798, %v4794
      %v5095 = vpack.c.b16 %v4799, %v4795
      %v5096 = vpack.c.b16 %v4804, %v4800
      %v5097 = vpack.c.b16 %v4805, %v4801
      %v5098 = vpack.c.b16 %v4806, %v4802
      %v5099 = vpack.c.b16 %v4807, %v4803
      %v5100 = vpack.c.b16 %v4812, %v4808
      %v5101 = vpack.c.b16 %v4813, %v4809
      %v5102 = vpack.c.b16 %v4814, %v4810
      %v5103 = vpack.c.b16 %v4815, %v4811
      %v5104 = vpack.c.b16 %v4820, %v4816
      %v5105 = vpack.c.b16 %v4821, %v4817
      %v5106 = vpack.c.b16 %v4822, %v4818
      %v5107 = vpack.c.b16 %v4823, %v4819
      %v5108 = vpack.c.b16 %v4828, %v4824
      %v5109 = vpack.c.b16 %v4829, %v4825
      %v5110 = vpack.c.b16 %v4830, %v4826
      %v5111 = vpack.c.b16 %v4831, %v4827
      %v5112 = vpack.c.b16 %v4836, %v4832
      %v5113 = vpack.c.b16 %v4837, %v4833
      %v5114 = vpack.c.b16 %v4838, %v4834
      %v5115 = vpack.c.b16 %v4839, %v4835
      %v5116 = vpack.c.b16 %v4844, %v4840
      %v5117 = vpack.c.b16 %v4845, %v4841
      %v5118 = vpack.c.b16 %v4846, %v4842
      %v5119 = vpack.c.b16 %v4847, %v4843
      %v5120 = vpack.c.b16 %v4852, %v4848
      %v5121 = vpack.c.b16 %v4853, %v4849
      %v5122 = vpack.c.b16 %v4854, %v4850
      %v5123 = vpack.c.b16 %v4855, %v4851
      %v5124 = vpack.c.b16 %v4860, %v4856
      %v5125 = vpack.c.b16 %v4861, %v4857
      %v5126 = vpack.c.b16 %v4862, %v4858
      %v5127 = vpack.c.b16 %v4863, %v4859
      %v5128 = vpack.c.b16 %v4868, %v4864
      %v5129 = vpack.c.b16 %v4869, %v4865
      %v5130 = vpack.c.b16 %v4870, %v4866
      %v5131 = vpack.c.b16 %v4871, %v4867
      %v5132 = vpack.c.b16 %v4876, %v4872
      %v5133 = vpack.c.b16 %v4877, %v4873
      %v5134 = vpack.c.b16 %v4878, %v4874
      %v5135 = vpack.c.b16 %v4879, %v4875
      %5392 = vmatpush.bf16.msra.mxu0 %v4908
      %5393 = vmatpush.bf16.msra.mxu0 %v4904
      %5394 = vmatpush.bf16.msra.mxu0 %v4900
      %5395 = vmatpush.bf16.msra.mxu0 %v4896
      %5396 = vmatpush.bf16.msra.mxu0 %v4892
      %5397 = vmatpush.bf16.msra.mxu0 %v4888
      %5398 = vmatpush.bf16.msra.mxu0 %v4884
      %5399 = vmatpush.bf16.msra.mxu0 %v4880
      %5400 = vmatmul.bf16.gmra.mxu0 %v3838
      %v5401 = vpop.f32.mrf.mxu0
      %v5402 = vadd.f32 %v4104, %v5401
      %v5403 = vpop.f32.mrf.mxu0
      %5404 = vdwg.mxu0
      %5405 = vmatpush.bf16.msra.mxu0 %v4940
      %5406 = vmatpush.bf16.msra.mxu0 %v4936
      %5407 = vmatpush.bf16.msra.mxu0 %v4932
      %5408 = vmatpush.bf16.msra.mxu0 %v4928
      %5409 = vmatpush.bf16.msra.mxu0 %v4924
      %5410 = vmatpush.bf16.msra.mxu0 %v4920
      %5411 = vmatpush.bf16.msra.mxu0 %v4916
      %5412 = vmatpush.bf16.msra.mxu0 %v4912
      %5413 = vmatmul.bf16.gmra.mxu0 %v3839
      %v5414 = vpop.f32.mrf.mxu0
      %v5415 = vadd.f32 %v5402, %v5414
      %v5416 = vpop.f32.mrf.mxu0
      %5417 = vdwg.mxu0
      %5418 = vmatpush.bf16.msra.mxu0 %v4972
      %5419 = vmatpush.bf16.msra.mxu0 %v4968
      %5420 = vmatpush.bf16.msra.mxu0 %v4964
      %5421 = vmatpush.bf16.msra.mxu0 %v4960
      %5422 = vmatpush.bf16.msra.mxu0 %v4956
      %5423 = vmatpush.bf16.msra.mxu0 %v4952
      %5424 = vmatpush.bf16.msra.mxu0 %v4948
      %5425 = vmatpush.bf16.msra.mxu0 %v4944
      %5426 = vmatmul.bf16.gmra.mxu0 %v3840
      %v5427 = vpop.f32.mrf.mxu0
      %v5428 = vadd.f32 %v5415, %v5427
      %v5429 = vpop.f32.mrf.mxu0
      %5430 = vdwg.mxu0
      %5431 = vmatpush.bf16.msra.mxu0 %v5004
      %5432 = vmatpush.bf16.msra.mxu0 %v5000
      %5433 = vmatpush.bf16.msra.mxu0 %v4996
      %5434 = vmatpush.bf16.msra.mxu0 %v4992
      %5435 = vmatpush.bf16.msra.mxu0 %v4988
      %5436 = vmatpush.bf16.msra.mxu0 %v4984
      %5437 = vmatpush.bf16.msra.mxu0 %v4980
      %5438 = vmatpush.bf16.msra.mxu0 %v4976
      %5439 = vmatmul.bf16.gmra.mxu0 %v3841
      %v5440 = vpop.f32.mrf.mxu0
      %v5441 = vadd.f32 %v5428, %v5440
      %v5442 = vpop.f32.mrf.mxu0
      %5443 = vdwg.mxu0
      %5444 = vmatpush.bf16.msra.mxu0 %v5036
      %5445 = vmatpush.bf16.msra.mxu0 %v5032
      %5446 = vmatpush.bf16.msra.mxu0 %v5028
      %5447 = vmatpush.bf16.msra.mxu0 %v5024
      %5448 = vmatpush.bf16.msra.mxu0 %v5020
      %5449 = vmatpush.bf16.msra.mxu0 %v5016
      %5450 = vmatpush.bf16.msra.mxu0 %v5012
      %5451 = vmatpush.bf16.msra.mxu0 %v5008
      %5452 = vmatmul.bf16.gmra.mxu0 %v3842
      %v5453 = vpop.f32.mrf.mxu0
      %v5454 = vadd.f32 %v5441, %v5453
      %v5455 = vpop.f32.mrf.mxu0
      %5456 = vdwg.mxu0
      %5457 = vmatpush.bf16.msra.mxu0 %v5068
      %5458 = vmatpush.bf16.msra.mxu0 %v5064
      %5459 = vmatpush.bf16.msra.mxu0 %v5060
      %5460 = vmatpush.bf16.msra.mxu0 %v5056
      %5461 = vmatpush.bf16.msra.mxu0 %v5052
      %5462 = vmatpush.bf16.msra.mxu0 %v5048
      %5463 = vmatpush.bf16.msra.mxu0 %v5044
      %5464 = vmatpush.bf16.msra.mxu0 %v5040
      %5465 = vmatmul.bf16.gmra.mxu0 %v3843
      %v5466 = vpop.f32.mrf.mxu0
      %v5467 = vadd.f32 %v5454, %v5466
      %v5468 = vpop.f32.mrf.mxu0
      %5469 = vdwg.mxu0
      %5470 = vmatpush.bf16.msra.mxu0 %v5100
      %5471 = vmatpush.bf16.msra.mxu0 %v5096
      %5472 = vmatpush.bf16.msra.mxu0 %v5092
      %5473 = vmatpush.bf16.msra.mxu0 %v5088
      %5474 = vmatpush.bf16.msra.mxu0 %v5084
      %5475 = vmatpush.bf16.msra.mxu0 %v5080
      %5476 = vmatpush.bf16.msra.mxu0 %v5076
      %5477 = vmatpush.bf16.msra.mxu0 %v5072
      %5478 = vmatmul.bf16.gmra.mxu0 %v3844
      %v5479 = vpop.f32.mrf.mxu0
      %v5480 = vadd.f32 %v5467, %v5479
      %v5481 = vpop.f32.mrf.mxu0
      %5482 = vdwg.mxu0
      %5483 = vmatpush.bf16.msra.mxu0 %v5132
      %5484 = vmatpush.bf16.msra.mxu0 %v5128
      %5485 = vmatpush.bf16.msra.mxu0 %v5124
      %5486 = vmatpush.bf16.msra.mxu0 %v5120
      %5487 = vmatpush.bf16.msra.mxu0 %v5116
      %5488 = vmatpush.bf16.msra.mxu0 %v5112
      %5489 = vmatpush.bf16.msra.mxu0 %v5108
      %5490 = vmatpush.bf16.msra.mxu0 %v5104
      %5491 = vmatmul.bf16.gmra.mxu0 %v3845
      %v5492 = vpop.f32.mrf.mxu0
      %v5493 = vadd.f32 %v5480, %v5492
      %v5494 = vpop.f32.mrf.mxu0
      %5495 = vdwg.mxu0
      %5496 = vmatpush.bf16.msra.mxu0 %v4909
      %5497 = vmatpush.bf16.msra.mxu0 %v4905
      %5498 = vmatpush.bf16.msra.mxu0 %v4901
      %5499 = vmatpush.bf16.msra.mxu0 %v4897
      %5500 = vmatpush.bf16.msra.mxu0 %v4893
      %5501 = vmatpush.bf16.msra.mxu0 %v4889
      %5502 = vmatpush.bf16.msra.mxu0 %v4885
      %5503 = vmatpush.bf16.msra.mxu0 %v4881
      %5504 = vmatmul.bf16.gmra.mxu0 %v3838
      %v5505 = vpop.f32.mrf.mxu0
      %v5506 = vadd.f32 %v4105, %v5505
      %v5507 = vpop.f32.mrf.mxu0
      %5508 = vdwg.mxu0
      %5509 = vmatpush.bf16.msra.mxu0 %v4941
      %5510 = vmatpush.bf16.msra.mxu0 %v4937
      %5511 = vmatpush.bf16.msra.mxu0 %v4933
      %5512 = vmatpush.bf16.msra.mxu0 %v4929
      %5513 = vmatpush.bf16.msra.mxu0 %v4925
      %5514 = vmatpush.bf16.msra.mxu0 %v4921
      %5515 = vmatpush.bf16.msra.mxu0 %v4917
      %5516 = vmatpush.bf16.msra.mxu0 %v4913
      %5517 = vmatmul.bf16.gmra.mxu0 %v3839
      %v5518 = vpop.f32.mrf.mxu0
      %v5519 = vadd.f32 %v5506, %v5518
      %v5520 = vpop.f32.mrf.mxu0
      %5521 = vdwg.mxu0
      %5522 = vmatpush.bf16.msra.mxu0 %v4973
      %5523 = vmatpush.bf16.msra.mxu0 %v4969
      %5524 = vmatpush.bf16.msra.mxu0 %v4965
      %5525 = vmatpush.bf16.msra.mxu0 %v4961
      %5526 = vmatpush.bf16.msra.mxu0 %v4957
      %5527 = vmatpush.bf16.msra.mxu0 %v4953
      %5528 = vmatpush.bf16.msra.mxu0 %v4949
      %5529 = vmatpush.bf16.msra.mxu0 %v4945
      %5530 = vmatmul.bf16.gmra.mxu0 %v3840
      %v5531 = vpop.f32.mrf.mxu0
      %v5532 = vadd.f32 %v5519, %v5531
      %v5533 = vpop.f32.mrf.mxu0
      %5534 = vdwg.mxu0
      %5535 = vmatpush.bf16.msra.mxu0 %v5005
      %5536 = vmatpush.bf16.msra.mxu0 %v5001
      %5537 = vmatpush.bf16.msra.mxu0 %v4997
      %5538 = vmatpush.bf16.msra.mxu0 %v4993
      %5539 = vmatpush.bf16.msra.mxu0 %v4989
      %5540 = vmatpush.bf16.msra.mxu0 %v4985
      %5541 = vmatpush.bf16.msra.mxu0 %v4981
      %5542 = vmatpush.bf16.msra.mxu0 %v4977
      %5543 = vmatmul.bf16.gmra.mxu0 %v3841
      %v5544 = vpop.f32.mrf.mxu0
      %v5545 = vadd.f32 %v5532, %v5544
      %v5546 = vpop.f32.mrf.mxu0
      %5547 = vdwg.mxu0
      %5548 = vmatpush.bf16.msra.mxu0 %v5037
      %5549 = vmatpush.bf16.msra.mxu0 %v5033
      %5550 = vmatpush.bf16.msra.mxu0 %v5029
      %5551 = vmatpush.bf16.msra.mxu0 %v5025
      %5552 = vmatpush.bf16.msra.mxu0 %v5021
      %5553 = vmatpush.bf16.msra.mxu0 %v5017
      %5554 = vmatpush.bf16.msra.mxu0 %v5013
      %5555 = vmatpush.bf16.msra.mxu0 %v5009
      %5556 = vmatmul.bf16.gmra.mxu0 %v3842
      %v5557 = vpop.f32.mrf.mxu0
      %v5558 = vadd.f32 %v5545, %v5557
      %v5559 = vpop.f32.mrf.mxu0
      %5560 = vdwg.mxu0
      %5561 = vmatpush.bf16.msra.mxu0 %v5069
      %5562 = vmatpush.bf16.msra.mxu0 %v5065
      %5563 = vmatpush.bf16.msra.mxu0 %v5061
      %5564 = vmatpush.bf16.msra.mxu0 %v5057
      %5565 = vmatpush.bf16.msra.mxu0 %v5053
      %5566 = vmatpush.bf16.msra.mxu0 %v5049
      %5567 = vmatpush.bf16.msra.mxu0 %v5045
      %5568 = vmatpush.bf16.msra.mxu0 %v5041
      %5569 = vmatmul.bf16.gmra.mxu0 %v3843
      %v5570 = vpop.f32.mrf.mxu0
      %v5571 = vadd.f32 %v5558, %v5570
      %v5572 = vpop.f32.mrf.mxu0
      %5573 = vdwg.mxu0
      %5574 = vmatpush.bf16.msra.mxu0 %v5101
      %5575 = vmatpush.bf16.msra.mxu0 %v5097
      %5576 = vmatpush.bf16.msra.mxu0 %v5093
      %5577 = vmatpush.bf16.msra.mxu0 %v5089
      %5578 = vmatpush.bf16.msra.mxu0 %v5085
      %5579 = vmatpush.bf16.msra.mxu0 %v5081
      %5580 = vmatpush.bf16.msra.mxu0 %v5077
      %5581 = vmatpush.bf16.msra.mxu0 %v5073
      %5582 = vmatmul.bf16.gmra.mxu0 %v3844
      %v5583 = vpop.f32.mrf.mxu0
      %v5584 = vadd.f32 %v5571, %v5583
      %v5585 = vpop.f32.mrf.mxu0
      %5586 = vdwg.mxu0
      %5587 = vmatpush.bf16.msra.mxu0 %v5133
      %5588 = vmatpush.bf16.msra.mxu0 %v5129
      %5589 = vmatpush.bf16.msra.mxu0 %v5125
      %5590 = vmatpush.bf16.msra.mxu0 %v5121
      %5591 = vmatpush.bf16.msra.mxu0 %v5117
      %5592 = vmatpush.bf16.msra.mxu0 %v5113
      %5593 = vmatpush.bf16.msra.mxu0 %v5109
      %5594 = vmatpush.bf16.msra.mxu0 %v5105
      %5595 = vmatmul.bf16.gmra.mxu0 %v3845
      %v5596 = vpop.f32.mrf.mxu0
      %v5597 = vadd.f32 %v5584, %v5596
      %v5598 = vpop.f32.mrf.mxu0
      %5599 = vdwg.mxu0
      %5600 = vmatpush.bf16.msra.mxu0 %v4910
      %5601 = vmatpush.bf16.msra.mxu0 %v4906
      %5602 = vmatpush.bf16.msra.mxu0 %v4902
      %5603 = vmatpush.bf16.msra.mxu0 %v4898
      %5604 = vmatpush.bf16.msra.mxu0 %v4894
      %5605 = vmatpush.bf16.msra.mxu0 %v4890
      %5606 = vmatpush.bf16.msra.mxu0 %v4886
      %5607 = vmatpush.bf16.msra.mxu0 %v4882
      %5608 = vmatmul.bf16.gmra.mxu0 %v3838
      %v5609 = vpop.f32.mrf.mxu0
      %v5610 = vadd.f32 %v4106, %v5609
      %v5611 = vpop.f32.mrf.mxu0
      %5612 = vdwg.mxu0
      %5613 = vmatpush.bf16.msra.mxu0 %v4942
      %5614 = vmatpush.bf16.msra.mxu0 %v4938
      %5615 = vmatpush.bf16.msra.mxu0 %v4934
      %5616 = vmatpush.bf16.msra.mxu0 %v4930
      %5617 = vmatpush.bf16.msra.mxu0 %v4926
      %5618 = vmatpush.bf16.msra.mxu0 %v4922
      %5619 = vmatpush.bf16.msra.mxu0 %v4918
      %5620 = vmatpush.bf16.msra.mxu0 %v4914
      %5621 = vmatmul.bf16.gmra.mxu0 %v3839
      %v5622 = vpop.f32.mrf.mxu0
      %v5623 = vadd.f32 %v5610, %v5622
      %v5624 = vpop.f32.mrf.mxu0
      %5625 = vdwg.mxu0
      %5626 = vmatpush.bf16.msra.mxu0 %v4974
      %5627 = vmatpush.bf16.msra.mxu0 %v4970
      %5628 = vmatpush.bf16.msra.mxu0 %v4966
      %5629 = vmatpush.bf16.msra.mxu0 %v4962
      %5630 = vmatpush.bf16.msra.mxu0 %v4958
      %5631 = vmatpush.bf16.msra.mxu0 %v4954
      %5632 = vmatpush.bf16.msra.mxu0 %v4950
      %5633 = vmatpush.bf16.msra.mxu0 %v4946
      %5634 = vmatmul.bf16.gmra.mxu0 %v3840
      %v5635 = vpop.f32.mrf.mxu0
      %v5636 = vadd.f32 %v5623, %v5635
      %v5637 = vpop.f32.mrf.mxu0
      %5638 = vdwg.mxu0
      %5639 = vmatpush.bf16.msra.mxu0 %v5006
      %5640 = vmatpush.bf16.msra.mxu0 %v5002
      %5641 = vmatpush.bf16.msra.mxu0 %v4998
      %5642 = vmatpush.bf16.msra.mxu0 %v4994
      %5643 = vmatpush.bf16.msra.mxu0 %v4990
      %5644 = vmatpush.bf16.msra.mxu0 %v4986
      %5645 = vmatpush.bf16.msra.mxu0 %v4982
      %5646 = vmatpush.bf16.msra.mxu0 %v4978
      %5647 = vmatmul.bf16.gmra.mxu0 %v3841
      %v5648 = vpop.f32.mrf.mxu0
      %v5649 = vadd.f32 %v5636, %v5648
      %v5650 = vpop.f32.mrf.mxu0
      %5651 = vdwg.mxu0
      %5652 = vmatpush.bf16.msra.mxu0 %v5038
      %5653 = vmatpush.bf16.msra.mxu0 %v5034
      %5654 = vmatpush.bf16.msra.mxu0 %v5030
      %5655 = vmatpush.bf16.msra.mxu0 %v5026
      %5656 = vmatpush.bf16.msra.mxu0 %v5022
      %5657 = vmatpush.bf16.msra.mxu0 %v5018
      %5658 = vmatpush.bf16.msra.mxu0 %v5014
      %5659 = vmatpush.bf16.msra.mxu0 %v5010
      %5660 = vmatmul.bf16.gmra.mxu0 %v3842
      %v5661 = vpop.f32.mrf.mxu0
      %v5662 = vadd.f32 %v5649, %v5661
      %v5663 = vpop.f32.mrf.mxu0
      %5664 = vdwg.mxu0
      %5665 = vmatpush.bf16.msra.mxu0 %v5070
      %5666 = vmatpush.bf16.msra.mxu0 %v5066
      %5667 = vmatpush.bf16.msra.mxu0 %v5062
      %5668 = vmatpush.bf16.msra.mxu0 %v5058
      %5669 = vmatpush.bf16.msra.mxu0 %v5054
      %5670 = vmatpush.bf16.msra.mxu0 %v5050
      %5671 = vmatpush.bf16.msra.mxu0 %v5046
      %5672 = vmatpush.bf16.msra.mxu0 %v5042
      %5673 = vmatmul.bf16.gmra.mxu0 %v3843
      %v5674 = vpop.f32.mrf.mxu0
      %v5675 = vadd.f32 %v5662, %v5674
      %v5676 = vpop.f32.mrf.mxu0
      %5677 = vdwg.mxu0
      %5678 = vmatpush.bf16.msra.mxu0 %v5102
      %5679 = vmatpush.bf16.msra.mxu0 %v5098
      %5680 = vmatpush.bf16.msra.mxu0 %v5094
      %5681 = vmatpush.bf16.msra.mxu0 %v5090
      %5682 = vmatpush.bf16.msra.mxu0 %v5086
      %5683 = vmatpush.bf16.msra.mxu0 %v5082
      %5684 = vmatpush.bf16.msra.mxu0 %v5078
      %5685 = vmatpush.bf16.msra.mxu0 %v5074
      %5686 = vmatmul.bf16.gmra.mxu0 %v3844
      %v5687 = vpop.f32.mrf.mxu0
      %v5688 = vadd.f32 %v5675, %v5687
      %v5689 = vpop.f32.mrf.mxu0
      %5690 = vdwg.mxu0
      %5691 = vmatpush.bf16.msra.mxu0 %v5134
      %5692 = vmatpush.bf16.msra.mxu0 %v5130
      %5693 = vmatpush.bf16.msra.mxu0 %v5126
      %5694 = vmatpush.bf16.msra.mxu0 %v5122
      %5695 = vmatpush.bf16.msra.mxu0 %v5118
      %5696 = vmatpush.bf16.msra.mxu0 %v5114
      %5697 = vmatpush.bf16.msra.mxu0 %v5110
      %5698 = vmatpush.bf16.msra.mxu0 %v5106
      %5699 = vmatmul.bf16.gmra.mxu0 %v3845
      %v5700 = vpop.f32.mrf.mxu0
      %v5701 = vadd.f32 %v5688, %v5700
      %v5702 = vpop.f32.mrf.mxu0
      %5703 = vdwg.mxu0
      %5704 = vmatpush.bf16.msra.mxu0 %v4911
      %5705 = vmatpush.bf16.msra.mxu0 %v4907
      %5706 = vmatpush.bf16.msra.mxu0 %v4903
      %5707 = vmatpush.bf16.msra.mxu0 %v4899
      %5708 = vmatpush.bf16.msra.mxu0 %v4895
      %5709 = vmatpush.bf16.msra.mxu0 %v4891
      %5710 = vmatpush.bf16.msra.mxu0 %v4887
      %5711 = vmatpush.bf16.msra.mxu0 %v4883
      %5712 = vmatmul.bf16.gmra.mxu0 %v3838
      %v5713 = vpop.f32.mrf.mxu0
      %v5714 = vadd.f32 %v4107, %v5713
      %v5715 = vpop.f32.mrf.mxu0
      %5716 = vdwg.mxu0
      %5717 = vmatpush.bf16.msra.mxu0 %v4943
      %5718 = vmatpush.bf16.msra.mxu0 %v4939
      %5719 = vmatpush.bf16.msra.mxu0 %v4935
      %5720 = vmatpush.bf16.msra.mxu0 %v4931
      %5721 = vmatpush.bf16.msra.mxu0 %v4927
      %5722 = vmatpush.bf16.msra.mxu0 %v4923
      %5723 = vmatpush.bf16.msra.mxu0 %v4919
      %5724 = vmatpush.bf16.msra.mxu0 %v4915
      %5725 = vmatmul.bf16.gmra.mxu0 %v3839
      %v5726 = vpop.f32.mrf.mxu0
      %v5727 = vadd.f32 %v5714, %v5726
      %v5728 = vpop.f32.mrf.mxu0
      %5729 = vdwg.mxu0
      %5730 = vmatpush.bf16.msra.mxu0 %v4975
      %5731 = vmatpush.bf16.msra.mxu0 %v4971
      %5732 = vmatpush.bf16.msra.mxu0 %v4967
      %5733 = vmatpush.bf16.msra.mxu0 %v4963
      %5734 = vmatpush.bf16.msra.mxu0 %v4959
      %5735 = vmatpush.bf16.msra.mxu0 %v4955
      %5736 = vmatpush.bf16.msra.mxu0 %v4951
      %5737 = vmatpush.bf16.msra.mxu0 %v4947
      %5738 = vmatmul.bf16.gmra.mxu0 %v3840
      %v5739 = vpop.f32.mrf.mxu0
      %v5740 = vadd.f32 %v5727, %v5739
      %v5741 = vpop.f32.mrf.mxu0
      %5742 = vdwg.mxu0
      %5743 = vmatpush.bf16.msra.mxu0 %v5007
      %5744 = vmatpush.bf16.msra.mxu0 %v5003
      %5745 = vmatpush.bf16.msra.mxu0 %v4999
      %5746 = vmatpush.bf16.msra.mxu0 %v4995
      %5747 = vmatpush.bf16.msra.mxu0 %v4991
      %5748 = vmatpush.bf16.msra.mxu0 %v4987
      %5749 = vmatpush.bf16.msra.mxu0 %v4983
      %5750 = vmatpush.bf16.msra.mxu0 %v4979
      %5751 = vmatmul.bf16.gmra.mxu0 %v3841
      %v5752 = vpop.f32.mrf.mxu0
      %v5753 = vadd.f32 %v5740, %v5752
      %v5754 = vpop.f32.mrf.mxu0
      %5755 = vdwg.mxu0
      %5756 = vmatpush.bf16.msra.mxu0 %v5039
      %5757 = vmatpush.bf16.msra.mxu0 %v5035
      %5758 = vmatpush.bf16.msra.mxu0 %v5031
      %5759 = vmatpush.bf16.msra.mxu0 %v5027
      %5760 = vmatpush.bf16.msra.mxu0 %v5023
      %5761 = vmatpush.bf16.msra.mxu0 %v5019
      %5762 = vmatpush.bf16.msra.mxu0 %v5015
      %5763 = vmatpush.bf16.msra.mxu0 %v5011
      %5764 = vmatmul.bf16.gmra.mxu0 %v3842
      %v5765 = vpop.f32.mrf.mxu0
      %v5766 = vadd.f32 %v5753, %v5765
      %v5767 = vpop.f32.mrf.mxu0
      %5768 = vdwg.mxu0
      %5769 = vmatpush.bf16.msra.mxu0 %v5071
      %5770 = vmatpush.bf16.msra.mxu0 %v5067
      %5771 = vmatpush.bf16.msra.mxu0 %v5063
      %5772 = vmatpush.bf16.msra.mxu0 %v5059
      %5773 = vmatpush.bf16.msra.mxu0 %v5055
      %5774 = vmatpush.bf16.msra.mxu0 %v5051
      %5775 = vmatpush.bf16.msra.mxu0 %v5047
      %5776 = vmatpush.bf16.msra.mxu0 %v5043
      %5777 = vmatmul.bf16.gmra.mxu0 %v3843
      %v5778 = vpop.f32.mrf.mxu0
      %v5779 = vadd.f32 %v5766, %v5778
      %v5780 = vpop.f32.mrf.mxu0
      %5781 = vdwg.mxu0
      %5782 = vmatpush.bf16.msra.mxu0 %v5103
      %5783 = vmatpush.bf16.msra.mxu0 %v5099
      %5784 = vmatpush.bf16.msra.mxu0 %v5095
      %5785 = vmatpush.bf16.msra.mxu0 %v5091
      %5786 = vmatpush.bf16.msra.mxu0 %v5087
      %5787 = vmatpush.bf16.msra.mxu0 %v5083
      %5788 = vmatpush.bf16.msra.mxu0 %v5079
      %5789 = vmatpush.bf16.msra.mxu0 %v5075
      %5790 = vmatmul.bf16.gmra.mxu0 %v3844
      %v5791 = vpop.f32.mrf.mxu0
      %v5792 = vadd.f32 %v5779, %v5791
      %v5793 = vpop.f32.mrf.mxu0
      %5794 = vdwg.mxu0
      %5795 = vmatpush.bf16.msra.mxu0 %v5135
      %5796 = vmatpush.bf16.msra.mxu0 %v5131
      %5797 = vmatpush.bf16.msra.mxu0 %v5127
      %5798 = vmatpush.bf16.msra.mxu0 %v5123
      %5799 = vmatpush.bf16.msra.mxu0 %v5119
      %5800 = vmatpush.bf16.msra.mxu0 %v5115
      %5801 = vmatpush.bf16.msra.mxu0 %v5111
      %5802 = vmatpush.bf16.msra.mxu0 %v5107
      %5803 = vmatmul.bf16.gmra.mxu0 %v3845
      %v5804 = vpop.f32.mrf.mxu0
      %v5805 = vadd.f32 %v5792, %v5804
      %v5806 = vpop.f32.mrf.mxu0
      %5807 = vdwg.mxu0
      %v5808 = vmax.f32 %v5493, 0.0
      %v5809 = vmax.f32 %v5597, 0.0
      %v5810 = vmax.f32 %v5701, 0.0
      %v5811 = vmax.f32 %v5805, 0.0
      %v5816 = vrot.slane %v5809, 4
      %v5817 = vrot.slane %v5811, 4
      %vm5818 = vcmask 1043456
      %v5819 = vsel %vm5818, %v5808, %v5816
      %v5820 = vsel %vm5818, %v5810, %v5817
      %5823 = vst [vmem:[%s278] sm:$0x33] %v5819
      %5824 = vst [vmem:[%s278 + $0x8] sm:$0x33] %v5820
      %v5825 = vld [vmem:[#allocation3] sm:$0x18]
      %v5826 = vld [vmem:[#allocation3 + $0x8] sm:$0x18]
      %v5827 = vld [vmem:[#allocation3] sm:$0x30]
      %v5828 = vld [vmem:[#allocation3 + $0x8] sm:$0x30]
      %v5829 = vld [vmem:[#allocation3] sm:$0xc0]
      %v5830 = vld [vmem:[#allocation3 + $0x8] sm:$0xc0]
      %v5831 = vld [vmem:[#allocation3] sm:$0x80]
      %v5832 = vld [vmem:[#allocation3 + $0x8] sm:$0x80]
      %v5833 = vld [vmem:[#allocation3 + $0x10] sm:$0x1]
      %v5834 = vld [vmem:[#allocation3 + $0x18] sm:$0x1]
      %v5837 = vrot.slane %v5827, 1
      %v5838 = vrot.slane %v5828, 1
      %v5843 = vrot.slane %v5829, 3
      %v5844 = vrot.slane %v5830, 3
      %v5851 = vrot.slane %v5831, 4
      %v5852 = vrot.slane %v5833, 4
      %v5853 = vsel %vm5818, %v5851, %v5852
      %v5854 = vrot.slane %v5832, 4
      %v5855 = vrot.slane %v5834, 4
      %v5856 = vsel %vm5818, %v5854, %v5855
      %v5859 = vpack.c.bf16 %v5825, %v5825
      %v5860 = vpack.c.bf16 %v5826, %v5826
      %v5861 = vpack.c.bf16 %v5837, %v5837
      %v5862 = vpack.c.bf16 %v5838, %v5838
      %v5863 = vpack.c.bf16 %v5843, %v5843
      %v5864 = vpack.c.bf16 %v5844, %v5844
      %v5865 = vpack.c.bf16 %v5853, %v5853
      %v5866 = vpack.c.bf16 %v5856, %v5856
      %v5867 = vld [vmem:[%s5] sm:$0xff]
      %v5868 = vld [vmem:[%s5 + $0x8] sm:$0xff]
      %v5869 = vld [vmem:[%s5 + $0x10] sm:$0xff]
      %v5870 = vld [vmem:[%s5 + $0x18] sm:$0xff]
      %v5871 = vld [vmem:[%s5 + $0x20] sm:$0xff]
      %v5872 = vld [vmem:[%s5 + $0x28] sm:$0xff]
      %v5873 = vld [vmem:[%s5 + $0x30] sm:$0xff]
      %v5874 = vld [vmem:[%s5 + $0x38] sm:$0xff]
      %v5875 = vld [vmem:[%s5 + $0x40] sm:$0xff]
      %v5876 = vld [vmem:[%s5 + $0x48] sm:$0xff]
      %v5877 = vld [vmem:[%s5 + $0x50] sm:$0xff]
      %v5878 = vld [vmem:[%s5 + $0x58] sm:$0xff]
      %v5879 = vld [vmem:[%s5 + $0x60] sm:$0xff]
      %v5880 = vld [vmem:[%s5 + $0x68] sm:$0xff]
      %v5881 = vld [vmem:[%s5 + $0x70] sm:$0xff]
      %v5882 = vld [vmem:[%s5 + $0x78] sm:$0xff]
      %v5883 = vld [vmem:[%s5 + $0x80] sm:$0xff]
      %v5884 = vld [vmem:[%s5 + $0x88] sm:$0xff]
      %v5885 = vld [vmem:[%s5 + $0x90] sm:$0xff]
      %v5886 = vld [vmem:[%s5 + $0x98] sm:$0xff]
      %v5887 = vld [vmem:[%s5 + $0xa0] sm:$0xff]
      %v5888 = vld [vmem:[%s5 + $0xa8] sm:$0xff]
      %v5889 = vld [vmem:[%s5 + $0xb0] sm:$0xff]
      %v5890 = vld [vmem:[%s5 + $0xb8] sm:$0xff]
      %v5891 = vld [vmem:[%s5 + $0xc0] sm:$0xff]
      %v5892 = vld [vmem:[%s5 + $0xc8] sm:$0xff]
      %v5893 = vld [vmem:[%s5 + $0xd0] sm:$0xff]
      %v5894 = vld [vmem:[%s5 + $0xd8] sm:$0xff]
      %v5895 = vld [vmem:[%s5 + $0xe0] sm:$0xff]
      %v5896 = vld [vmem:[%s5 + $0xe8] sm:$0xff]
      %v5897 = vld [vmem:[%s5 + $0xf0] sm:$0xff]
      %v5898 = vld [vmem:[%s5 + $0xf8] sm:$0xff]
      %v5899 = vld [vmem:[%s5 + $0x100] sm:$0xff]
      %v5900 = vld [vmem:[%s5 + $0x108] sm:$0xff]
      %v5901 = vld [vmem:[%s5 + $0x110] sm:$0xff]
      %v5902 = vld [vmem:[%s5 + $0x118] sm:$0xff]
      %v5903 = vld [vmem:[%s5 + $0x120] sm:$0xff]
      %v5904 = vld [vmem:[%s5 + $0x128] sm:$0xff]
      %v5905 = vld [vmem:[%s5 + $0x130] sm:$0xff]
      %v5906 = vld [vmem:[%s5 + $0x138] sm:$0xff]
      %v5907 = vld [vmem:[%s5 + $0x140] sm:$0xff]
      %v5908 = vld [vmem:[%s5 + $0x148] sm:$0xff]
      %v5909 = vld [vmem:[%s5 + $0x150] sm:$0xff]
      %v5910 = vld [vmem:[%s5 + $0x158] sm:$0xff]
      %v5911 = vld [vmem:[%s5 + $0x160] sm:$0xff]
      %v5912 = vld [vmem:[%s5 + $0x168] sm:$0xff]
      %v5913 = vld [vmem:[%s5 + $0x170] sm:$0xff]
      %v5914 = vld [vmem:[%s5 + $0x178] sm:$0xff]
      %v5915 = vld [vmem:[%s5 + $0x180] sm:$0xff]
      %v5916 = vld [vmem:[%s5 + $0x188] sm:$0xff]
      %v5917 = vld [vmem:[%s5 + $0x190] sm:$0xff]
      %v5918 = vld [vmem:[%s5 + $0x198] sm:$0xff]
      %v5919 = vld [vmem:[%s5 + $0x1a0] sm:$0xff]
      %v5920 = vld [vmem:[%s5 + $0x1a8] sm:$0xff]
      %v5921 = vld [vmem:[%s5 + $0x1b0] sm:$0xff]
      %v5922 = vld [vmem:[%s5 + $0x1b8] sm:$0xff]
      %v5923 = vld [vmem:[%s5 + $0x1c0] sm:$0xff]
      %v5924 = vld [vmem:[%s5 + $0x1c8] sm:$0xff]
      %v5925 = vld [vmem:[%s5 + $0x1d0] sm:$0xff]
      %v5926 = vld [vmem:[%s5 + $0x1d8] sm:$0xff]
      %v5927 = vld [vmem:[%s5 + $0x1e0] sm:$0xff]
      %v5928 = vld [vmem:[%s5 + $0x1e8] sm:$0xff]
      %v5929 = vld [vmem:[%s5 + $0x1f0] sm:$0xff]
      %v5930 = vld [vmem:[%s5 + $0x1f8] sm:$0xff]
      %v5931 = vld [vmem:[%s5 + $0x200] sm:$0xff]
      %v5932 = vld [vmem:[%s5 + $0x208] sm:$0xff]
      %v5933 = vld [vmem:[%s5 + $0x210] sm:$0xff]
      %v5934 = vld [vmem:[%s5 + $0x218] sm:$0xff]
      %v5935 = vld [vmem:[%s5 + $0x220] sm:$0xff]
      %v5936 = vld [vmem:[%s5 + $0x228] sm:$0xff]
      %v5937 = vld [vmem:[%s5 + $0x230] sm:$0xff]
      %v5938 = vld [vmem:[%s5 + $0x238] sm:$0xff]
      %v5939 = vld [vmem:[%s5 + $0x240] sm:$0xff]
      %v5940 = vld [vmem:[%s5 + $0x248] sm:$0xff]
      %v5941 = vld [vmem:[%s5 + $0x250] sm:$0xff]
      %v5942 = vld [vmem:[%s5 + $0x258] sm:$0xff]
      %v5943 = vld [vmem:[%s5 + $0x260] sm:$0xff]
      %v5944 = vld [vmem:[%s5 + $0x268] sm:$0xff]
      %v5945 = vld [vmem:[%s5 + $0x270] sm:$0xff]
      %v5946 = vld [vmem:[%s5 + $0x278] sm:$0xff]
      %v5947 = vld [vmem:[%s5 + $0x280] sm:$0xff]
      %v5948 = vld [vmem:[%s5 + $0x288] sm:$0xff]
      %v5949 = vld [vmem:[%s5 + $0x290] sm:$0xff]
      %v5950 = vld [vmem:[%s5 + $0x298] sm:$0xff]
      %v5951 = vld [vmem:[%s5 + $0x2a0] sm:$0xff]
      %v5952 = vld [vmem:[%s5 + $0x2a8] sm:$0xff]
      %v5953 = vld [vmem:[%s5 + $0x2b0] sm:$0xff]
      %v5954 = vld [vmem:[%s5 + $0x2b8] sm:$0xff]
      %v5955 = vld [vmem:[%s5 + $0x2c0] sm:$0xff]
      %v5956 = vld [vmem:[%s5 + $0x2c8] sm:$0xff]
      %v5957 = vld [vmem:[%s5 + $0x2d0] sm:$0xff]
      %v5958 = vld [vmem:[%s5 + $0x2d8] sm:$0xff]
      %v5959 = vld [vmem:[%s5 + $0x2e0] sm:$0xff]
      %v5960 = vld [vmem:[%s5 + $0x2e8] sm:$0xff]
      %v5961 = vld [vmem:[%s5 + $0x2f0] sm:$0xff]
      %v5962 = vld [vmem:[%s5 + $0x2f8] sm:$0xff]
      %v5963 = vld [vmem:[%s5 + $0x300] sm:$0xff]
      %v5964 = vld [vmem:[%s5 + $0x308] sm:$0xff]
      %v5965 = vld [vmem:[%s5 + $0x310] sm:$0xff]
      %v5966 = vld [vmem:[%s5 + $0x318] sm:$0xff]
      %v5967 = vld [vmem:[%s5 + $0x320] sm:$0xff]
      %v5968 = vld [vmem:[%s5 + $0x328] sm:$0xff]
      %v5969 = vld [vmem:[%s5 + $0x330] sm:$0xff]
      %v5970 = vld [vmem:[%s5 + $0x338] sm:$0xff]
      %v5971 = vld [vmem:[%s5 + $0x340] sm:$0xff]
      %v5972 = vld [vmem:[%s5 + $0x348] sm:$0xff]
      %v5973 = vld [vmem:[%s5 + $0x350] sm:$0xff]
      %v5974 = vld [vmem:[%s5 + $0x358] sm:$0xff]
      %v5975 = vld [vmem:[%s5 + $0x360] sm:$0xff]
      %v5976 = vld [vmem:[%s5 + $0x368] sm:$0xff]
      %v5977 = vld [vmem:[%s5 + $0x370] sm:$0xff]
      %v5978 = vld [vmem:[%s5 + $0x378] sm:$0xff]
      %v5979 = vld [vmem:[%s5 + $0x380] sm:$0xff]
      %v5980 = vld [vmem:[%s5 + $0x388] sm:$0xff]
      %v5981 = vld [vmem:[%s5 + $0x390] sm:$0xff]
      %v5982 = vld [vmem:[%s5 + $0x398] sm:$0xff]
      %v5983 = vld [vmem:[%s5 + $0x3a0] sm:$0xff]
      %v5984 = vld [vmem:[%s5 + $0x3a8] sm:$0xff]
      %v5985 = vld [vmem:[%s5 + $0x3b0] sm:$0xff]
      %v5986 = vld [vmem:[%s5 + $0x3b8] sm:$0xff]
      %v5987 = vld [vmem:[%s5 + $0x3c0] sm:$0xff]
      %v5988 = vld [vmem:[%s5 + $0x3c8] sm:$0xff]
      %v5989 = vld [vmem:[%s5 + $0x3d0] sm:$0xff]
      %v5990 = vld [vmem:[%s5 + $0x3d8] sm:$0xff]
      %v5991 = vld [vmem:[%s5 + $0x3e0] sm:$0xff]
      %v5992 = vld [vmem:[%s5 + $0x3e8] sm:$0xff]
      %v5993 = vld [vmem:[%s5 + $0x3f0] sm:$0xff]
      %v5994 = vld [vmem:[%s5 + $0x3f8] sm:$0xff]
      %v5995 = vld [vmem:[%s5 + $0x400] sm:$0xff]
      %v5996 = vld [vmem:[%s5 + $0x408] sm:$0xff]
      %v5997 = vld [vmem:[%s5 + $0x410] sm:$0xff]
      %v5998 = vld [vmem:[%s5 + $0x418] sm:$0xff]
      %v5999 = vld [vmem:[%s5 + $0x420] sm:$0xff]
      %v6000 = vld [vmem:[%s5 + $0x428] sm:$0xff]
      %v6001 = vld [vmem:[%s5 + $0x430] sm:$0xff]
      %v6002 = vld [vmem:[%s5 + $0x438] sm:$0xff]
      %v6003 = vld [vmem:[%s5 + $0x440] sm:$0xff]
      %v6004 = vld [vmem:[%s5 + $0x448] sm:$0xff]
      %v6005 = vld [vmem:[%s5 + $0x450] sm:$0xff]
      %v6006 = vld [vmem:[%s5 + $0x458] sm:$0xff]
      %v6007 = vld [vmem:[%s5 + $0x460] sm:$0xff]
      %v6008 = vld [vmem:[%s5 + $0x468] sm:$0xff]
      %v6009 = vld [vmem:[%s5 + $0x470] sm:$0xff]
      %v6010 = vld [vmem:[%s5 + $0x478] sm:$0xff]
      %v6011 = vld [vmem:[%s5 + $0x480] sm:$0xff]
      %v6012 = vld [vmem:[%s5 + $0x488] sm:$0xff]
      %v6013 = vld [vmem:[%s5 + $0x490] sm:$0xff]
      %v6014 = vld [vmem:[%s5 + $0x498] sm:$0xff]
      %v6015 = vld [vmem:[%s5 + $0x4a0] sm:$0xff]
      %v6016 = vld [vmem:[%s5 + $0x4a8] sm:$0xff]
      %v6017 = vld [vmem:[%s5 + $0x4b0] sm:$0xff]
      %v6018 = vld [vmem:[%s5 + $0x4b8] sm:$0xff]
      %v6019 = vld [vmem:[%s5 + $0x4c0] sm:$0xff]
      %v6020 = vld [vmem:[%s5 + $0x4c8] sm:$0xff]
      %v6021 = vld [vmem:[%s5 + $0x4d0] sm:$0xff]
      %v6022 = vld [vmem:[%s5 + $0x4d8] sm:$0xff]
      %v6023 = vld [vmem:[%s5 + $0x4e0] sm:$0xff]
      %v6024 = vld [vmem:[%s5 + $0x4e8] sm:$0xff]
      %v6025 = vld [vmem:[%s5 + $0x4f0] sm:$0xff]
      %v6026 = vld [vmem:[%s5 + $0x4f8] sm:$0xff]
      %v6027 = vld [vmem:[%s5 + $0x500] sm:$0xff]
      %v6028 = vld [vmem:[%s5 + $0x508] sm:$0xff]
      %v6029 = vld [vmem:[%s5 + $0x510] sm:$0xff]
      %v6030 = vld [vmem:[%s5 + $0x518] sm:$0xff]
      %v6031 = vld [vmem:[%s5 + $0x520] sm:$0xff]
      %v6032 = vld [vmem:[%s5 + $0x528] sm:$0xff]
      %v6033 = vld [vmem:[%s5 + $0x530] sm:$0xff]
      %v6034 = vld [vmem:[%s5 + $0x538] sm:$0xff]
      %v6035 = vld [vmem:[%s5 + $0x540] sm:$0xff]
      %v6036 = vld [vmem:[%s5 + $0x548] sm:$0xff]
      %v6037 = vld [vmem:[%s5 + $0x550] sm:$0xff]
      %v6038 = vld [vmem:[%s5 + $0x558] sm:$0xff]
      %v6039 = vld [vmem:[%s5 + $0x560] sm:$0xff]
      %v6040 = vld [vmem:[%s5 + $0x568] sm:$0xff]
      %v6041 = vld [vmem:[%s5 + $0x570] sm:$0xff]
      %v6042 = vld [vmem:[%s5 + $0x578] sm:$0xff]
      %v6043 = vld [vmem:[%s5 + $0x580] sm:$0xff]
      %v6044 = vld [vmem:[%s5 + $0x588] sm:$0xff]
      %v6045 = vld [vmem:[%s5 + $0x590] sm:$0xff]
      %v6046 = vld [vmem:[%s5 + $0x598] sm:$0xff]
      %v6047 = vld [vmem:[%s5 + $0x5a0] sm:$0xff]
      %v6048 = vld [vmem:[%s5 + $0x5a8] sm:$0xff]
      %v6049 = vld [vmem:[%s5 + $0x5b0] sm:$0xff]
      %v6050 = vld [vmem:[%s5 + $0x5b8] sm:$0xff]
      %v6051 = vld [vmem:[%s5 + $0x5c0] sm:$0xff]
      %v6052 = vld [vmem:[%s5 + $0x5c8] sm:$0xff]
      %v6053 = vld [vmem:[%s5 + $0x5d0] sm:$0xff]
      %v6054 = vld [vmem:[%s5 + $0x5d8] sm:$0xff]
      %v6055 = vld [vmem:[%s5 + $0x5e0] sm:$0xff]
      %v6056 = vld [vmem:[%s5 + $0x5e8] sm:$0xff]
      %v6057 = vld [vmem:[%s5 + $0x5f0] sm:$0xff]
      %v6058 = vld [vmem:[%s5 + $0x5f8] sm:$0xff]
      %v6059 = vld [vmem:[%s5 + $0x600] sm:$0xff]
      %v6060 = vld [vmem:[%s5 + $0x608] sm:$0xff]
      %v6061 = vld [vmem:[%s5 + $0x610] sm:$0xff]
      %v6062 = vld [vmem:[%s5 + $0x618] sm:$0xff]
      %v6063 = vld [vmem:[%s5 + $0x620] sm:$0xff]
      %v6064 = vld [vmem:[%s5 + $0x628] sm:$0xff]
      %v6065 = vld [vmem:[%s5 + $0x630] sm:$0xff]
      %v6066 = vld [vmem:[%s5 + $0x638] sm:$0xff]
      %v6067 = vld [vmem:[%s5 + $0x640] sm:$0xff]
      %v6068 = vld [vmem:[%s5 + $0x648] sm:$0xff]
      %v6069 = vld [vmem:[%s5 + $0x650] sm:$0xff]
      %v6070 = vld [vmem:[%s5 + $0x658] sm:$0xff]
      %v6071 = vld [vmem:[%s5 + $0x660] sm:$0xff]
      %v6072 = vld [vmem:[%s5 + $0x668] sm:$0xff]
      %v6073 = vld [vmem:[%s5 + $0x670] sm:$0xff]
      %v6074 = vld [vmem:[%s5 + $0x678] sm:$0xff]
      %v6075 = vld [vmem:[%s5 + $0x680] sm:$0xff]
      %v6076 = vld [vmem:[%s5 + $0x688] sm:$0xff]
      %v6077 = vld [vmem:[%s5 + $0x690] sm:$0xff]
      %v6078 = vld [vmem:[%s5 + $0x698] sm:$0xff]
      %v6079 = vld [vmem:[%s5 + $0x6a0] sm:$0xff]
      %v6080 = vld [vmem:[%s5 + $0x6a8] sm:$0xff]
      %v6081 = vld [vmem:[%s5 + $0x6b0] sm:$0xff]
      %v6082 = vld [vmem:[%s5 + $0x6b8] sm:$0xff]
      %v6083 = vld [vmem:[%s5 + $0x6c0] sm:$0xff]
      %v6084 = vld [vmem:[%s5 + $0x6c8] sm:$0xff]
      %v6085 = vld [vmem:[%s5 + $0x6d0] sm:$0xff]
      %v6086 = vld [vmem:[%s5 + $0x6d8] sm:$0xff]
      %v6087 = vld [vmem:[%s5 + $0x6e0] sm:$0xff]
      %v6088 = vld [vmem:[%s5 + $0x6e8] sm:$0xff]
      %v6089 = vld [vmem:[%s5 + $0x6f0] sm:$0xff]
      %v6090 = vld [vmem:[%s5 + $0x6f8] sm:$0xff]
      %v6091 = vld [vmem:[%s5 + $0x700] sm:$0xff]
      %v6092 = vld [vmem:[%s5 + $0x708] sm:$0xff]
      %v6093 = vld [vmem:[%s5 + $0x710] sm:$0xff]
      %v6094 = vld [vmem:[%s5 + $0x718] sm:$0xff]
      %v6095 = vld [vmem:[%s5 + $0x720] sm:$0xff]
      %v6096 = vld [vmem:[%s5 + $0x728] sm:$0xff]
      %v6097 = vld [vmem:[%s5 + $0x730] sm:$0xff]
      %v6098 = vld [vmem:[%s5 + $0x738] sm:$0xff]
      %v6099 = vld [vmem:[%s5 + $0x740] sm:$0xff]
      %v6100 = vld [vmem:[%s5 + $0x748] sm:$0xff]
      %v6101 = vld [vmem:[%s5 + $0x750] sm:$0xff]
      %v6102 = vld [vmem:[%s5 + $0x758] sm:$0xff]
      %v6103 = vld [vmem:[%s5 + $0x760] sm:$0xff]
      %v6104 = vld [vmem:[%s5 + $0x768] sm:$0xff]
      %v6105 = vld [vmem:[%s5 + $0x770] sm:$0xff]
      %v6106 = vld [vmem:[%s5 + $0x778] sm:$0xff]
      %v6107 = vld [vmem:[%s5 + $0x780] sm:$0xff]
      %v6108 = vld [vmem:[%s5 + $0x788] sm:$0xff]
      %v6109 = vld [vmem:[%s5 + $0x790] sm:$0xff]
      %v6110 = vld [vmem:[%s5 + $0x798] sm:$0xff]
      %v6111 = vld [vmem:[%s5 + $0x7a0] sm:$0xff]
      %v6112 = vld [vmem:[%s5 + $0x7a8] sm:$0xff]
      %v6113 = vld [vmem:[%s5 + $0x7b0] sm:$0xff]
      %v6114 = vld [vmem:[%s5 + $0x7b8] sm:$0xff]
      %v6115 = vld [vmem:[%s5 + $0x7c0] sm:$0xff]
      %v6116 = vld [vmem:[%s5 + $0x7c8] sm:$0xff]
      %v6117 = vld [vmem:[%s5 + $0x7d0] sm:$0xff]
      %v6118 = vld [vmem:[%s5 + $0x7d8] sm:$0xff]
      %v6119 = vld [vmem:[%s5 + $0x7e0] sm:$0xff]
      %v6120 = vld [vmem:[%s5 + $0x7e8] sm:$0xff]
      %v6121 = vld [vmem:[%s5 + $0x7f0] sm:$0xff]
      %v6122 = vld [vmem:[%s5 + $0x7f8] sm:$0xff]
      %v6123 = vld [vmem:[%s6] sm:$0xf]
      %v6125 = vperm.slane %v6123, 0
      %v6126 = vperm.slane %v6123, 1
      %v6127 = vperm.slane %v6123, 2
      %v6128 = vperm.slane %v6123, 3
      %v6134 = vshrl.u32 %v5859, 16
      %v6136 = vrot.slane %v6134, 1
      %v6137 = vshll.u32 %v5859, 16
      %v6139 = vrot.slane %v6137, 2
      %v6140 = vor.u32 %v6136, %v6139
      %v6142 = vshrl.u32 %v5860, 16
      %v6144 = vrot.slane %v6142, 1
      %v6145 = vshll.u32 %v5860, 16
      %v6147 = vrot.slane %v6145, 2
      %v6148 = vor.u32 %v6144, %v6147
      %v6150 = vshrl.u32 %v5861, 16
      %v6152 = vrot.slane %v6150, 1
      %v6153 = vshll.u32 %v5861, 16
      %v6155 = vrot.slane %v6153, 2
      %v6156 = vor.u32 %v6152, %v6155
      %v6158 = vshrl.u32 %v5862, 16
      %v6160 = vrot.slane %v6158, 1
      %v6161 = vshll.u32 %v5862, 16
      %v6163 = vrot.slane %v6161, 2
      %v6164 = vor.u32 %v6160, %v6163
      %v6166 = vshrl.u32 %v5863, 16
      %v6168 = vrot.slane %v6166, 1
      %v6169 = vshll.u32 %v5863, 16
      %v6171 = vrot.slane %v6169, 2
      %v6172 = vor.u32 %v6168, %v6171
      %v6174 = vshrl.u32 %v5864, 16
      %v6176 = vrot.slane %v6174, 1
      %v6177 = vshll.u32 %v5864, 16
      %v6179 = vrot.slane %v6177, 2
      %v6180 = vor.u32 %v6176, %v6179
      %v6182 = vshrl.u32 %v5865, 16
      %v6184 = vrot.slane %v6182, 1
      %v6185 = vshll.u32 %v5865, 16
      %v6187 = vrot.slane %v6185, 2
      %v6188 = vor.u32 %v6184, %v6187
      %v6190 = vshrl.u32 %v5866, 16
      %v6192 = vrot.slane %v6190, 1
      %v6193 = vshll.u32 %v5866, 16
      %v6195 = vrot.slane %v6193, 2
      %v6196 = vor.u32 %v6192, %v6195
      %v6461 = vunpack.c.l.b16 %v5867
      %v6462 = vunpack.c.h.b16 %v5867
      %v6463 = vunpack.c.l.b16 %v5868
      %v6464 = vunpack.c.h.b16 %v5868
      %v6465 = vunpack.c.l.b16 %v5869
      %v6466 = vunpack.c.h.b16 %v5869
      %v6467 = vunpack.c.l.b16 %v5870
      %v6468 = vunpack.c.h.b16 %v5870
      %v6469 = vunpack.c.l.b16 %v5871
      %v6470 = vunpack.c.h.b16 %v5871
      %v6471 = vunpack.c.l.b16 %v5872
      %v6472 = vunpack.c.h.b16 %v5872
      %v6473 = vunpack.c.l.b16 %v5873
      %v6474 = vunpack.c.h.b16 %v5873
      %v6475 = vunpack.c.l.b16 %v5874
      %v6476 = vunpack.c.h.b16 %v5874
      %v6477 = vunpack.c.l.b16 %v5875
      %v6478 = vunpack.c.h.b16 %v5875
      %v6479 = vunpack.c.l.b16 %v5876
      %v6480 = vunpack.c.h.b16 %v5876
      %v6481 = vunpack.c.l.b16 %v5877
      %v6482 = vunpack.c.h.b16 %v5877
      %v6483 = vunpack.c.l.b16 %v5878
      %v6484 = vunpack.c.h.b16 %v5878
      %v6485 = vunpack.c.l.b16 %v5879
      %v6486 = vunpack.c.h.b16 %v5879
      %v6487 = vunpack.c.l.b16 %v5880
      %v6488 = vunpack.c.h.b16 %v5880
      %v6489 = vunpack.c.l.b16 %v5881
      %v6490 = vunpack.c.h.b16 %v5881
      %v6491 = vunpack.c.l.b16 %v5882
      %v6492 = vunpack.c.h.b16 %v5882
      %v6493 = vunpack.c.l.b16 %v5883
      %v6494 = vunpack.c.h.b16 %v5883
      %v6495 = vunpack.c.l.b16 %v5884
      %v6496 = vunpack.c.h.b16 %v5884
      %v6497 = vunpack.c.l.b16 %v5885
      %v6498 = vunpack.c.h.b16 %v5885
      %v6499 = vunpack.c.l.b16 %v5886
      %v6500 = vunpack.c.h.b16 %v5886
      %v6501 = vunpack.c.l.b16 %v5887
      %v6502 = vunpack.c.h.b16 %v5887
      %v6503 = vunpack.c.l.b16 %v5888
      %v6504 = vunpack.c.h.b16 %v5888
      %v6505 = vunpack.c.l.b16 %v5889
      %v6506 = vunpack.c.h.b16 %v5889
      %v6507 = vunpack.c.l.b16 %v5890
      %v6508 = vunpack.c.h.b16 %v5890
      %v6509 = vunpack.c.l.b16 %v5891
      %v6510 = vunpack.c.h.b16 %v5891
      %v6511 = vunpack.c.l.b16 %v5892
      %v6512 = vunpack.c.h.b16 %v5892
      %v6513 = vunpack.c.l.b16 %v5893
      %v6514 = vunpack.c.h.b16 %v5893
      %v6515 = vunpack.c.l.b16 %v5894
      %v6516 = vunpack.c.h.b16 %v5894
      %v6517 = vunpack.c.l.b16 %v5895
      %v6518 = vunpack.c.h.b16 %v5895
      %v6519 = vunpack.c.l.b16 %v5896
      %v6520 = vunpack.c.h.b16 %v5896
      %v6521 = vunpack.c.l.b16 %v5897
      %v6522 = vunpack.c.h.b16 %v5897
      %v6523 = vunpack.c.l.b16 %v5898
      %v6524 = vunpack.c.h.b16 %v5898
      %v6525 = vunpack.c.l.b16 %v5899
      %v6526 = vunpack.c.h.b16 %v5899
      %v6527 = vunpack.c.l.b16 %v5900
      %v6528 = vunpack.c.h.b16 %v5900
      %v6529 = vunpack.c.l.b16 %v5901
      %v6530 = vunpack.c.h.b16 %v5901
      %v6531 = vunpack.c.l.b16 %v5902
      %v6532 = vunpack.c.h.b16 %v5902
      %v6533 = vunpack.c.l.b16 %v5903
      %v6534 = vunpack.c.h.b16 %v5903
      %v6535 = vunpack.c.l.b16 %v5904
      %v6536 = vunpack.c.h.b16 %v5904
      %v6537 = vunpack.c.l.b16 %v5905
      %v6538 = vunpack.c.h.b16 %v5905
      %v6539 = vunpack.c.l.b16 %v5906
      %v6540 = vunpack.c.h.b16 %v5906
      %v6541 = vunpack.c.l.b16 %v5907
      %v6542 = vunpack.c.h.b16 %v5907
      %v6543 = vunpack.c.l.b16 %v5908
      %v6544 = vunpack.c.h.b16 %v5908
      %v6545 = vunpack.c.l.b16 %v5909
      %v6546 = vunpack.c.h.b16 %v5909
      %v6547 = vunpack.c.l.b16 %v5910
      %v6548 = vunpack.c.h.b16 %v5910
      %v6549 = vunpack.c.l.b16 %v5911
      %v6550 = vunpack.c.h.b16 %v5911
      %v6551 = vunpack.c.l.b16 %v5912
      %v6552 = vunpack.c.h.b16 %v5912
      %v6553 = vunpack.c.l.b16 %v5913
      %v6554 = vunpack.c.h.b16 %v5913
      %v6555 = vunpack.c.l.b16 %v5914
      %v6556 = vunpack.c.h.b16 %v5914
      %v6557 = vunpack.c.l.b16 %v5915
      %v6558 = vunpack.c.h.b16 %v5915
      %v6559 = vunpack.c.l.b16 %v5916
      %v6560 = vunpack.c.h.b16 %v5916
      %v6561 = vunpack.c.l.b16 %v5917
      %v6562 = vunpack.c.h.b16 %v5917
      %v6563 = vunpack.c.l.b16 %v5918
      %v6564 = vunpack.c.h.b16 %v5918
      %v6565 = vunpack.c.l.b16 %v5919
      %v6566 = vunpack.c.h.b16 %v5919
      %v6567 = vunpack.c.l.b16 %v5920
      %v6568 = vunpack.c.h.b16 %v5920
      %v6569 = vunpack.c.l.b16 %v5921
      %v6570 = vunpack.c.h.b16 %v5921
      %v6571 = vunpack.c.l.b16 %v5922
      %v6572 = vunpack.c.h.b16 %v5922
      %v6573 = vunpack.c.l.b16 %v5923
      %v6574 = vunpack.c.h.b16 %v5923
      %v6575 = vunpack.c.l.b16 %v5924
      %v6576 = vunpack.c.h.b16 %v5924
      %v6577 = vunpack.c.l.b16 %v5925
      %v6578 = vunpack.c.h.b16 %v5925
      %v6579 = vunpack.c.l.b16 %v5926
      %v6580 = vunpack.c.h.b16 %v5926
      %v6581 = vunpack.c.l.b16 %v5927
      %v6582 = vunpack.c.h.b16 %v5927
      %v6583 = vunpack.c.l.b16 %v5928
      %v6584 = vunpack.c.h.b16 %v5928
      %v6585 = vunpack.c.l.b16 %v5929
      %v6586 = vunpack.c.h.b16 %v5929
      %v6587 = vunpack.c.l.b16 %v5930
      %v6588 = vunpack.c.h.b16 %v5930
      %v6589 = vunpack.c.l.b16 %v5931
      %v6590 = vunpack.c.h.b16 %v5931
      %v6591 = vunpack.c.l.b16 %v5932
      %v6592 = vunpack.c.h.b16 %v5932
      %v6593 = vunpack.c.l.b16 %v5933
      %v6594 = vunpack.c.h.b16 %v5933
      %v6595 = vunpack.c.l.b16 %v5934
      %v6596 = vunpack.c.h.b16 %v5934
      %v6597 = vunpack.c.l.b16 %v5935
      %v6598 = vunpack.c.h.b16 %v5935
      %v6599 = vunpack.c.l.b16 %v5936
      %v6600 = vunpack.c.h.b16 %v5936
      %v6601 = vunpack.c.l.b16 %v5937
      %v6602 = vunpack.c.h.b16 %v5937
      %v6603 = vunpack.c.l.b16 %v5938
      %v6604 = vunpack.c.h.b16 %v5938
      %v6605 = vunpack.c.l.b16 %v5939
      %v6606 = vunpack.c.h.b16 %v5939
      %v6607 = vunpack.c.l.b16 %v5940
      %v6608 = vunpack.c.h.b16 %v5940
      %v6609 = vunpack.c.l.b16 %v5941
      %v6610 = vunpack.c.h.b16 %v5941
      %v6611 = vunpack.c.l.b16 %v5942
      %v6612 = vunpack.c.h.b16 %v5942
      %v6613 = vunpack.c.l.b16 %v5943
      %v6614 = vunpack.c.h.b16 %v5943
      %v6615 = vunpack.c.l.b16 %v5944
      %v6616 = vunpack.c.h.b16 %v5944
      %v6617 = vunpack.c.l.b16 %v5945
      %v6618 = vunpack.c.h.b16 %v5945
      %v6619 = vunpack.c.l.b16 %v5946
      %v6620 = vunpack.c.h.b16 %v5946
      %v6621 = vunpack.c.l.b16 %v5947
      %v6622 = vunpack.c.h.b16 %v5947
      %v6623 = vunpack.c.l.b16 %v5948
      %v6624 = vunpack.c.h.b16 %v5948
      %v6625 = vunpack.c.l.b16 %v5949
      %v6626 = vunpack.c.h.b16 %v5949
      %v6627 = vunpack.c.l.b16 %v5950
      %v6628 = vunpack.c.h.b16 %v5950
      %v6629 = vunpack.c.l.b16 %v5951
      %v6630 = vunpack.c.h.b16 %v5951
      %v6631 = vunpack.c.l.b16 %v5952
      %v6632 = vunpack.c.h.b16 %v5952
      %v6633 = vunpack.c.l.b16 %v5953
      %v6634 = vunpack.c.h.b16 %v5953
      %v6635 = vunpack.c.l.b16 %v5954
      %v6636 = vunpack.c.h.b16 %v5954
      %v6637 = vunpack.c.l.b16 %v5955
      %v6638 = vunpack.c.h.b16 %v5955
      %v6639 = vunpack.c.l.b16 %v5956
      %v6640 = vunpack.c.h.b16 %v5956
      %v6641 = vunpack.c.l.b16 %v5957
      %v6642 = vunpack.c.h.b16 %v5957
      %v6643 = vunpack.c.l.b16 %v5958
      %v6644 = vunpack.c.h.b16 %v5958
      %v6645 = vunpack.c.l.b16 %v5959
      %v6646 = vunpack.c.h.b16 %v5959
      %v6647 = vunpack.c.l.b16 %v5960
      %v6648 = vunpack.c.h.b16 %v5960
      %v6649 = vunpack.c.l.b16 %v5961
      %v6650 = vunpack.c.h.b16 %v5961
      %v6651 = vunpack.c.l.b16 %v5962
      %v6652 = vunpack.c.h.b16 %v5962
      %v6653 = vunpack.c.l.b16 %v5963
      %v6654 = vunpack.c.h.b16 %v5963
      %v6655 = vunpack.c.l.b16 %v5964
      %v6656 = vunpack.c.h.b16 %v5964
      %v6657 = vunpack.c.l.b16 %v5965
      %v6658 = vunpack.c.h.b16 %v5965
      %v6659 = vunpack.c.l.b16 %v5966
      %v6660 = vunpack.c.h.b16 %v5966
      %v6661 = vunpack.c.l.b16 %v5967
      %v6662 = vunpack.c.h.b16 %v5967
      %v6663 = vunpack.c.l.b16 %v5968
      %v6664 = vunpack.c.h.b16 %v5968
      %v6665 = vunpack.c.l.b16 %v5969
      %v6666 = vunpack.c.h.b16 %v5969
      %v6667 = vunpack.c.l.b16 %v5970
      %v6668 = vunpack.c.h.b16 %v5970
      %v6669 = vunpack.c.l.b16 %v5971
      %v6670 = vunpack.c.h.b16 %v5971
      %v6671 = vunpack.c.l.b16 %v5972
      %v6672 = vunpack.c.h.b16 %v5972
      %v6673 = vunpack.c.l.b16 %v5973
      %v6674 = vunpack.c.h.b16 %v5973
      %v6675 = vunpack.c.l.b16 %v5974
      %v6676 = vunpack.c.h.b16 %v5974
      %v6677 = vunpack.c.l.b16 %v5975
      %v6678 = vunpack.c.h.b16 %v5975
      %v6679 = vunpack.c.l.b16 %v5976
      %v6680 = vunpack.c.h.b16 %v5976
      %v6681 = vunpack.c.l.b16 %v5977
      %v6682 = vunpack.c.h.b16 %v5977
      %v6683 = vunpack.c.l.b16 %v5978
      %v6684 = vunpack.c.h.b16 %v5978
      %v6685 = vunpack.c.l.b16 %v5979
      %v6686 = vunpack.c.h.b16 %v5979
      %v6687 = vunpack.c.l.b16 %v5980
      %v6688 = vunpack.c.h.b16 %v5980
      %v6689 = vunpack.c.l.b16 %v5981
      %v6690 = vunpack.c.h.b16 %v5981
      %v6691 = vunpack.c.l.b16 %v5982
      %v6692 = vunpack.c.h.b16 %v5982
      %v6693 = vunpack.c.l.b16 %v5983
      %v6694 = vunpack.c.h.b16 %v5983
      %v6695 = vunpack.c.l.b16 %v5984
      %v6696 = vunpack.c.h.b16 %v5984
      %v6697 = vunpack.c.l.b16 %v5985
      %v6698 = vunpack.c.h.b16 %v5985
      %v6699 = vunpack.c.l.b16 %v5986
      %v6700 = vunpack.c.h.b16 %v5986
      %v6701 = vunpack.c.l.b16 %v5987
      %v6702 = vunpack.c.h.b16 %v5987
      %v6703 = vunpack.c.l.b16 %v5988
      %v6704 = vunpack.c.h.b16 %v5988
      %v6705 = vunpack.c.l.b16 %v5989
      %v6706 = vunpack.c.h.b16 %v5989
      %v6707 = vunpack.c.l.b16 %v5990
      %v6708 = vunpack.c.h.b16 %v5990
      %v6709 = vunpack.c.l.b16 %v5991
      %v6710 = vunpack.c.h.b16 %v5991
      %v6711 = vunpack.c.l.b16 %v5992
      %v6712 = vunpack.c.h.b16 %v5992
      %v6713 = vunpack.c.l.b16 %v5993
      %v6714 = vunpack.c.h.b16 %v5993
      %v6715 = vunpack.c.l.b16 %v5994
      %v6716 = vunpack.c.h.b16 %v5994
      %v6717 = vunpack.c.l.b16 %v5995
      %v6718 = vunpack.c.h.b16 %v5995
      %v6719 = vunpack.c.l.b16 %v5996
      %v6720 = vunpack.c.h.b16 %v5996
      %v6721 = vunpack.c.l.b16 %v5997
      %v6722 = vunpack.c.h.b16 %v5997
      %v6723 = vunpack.c.l.b16 %v5998
      %v6724 = vunpack.c.h.b16 %v5998
      %v6725 = vunpack.c.l.b16 %v5999
      %v6726 = vunpack.c.h.b16 %v5999
      %v6727 = vunpack.c.l.b16 %v6000
      %v6728 = vunpack.c.h.b16 %v6000
      %v6729 = vunpack.c.l.b16 %v6001
      %v6730 = vunpack.c.h.b16 %v6001
      %v6731 = vunpack.c.l.b16 %v6002
      %v6732 = vunpack.c.h.b16 %v6002
      %v6733 = vunpack.c.l.b16 %v6003
      %v6734 = vunpack.c.h.b16 %v6003
      %v6735 = vunpack.c.l.b16 %v6004
      %v6736 = vunpack.c.h.b16 %v6004
      %v6737 = vunpack.c.l.b16 %v6005
      %v6738 = vunpack.c.h.b16 %v6005
      %v6739 = vunpack.c.l.b16 %v6006
      %v6740 = vunpack.c.h.b16 %v6006
      %v6741 = vunpack.c.l.b16 %v6007
      %v6742 = vunpack.c.h.b16 %v6007
      %v6743 = vunpack.c.l.b16 %v6008
      %v6744 = vunpack.c.h.b16 %v6008
      %v6745 = vunpack.c.l.b16 %v6009
      %v6746 = vunpack.c.h.b16 %v6009
      %v6747 = vunpack.c.l.b16 %v6010
      %v6748 = vunpack.c.h.b16 %v6010
      %v6749 = vunpack.c.l.b16 %v6011
      %v6750 = vunpack.c.h.b16 %v6011
      %v6751 = vunpack.c.l.b16 %v6012
      %v6752 = vunpack.c.h.b16 %v6012
      %v6753 = vunpack.c.l.b16 %v6013
      %v6754 = vunpack.c.h.b16 %v6013
      %v6755 = vunpack.c.l.b16 %v6014
      %v6756 = vunpack.c.h.b16 %v6014
      %v6757 = vunpack.c.l.b16 %v6015
      %v6758 = vunpack.c.h.b16 %v6015
      %v6759 = vunpack.c.l.b16 %v6016
      %v6760 = vunpack.c.h.b16 %v6016
      %v6761 = vunpack.c.l.b16 %v6017
      %v6762 = vunpack.c.h.b16 %v6017
      %v6763 = vunpack.c.l.b16 %v6018
      %v6764 = vunpack.c.h.b16 %v6018
      %v6765 = vunpack.c.l.b16 %v6019
      %v6766 = vunpack.c.h.b16 %v6019
      %v6767 = vunpack.c.l.b16 %v6020
      %v6768 = vunpack.c.h.b16 %v6020
      %v6769 = vunpack.c.l.b16 %v6021
      %v6770 = vunpack.c.h.b16 %v6021
      %v6771 = vunpack.c.l.b16 %v6022
      %v6772 = vunpack.c.h.b16 %v6022
      %v6773 = vunpack.c.l.b16 %v6023
      %v6774 = vunpack.c.h.b16 %v6023
      %v6775 = vunpack.c.l.b16 %v6024
      %v6776 = vunpack.c.h.b16 %v6024
      %v6777 = vunpack.c.l.b16 %v6025
      %v6778 = vunpack.c.h.b16 %v6025
      %v6779 = vunpack.c.l.b16 %v6026
      %v6780 = vunpack.c.h.b16 %v6026
      %v6781 = vunpack.c.l.b16 %v6027
      %v6782 = vunpack.c.h.b16 %v6027
      %v6783 = vunpack.c.l.b16 %v6028
      %v6784 = vunpack.c.h.b16 %v6028
      %v6785 = vunpack.c.l.b16 %v6029
      %v6786 = vunpack.c.h.b16 %v6029
      %v6787 = vunpack.c.l.b16 %v6030
      %v6788 = vunpack.c.h.b16 %v6030
      %v6789 = vunpack.c.l.b16 %v6031
      %v6790 = vunpack.c.h.b16 %v6031
      %v6791 = vunpack.c.l.b16 %v6032
      %v6792 = vunpack.c.h.b16 %v6032
      %v6793 = vunpack.c.l.b16 %v6033
      %v6794 = vunpack.c.h.b16 %v6033
      %v6795 = vunpack.c.l.b16 %v6034
      %v6796 = vunpack.c.h.b16 %v6034
      %v6797 = vunpack.c.l.b16 %v6035
      %v6798 = vunpack.c.h.b16 %v6035
      %v6799 = vunpack.c.l.b16 %v6036
      %v6800 = vunpack.c.h.b16 %v6036
      %v6801 = vunpack.c.l.b16 %v6037
      %v6802 = vunpack.c.h.b16 %v6037
      %v6803 = vunpack.c.l.b16 %v6038
      %v6804 = vunpack.c.h.b16 %v6038
      %v6805 = vunpack.c.l.b16 %v6039
      %v6806 = vunpack.c.h.b16 %v6039
      %v6807 = vunpack.c.l.b16 %v6040
      %v6808 = vunpack.c.h.b16 %v6040
      %v6809 = vunpack.c.l.b16 %v6041
      %v6810 = vunpack.c.h.b16 %v6041
      %v6811 = vunpack.c.l.b16 %v6042
      %v6812 = vunpack.c.h.b16 %v6042
      %v6813 = vunpack.c.l.b16 %v6043
      %v6814 = vunpack.c.h.b16 %v6043
      %v6815 = vunpack.c.l.b16 %v6044
      %v6816 = vunpack.c.h.b16 %v6044
      %v6817 = vunpack.c.l.b16 %v6045
      %v6818 = vunpack.c.h.b16 %v6045
      %v6819 = vunpack.c.l.b16 %v6046
      %v6820 = vunpack.c.h.b16 %v6046
      %v6821 = vunpack.c.l.b16 %v6047
      %v6822 = vunpack.c.h.b16 %v6047
      %v6823 = vunpack.c.l.b16 %v6048
      %v6824 = vunpack.c.h.b16 %v6048
      %v6825 = vunpack.c.l.b16 %v6049
      %v6826 = vunpack.c.h.b16 %v6049
      %v6827 = vunpack.c.l.b16 %v6050
      %v6828 = vunpack.c.h.b16 %v6050
      %v6829 = vunpack.c.l.b16 %v6051
      %v6830 = vunpack.c.h.b16 %v6051
      %v6831 = vunpack.c.l.b16 %v6052
      %v6832 = vunpack.c.h.b16 %v6052
      %v6833 = vunpack.c.l.b16 %v6053
      %v6834 = vunpack.c.h.b16 %v6053
      %v6835 = vunpack.c.l.b16 %v6054
      %v6836 = vunpack.c.h.b16 %v6054
      %v6837 = vunpack.c.l.b16 %v6055
      %v6838 = vunpack.c.h.b16 %v6055
      %v6839 = vunpack.c.l.b16 %v6056
      %v6840 = vunpack.c.h.b16 %v6056
      %v6841 = vunpack.c.l.b16 %v6057
      %v6842 = vunpack.c.h.b16 %v6057
      %v6843 = vunpack.c.l.b16 %v6058
      %v6844 = vunpack.c.h.b16 %v6058
      %v6845 = vunpack.c.l.b16 %v6059
      %v6846 = vunpack.c.h.b16 %v6059
      %v6847 = vunpack.c.l.b16 %v6060
      %v6848 = vunpack.c.h.b16 %v6060
      %v6849 = vunpack.c.l.b16 %v6061
      %v6850 = vunpack.c.h.b16 %v6061
      %v6851 = vunpack.c.l.b16 %v6062
      %v6852 = vunpack.c.h.b16 %v6062
      %v6853 = vunpack.c.l.b16 %v6063
      %v6854 = vunpack.c.h.b16 %v6063
      %v6855 = vunpack.c.l.b16 %v6064
      %v6856 = vunpack.c.h.b16 %v6064
      %v6857 = vunpack.c.l.b16 %v6065
      %v6858 = vunpack.c.h.b16 %v6065
      %v6859 = vunpack.c.l.b16 %v6066
      %v6860 = vunpack.c.h.b16 %v6066
      %v6861 = vunpack.c.l.b16 %v6067
      %v6862 = vunpack.c.h.b16 %v6067
      %v6863 = vunpack.c.l.b16 %v6068
      %v6864 = vunpack.c.h.b16 %v6068
      %v6865 = vunpack.c.l.b16 %v6069
      %v6866 = vunpack.c.h.b16 %v6069
      %v6867 = vunpack.c.l.b16 %v6070
      %v6868 = vunpack.c.h.b16 %v6070
      %v6869 = vunpack.c.l.b16 %v6071
      %v6870 = vunpack.c.h.b16 %v6071
      %v6871 = vunpack.c.l.b16 %v6072
      %v6872 = vunpack.c.h.b16 %v6072
      %v6873 = vunpack.c.l.b16 %v6073
      %v6874 = vunpack.c.h.b16 %v6073
      %v6875 = vunpack.c.l.b16 %v6074
      %v6876 = vunpack.c.h.b16 %v6074
      %v6877 = vunpack.c.l.b16 %v6075
      %v6878 = vunpack.c.h.b16 %v6075
      %v6879 = vunpack.c.l.b16 %v6076
      %v6880 = vunpack.c.h.b16 %v6076
      %v6881 = vunpack.c.l.b16 %v6077
      %v6882 = vunpack.c.h.b16 %v6077
      %v6883 = vunpack.c.l.b16 %v6078
      %v6884 = vunpack.c.h.b16 %v6078
      %v6885 = vunpack.c.l.b16 %v6079
      %v6886 = vunpack.c.h.b16 %v6079
      %v6887 = vunpack.c.l.b16 %v6080
      %v6888 = vunpack.c.h.b16 %v6080
      %v6889 = vunpack.c.l.b16 %v6081
      %v6890 = vunpack.c.h.b16 %v6081
      %v6891 = vunpack.c.l.b16 %v6082
      %v6892 = vunpack.c.h.b16 %v6082
      %v6893 = vunpack.c.l.b16 %v6083
      %v6894 = vunpack.c.h.b16 %v6083
      %v6895 = vunpack.c.l.b16 %v6084
      %v6896 = vunpack.c.h.b16 %v6084
      %v6897 = vunpack.c.l.b16 %v6085
      %v6898 = vunpack.c.h.b16 %v6085
      %v6899 = vunpack.c.l.b16 %v6086
      %v6900 = vunpack.c.h.b16 %v6086
      %v6901 = vunpack.c.l.b16 %v6087
      %v6902 = vunpack.c.h.b16 %v6087
      %v6903 = vunpack.c.l.b16 %v6088
      %v6904 = vunpack.c.h.b16 %v6088
      %v6905 = vunpack.c.l.b16 %v6089
      %v6906 = vunpack.c.h.b16 %v6089
      %v6907 = vunpack.c.l.b16 %v6090
      %v6908 = vunpack.c.h.b16 %v6090
      %v6909 = vunpack.c.l.b16 %v6091
      %v6910 = vunpack.c.h.b16 %v6091
      %v6911 = vunpack.c.l.b16 %v6092
      %v6912 = vunpack.c.h.b16 %v6092
      %v6913 = vunpack.c.l.b16 %v6093
      %v6914 = vunpack.c.h.b16 %v6093
      %v6915 = vunpack.c.l.b16 %v6094
      %v6916 = vunpack.c.h.b16 %v6094
      %v6917 = vunpack.c.l.b16 %v6095
      %v6918 = vunpack.c.h.b16 %v6095
      %v6919 = vunpack.c.l.b16 %v6096
      %v6920 = vunpack.c.h.b16 %v6096
      %v6921 = vunpack.c.l.b16 %v6097
      %v6922 = vunpack.c.h.b16 %v6097
      %v6923 = vunpack.c.l.b16 %v6098
      %v6924 = vunpack.c.h.b16 %v6098
      %v6925 = vunpack.c.l.b16 %v6099
      %v6926 = vunpack.c.h.b16 %v6099
      %v6927 = vunpack.c.l.b16 %v6100
      %v6928 = vunpack.c.h.b16 %v6100
      %v6929 = vunpack.c.l.b16 %v6101
      %v6930 = vunpack.c.h.b16 %v6101
      %v6931 = vunpack.c.l.b16 %v6102
      %v6932 = vunpack.c.h.b16 %v6102
      %v6933 = vunpack.c.l.b16 %v6103
      %v6934 = vunpack.c.h.b16 %v6103
      %v6935 = vunpack.c.l.b16 %v6104
      %v6936 = vunpack.c.h.b16 %v6104
      %v6937 = vunpack.c.l.b16 %v6105
      %v6938 = vunpack.c.h.b16 %v6105
      %v6939 = vunpack.c.l.b16 %v6106
      %v6940 = vunpack.c.h.b16 %v6106
      %v6941 = vunpack.c.l.b16 %v6107
      %v6942 = vunpack.c.h.b16 %v6107
      %v6943 = vunpack.c.l.b16 %v6108
      %v6944 = vunpack.c.h.b16 %v6108
      %v6945 = vunpack.c.l.b16 %v6109
      %v6946 = vunpack.c.h.b16 %v6109
      %v6947 = vunpack.c.l.b16 %v6110
      %v6948 = vunpack.c.h.b16 %v6110
      %v6949 = vunpack.c.l.b16 %v6111
      %v6950 = vunpack.c.h.b16 %v6111
      %v6951 = vunpack.c.l.b16 %v6112
      %v6952 = vunpack.c.h.b16 %v6112
      %v6953 = vunpack.c.l.b16 %v6113
      %v6954 = vunpack.c.h.b16 %v6113
      %v6955 = vunpack.c.l.b16 %v6114
      %v6956 = vunpack.c.h.b16 %v6114
      %v6957 = vunpack.c.l.b16 %v6115
      %v6958 = vunpack.c.h.b16 %v6115
      %v6959 = vunpack.c.l.b16 %v6116
      %v6960 = vunpack.c.h.b16 %v6116
      %v6961 = vunpack.c.l.b16 %v6117
      %v6962 = vunpack.c.h.b16 %v6117
      %v6963 = vunpack.c.l.b16 %v6118
      %v6964 = vunpack.c.h.b16 %v6118
      %v6965 = vunpack.c.l.b16 %v6119
      %v6966 = vunpack.c.h.b16 %v6119
      %v6967 = vunpack.c.l.b16 %v6120
      %v6968 = vunpack.c.h.b16 %v6120
      %v6969 = vunpack.c.l.b16 %v6121
      %v6970 = vunpack.c.h.b16 %v6121
      %v6971 = vunpack.c.l.b16 %v6122
      %v6972 = vunpack.c.h.b16 %v6122
      %v6973 = vpack.c.b16 %v6465, %v6461
      %v6974 = vpack.c.b16 %v6466, %v6462
      %v6975 = vpack.c.b16 %v6467, %v6463
      %v6976 = vpack.c.b16 %v6468, %v6464
      %v6977 = vpack.c.b16 %v6473, %v6469
      %v6978 = vpack.c.b16 %v6474, %v6470
      %v6979 = vpack.c.b16 %v6475, %v6471
      %v6980 = vpack.c.b16 %v6476, %v6472
      %v6981 = vpack.c.b16 %v6481, %v6477
      %v6982 = vpack.c.b16 %v6482, %v6478
      %v6983 = vpack.c.b16 %v6483, %v6479
      %v6984 = vpack.c.b16 %v6484, %v6480
      %v6985 = vpack.c.b16 %v6489, %v6485
      %v6986 = vpack.c.b16 %v6490, %v6486
      %v6987 = vpack.c.b16 %v6491, %v6487
      %v6988 = vpack.c.b16 %v6492, %v6488
      %v6989 = vpack.c.b16 %v6497, %v6493
      %v6990 = vpack.c.b16 %v6498, %v6494
      %v6991 = vpack.c.b16 %v6499, %v6495
      %v6992 = vpack.c.b16 %v6500, %v6496
      %v6993 = vpack.c.b16 %v6505, %v6501
      %v6994 = vpack.c.b16 %v6506, %v6502
      %v6995 = vpack.c.b16 %v6507, %v6503
      %v6996 = vpack.c.b16 %v6508, %v6504
      %v6997 = vpack.c.b16 %v6513, %v6509
      %v6998 = vpack.c.b16 %v6514, %v6510
      %v6999 = vpack.c.b16 %v6515, %v6511
      %v7000 = vpack.c.b16 %v6516, %v6512
      %v7001 = vpack.c.b16 %v6521, %v6517
      %v7002 = vpack.c.b16 %v6522, %v6518
      %v7003 = vpack.c.b16 %v6523, %v6519
      %v7004 = vpack.c.b16 %v6524, %v6520
      %v7005 = vpack.c.b16 %v6529, %v6525
      %v7006 = vpack.c.b16 %v6530, %v6526
      %v7007 = vpack.c.b16 %v6531, %v6527
      %v7008 = vpack.c.b16 %v6532, %v6528
      %v7009 = vpack.c.b16 %v6537, %v6533
      %v7010 = vpack.c.b16 %v6538, %v6534
      %v7011 = vpack.c.b16 %v6539, %v6535
      %v7012 = vpack.c.b16 %v6540, %v6536
      %v7013 = vpack.c.b16 %v6545, %v6541
      %v7014 = vpack.c.b16 %v6546, %v6542
      %v7015 = vpack.c.b16 %v6547, %v6543
      %v7016 = vpack.c.b16 %v6548, %v6544
      %v7017 = vpack.c.b16 %v6553, %v6549
      %v7018 = vpack.c.b16 %v6554, %v6550
      %v7019 = vpack.c.b16 %v6555, %v6551
      %v7020 = vpack.c.b16 %v6556, %v6552
      %v7021 = vpack.c.b16 %v6561, %v6557
      %v7022 = vpack.c.b16 %v6562, %v6558
      %v7023 = vpack.c.b16 %v6563, %v6559
      %v7024 = vpack.c.b16 %v6564, %v6560
      %v7025 = vpack.c.b16 %v6569, %v6565
      %v7026 = vpack.c.b16 %v6570, %v6566
      %v7027 = vpack.c.b16 %v6571, %v6567
      %v7028 = vpack.c.b16 %v6572, %v6568
      %v7029 = vpack.c.b16 %v6577, %v6573
      %v7030 = vpack.c.b16 %v6578, %v6574
      %v7031 = vpack.c.b16 %v6579, %v6575
      %v7032 = vpack.c.b16 %v6580, %v6576
      %v7033 = vpack.c.b16 %v6585, %v6581
      %v7034 = vpack.c.b16 %v6586, %v6582
      %v7035 = vpack.c.b16 %v6587, %v6583
      %v7036 = vpack.c.b16 %v6588, %v6584
      %v7037 = vpack.c.b16 %v6593, %v6589
      %v7038 = vpack.c.b16 %v6594, %v6590
      %v7039 = vpack.c.b16 %v6595, %v6591
      %v7040 = vpack.c.b16 %v6596, %v6592
      %v7041 = vpack.c.b16 %v6601, %v6597
      %v7042 = vpack.c.b16 %v6602, %v6598
      %v7043 = vpack.c.b16 %v6603, %v6599
      %v7044 = vpack.c.b16 %v6604, %v6600
      %v7045 = vpack.c.b16 %v6609, %v6605
      %v7046 = vpack.c.b16 %v6610, %v6606
      %v7047 = vpack.c.b16 %v6611, %v6607
      %v7048 = vpack.c.b16 %v6612, %v6608
      %v7049 = vpack.c.b16 %v6617, %v6613
      %v7050 = vpack.c.b16 %v6618, %v6614
      %v7051 = vpack.c.b16 %v6619, %v6615
      %v7052 = vpack.c.b16 %v6620, %v6616
      %v7053 = vpack.c.b16 %v6625, %v6621
      %v7054 = vpack.c.b16 %v6626, %v6622
      %v7055 = vpack.c.b16 %v6627, %v6623
      %v7056 = vpack.c.b16 %v6628, %v6624
      %v7057 = vpack.c.b16 %v6633, %v6629
      %v7058 = vpack.c.b16 %v6634, %v6630
      %v7059 = vpack.c.b16 %v6635, %v6631
      %v7060 = vpack.c.b16 %v6636, %v6632
      %v7061 = vpack.c.b16 %v6641, %v6637
      %v7062 = vpack.c.b16 %v6642, %v6638
      %v7063 = vpack.c.b16 %v6643, %v6639
      %v7064 = vpack.c.b16 %v6644, %v6640
      %v7065 = vpack.c.b16 %v6649, %v6645
      %v7066 = vpack.c.b16 %v6650, %v6646
      %v7067 = vpack.c.b16 %v6651, %v6647
      %v7068 = vpack.c.b16 %v6652, %v6648
      %v7069 = vpack.c.b16 %v6657, %v6653
      %v7070 = vpack.c.b16 %v6658, %v6654
      %v7071 = vpack.c.b16 %v6659, %v6655
      %v7072 = vpack.c.b16 %v6660, %v6656
      %v7073 = vpack.c.b16 %v6665, %v6661
      %v7074 = vpack.c.b16 %v6666, %v6662
      %v7075 = vpack.c.b16 %v6667, %v6663
      %v7076 = vpack.c.b16 %v6668, %v6664
      %v7077 = vpack.c.b16 %v6673, %v6669
      %v7078 = vpack.c.b16 %v6674, %v6670
      %v7079 = vpack.c.b16 %v6675, %v6671
      %v7080 = vpack.c.b16 %v6676, %v6672
      %v7081 = vpack.c.b16 %v6681, %v6677
      %v7082 = vpack.c.b16 %v6682, %v6678
      %v7083 = vpack.c.b16 %v6683, %v6679
      %v7084 = vpack.c.b16 %v6684, %v6680
      %v7085 = vpack.c.b16 %v6689, %v6685
      %v7086 = vpack.c.b16 %v6690, %v6686
      %v7087 = vpack.c.b16 %v6691, %v6687
      %v7088 = vpack.c.b16 %v6692, %v6688
      %v7089 = vpack.c.b16 %v6697, %v6693
      %v7090 = vpack.c.b16 %v6698, %v6694
      %v7091 = vpack.c.b16 %v6699, %v6695
      %v7092 = vpack.c.b16 %v6700, %v6696
      %v7093 = vpack.c.b16 %v6705, %v6701
      %v7094 = vpack.c.b16 %v6706, %v6702
      %v7095 = vpack.c.b16 %v6707, %v6703
      %v7096 = vpack.c.b16 %v6708, %v6704
      %v7097 = vpack.c.b16 %v6713, %v6709
      %v7098 = vpack.c.b16 %v6714, %v6710
      %v7099 = vpack.c.b16 %v6715, %v6711
      %v7100 = vpack.c.b16 %v6716, %v6712
      %v7101 = vpack.c.b16 %v6721, %v6717
      %v7102 = vpack.c.b16 %v6722, %v6718
      %v7103 = vpack.c.b16 %v6723, %v6719
      %v7104 = vpack.c.b16 %v6724, %v6720
      %v7105 = vpack.c.b16 %v6729, %v6725
      %v7106 = vpack.c.b16 %v6730, %v6726
      %v7107 = vpack.c.b16 %v6731, %v6727
      %v7108 = vpack.c.b16 %v6732, %v6728
      %v7109 = vpack.c.b16 %v6737, %v6733
      %v7110 = vpack.c.b16 %v6738, %v6734
      %v7111 = vpack.c.b16 %v6739, %v6735
      %v7112 = vpack.c.b16 %v6740, %v6736
      %v7113 = vpack.c.b16 %v6745, %v6741
      %v7114 = vpack.c.b16 %v6746, %v6742
      %v7115 = vpack.c.b16 %v6747, %v6743
      %v7116 = vpack.c.b16 %v6748, %v6744
      %v7117 = vpack.c.b16 %v6753, %v6749
      %v7118 = vpack.c.b16 %v6754, %v6750
      %v7119 = vpack.c.b16 %v6755, %v6751
      %v7120 = vpack.c.b16 %v6756, %v6752
      %v7121 = vpack.c.b16 %v6761, %v6757
      %v7122 = vpack.c.b16 %v6762, %v6758
      %v7123 = vpack.c.b16 %v6763, %v6759
      %v7124 = vpack.c.b16 %v6764, %v6760
      %v7125 = vpack.c.b16 %v6769, %v6765
      %v7126 = vpack.c.b16 %v6770, %v6766
      %v7127 = vpack.c.b16 %v6771, %v6767
      %v7128 = vpack.c.b16 %v6772, %v6768
      %v7129 = vpack.c.b16 %v6777, %v6773
      %v7130 = vpack.c.b16 %v6778, %v6774
      %v7131 = vpack.c.b16 %v6779, %v6775
      %v7132 = vpack.c.b16 %v6780, %v6776
      %v7133 = vpack.c.b16 %v6785, %v6781
      %v7134 = vpack.c.b16 %v6786, %v6782
      %v7135 = vpack.c.b16 %v6787, %v6783
      %v7136 = vpack.c.b16 %v6788, %v6784
      %v7137 = vpack.c.b16 %v6793, %v6789
      %v7138 = vpack.c.b16 %v6794, %v6790
      %v7139 = vpack.c.b16 %v6795, %v6791
      %v7140 = vpack.c.b16 %v6796, %v6792
      %v7141 = vpack.c.b16 %v6801, %v6797
      %v7142 = vpack.c.b16 %v6802, %v6798
      %v7143 = vpack.c.b16 %v6803, %v6799
      %v7144 = vpack.c.b16 %v6804, %v6800
      %v7145 = vpack.c.b16 %v6809, %v6805
      %v7146 = vpack.c.b16 %v6810, %v6806
      %v7147 = vpack.c.b16 %v6811, %v6807
      %v7148 = vpack.c.b16 %v6812, %v6808
      %v7149 = vpack.c.b16 %v6817, %v6813
      %v7150 = vpack.c.b16 %v6818, %v6814
      %v7151 = vpack.c.b16 %v6819, %v6815
      %v7152 = vpack.c.b16 %v6820, %v6816
      %v7153 = vpack.c.b16 %v6825, %v6821
      %v7154 = vpack.c.b16 %v6826, %v6822
      %v7155 = vpack.c.b16 %v6827, %v6823
      %v7156 = vpack.c.b16 %v6828, %v6824
      %v7157 = vpack.c.b16 %v6833, %v6829
      %v7158 = vpack.c.b16 %v6834, %v6830
      %v7159 = vpack.c.b16 %v6835, %v6831
      %v7160 = vpack.c.b16 %v6836, %v6832
      %v7161 = vpack.c.b16 %v6841, %v6837
      %v7162 = vpack.c.b16 %v6842, %v6838
      %v7163 = vpack.c.b16 %v6843, %v6839
      %v7164 = vpack.c.b16 %v6844, %v6840
      %v7165 = vpack.c.b16 %v6849, %v6845
      %v7166 = vpack.c.b16 %v6850, %v6846
      %v7167 = vpack.c.b16 %v6851, %v6847
      %v7168 = vpack.c.b16 %v6852, %v6848
      %v7169 = vpack.c.b16 %v6857, %v6853
      %v7170 = vpack.c.b16 %v6858, %v6854
      %v7171 = vpack.c.b16 %v6859, %v6855
      %v7172 = vpack.c.b16 %v6860, %v6856
      %v7173 = vpack.c.b16 %v6865, %v6861
      %v7174 = vpack.c.b16 %v6866, %v6862
      %v7175 = vpack.c.b16 %v6867, %v6863
      %v7176 = vpack.c.b16 %v6868, %v6864
      %v7177 = vpack.c.b16 %v6873, %v6869
      %v7178 = vpack.c.b16 %v6874, %v6870
      %v7179 = vpack.c.b16 %v6875, %v6871
      %v7180 = vpack.c.b16 %v6876, %v6872
      %v7181 = vpack.c.b16 %v6881, %v6877
      %v7182 = vpack.c.b16 %v6882, %v6878
      %v7183 = vpack.c.b16 %v6883, %v6879
      %v7184 = vpack.c.b16 %v6884, %v6880
      %v7185 = vpack.c.b16 %v6889, %v6885
      %v7186 = vpack.c.b16 %v6890, %v6886
      %v7187 = vpack.c.b16 %v6891, %v6887
      %v7188 = vpack.c.b16 %v6892, %v6888
      %v7189 = vpack.c.b16 %v6897, %v6893
      %v7190 = vpack.c.b16 %v6898, %v6894
      %v7191 = vpack.c.b16 %v6899, %v6895
      %v7192 = vpack.c.b16 %v6900, %v6896
      %v7193 = vpack.c.b16 %v6905, %v6901
      %v7194 = vpack.c.b16 %v6906, %v6902
      %v7195 = vpack.c.b16 %v6907, %v6903
      %v7196 = vpack.c.b16 %v6908, %v6904
      %v7197 = vpack.c.b16 %v6913, %v6909
      %v7198 = vpack.c.b16 %v6914, %v6910
      %v7199 = vpack.c.b16 %v6915, %v6911
      %v7200 = vpack.c.b16 %v6916, %v6912
      %v7201 = vpack.c.b16 %v6921, %v6917
      %v7202 = vpack.c.b16 %v6922, %v6918
      %v7203 = vpack.c.b16 %v6923, %v6919
      %v7204 = vpack.c.b16 %v6924, %v6920
      %v7205 = vpack.c.b16 %v6929, %v6925
      %v7206 = vpack.c.b16 %v6930, %v6926
      %v7207 = vpack.c.b16 %v6931, %v6927
      %v7208 = vpack.c.b16 %v6932, %v6928
      %v7209 = vpack.c.b16 %v6937, %v6933
      %v7210 = vpack.c.b16 %v6938, %v6934
      %v7211 = vpack.c.b16 %v6939, %v6935
      %v7212 = vpack.c.b16 %v6940, %v6936
      %v7213 = vpack.c.b16 %v6945, %v6941
      %v7214 = vpack.c.b16 %v6946, %v6942
      %v7215 = vpack.c.b16 %v6947, %v6943
      %v7216 = vpack.c.b16 %v6948, %v6944
      %v7217 = vpack.c.b16 %v6953, %v6949
      %v7218 = vpack.c.b16 %v6954, %v6950
      %v7219 = vpack.c.b16 %v6955, %v6951
      %v7220 = vpack.c.b16 %v6956, %v6952
      %v7221 = vpack.c.b16 %v6961, %v6957
      %v7222 = vpack.c.b16 %v6962, %v6958
      %v7223 = vpack.c.b16 %v6963, %v6959
      %v7224 = vpack.c.b16 %v6964, %v6960
      %v7225 = vpack.c.b16 %v6969, %v6965
      %v7226 = vpack.c.b16 %v6970, %v6966
      %v7227 = vpack.c.b16 %v6971, %v6967
      %v7228 = vpack.c.b16 %v6972, %v6968
      %7485 = vmatpush.bf16.msra.mxu0 %v7001
      %7486 = vmatpush.bf16.msra.mxu0 %v6997
      %7487 = vmatpush.bf16.msra.mxu0 %v6993
      %7488 = vmatpush.bf16.msra.mxu0 %v6989
      %7489 = vmatpush.bf16.msra.mxu0 %v6985
      %7490 = vmatpush.bf16.msra.mxu0 %v6981
      %7491 = vmatpush.bf16.msra.mxu0 %v6977
      %7492 = vmatpush.bf16.msra.mxu0 %v6973
      %7493 = vmatmul.bf16.gmra.mxu0 %v6140
      %v7494 = vpop.f32.mrf.mxu0
      %v7495 = vadd.f32 %v6125, %v7494
      %v7496 = vpop.f32.mrf.mxu0
      %7497 = vdwg.mxu0
      %7498 = vmatpush.bf16.msra.mxu0 %v7033
      %7499 = vmatpush.bf16.msra.mxu0 %v7029
      %7500 = vmatpush.bf16.msra.mxu0 %v7025
      %7501 = vmatpush.bf16.msra.mxu0 %v7021
      %7502 = vmatpush.bf16.msra.mxu0 %v7017
      %7503 = vmatpush.bf16.msra.mxu0 %v7013
      %7504 = vmatpush.bf16.msra.mxu0 %v7009
      %7505 = vmatpush.bf16.msra.mxu0 %v7005
      %7506 = vmatmul.bf16.gmra.mxu0 %v6148
      %v7507 = vpop.f32.mrf.mxu0
      %v7508 = vadd.f32 %v7495, %v7507
      %v7509 = vpop.f32.mrf.mxu0
      %7510 = vdwg.mxu0
      %7511 = vmatpush.bf16.msra.mxu0 %v7065
      %7512 = vmatpush.bf16.msra.mxu0 %v7061
      %7513 = vmatpush.bf16.msra.mxu0 %v7057
      %7514 = vmatpush.bf16.msra.mxu0 %v7053
      %7515 = vmatpush.bf16.msra.mxu0 %v7049
      %7516 = vmatpush.bf16.msra.mxu0 %v7045
      %7517 = vmatpush.bf16.msra.mxu0 %v7041
      %7518 = vmatpush.bf16.msra.mxu0 %v7037
      %7519 = vmatmul.bf16.gmra.mxu0 %v6156
      %v7520 = vpop.f32.mrf.mxu0
      %v7521 = vadd.f32 %v7508, %v7520
      %v7522 = vpop.f32.mrf.mxu0
      %7523 = vdwg.mxu0
      %7524 = vmatpush.bf16.msra.mxu0 %v7097
      %7525 = vmatpush.bf16.msra.mxu0 %v7093
      %7526 = vmatpush.bf16.msra.mxu0 %v7089
      %7527 = vmatpush.bf16.msra.mxu0 %v7085
      %7528 = vmatpush.bf16.msra.mxu0 %v7081
      %7529 = vmatpush.bf16.msra.mxu0 %v7077
      %7530 = vmatpush.bf16.msra.mxu0 %v7073
      %7531 = vmatpush.bf16.msra.mxu0 %v7069
      %7532 = vmatmul.bf16.gmra.mxu0 %v6164
      %v7533 = vpop.f32.mrf.mxu0
      %v7534 = vadd.f32 %v7521, %v7533
      %v7535 = vpop.f32.mrf.mxu0
      %7536 = vdwg.mxu0
      %7537 = vmatpush.bf16.msra.mxu0 %v7129
      %7538 = vmatpush.bf16.msra.mxu0 %v7125
      %7539 = vmatpush.bf16.msra.mxu0 %v7121
      %7540 = vmatpush.bf16.msra.mxu0 %v7117
      %7541 = vmatpush.bf16.msra.mxu0 %v7113
      %7542 = vmatpush.bf16.msra.mxu0 %v7109
      %7543 = vmatpush.bf16.msra.mxu0 %v7105
      %7544 = vmatpush.bf16.msra.mxu0 %v7101
      %7545 = vmatmul.bf16.gmra.mxu0 %v6172
      %v7546 = vpop.f32.mrf.mxu0
      %v7547 = vadd.f32 %v7534, %v7546
      %v7548 = vpop.f32.mrf.mxu0
      %7549 = vdwg.mxu0
      %7550 = vmatpush.bf16.msra.mxu0 %v7161
      %7551 = vmatpush.bf16.msra.mxu0 %v7157
      %7552 = vmatpush.bf16.msra.mxu0 %v7153
      %7553 = vmatpush.bf16.msra.mxu0 %v7149
      %7554 = vmatpush.bf16.msra.mxu0 %v7145
      %7555 = vmatpush.bf16.msra.mxu0 %v7141
      %7556 = vmatpush.bf16.msra.mxu0 %v7137
      %7557 = vmatpush.bf16.msra.mxu0 %v7133
      %7558 = vmatmul.bf16.gmra.mxu0 %v6180
      %v7559 = vpop.f32.mrf.mxu0
      %v7560 = vadd.f32 %v7547, %v7559
      %v7561 = vpop.f32.mrf.mxu0
      %7562 = vdwg.mxu0
      %7563 = vmatpush.bf16.msra.mxu0 %v7193
      %7564 = vmatpush.bf16.msra.mxu0 %v7189
      %7565 = vmatpush.bf16.msra.mxu0 %v7185
      %7566 = vmatpush.bf16.msra.mxu0 %v7181
      %7567 = vmatpush.bf16.msra.mxu0 %v7177
      %7568 = vmatpush.bf16.msra.mxu0 %v7173
      %7569 = vmatpush.bf16.msra.mxu0 %v7169
      %7570 = vmatpush.bf16.msra.mxu0 %v7165
      %7571 = vmatmul.bf16.gmra.mxu0 %v6188
      %v7572 = vpop.f32.mrf.mxu0
      %v7573 = vadd.f32 %v7560, %v7572
      %v7574 = vpop.f32.mrf.mxu0
      %7575 = vdwg.mxu0
      %7576 = vmatpush.bf16.msra.mxu0 %v7225
      %7577 = vmatpush.bf16.msra.mxu0 %v7221
      %7578 = vmatpush.bf16.msra.mxu0 %v7217
      %7579 = vmatpush.bf16.msra.mxu0 %v7213
      %7580 = vmatpush.bf16.msra.mxu0 %v7209
      %7581 = vmatpush.bf16.msra.mxu0 %v7205
      %7582 = vmatpush.bf16.msra.mxu0 %v7201
      %7583 = vmatpush.bf16.msra.mxu0 %v7197
      %7584 = vmatmul.bf16.gmra.mxu0 %v6196
      %v7585 = vpop.f32.mrf.mxu0
      %v7586 = vadd.f32 %v7573, %v7585
      %v7587 = vpop.f32.mrf.mxu0
      %7588 = vdwg.mxu0
      %7589 = vmatpush.bf16.msra.mxu0 %v7002
      %7590 = vmatpush.bf16.msra.mxu0 %v6998
      %7591 = vmatpush.bf16.msra.mxu0 %v6994
      %7592 = vmatpush.bf16.msra.mxu0 %v6990
      %7593 = vmatpush.bf16.msra.mxu0 %v6986
      %7594 = vmatpush.bf16.msra.mxu0 %v6982
      %7595 = vmatpush.bf16.msra.mxu0 %v6978
      %7596 = vmatpush.bf16.msra.mxu0 %v6974
      %7597 = vmatmul.bf16.gmra.mxu0 %v6140
      %v7598 = vpop.f32.mrf.mxu0
      %v7599 = vadd.f32 %v6126, %v7598
      %v7600 = vpop.f32.mrf.mxu0
      %7601 = vdwg.mxu0
      %7602 = vmatpush.bf16.msra.mxu0 %v7034
      %7603 = vmatpush.bf16.msra.mxu0 %v7030
      %7604 = vmatpush.bf16.msra.mxu0 %v7026
      %7605 = vmatpush.bf16.msra.mxu0 %v7022
      %7606 = vmatpush.bf16.msra.mxu0 %v7018
      %7607 = vmatpush.bf16.msra.mxu0 %v7014
      %7608 = vmatpush.bf16.msra.mxu0 %v7010
      %7609 = vmatpush.bf16.msra.mxu0 %v7006
      %7610 = vmatmul.bf16.gmra.mxu0 %v6148
      %v7611 = vpop.f32.mrf.mxu0
      %v7612 = vadd.f32 %v7599, %v7611
      %v7613 = vpop.f32.mrf.mxu0
      %7614 = vdwg.mxu0
      %7615 = vmatpush.bf16.msra.mxu0 %v7066
      %7616 = vmatpush.bf16.msra.mxu0 %v7062
      %7617 = vmatpush.bf16.msra.mxu0 %v7058
      %7618 = vmatpush.bf16.msra.mxu0 %v7054
      %7619 = vmatpush.bf16.msra.mxu0 %v7050
      %7620 = vmatpush.bf16.msra.mxu0 %v7046
      %7621 = vmatpush.bf16.msra.mxu0 %v7042
      %7622 = vmatpush.bf16.msra.mxu0 %v7038
      %7623 = vmatmul.bf16.gmra.mxu0 %v6156
      %v7624 = vpop.f32.mrf.mxu0
      %v7625 = vadd.f32 %v7612, %v7624
      %v7626 = vpop.f32.mrf.mxu0
      %7627 = vdwg.mxu0
      %7628 = vmatpush.bf16.msra.mxu0 %v7098
      %7629 = vmatpush.bf16.msra.mxu0 %v7094
      %7630 = vmatpush.bf16.msra.mxu0 %v7090
      %7631 = vmatpush.bf16.msra.mxu0 %v7086
      %7632 = vmatpush.bf16.msra.mxu0 %v7082
      %7633 = vmatpush.bf16.msra.mxu0 %v7078
      %7634 = vmatpush.bf16.msra.mxu0 %v7074
      %7635 = vmatpush.bf16.msra.mxu0 %v7070
      %7636 = vmatmul.bf16.gmra.mxu0 %v6164
      %v7637 = vpop.f32.mrf.mxu0
      %v7638 = vadd.f32 %v7625, %v7637
      %v7639 = vpop.f32.mrf.mxu0
      %7640 = vdwg.mxu0
      %7641 = vmatpush.bf16.msra.mxu0 %v7130
      %7642 = vmatpush.bf16.msra.mxu0 %v7126
      %7643 = vmatpush.bf16.msra.mxu0 %v7122
      %7644 = vmatpush.bf16.msra.mxu0 %v7118
      %7645 = vmatpush.bf16.msra.mxu0 %v7114
      %7646 = vmatpush.bf16.msra.mxu0 %v7110
      %7647 = vmatpush.bf16.msra.mxu0 %v7106
      %7648 = vmatpush.bf16.msra.mxu0 %v7102
      %7649 = vmatmul.bf16.gmra.mxu0 %v6172
      %v7650 = vpop.f32.mrf.mxu0
      %v7651 = vadd.f32 %v7638, %v7650
      %v7652 = vpop.f32.mrf.mxu0
      %7653 = vdwg.mxu0
      %7654 = vmatpush.bf16.msra.mxu0 %v7162
      %7655 = vmatpush.bf16.msra.mxu0 %v7158
      %7656 = vmatpush.bf16.msra.mxu0 %v7154
      %7657 = vmatpush.bf16.msra.mxu0 %v7150
      %7658 = vmatpush.bf16.msra.mxu0 %v7146
      %7659 = vmatpush.bf16.msra.mxu0 %v7142
      %7660 = vmatpush.bf16.msra.mxu0 %v7138
      %7661 = vmatpush.bf16.msra.mxu0 %v7134
      %7662 = vmatmul.bf16.gmra.mxu0 %v6180
      %v7663 = vpop.f32.mrf.mxu0
      %v7664 = vadd.f32 %v7651, %v7663
      %v7665 = vpop.f32.mrf.mxu0
      %7666 = vdwg.mxu0
      %7667 = vmatpush.bf16.msra.mxu0 %v7194
      %7668 = vmatpush.bf16.msra.mxu0 %v7190
      %7669 = vmatpush.bf16.msra.mxu0 %v7186
      %7670 = vmatpush.bf16.msra.mxu0 %v7182
      %7671 = vmatpush.bf16.msra.mxu0 %v7178
      %7672 = vmatpush.bf16.msra.mxu0 %v7174
      %7673 = vmatpush.bf16.msra.mxu0 %v7170
      %7674 = vmatpush.bf16.msra.mxu0 %v7166
      %7675 = vmatmul.bf16.gmra.mxu0 %v6188
      %v7676 = vpop.f32.mrf.mxu0
      %v7677 = vadd.f32 %v7664, %v7676
      %v7678 = vpop.f32.mrf.mxu0
      %7679 = vdwg.mxu0
      %7680 = vmatpush.bf16.msra.mxu0 %v7226
      %7681 = vmatpush.bf16.msra.mxu0 %v7222
      %7682 = vmatpush.bf16.msra.mxu0 %v7218
      %7683 = vmatpush.bf16.msra.mxu0 %v7214
      %7684 = vmatpush.bf16.msra.mxu0 %v7210
      %7685 = vmatpush.bf16.msra.mxu0 %v7206
      %7686 = vmatpush.bf16.msra.mxu0 %v7202
      %7687 = vmatpush.bf16.msra.mxu0 %v7198
      %7688 = vmatmul.bf16.gmra.mxu0 %v6196
      %v7689 = vpop.f32.mrf.mxu0
      %v7690 = vadd.f32 %v7677, %v7689
      %v7691 = vpop.f32.mrf.mxu0
      %7692 = vdwg.mxu0
      %7693 = vmatpush.bf16.msra.mxu0 %v7003
      %7694 = vmatpush.bf16.msra.mxu0 %v6999
      %7695 = vmatpush.bf16.msra.mxu0 %v6995
      %7696 = vmatpush.bf16.msra.mxu0 %v6991
      %7697 = vmatpush.bf16.msra.mxu0 %v6987
      %7698 = vmatpush.bf16.msra.mxu0 %v6983
      %7699 = vmatpush.bf16.msra.mxu0 %v6979
      %7700 = vmatpush.bf16.msra.mxu0 %v6975
      %7701 = vmatmul.bf16.gmra.mxu0 %v6140
      %v7702 = vpop.f32.mrf.mxu0
      %v7703 = vadd.f32 %v6127, %v7702
      %v7704 = vpop.f32.mrf.mxu0
      %7705 = vdwg.mxu0
      %7706 = vmatpush.bf16.msra.mxu0 %v7035
      %7707 = vmatpush.bf16.msra.mxu0 %v7031
      %7708 = vmatpush.bf16.msra.mxu0 %v7027
      %7709 = vmatpush.bf16.msra.mxu0 %v7023
      %7710 = vmatpush.bf16.msra.mxu0 %v7019
      %7711 = vmatpush.bf16.msra.mxu0 %v7015
      %7712 = vmatpush.bf16.msra.mxu0 %v7011
      %7713 = vmatpush.bf16.msra.mxu0 %v7007
      %7714 = vmatmul.bf16.gmra.mxu0 %v6148
      %v7715 = vpop.f32.mrf.mxu0
      %v7716 = vadd.f32 %v7703, %v7715
      %v7717 = vpop.f32.mrf.mxu0
      %7718 = vdwg.mxu0
      %7719 = vmatpush.bf16.msra.mxu0 %v7067
      %7720 = vmatpush.bf16.msra.mxu0 %v7063
      %7721 = vmatpush.bf16.msra.mxu0 %v7059
      %7722 = vmatpush.bf16.msra.mxu0 %v7055
      %7723 = vmatpush.bf16.msra.mxu0 %v7051
      %7724 = vmatpush.bf16.msra.mxu0 %v7047
      %7725 = vmatpush.bf16.msra.mxu0 %v7043
      %7726 = vmatpush.bf16.msra.mxu0 %v7039
      %7727 = vmatmul.bf16.gmra.mxu0 %v6156
      %v7728 = vpop.f32.mrf.mxu0
      %v7729 = vadd.f32 %v7716, %v7728
      %v7730 = vpop.f32.mrf.mxu0
      %7731 = vdwg.mxu0
      %7732 = vmatpush.bf16.msra.mxu0 %v7099
      %7733 = vmatpush.bf16.msra.mxu0 %v7095
      %7734 = vmatpush.bf16.msra.mxu0 %v7091
      %7735 = vmatpush.bf16.msra.mxu0 %v7087
      %7736 = vmatpush.bf16.msra.mxu0 %v7083
      %7737 = vmatpush.bf16.msra.mxu0 %v7079
      %7738 = vmatpush.bf16.msra.mxu0 %v7075
      %7739 = vmatpush.bf16.msra.mxu0 %v7071
      %7740 = vmatmul.bf16.gmra.mxu0 %v6164
      %v7741 = vpop.f32.mrf.mxu0
      %v7742 = vadd.f32 %v7729, %v7741
      %v7743 = vpop.f32.mrf.mxu0
      %7744 = vdwg.mxu0
      %7745 = vmatpush.bf16.msra.mxu0 %v7131
      %7746 = vmatpush.bf16.msra.mxu0 %v7127
      %7747 = vmatpush.bf16.msra.mxu0 %v7123
      %7748 = vmatpush.bf16.msra.mxu0 %v7119
      %7749 = vmatpush.bf16.msra.mxu0 %v7115
      %7750 = vmatpush.bf16.msra.mxu0 %v7111
      %7751 = vmatpush.bf16.msra.mxu0 %v7107
      %7752 = vmatpush.bf16.msra.mxu0 %v7103
      %7753 = vmatmul.bf16.gmra.mxu0 %v6172
      %v7754 = vpop.f32.mrf.mxu0
      %v7755 = vadd.f32 %v7742, %v7754
      %v7756 = vpop.f32.mrf.mxu0
      %7757 = vdwg.mxu0
      %7758 = vmatpush.bf16.msra.mxu0 %v7163
      %7759 = vmatpush.bf16.msra.mxu0 %v7159
      %7760 = vmatpush.bf16.msra.mxu0 %v7155
      %7761 = vmatpush.bf16.msra.mxu0 %v7151
      %7762 = vmatpush.bf16.msra.mxu0 %v7147
      %7763 = vmatpush.bf16.msra.mxu0 %v7143
      %7764 = vmatpush.bf16.msra.mxu0 %v7139
      %7765 = vmatpush.bf16.msra.mxu0 %v7135
      %7766 = vmatmul.bf16.gmra.mxu0 %v6180
      %v7767 = vpop.f32.mrf.mxu0
      %v7768 = vadd.f32 %v7755, %v7767
      %v7769 = vpop.f32.mrf.mxu0
      %7770 = vdwg.mxu0
      %7771 = vmatpush.bf16.msra.mxu0 %v7195
      %7772 = vmatpush.bf16.msra.mxu0 %v7191
      %7773 = vmatpush.bf16.msra.mxu0 %v7187
      %7774 = vmatpush.bf16.msra.mxu0 %v7183
      %7775 = vmatpush.bf16.msra.mxu0 %v7179
      %7776 = vmatpush.bf16.msra.mxu0 %v7175
      %7777 = vmatpush.bf16.msra.mxu0 %v7171
      %7778 = vmatpush.bf16.msra.mxu0 %v7167
      %7779 = vmatmul.bf16.gmra.mxu0 %v6188
      %v7780 = vpop.f32.mrf.mxu0
      %v7781 = vadd.f32 %v7768, %v7780
      %v7782 = vpop.f32.mrf.mxu0
      %7783 = vdwg.mxu0
      %7784 = vmatpush.bf16.msra.mxu0 %v7227
      %7785 = vmatpush.bf16.msra.mxu0 %v7223
      %7786 = vmatpush.bf16.msra.mxu0 %v7219
      %7787 = vmatpush.bf16.msra.mxu0 %v7215
      %7788 = vmatpush.bf16.msra.mxu0 %v7211
      %7789 = vmatpush.bf16.msra.mxu0 %v7207
      %7790 = vmatpush.bf16.msra.mxu0 %v7203
      %7791 = vmatpush.bf16.msra.mxu0 %v7199
      %7792 = vmatmul.bf16.gmra.mxu0 %v6196
      %v7793 = vpop.f32.mrf.mxu0
      %v7794 = vadd.f32 %v7781, %v7793
      %v7795 = vpop.f32.mrf.mxu0
      %7796 = vdwg.mxu0
      %7797 = vmatpush.bf16.msra.mxu0 %v7004
      %7798 = vmatpush.bf16.msra.mxu0 %v7000
      %7799 = vmatpush.bf16.msra.mxu0 %v6996
      %7800 = vmatpush.bf16.msra.mxu0 %v6992
      %7801 = vmatpush.bf16.msra.mxu0 %v6988
      %7802 = vmatpush.bf16.msra.mxu0 %v6984
      %7803 = vmatpush.bf16.msra.mxu0 %v6980
      %7804 = vmatpush.bf16.msra.mxu0 %v6976
      %7805 = vmatmul.bf16.gmra.mxu0 %v6140
      %v7806 = vpop.f32.mrf.mxu0
      %v7807 = vadd.f32 %v6128, %v7806
      %v7808 = vpop.f32.mrf.mxu0
      %7809 = vdwg.mxu0
      %7810 = vmatpush.bf16.msra.mxu0 %v7036
      %7811 = vmatpush.bf16.msra.mxu0 %v7032
      %7812 = vmatpush.bf16.msra.mxu0 %v7028
      %7813 = vmatpush.bf16.msra.mxu0 %v7024
      %7814 = vmatpush.bf16.msra.mxu0 %v7020
      %7815 = vmatpush.bf16.msra.mxu0 %v7016
      %7816 = vmatpush.bf16.msra.mxu0 %v7012
      %7817 = vmatpush.bf16.msra.mxu0 %v7008
      %7818 = vmatmul.bf16.gmra.mxu0 %v6148
      %v7819 = vpop.f32.mrf.mxu0
      %v7820 = vadd.f32 %v7807, %v7819
      %v7821 = vpop.f32.mrf.mxu0
      %7822 = vdwg.mxu0
      %7823 = vmatpush.bf16.msra.mxu0 %v7068
      %7824 = vmatpush.bf16.msra.mxu0 %v7064
      %7825 = vmatpush.bf16.msra.mxu0 %v7060
      %7826 = vmatpush.bf16.msra.mxu0 %v7056
      %7827 = vmatpush.bf16.msra.mxu0 %v7052
      %7828 = vmatpush.bf16.msra.mxu0 %v7048
      %7829 = vmatpush.bf16.msra.mxu0 %v7044
      %7830 = vmatpush.bf16.msra.mxu0 %v7040
      %7831 = vmatmul.bf16.gmra.mxu0 %v6156
      %v7832 = vpop.f32.mrf.mxu0
      %v7833 = vadd.f32 %v7820, %v7832
      %v7834 = vpop.f32.mrf.mxu0
      %7835 = vdwg.mxu0
      %7836 = vmatpush.bf16.msra.mxu0 %v7100
      %7837 = vmatpush.bf16.msra.mxu0 %v7096
      %7838 = vmatpush.bf16.msra.mxu0 %v7092
      %7839 = vmatpush.bf16.msra.mxu0 %v7088
      %7840 = vmatpush.bf16.msra.mxu0 %v7084
      %7841 = vmatpush.bf16.msra.mxu0 %v7080
      %7842 = vmatpush.bf16.msra.mxu0 %v7076
      %7843 = vmatpush.bf16.msra.mxu0 %v7072
      %7844 = vmatmul.bf16.gmra.mxu0 %v6164
      %v7845 = vpop.f32.mrf.mxu0
      %v7846 = vadd.f32 %v7833, %v7845
      %v7847 = vpop.f32.mrf.mxu0
      %7848 = vdwg.mxu0
      %7849 = vmatpush.bf16.msra.mxu0 %v7132
      %7850 = vmatpush.bf16.msra.mxu0 %v7128
      %7851 = vmatpush.bf16.msra.mxu0 %v7124
      %7852 = vmatpush.bf16.msra.mxu0 %v7120
      %7853 = vmatpush.bf16.msra.mxu0 %v7116
      %7854 = vmatpush.bf16.msra.mxu0 %v7112
      %7855 = vmatpush.bf16.msra.mxu0 %v7108
      %7856 = vmatpush.bf16.msra.mxu0 %v7104
      %7857 = vmatmul.bf16.gmra.mxu0 %v6172
      %v7858 = vpop.f32.mrf.mxu0
      %v7859 = vadd.f32 %v7846, %v7858
      %v7860 = vpop.f32.mrf.mxu0
      %7861 = vdwg.mxu0
      %7862 = vmatpush.bf16.msra.mxu0 %v7164
      %7863 = vmatpush.bf16.msra.mxu0 %v7160
      %7864 = vmatpush.bf16.msra.mxu0 %v7156
      %7865 = vmatpush.bf16.msra.mxu0 %v7152
      %7866 = vmatpush.bf16.msra.mxu0 %v7148
      %7867 = vmatpush.bf16.msra.mxu0 %v7144
      %7868 = vmatpush.bf16.msra.mxu0 %v7140
      %7869 = vmatpush.bf16.msra.mxu0 %v7136
      %7870 = vmatmul.bf16.gmra.mxu0 %v6180
      %v7871 = vpop.f32.mrf.mxu0
      %v7872 = vadd.f32 %v7859, %v7871
      %v7873 = vpop.f32.mrf.mxu0
      %7874 = vdwg.mxu0
      %7875 = vmatpush.bf16.msra.mxu0 %v7196
      %7876 = vmatpush.bf16.msra.mxu0 %v7192
      %7877 = vmatpush.bf16.msra.mxu0 %v7188
      %7878 = vmatpush.bf16.msra.mxu0 %v7184
      %7879 = vmatpush.bf16.msra.mxu0 %v7180
      %7880 = vmatpush.bf16.msra.mxu0 %v7176
      %7881 = vmatpush.bf16.msra.mxu0 %v7172
      %7882 = vmatpush.bf16.msra.mxu0 %v7168
      %7883 = vmatmul.bf16.gmra.mxu0 %v6188
      %v7884 = vpop.f32.mrf.mxu0
      %v7885 = vadd.f32 %v7872, %v7884
      %v7886 = vpop.f32.mrf.mxu0
      %7887 = vdwg.mxu0
      %7888 = vmatpush.bf16.msra.mxu0 %v7228
      %7889 = vmatpush.bf16.msra.mxu0 %v7224
      %7890 = vmatpush.bf16.msra.mxu0 %v7220
      %7891 = vmatpush.bf16.msra.mxu0 %v7216
      %7892 = vmatpush.bf16.msra.mxu0 %v7212
      %7893 = vmatpush.bf16.msra.mxu0 %v7208
      %7894 = vmatpush.bf16.msra.mxu0 %v7204
      %7895 = vmatpush.bf16.msra.mxu0 %v7200
      %7896 = vmatmul.bf16.gmra.mxu0 %v6196
      %v7897 = vpop.f32.mrf.mxu0
      %v7898 = vadd.f32 %v7885, %v7897
      %v7899 = vpop.f32.mrf.mxu0
      %7900 = vdwg.mxu0
      %v7901 = vmax.f32 %v7586, 0.0
      %v7902 = vmax.f32 %v7690, 0.0
      %v7903 = vmax.f32 %v7794, 0.0
      %v7904 = vmax.f32 %v7898, 0.0
      %v7909 = vrot.slane %v7902, 4
      %v7910 = vrot.slane %v7904, 4
      %v7911 = vsel %vm5818, %v7901, %v7909
      %v7912 = vsel %vm5818, %v7903, %v7910
      %v7913 = vrot.slane %v7911, 6
      %v7914 = vrot.slane %v7912, 6
      %7917 = vst [vmem:[%s278] sm:$0xcc] %v7913
      %7918 = vst [vmem:[%s278 + $0x8] sm:$0xcc] %v7914
      %p7919 = scmp.lt.s32.totalorder %s18, 1
      %s7920 = scalar_select %p7919, %s18, 1
      %s7921 = smul.addr %s7920, 4
      %s7922 = smul.addr %s7921, 4
      %s7923 = scalar_lea.vmem %s7, %s7922
      // Predicated region
      $region49: #{three_layer_cnn_forward.1} parent=47 // pred_check
        %p7924 = pneg %p188
      $region50: #{three_layer_cnn_forward.1} parent=47 // pred_check_branch
        %7926 = sbr.rel (%p7924) target = $region52
      $region51: #{three_layer_cnn_forward.1} parent=47 // pred_region
        _
      $region52: #{three_layer_cnn_forward.1} parent=47 // pred_fallthru
        _
    $region48: #{three_layer_cnn_forward.1} parent=5 // pred_fallthru
      _
    %p7927 = scmp.le.s32.totalorder 2, %s13
    // Predicated region
    $region53: #{three_layer_cnn_forward.1} parent=5 // pred_check
      %p7928 = pneg %p7927
    $region54: #{three_layer_cnn_forward.1} parent=5 // pred_check_branch
      %7930 = sbr.rel (%p7928) target = $region56
    $region55: #{three_layer_cnn_forward.1} parent=5 // pred_region
      %s7931 = ssub.s32 %s13, 2
      // Predicated region
      $region57: #{three_layer_cnn_forward.1} parent=55 // pred_check
        %p7932 = pneg %p194
      $region58: #{three_layer_cnn_forward.1} parent=55 // pred_check_branch
        %7934 = sbr.rel (%p7932) target = $region60
      $region59: #{three_layer_cnn_forward.1} parent=55 // pred_region
        %p7935 = scmp.lt.s32.totalorder %s19, 1
        %s7936 = scalar_select %p7935, %s19, 1
        %s7937 = smul.addr %s7936, 4
        %s7938 = smul.addr %s7937, 4
        %s7939 = scalar_lea.vmem %s7, %s7938
      $region60: #{three_layer_cnn_forward.1} parent=55 // pred_fallthru
        _
    $region56: #{three_layer_cnn_forward.1} parent=5 // pred_fallthru
      _
  $region6: #{three_layer_cnn_forward.1} parent=0 // loop_footer
    %s17 = sadd.s32 1, %s13
  $region7: #{three_layer_cnn_forward.1} parent=0 // loop_footer_branch
    %12 = sbr.rel target = $region3
  $region8: #{three_layer_cnn_forward.1} parent=0 // loop_exit
    _

</llo_original>
